<compile_context>
chip_gen: v7x
topology: tpu7x:2x2x1
jax: 0.10.0
libtpu: 0.0.40
codegen_flags: <defaults>
</compile_context>

<pallas_src>
import jax
import jax.numpy as jnp
from jax import lax
from jax.experimental import pallas as pl
from jax.experimental.pallas import tpu as pltpu

# ---------------- small-but-consistent MAE3D configuration ----------------
INPUT_SIZE = (12, 12, 8)          # H, W, D
PATCH_SIZE = (6, 6, 4)            # Ph, Pw, Pd
IN_CHANS   = 1
ENC_DIM    = 48                   # divisible by 6 (sincos PE) and by ENC_HEADS
ENC_DEPTH  = 2
ENC_HEADS  = 4                    # head_dim = 12
DEC_DIM    = 24                   # divisible by 6 and by DEC_HEADS
DEC_DEPTH  = 2
DEC_HEADS  = 4                    # head_dim = 6
MLP_RATIO  = 4.0
MASK_RATIO = 0.75

GRID_SIZE   = tuple(i // p for i, p in zip(INPUT_SIZE, PATCH_SIZE))        # (2, 2, 2)
NUM_PATCHES = GRID_SIZE[0] * GRID_SIZE[1] * GRID_SIZE[2]                   # 8
OUT_CHANS   = IN_CHANS * PATCH_SIZE[0] * PATCH_SIZE[1] * PATCH_SIZE[2]     # 144
LN_EPS      = 1e-6

SEL_LEN = int(NUM_PATCHES * (1 - MASK_RATIO))    # 2  visible patches
MSK_LEN = NUM_PATCHES - SEL_LEN                  # 6  masked patches
SEQ_LEN = NUM_PATCHES + 1                        # 9  cls + all patch slots
SE      = SEL_LEN + 1                            # 3  cls + visible tokens

ENC_HID = int(ENC_DIM * MLP_RATIO)               # 192
DEC_HID = int(DEC_DIM * MLP_RATIO)               # 96


def _dp(dim):
    # padded q/k/v section width (multiple of 32 so splits stay inside a lane tile)
    return ((dim + 31) // 32) * 32


ENC_DP = _dp(ENC_DIM)             # 64
DEC_DP = _dp(DEC_DIM)             # 32
ENC_VW = max(3 * ENC_DP, ENC_HID)  # 192  packed-vector slab width (encoder)
DEC_VW = max(3 * DEC_DP, DEC_HID)  # 96   packed-vector slab width (decoder)


# ============================ in-kernel helpers ============================
def _layer_norm(x, w, b, eps=LN_EPS):
    mu  = jnp.mean(x, axis=-1, keepdims=True)
    var = jnp.mean(jnp.square(x - mu), axis=-1, keepdims=True)
    return (x - mu) * lax.rsqrt(var + eps) * w + b


def _erf(x):
    # Abramowitz & Stegun 7.1.26 (max abs err ~1.5e-7); exp/abs/where only,
    # so it lowers on Mosaic without relying on an erf primitive.
    ax = jnp.abs(x)
    t = 1.0 / (1.0 + 0.3275911 * ax)
    poly = ((((1.061405429 * t - 1.453152027) * t + 1.421413741) * t
             - 0.284496736) * t + 0.254829592) * t
    y = 1.0 - poly * jnp.exp(-(ax * ax))
    return jnp.where(x < 0.0, -y, y)


def _gelu(x):
    # exact-erf GELU (matches torch nn.GELU default)
    return 0.5 * x * (1.0 + _erf(x * 0.7071067811865475))


def _floor_div_f(idx_i32, d):
    """floor(idx / d) for small non-negative integer iotas, computed in f32.

    Avoids vector-integer division; the +0.5 guard makes the result exact
    despite reciprocal rounding error (valid while idx << 2^23)."""
    return jnp.floor((idx_i32.astype(jnp.float32) + 0.5) * (1.0 / float(d)))


def _head_masks(width, dim, heads):
    """Per-head lane masks of shape (1, width); built once and reused."""
    lane = lax.broadcasted_iota(jnp.int32, (1, width), 1)
    dh = dim // heads
    return [((lane >= h * dh) & (lane < (h + 1) * dh)).astype(jnp.float32)
            for h in range(heads)]


def _unpack_block(qkv_w_ref, proj_w_ref, fc1_w_ref, fc2_w_ref, vec_ref,
                  layer, dim, dp, hid):
    vec = vec_ref[layer]                       # (8, VW)
    return dict(
        n1_w=vec[0:1, 0:dim],   n1_b=vec[1:2, 0:dim],
        proj_b=vec[2:3, 0:dim], n2_w=vec[3:4, 0:dim],
        n2_b=vec[4:5, 0:dim],   fc2_b=vec[5:6, 0:dim],
        qkv_b=vec[6:7, 0:3 * dp], fc1_b=vec[7:8, 0:hid],
        qkv_w=qkv_w_ref[layer], proj_w=proj_w_ref[layer],
        fc1_w=fc1_w_ref[layer], fc2_w=fc2_w_ref[layer])


def _vit_block(x, p, head_masks, attn_bias, dim, dp):
    """Timm-style pre-norm ViT block over a (BT*T, dim) row block.

    Fused qkv matmul; per-head attention with lane masks + additive
    block-diagonal / key-validity bias; single padded projection matmul."""
    heads = len(head_masks)
    scale = (dim // heads) ** -0.5

    h = _layer_norm(x, p['n1_w'], p['n1_b'])
    qkv = jnp.dot(h, p['qkv_w'], preferred_element_type=jnp.float32) + p['qkv_b']
    q = qkv[:, 0:dp] * scale                   # lanes [0, dim) meaningful
    k = qkv[:, dp:2 * dp]
    v = qkv[:, 2 * dp:3 * dp]

    ctx = jnp.zeros_like(q)
    for m in head_masks:                       # m: (1, dp) f32 lane mask
        # (q*m) @ k^T contracts only this head's lanes -> per-head scores
        s = lax.dot_general(q * m, k, (((1,), (1,)), ((), ())),
                            preferred_element_type=jnp.float32)
        s = s + attn_bias                      # block-diag batch + key-limit mask
        s = s - jnp.max(s, axis=-1, keepdims=True)
        e = jnp.exp(s)
        a = e * pl.reciprocal(jnp.sum(e, axis=-1, keepdims=True), approx=True)
        # a @ (v*m) is non-zero only on this head's lanes -> summing == concat
        ctx = ctx + jnp.dot(a, v * m, preferred_element_type=jnp.float32)

    # proj_w is zero-padded to (dp, dim) on the host -> no slicing of ctx needed
    x = x + jnp.dot(ctx, p['proj_w'], preferred_element_type=jnp.float32) + p['proj_b']

    h2 = _layer_norm(x, p['n2_w'], p['n2_b'])
    h2 = jnp.dot(h2, p['fc1_w'], preferred_element_type=jnp.float32) + p['fc1_b']
    h2 = _gelu(h2)
    h2 = jnp.dot(h2, p['fc2_w'], preferred_element_type=jnp.float32) + p['fc2_b']
    return x + h2


# ============================== fused Pallas kernel ========================
def mae3d_fused_kernel(x_ref, epe_ref, dpe_ref,
                       patch_w_ref, e2d_w_ref, head_w_ref, misc_ref,
                       eqkv_ref, eproj_ref, efc1_ref, efc2_ref, evec_ref,
                       dqkv_ref, dproj_ref, dfc1_ref, dfc2_ref, dvec_ref,
                       o_ref):
    """One grid step == BT batch elements: full encoder + decoder + masked MSE."""
    T = SEQ_LEN
    X    = x_ref[0]                            # (N, OUT_CHANS), N = BT*T
    pe_e = epe_ref[0]                          # (N, ENC_DIM); cls rows are zero
    pe_d = dpe_ref[0]                          # (N, DEC_DIM); cls rows are zero
    N    = X.shape[0]

    # ---- unpack the misc vector slab (one row per small parameter) ---------
    misc = misc_ref[...]
    patch_b  = misc[0:1, 0:ENC_DIM]
    cls_tok  = misc[1:2, 0:ENC_DIM]
    mask_tok = misc[2:3, 0:DEC_DIM]
    enc_nw   = misc[3:4, 0:ENC_DIM]
    enc_nb   = misc[4:5, 0:ENC_DIM]
    e2d_b    = misc[5:6, 0:DEC_DIM]
    dec_nw   = misc[6:7, 0:DEC_DIM]
    dec_nb   = misc[7:8, 0:DEC_DIM]
    head_b   = misc[8:9, 0:OUT_CHANS]

    # ---- hoisted row / attention masks (built once; JAX does not CSE iotas) --
    r1 = lax.broadcasted_iota(jnp.int32, (N, 1), 0)
    row_in = r1.astype(jnp.float32) - _floor_div_f(r1, T) * float(T)  # pos in sample
    is_cls      = row_in == 0.0
    is_enc_row  = row_in < float(SE)           # cls + visible tokens
    is_loss_row = row_in >= float(SE)          # masked-patch rows (enter the loss)

    r2 = lax.broadcasted_iota(jnp.int32, (N, N), 0)
    c2 = lax.broadcasted_iota(jnp.int32, (N, N), 1)
    samp_r = _floor_div_f(r2, T)
    samp_c = _floor_div_f(c2, T)
    col_in = c2.astype(jnp.float32) - samp_c * float(T)
    same_sample = samp_r == samp_c
    enc_bias = jnp.where(same_sample & (col_in < float(SE)), 0.0, -1e30)
    dec_bias = jnp.where(same_sample, 0.0, -1e30)

    enc_hm = _head_masks(ENC_DP, ENC_DIM, ENC_HEADS)
    dec_hm = _head_masks(DEC_DP, DEC_DIM, DEC_HEADS)

    # ---- patch embedding + cls token + encoder pos-embed -------------------
    emb = jnp.dot(X, patch_w_ref[...], preferred_element_type=jnp.float32) + patch_b
    h = jnp.where(is_cls, cls_tok, emb) + pe_e

    # ---- encoder: keys masked to the SE real tokens of each sample ----------
    for layer in range(ENC_DEPTH):
        p = _unpack_block(eqkv_ref, eproj_ref, efc1_ref, efc2_ref, evec_ref,
                          layer, ENC_DIM, ENC_DP, ENC_HID)
        h = _vit_block(h, p, enc_hm, enc_bias, ENC_DIM, ENC_DP)
    h = _layer_norm(h, enc_nw, enc_nb)

    # ---- encoder -> decoder: padded rows replaced by mask token, add dec PE --
    dec_in = jnp.dot(h, e2d_w_ref[...], preferred_element_type=jnp.float32) + e2d_b
    g = jnp.where(is_enc_row, dec_in, mask_tok) + pe_d

    # ---- decoder (full attention within each sample) ------------------------
    for layer in range(DEC_DEPTH):
        p = _unpack_block(dqkv_ref, dproj_ref, dfc1_ref, dfc2_ref, dvec_ref,
                          layer, DEC_DIM, DEC_DP, DEC_HID)
        g = _vit_block(g, p, dec_hm, dec_bias, DEC_DIM, DEC_DP)
    g = _layer_norm(g, dec_nw, dec_nb)
    pred = jnp.dot(g, head_w_ref[...], preferred_element_type=jnp.float32) + head_b

    # ---- loss: MSE(pred on masked rows, LayerNorm_no_affine(masked patches)) --
    mu   = jnp.mean(X, axis=-1, keepdims=True)
    var  = jnp.mean(jnp.square(X - mu), axis=-1, keepdims=True)
    tgt  = (X - mu) * lax.rsqrt(var + LN_EPS)
    diff = pred - tgt
    sq   = jnp.where(is_loss_row, diff * diff, 0.0)
    sse  = jnp.sum(sq)
    # one full (8,128) unmasked store per grid step
    o_ref[...] = jnp.zeros((1, 8, 128), jnp.float32) + sse


# ============================ pallas_call wrapper ==========================
def _const_index_map(nd):
    return lambda g, _nd=nd: (0,) * _nd


def _pick_bt(batch, seq_len, target_rows=128):
    """Largest divisor of `batch` with BT*T <= target rows.

    target_rows~128 suits the v5e MXU; raise to ~256 on v6e/v7x.  On v7x also
    keep at least 2 grid steps (grid axis is 'parallel') to feed both cores."""
    best = 1
    for d in range(1, batch + 1):
        if batch % d == 0 and d * seq_len <= target_rows:
            best = d
    return best


def fused_mae3d(packed, x_seq, enc_pe_seq, dec_pe_seq, bt):
    B, T, _ = x_seq.shape
    assert B % bt == 0
    G = B // bt
    N = bt * T
    x_f = x_seq.reshape(G, N, OUT_CHANS)
    e_f = enc_pe_seq.reshape(G, N, ENC_DIM)
    d_f = dec_pe_seq.reshape(G, N, DEC_DIM)

    weights = [packed['patch_w'], packed['e2d_w'], packed['head_w'], packed['misc'],
               packed['enc_qkv_w'], packed['enc_proj_w'], packed['enc_fc1_w'],
               packed['enc_fc2_w'], packed['enc_vec'],
               packed['dec_qkv_w'], packed['dec_proj_w'], packed['dec_fc1_w'],
               packed['dec_fc2_w'], packed['dec_vec']]

    data_specs = [
        pl.BlockSpec((1, N, OUT_CHANS), lambda g: (g, 0, 0)),
        pl.BlockSpec((1, N, ENC_DIM),   lambda g: (g, 0, 0)),
        pl.BlockSpec((1, N, DEC_DIM),   lambda g: (g, 0, 0)),
    ]
    weight_specs = [pl.BlockSpec(w.shape, _const_index_map(w.ndim)) for w in weights]

    sse = pl.pallas_call(
        mae3d_fused_kernel,
        grid=(G,),
        out_shape=jax.ShapeDtypeStruct((G, 8, 128), jnp.float32),
        in_specs=data_specs + weight_specs,
        out_specs=pl.BlockSpec((1, 8, 128), lambda g: (g, 0, 0)),
        compiler_params=pltpu.CompilerParams(dimension_semantics=("parallel",)),
    )(x_f, e_f, d_f, *weights)
    return sse                                 # (G, 8, 128); [g, 0, 0] is the SSE


# ================================ JAX glue =================================
def patchify_image(x, patch_size):
    # mirrors the torch patchify: final axis ordering is [ph, pw, pd, c]
    B, C, H, W, D = x.shape
    gh, gw, gd = H // patch_size[0], W // patch_size[1], D // patch_size[2]
    x = x.reshape(B, C, gh, patch_size[0], gw, patch_size[1], gd, patch_size[2])
    x = jnp.transpose(x, (0, 2, 4, 6, 3, 5, 7, 1))
    return x.reshape(B, gh * gw * gd,
                     patch_size[0] * patch_size[1] * patch_size[2] * C)


def build_3d_sincos_pos_embed(grid_size, embed_dim, temperature=10000.0):
    h, w, d = grid_size
    gh, gw, gd = jnp.meshgrid(jnp.arange(h, dtype=jnp.float32),
                              jnp.arange(w, dtype=jnp.float32),
                              jnp.arange(d, dtype=jnp.float32), indexing='ij')
    pos_dim = embed_dim // 6
    omega = jnp.arange(pos_dim, dtype=jnp.float32) / pos_dim
    omega = 1.0 / (temperature ** omega)
    out_h = gh.reshape(-1)[:, None] * omega[None, :]
    out_w = gw.reshape(-1)[:, None] * omega[None, :]
    out_d = gd.reshape(-1)[:, None] * omega[None, :]
    pe = jnp.concatenate([jnp.sin(out_h), jnp.cos(out_h),
                          jnp.sin(out_w), jnp.cos(out_w),
                          jnp.sin(out_d), jnp.cos(out_d)], axis=1)
    return pe[None, :, :]                      # (1, L, embed_dim)


def _dense_init(key, din, dout, std=0.02):
    w = jax.random.normal(key, (din, dout), jnp.float32) * std
    b = jnp.zeros((1, dout), jnp.float32)
    return w, b


def _block_init(key, dim):
    hidden = int(dim * MLP_RATIO)
    k = jax.random.split(key, 6)
    q_w, q_b       = _dense_init(k[0], dim, dim)
    k_w, k_b       = _dense_init(k[1], dim, dim)
    v_w, v_b       = _dense_init(k[2], dim, dim)
    proj_w, proj_b = _dense_init(k[3], dim, dim)
    fc1_w, fc1_b   = _dense_init(k[4], dim, hidden)
    fc2_w, fc2_b   = _dense_init(k[5], hidden, dim)
    ones, zeros = jnp.ones((1, dim), jnp.float32), jnp.zeros((1, dim), jnp.float32)
    return dict(n1_w=ones, n1_b=zeros, q_w=q_w, q_b=q_b, k_w=k_w, k_b=k_b,
                v_w=v_w, v_b=v_b, proj_w=proj_w, proj_b=proj_b,
                n2_w=ones, n2_b=zeros, fc1_w=fc1_w, fc1_b=fc1_b,
                fc2_w=fc2_w, fc2_b=fc2_b)


def init_params(key):
    ks = jax.random.split(key, 8 + ENC_DEPTH + DEC_DEPTH)
    # PatchEmbed3D: Conv3d(in_chans, ENC_DIM, kernel=stride=patch) on one patch
    # == linear on the [ph, pw, pd, c]-ordered flattened patch vector.
    conv_w = jax.random.normal(ks[0], (ENC_DIM, IN_CHANS) + PATCH_SIZE,
                               jnp.float32) * 0.02
    patch_embed_w = jnp.transpose(conv_w, (2, 3, 4, 1, 0)).reshape(OUT_CHANS, ENC_DIM)
    patch_embed_b = jnp.zeros((1, ENC_DIM), jnp.float32)
    cls_token  = jax.random.normal(ks[1], (1, ENC_DIM), jnp.float32) * 0.02
    mask_token = jax.random.normal(ks[2], (1, DEC_DIM), jnp.float32) * 0.02
    e2d_w, e2d_b   = _dense_init(ks[3], ENC_DIM, DEC_DIM)
    head_w, head_b = _dense_init(ks[4], DEC_DIM, OUT_CHANS)
    enc_blocks = [_block_init(ks[8 + i], ENC_DIM) for i in range(ENC_DEPTH)]
    dec_blocks = [_block_init(ks[8 + ENC_DEPTH + i], DEC_DIM) for i in range(DEC_DEPTH)]
    return dict(
        patch_embed_w=patch_embed_w, patch_embed_b=patch_embed_b,
        cls_token=cls_token, mask_token=mask_token,
        e2d_w=e2d_w, e2d_b=e2d_b, head_w=head_w, head_b=head_b,
        enc_norm_w=jnp.ones((1, ENC_DIM), jnp.float32),
        enc_norm_b=jnp.zeros((1, ENC_DIM), jnp.float32),
        dec_norm_w=jnp.ones((1, DEC_DIM), jnp.float32),
        dec_norm_b=jnp.zeros((1, DEC_DIM), jnp.float32),
        enc_pos_embed=build_3d_sincos_pos_embed(GRID_SIZE, ENC_DIM),
        dec_pos_embed=build_3d_sincos_pos_embed(GRID_SIZE, DEC_DIM),
        enc_blocks_list=enc_blocks, dec_blocks_list=dec_blocks,
    )


# ------------------------ host-side weight packing -------------------------
def _pack_blocks(blocks, dim):
    depth = len(blocks)
    dp = _dp(dim)
    hid = int(dim * MLP_RATIO)
    vw = max(3 * dp, hid)
    qkv_w  = jnp.zeros((depth, dim, 3 * dp), jnp.float32)
    proj_w = jnp.zeros((depth, dp, dim), jnp.float32)      # zero-padded rows >= dim
    fc1_w  = jnp.zeros((depth, dim, hid), jnp.float32)
    fc2_w  = jnp.zeros((depth, hid, dim), jnp.float32)
    vec    = jnp.zeros((depth, 8, vw), jnp.float32)
    for l, b in enumerate(blocks):
        qkv_w  = qkv_w.at[l, :, 0:dim].set(b['q_w'])
        qkv_w  = qkv_w.at[l, :, dp:dp + dim].set(b['k_w'])
        qkv_w  = qkv_w.at[l, :, 2 * dp:2 * dp + dim].set(b['v_w'])
        proj_w = proj_w.at[l, 0:dim, :].set(b['proj_w'])
        fc1_w  = fc1_w.at[l].set(b['fc1_w'])
        fc2_w  = fc2_w.at[l].set(b['fc2_w'])
        vec = vec.at[l, 0, 0:dim].set(b['n1_w'][0])
        vec = vec.at[l, 1, 0:dim].set(b['n1_b'][0])
        vec = vec.at[l, 2, 0:dim].set(b['proj_b'][0])
        vec = vec.at[l, 3, 0:dim].set(b['n2_w'][0])
        vec = vec.at[l, 4, 0:dim].set(b['n2_b'][0])
        vec = vec.at[l, 5, 0:dim].set(b['fc2_b'][0])
        vec = vec.at[l, 6, 0:dim].set(b['q_b'][0])
        vec = vec.at[l, 6, dp:dp + dim].set(b['k_b'][0])
        vec = vec.at[l, 6, 2 * dp:2 * dp + dim].set(b['v_b'][0])
        vec = vec.at[l, 7, 0:hid].set(b['fc1_b'][0])
    return dict(qkv_w=qkv_w, proj_w=proj_w, fc1_w=fc1_w, fc2_w=fc2_w, vec=vec)


def _pack_misc(params):
    misc = jnp.zeros((9, OUT_CHANS), jnp.float32)
    misc = misc.at[0, 0:ENC_DIM].set(params['patch_embed_b'][0])
    misc = misc.at[1, 0:ENC_DIM].set(params['cls_token'][0])
    misc = misc.at[2, 0:DEC_DIM].set(params['mask_token'][0])
    misc = misc.at[3, 0:ENC_DIM].set(params['enc_norm_w'][0])
    misc = misc.at[4, 0:ENC_DIM].set(params['enc_norm_b'][0])
    misc = misc.at[5, 0:DEC_DIM].set(params['e2d_b'][0])
    misc = misc.at[6, 0:DEC_DIM].set(params['dec_norm_w'][0])
    misc = misc.at[7, 0:DEC_DIM].set(params['dec_norm_b'][0])
    misc = misc.at[8, 0:OUT_CHANS].set(params['head_b'][0])
    return misc


def pack_params(params):
    enc = _pack_blocks(params['enc_blocks_list'], ENC_DIM)
    dec = _pack_blocks(params['dec_blocks_list'], DEC_DIM)
    return dict(
        patch_w=params['patch_embed_w'], e2d_w=params['e2d_w'],
        head_w=params['head_w'], misc=_pack_misc(params),
        enc_qkv_w=enc['qkv_w'], enc_proj_w=enc['proj_w'],
        enc_fc1_w=enc['fc1_w'], enc_fc2_w=enc['fc2_w'], enc_vec=enc['vec'],
        dec_qkv_w=dec['qkv_w'], dec_proj_w=dec['proj_w'],
        dec_fc1_w=dec['fc1_w'], dec_fc2_w=dec['fc2_w'], dec_vec=dec['vec'],
        enc_pos_embed=params['enc_pos_embed'],
        dec_pos_embed=params['dec_pos_embed'],
    )


# ---------------------------------- forward --------------------------------
def mae3d_forward(packed, x_img, shuffle_key):
    """MAE3D.forward(x, apply_mask=True, return_image=False) -> scalar MSE loss."""
    B = x_img.shape[0]
    L = NUM_PATCHES
    patches = patchify_image(x_img, PATCH_SIZE)                 # (B, L, OUT_CHANS)

    # batched random shuffle (torch.rand().argsort() equivalent, JAX RNG)
    rand = jax.random.uniform(shuffle_key, (B, L))
    shuffle_idx = jnp.argsort(rand, axis=1)
    shuffled = jnp.take_along_axis(patches, shuffle_idx[:, :, None], axis=1)

    enc_pe = jnp.broadcast_to(packed['enc_pos_embed'], (B, L, ENC_DIM))
    dec_pe = jnp.broadcast_to(packed['dec_pos_embed'], (B, L, DEC_DIM))
    shuf_enc_pe = jnp.take_along_axis(enc_pe, shuffle_idx[:, :, None], axis=1)
    shuf_dec_pe = jnp.take_along_axis(dec_pe, shuffle_idx[:, :, None], axis=1)

    # prepend a zero "cls slot" row so every sample is a fixed (SEQ_LEN, .) block
    def zrow(f):
        return jnp.zeros((B, 1, f), jnp.float32)
    x_seq      = jnp.concatenate([zrow(OUT_CHANS), shuffled],    axis=1)   # (B, 9, 144)
    enc_pe_seq = jnp.concatenate([zrow(ENC_DIM),   shuf_enc_pe], axis=1)   # (B, 9, 48)
    dec_pe_seq = jnp.concatenate([zrow(DEC_DIM),   shuf_dec_pe], axis=1)   # (B, 9, 24)

    bt = _pick_bt(B, SEQ_LEN)                                              # static
    sse = fused_mae3d(packed, x_seq, enc_pe_seq, dec_pe_seq, bt)           # (G, 8, 128)
    loss = jnp.sum(sse[:, 0, 0]) / float(B * MSK_LEN * OUT_CHANS)
    return loss


if __name__ == "__main__":
    key = jax.random.PRNGKey(0)
    pkey, xkey, skey = jax.random.split(key, 3)
    params = init_params(pkey)
    packed = pack_params(params)
    # layout: (B, C, H, W, D) = (2, 1, 12, 12, 8), PyTorch Conv3d-style channels-first.
    x = jax.random.normal(xkey, (2, IN_CHANS) + INPUT_SIZE, dtype=jnp.float32)
    loss = jax.jit(mae3d_forward)(packed, x, skey)
    loss = jax.block_until_ready(loss)
    assert loss.shape == () and bool(jnp.isfinite(loss))
    print("KERNEL_OK")
</pallas_src>

<mosaic_0001>
module attributes {stable_mosaic.version = 11 : i64} {
  func.func @mae3d_fused_kernel(%arg0: i32, %arg1: memref<1x18x144xf32, #tpu.memory_space<vmem>>, %arg2: memref<1x18x48xf32, #tpu.memory_space<vmem>>, %arg3: memref<1x18x24xf32, #tpu.memory_space<vmem>>, %arg4: memref<144x48xf32, #tpu.memory_space<vmem>>, %arg5: memref<48x24xf32, #tpu.memory_space<vmem>>, %arg6: memref<24x144xf32, #tpu.memory_space<vmem>>, %arg7: memref<9x144xf32, #tpu.memory_space<vmem>>, %arg8: memref<2x48x192xf32, #tpu.memory_space<vmem>>, %arg9: memref<2x64x48xf32, #tpu.memory_space<vmem>>, %arg10: memref<2x48x192xf32, #tpu.memory_space<vmem>>, %arg11: memref<2x192x48xf32, #tpu.memory_space<vmem>>, %arg12: memref<2x8x192xf32, #tpu.memory_space<vmem>>, %arg13: memref<2x24x96xf32, #tpu.memory_space<vmem>>, %arg14: memref<2x32x24xf32, #tpu.memory_space<vmem>>, %arg15: memref<2x24x96xf32, #tpu.memory_space<vmem>>, %arg16: memref<2x96x24xf32, #tpu.memory_space<vmem>>, %arg17: memref<2x8x96xf32, #tpu.memory_space<vmem>>, %arg18: memref<1x8x128xf32, #tpu.memory_space<vmem>>) attributes {dimension_semantics = [#tpu.dimension_semantics<parallel>], iteration_bounds = array<i64: 1>, scalar_prefetch = 0 : i64, scratch_operands = 0 : i64, tpu.core_type = #tpu.core_type<tc>, window_params = [{transform_indices = @transform_0, window_bounds = array<i64: 1, 18, 144>}, {transform_indices = @transform_1, window_bounds = array<i64: 1, 18, 48>}, {transform_indices = @transform_2, window_bounds = array<i64: 1, 18, 24>}, {pipeline_mode = #tpu.pipeline_mode<synchronous>, transform_indices = @transform_3, window_bounds = array<i64: 144, 48>}, {pipeline_mode = #tpu.pipeline_mode<synchronous>, transform_indices = @transform_4, window_bounds = array<i64: 48, 24>}, {pipeline_mode = #tpu.pipeline_mode<synchronous>, transform_indices = @transform_5, window_bounds = array<i64: 24, 144>}, {pipeline_mode = #tpu.pipeline_mode<synchronous>, transform_indices = @transform_6, window_bounds = array<i64: 9, 144>}, {pipeline_mode = #tpu.pipeline_mode<synchronous>, transform_indices = @transform_7, window_bounds = array<i64: 2, 48, 192>}, {pipeline_mode = #tpu.pipeline_mode<synchronous>, transform_indices = @transform_8, window_bounds = array<i64: 2, 64, 48>}, {pipeline_mode = #tpu.pipeline_mode<synchronous>, transform_indices = @transform_9, window_bounds = array<i64: 2, 48, 192>}, {pipeline_mode = #tpu.pipeline_mode<synchronous>, transform_indices = @transform_10, window_bounds = array<i64: 2, 192, 48>}, {pipeline_mode = #tpu.pipeline_mode<synchronous>, transform_indices = @transform_11, window_bounds = array<i64: 2, 8, 192>}, {pipeline_mode = #tpu.pipeline_mode<synchronous>, transform_indices = @transform_12, window_bounds = array<i64: 2, 24, 96>}, {pipeline_mode = #tpu.pipeline_mode<synchronous>, transform_indices = @transform_13, window_bounds = array<i64: 2, 32, 24>}, {pipeline_mode = #tpu.pipeline_mode<synchronous>, transform_indices = @transform_14, window_bounds = array<i64: 2, 24, 96>}, {pipeline_mode = #tpu.pipeline_mode<synchronous>, transform_indices = @transform_15, window_bounds = array<i64: 2, 96, 24>}, {pipeline_mode = #tpu.pipeline_mode<synchronous>, transform_indices = @transform_16, window_bounds = array<i64: 2, 8, 96>}, {transform_indices = @transform_17, window_bounds = array<i64: 1, 8, 128>}]} {
    %c0 = arith.constant 0 : index
    %c0_0 = arith.constant 0 : index
    %c0_1 = arith.constant 0 : index
    %0 = vector.load %arg1[%c0, %c0_0, %c0_1] : memref<1x18x144xf32, #tpu.memory_space<vmem>>, vector<1x18x144xf32>
    %1 = vector.shape_cast %0 : vector<1x18x144xf32> to vector<18x144xf32>
    %c0_2 = arith.constant 0 : index
    %c0_3 = arith.constant 0 : index
    %c0_4 = arith.constant 0 : index
    %2 = vector.load %arg2[%c0_2, %c0_3, %c0_4] : memref<1x18x48xf32, #tpu.memory_space<vmem>>, vector<1x18x48xf32>
    %3 = vector.shape_cast %2 : vector<1x18x48xf32> to vector<18x48xf32>
    %c0_5 = arith.constant 0 : index
    %c0_6 = arith.constant 0 : index
    %c0_7 = arith.constant 0 : index
    %4 = vector.load %arg3[%c0_5, %c0_6, %c0_7] : memref<1x18x24xf32, #tpu.memory_space<vmem>>, vector<1x18x24xf32>
    %5 = vector.shape_cast %4 : vector<1x18x24xf32> to vector<18x24xf32>
    %c0_8 = arith.constant 0 : index
    %c0_9 = arith.constant 0 : index
    %6 = vector.load %arg7[%c0_8, %c0_9] : memref<9x144xf32, #tpu.memory_space<vmem>>, vector<9x144xf32>
    %7 = vector.extract_strided_slice %6 {offsets = [0, 0], sizes = [1, 48], strides = [1, 1]} : vector<9x144xf32> to vector<1x48xf32>
    %8 = vector.extract_strided_slice %6 {offsets = [1, 0], sizes = [1, 48], strides = [1, 1]} : vector<9x144xf32> to vector<1x48xf32>
    %9 = vector.extract_strided_slice %6 {offsets = [2, 0], sizes = [1, 24], strides = [1, 1]} : vector<9x144xf32> to vector<1x24xf32>
    %10 = vector.extract_strided_slice %6 {offsets = [3, 0], sizes = [1, 48], strides = [1, 1]} : vector<9x144xf32> to vector<1x48xf32>
    %11 = vector.extract_strided_slice %6 {offsets = [4, 0], sizes = [1, 48], strides = [1, 1]} : vector<9x144xf32> to vector<1x48xf32>
    %12 = vector.extract_strided_slice %6 {offsets = [5, 0], sizes = [1, 24], strides = [1, 1]} : vector<9x144xf32> to vector<1x24xf32>
    %13 = vector.extract_strided_slice %6 {offsets = [6, 0], sizes = [1, 24], strides = [1, 1]} : vector<9x144xf32> to vector<1x24xf32>
    %14 = vector.extract_strided_slice %6 {offsets = [7, 0], sizes = [1, 24], strides = [1, 1]} : vector<9x144xf32> to vector<1x24xf32>
    %15 = vector.extract_strided_slice %6 {offsets = [8, 0], sizes = [1, 144], strides = [1, 1]} : vector<9x144xf32> to vector<1x144xf32>
    %16 = tpu.iota {dimensions = array<i32: 0>} : vector<18x1xi32>
    %17 = arith.sitofp %16 : vector<18x1xi32> to vector<18x1xf32>
    %18 = arith.sitofp %16 : vector<18x1xi32> to vector<18x1xf32>
    %cst = arith.constant 5.000000e-01 : f32
    %19 = vector.broadcast %cst : f32 to vector<18x1xf32>
    %20 = arith.addf %18, %19 : vector<18x1xf32>
    %cst_10 = arith.constant 0.111111112 : f32
    %21 = vector.broadcast %cst_10 : f32 to vector<18x1xf32>
    %22 = arith.mulf %20, %21 : vector<18x1xf32>
    %23 = math.floor %22 : vector<18x1xf32>
    %cst_11 = arith.constant 9.000000e+00 : f32
    %24 = vector.broadcast %cst_11 : f32 to vector<18x1xf32>
    %25 = arith.mulf %23, %24 : vector<18x1xf32>
    %26 = arith.subf %17, %25 : vector<18x1xf32>
    %cst_12 = arith.constant 0.000000e+00 : f32
    %27 = vector.broadcast %cst_12 : f32 to vector<18x1xf32>
    %28 = arith.cmpf oeq, %26, %27 : vector<18x1xf32>
    %cst_13 = arith.constant 3.000000e+00 : f32
    %29 = vector.broadcast %cst_13 : f32 to vector<18x1xf32>
    %30 = arith.cmpf olt, %26, %29 : vector<18x1xf32>
    %cst_14 = arith.constant 3.000000e+00 : f32
    %31 = vector.broadcast %cst_14 : f32 to vector<18x1xf32>
    %32 = arith.cmpf oge, %26, %31 : vector<18x1xf32>
    %33 = tpu.iota {dimensions = array<i32: 0>} : vector<18x18xi32>
    %34 = tpu.iota {dimensions = array<i32: 1>} : vector<18x18xi32>
    %35 = arith.sitofp %33 : vector<18x18xi32> to vector<18x18xf32>
    %cst_15 = arith.constant 5.000000e-01 : f32
    %36 = vector.broadcast %cst_15 : f32 to vector<18x18xf32>
    %37 = arith.addf %35, %36 : vector<18x18xf32>
    %cst_16 = arith.constant 0.111111112 : f32
    %38 = vector.broadcast %cst_16 : f32 to vector<18x18xf32>
    %39 = arith.mulf %37, %38 : vector<18x18xf32>
    %40 = math.floor %39 : vector<18x18xf32>
    %41 = arith.sitofp %34 : vector<18x18xi32> to vector<18x18xf32>
    %cst_17 = arith.constant 5.000000e-01 : f32
    %42 = vector.broadcast %cst_17 : f32 to vector<18x18xf32>
    %43 = arith.addf %41, %42 : vector<18x18xf32>
    %cst_18 = arith.constant 0.111111112 : f32
    %44 = vector.broadcast %cst_18 : f32 to vector<18x18xf32>
    %45 = arith.mulf %43, %44 : vector<18x18xf32>
    %46 = math.floor %45 : vector<18x18xf32>
    %47 = arith.sitofp %34 : vector<18x18xi32> to vector<18x18xf32>
    %cst_19 = arith.constant 9.000000e+00 : f32
    %48 = vector.broadcast %cst_19 : f32 to vector<18x18xf32>
    %49 = arith.mulf %46, %48 : vector<18x18xf32>
    %50 = arith.subf %47, %49 : vector<18x18xf32>
    %51 = arith.cmpf oeq, %40, %46 : vector<18x18xf32>
    %cst_20 = arith.constant 3.000000e+00 : f32
    %52 = vector.broadcast %cst_20 : f32 to vector<18x18xf32>
    %53 = arith.cmpf olt, %50, %52 : vector<18x18xf32>
    %54 = arith.andi %51, %53 : vector<18x18xi1>
    %cst_21 = arith.constant 0.000000e+00 : f32
    %cst_22 = arith.constant -1.000000e+30 : f32
    %55 = vector.broadcast %cst_21 : f32 to vector<18x18xf32>
    %56 = vector.broadcast %cst_22 : f32 to vector<18x18xf32>
    %57 = arith.select %54, %55, %56 : vector<18x18xi1>, vector<18x18xf32>
    %cst_23 = arith.constant 0.000000e+00 : f32
    %cst_24 = arith.constant -1.000000e+30 : f32
    %58 = vector.broadcast %cst_23 : f32 to vector<18x18xf32>
    %59 = vector.broadcast %cst_24 : f32 to vector<18x18xf32>
    %60 = arith.select %51, %58, %59 : vector<18x18xi1>, vector<18x18xf32>
    %61 = tpu.iota {dimensions = array<i32: 1>} : vector<1x64xi32>
    %c0_i32 = arith.constant 0 : i32
    %62 = vector.broadcast %c0_i32 : i32 to vector<1x64xi32>
    %63 = arith.cmpi sge, %61, %62 : vector<1x64xi32>
    %c12_i32 = arith.constant 12 : i32
    %64 = vector.broadcast %c12_i32 : i32 to vector<1x64xi32>
    %65 = arith.cmpi slt, %61, %64 : vector<1x64xi32>
    %66 = arith.andi %63, %65 : vector<1x64xi1>
    %67 = arith.extui %66 : vector<1x64xi1> to vector<1x64xi32>
    %68 = arith.sitofp %67 : vector<1x64xi32> to vector<1x64xf32>
    %c12_i32_25 = arith.constant 12 : i32
    %69 = vector.broadcast %c12_i32_25 : i32 to vector<1x64xi32>
    %70 = arith.cmpi sge, %61, %69 : vector<1x64xi32>
    %c24_i32 = arith.constant 24 : i32
    %71 = vector.broadcast %c24_i32 : i32 to vector<1x64xi32>
    %72 = arith.cmpi slt, %61, %71 : vector<1x64xi32>
    %73 = arith.andi %70, %72 : vector<1x64xi1>
    %74 = arith.extui %73 : vector<1x64xi1> to vector<1x64xi32>
    %75 = arith.sitofp %74 : vector<1x64xi32> to vector<1x64xf32>
    %c24_i32_26 = arith.constant 24 : i32
    %76 = vector.broadcast %c24_i32_26 : i32 to vector<1x64xi32>
    %77 = arith.cmpi sge, %61, %76 : vector<1x64xi32>
    %c36_i32 = arith.constant 36 : i32
    %78 = vector.broadcast %c36_i32 : i32 to vector<1x64xi32>
    %79 = arith.cmpi slt, %61, %78 : vector<1x64xi32>
    %80 = arith.andi %77, %79 : vector<1x64xi1>
    %81 = arith.extui %80 : vector<1x64xi1> to vector<1x64xi32>
    %82 = arith.sitofp %81 : vector<1x64xi32> to vector<1x64xf32>
    %c36_i32_27 = arith.constant 36 : i32
    %83 = vector.broadcast %c36_i32_27 : i32 to vector<1x64xi32>
    %84 = arith.cmpi sge, %61, %83 : vector<1x64xi32>
    %c48_i32 = arith.constant 48 : i32
    %85 = vector.broadcast %c48_i32 : i32 to vector<1x64xi32>
    %86 = arith.cmpi slt, %61, %85 : vector<1x64xi32>
    %87 = arith.andi %84, %86 : vector<1x64xi1>
    %88 = arith.extui %87 : vector<1x64xi1> to vector<1x64xi32>
    %89 = arith.sitofp %88 : vector<1x64xi32> to vector<1x64xf32>
    %90 = tpu.iota {dimensions = array<i32: 1>} : vector<1x32xi32>
    %c0_i32_28 = arith.constant 0 : i32
    %91 = vector.broadcast %c0_i32_28 : i32 to vector<1x32xi32>
    %92 = arith.cmpi sge, %90, %91 : vector<1x32xi32>
    %c6_i32 = arith.constant 6 : i32
    %93 = vector.broadcast %c6_i32 : i32 to vector<1x32xi32>
    %94 = arith.cmpi slt, %90, %93 : vector<1x32xi32>
    %95 = arith.andi %92, %94 : vector<1x32xi1>
    %96 = arith.extui %95 : vector<1x32xi1> to vector<1x32xi32>
    %97 = arith.sitofp %96 : vector<1x32xi32> to vector<1x32xf32>
    %c6_i32_29 = arith.constant 6 : i32
    %98 = vector.broadcast %c6_i32_29 : i32 to vector<1x32xi32>
    %99 = arith.cmpi sge, %90, %98 : vector<1x32xi32>
    %c12_i32_30 = arith.constant 12 : i32
    %100 = vector.broadcast %c12_i32_30 : i32 to vector<1x32xi32>
    %101 = arith.cmpi slt, %90, %100 : vector<1x32xi32>
    %102 = arith.andi %99, %101 : vector<1x32xi1>
    %103 = arith.extui %102 : vector<1x32xi1> to vector<1x32xi32>
    %104 = arith.sitofp %103 : vector<1x32xi32> to vector<1x32xf32>
    %c12_i32_31 = arith.constant 12 : i32
    %105 = vector.broadcast %c12_i32_31 : i32 to vector<1x32xi32>
    %106 = arith.cmpi sge, %90, %105 : vector<1x32xi32>
    %c18_i32 = arith.constant 18 : i32
    %107 = vector.broadcast %c18_i32 : i32 to vector<1x32xi32>
    %108 = arith.cmpi slt, %90, %107 : vector<1x32xi32>
    %109 = arith.andi %106, %108 : vector<1x32xi1>
    %110 = arith.extui %109 : vector<1x32xi1> to vector<1x32xi32>
    %111 = arith.sitofp %110 : vector<1x32xi32> to vector<1x32xf32>
    %c18_i32_32 = arith.constant 18 : i32
    %112 = vector.broadcast %c18_i32_32 : i32 to vector<1x32xi32>
    %113 = arith.cmpi sge, %90, %112 : vector<1x32xi32>
    %c24_i32_33 = arith.constant 24 : i32
    %114 = vector.broadcast %c24_i32_33 : i32 to vector<1x32xi32>
    %115 = arith.cmpi slt, %90, %114 : vector<1x32xi32>
    %116 = arith.andi %113, %115 : vector<1x32xi1>
    %117 = arith.extui %116 : vector<1x32xi1> to vector<1x32xi32>
    %118 = arith.sitofp %117 : vector<1x32xi32> to vector<1x32xf32>
    %c0_34 = arith.constant 0 : index
    %c0_35 = arith.constant 0 : index
    %119 = vector.load %arg4[%c0_34, %c0_35] : memref<144x48xf32, #tpu.memory_space<vmem>>, vector<144x48xf32>
    %cst_36 = arith.constant dense<0.000000e+00> : vector<18x48xf32>
    %120 = tpu.matmul %1, %119, %cst_36 {dimension_numbers = #tpu.dot_dimension_numbers<[1], [0], [0], [1], [0, 0, 1, 1], [], []>} : vector<18x144xf32>, vector<144x48xf32>, vector<18x48xf32> -> vector<18x48xf32>
    %121 = vector.broadcast %7 : vector<1x48xf32> to vector<18x48xf32>
    %122 = arith.addf %120, %121 : vector<18x48xf32>
    %123 = vector.shape_cast %28 : vector<18x1xi1> to vector<18x1xi1>
    %124 = vector.broadcast %123 : vector<18x1xi1> to vector<18x48xi1>
    %125 = vector.shape_cast %8 : vector<1x48xf32> to vector<1x48xf32>
    %126 = vector.broadcast %125 : vector<1x48xf32> to vector<18x48xf32>
    %127 = arith.select %124, %126, %122 : vector<18x48xi1>, vector<18x48xf32>
    %128 = arith.addf %127, %3 : vector<18x48xf32>
    %c0_37 = arith.constant 0 : index
    %c0_38 = arith.constant 0 : index
    %c0_39 = arith.constant 0 : index
    %129 = vector.load %arg12[%c0_37, %c0_38, %c0_39] : memref<2x8x192xf32, #tpu.memory_space<vmem>>, vector<1x8x192xf32>
    %130 = vector.shape_cast %129 : vector<1x8x192xf32> to vector<8x192xf32>
    %131 = vector.extract_strided_slice %130 {offsets = [0, 0], sizes = [1, 48], strides = [1, 1]} : vector<8x192xf32> to vector<1x48xf32>
    %132 = vector.extract_strided_slice %130 {offsets = [1, 0], sizes = [1, 48], strides = [1, 1]} : vector<8x192xf32> to vector<1x48xf32>
    %133 = vector.extract_strided_slice %130 {offsets = [2, 0], sizes = [1, 48], strides = [1, 1]} : vector<8x192xf32> to vector<1x48xf32>
    %134 = vector.extract_strided_slice %130 {offsets = [3, 0], sizes = [1, 48], strides = [1, 1]} : vector<8x192xf32> to vector<1x48xf32>
    %135 = vector.extract_strided_slice %130 {offsets = [4, 0], sizes = [1, 48], strides = [1, 1]} : vector<8x192xf32> to vector<1x48xf32>
    %136 = vector.extract_strided_slice %130 {offsets = [5, 0], sizes = [1, 48], strides = [1, 1]} : vector<8x192xf32> to vector<1x48xf32>
    %137 = vector.extract_strided_slice %130 {offsets = [6, 0], sizes = [1, 192], strides = [1, 1]} : vector<8x192xf32> to vector<1x192xf32>
    %138 = vector.extract_strided_slice %130 {offsets = [7, 0], sizes = [1, 192], strides = [1, 1]} : vector<8x192xf32> to vector<1x192xf32>
    %c0_40 = arith.constant 0 : index
    %c0_41 = arith.constant 0 : index
    %c0_42 = arith.constant 0 : index
    %139 = vector.load %arg8[%c0_40, %c0_41, %c0_42] : memref<2x48x192xf32, #tpu.memory_space<vmem>>, vector<1x48x192xf32>
    %140 = vector.shape_cast %139 : vector<1x48x192xf32> to vector<48x192xf32>
    %c0_43 = arith.constant 0 : index
    %c0_44 = arith.constant 0 : index
    %c0_45 = arith.constant 0 : index
    %141 = vector.load %arg9[%c0_43, %c0_44, %c0_45] : memref<2x64x48xf32, #tpu.memory_space<vmem>>, vector<1x64x48xf32>
    %142 = vector.shape_cast %141 : vector<1x64x48xf32> to vector<64x48xf32>
    %c0_46 = arith.constant 0 : index
    %c0_47 = arith.constant 0 : index
    %c0_48 = arith.constant 0 : index
    %143 = vector.load %arg10[%c0_46, %c0_47, %c0_48] : memref<2x48x192xf32, #tpu.memory_space<vmem>>, vector<1x48x192xf32>
    %144 = vector.shape_cast %143 : vector<1x48x192xf32> to vector<48x192xf32>
    %c0_49 = arith.constant 0 : index
    %c0_50 = arith.constant 0 : index
    %c0_51 = arith.constant 0 : index
    %145 = vector.load %arg11[%c0_49, %c0_50, %c0_51] : memref<2x192x48xf32, #tpu.memory_space<vmem>>, vector<1x192x48xf32>
    %146 = vector.shape_cast %145 : vector<1x192x48xf32> to vector<192x48xf32>
    %cst_52 = arith.constant dense<0.000000e+00> : vector<18xf32>
    %147 = vector.multi_reduction <add>, %128, %cst_52 [1] : vector<18x48xf32> to vector<18xf32>
    %148 = vector.shape_cast %147 : vector<18xf32> to vector<18x1xf32>
    %cst_53 = arith.constant 4.800000e+01 : f32
    %149 = vector.broadcast %cst_53 : f32 to vector<18x1xf32>
    %150 = arith.divf %148, %149 : vector<18x1xf32>
    %151 = vector.broadcast %150 : vector<18x1xf32> to vector<18x48xf32>
    %152 = arith.subf %128, %151 : vector<18x48xf32>
    %153 = arith.mulf %152, %152 : vector<18x48xf32>
    %cst_54 = arith.constant dense<0.000000e+00> : vector<18xf32>
    %154 = vector.multi_reduction <add>, %153, %cst_54 [1] : vector<18x48xf32> to vector<18xf32>
    %155 = vector.shape_cast %154 : vector<18xf32> to vector<18x1xf32>
    %cst_55 = arith.constant 4.800000e+01 : f32
    %156 = vector.broadcast %cst_55 : f32 to vector<18x1xf32>
    %157 = arith.divf %155, %156 : vector<18x1xf32>
    %158 = vector.broadcast %150 : vector<18x1xf32> to vector<18x48xf32>
    %159 = arith.subf %128, %158 : vector<18x48xf32>
    %cst_56 = arith.constant 9.99999997E-7 : f32
    %160 = vector.broadcast %cst_56 : f32 to vector<18x1xf32>
    %161 = arith.addf %157, %160 : vector<18x1xf32>
    %162 = math.rsqrt %161 : vector<18x1xf32>
    %163 = vector.broadcast %162 : vector<18x1xf32> to vector<18x48xf32>
    %164 = arith.mulf %159, %163 : vector<18x48xf32>
    %165 = vector.broadcast %131 : vector<1x48xf32> to vector<18x48xf32>
    %166 = arith.mulf %164, %165 : vector<18x48xf32>
    %167 = vector.broadcast %132 : vector<1x48xf32> to vector<18x48xf32>
    %168 = arith.addf %166, %167 : vector<18x48xf32>
    %cst_57 = arith.constant dense<0.000000e+00> : vector<18x192xf32>
    %169 = tpu.matmul %168, %140, %cst_57 {dimension_numbers = #tpu.dot_dimension_numbers<[1], [0], [0], [1], [0, 0, 1, 1], [], []>} : vector<18x48xf32>, vector<48x192xf32>, vector<18x192xf32> -> vector<18x192xf32>
    %170 = vector.broadcast %137 : vector<1x192xf32> to vector<18x192xf32>
    %171 = arith.addf %169, %170 : vector<18x192xf32>
    %172 = vector.extract_strided_slice %171 {offsets = [0, 0], sizes = [18, 64], strides = [1, 1]} : vector<18x192xf32> to vector<18x64xf32>
    %cst_58 = arith.constant 0.288675129 : f32
    %173 = vector.broadcast %cst_58 : f32 to vector<18x64xf32>
    %174 = arith.mulf %172, %173 : vector<18x64xf32>
    %175 = vector.extract_strided_slice %171 {offsets = [0, 64], sizes = [18, 64], strides = [1, 1]} : vector<18x192xf32> to vector<18x64xf32>
    %176 = vector.extract_strided_slice %171 {offsets = [0, 128], sizes = [18, 64], strides = [1, 1]} : vector<18x192xf32> to vector<18x64xf32>
    %cst_59 = arith.constant 0.000000e+00 : f32
    %177 = vector.broadcast %cst_59 : f32 to vector<18x64xf32>
    %178 = vector.broadcast %68 : vector<1x64xf32> to vector<18x64xf32>
    %179 = arith.mulf %174, %178 : vector<18x64xf32>
    %cst_60 = arith.constant dense<0.000000e+00> : vector<18x18xf32>
    %180 = tpu.matmul %179, %175, %cst_60 {dimension_numbers = #tpu.dot_dimension_numbers<[1], [1], [0], [0], [0, 0, 1, 0], [], []>} : vector<18x64xf32>, vector<18x64xf32>, vector<18x18xf32> -> vector<18x18xf32>
    %181 = arith.addf %180, %57 : vector<18x18xf32>
    %cst_61 = arith.constant dense<0xFF800000> : vector<18xf32>
    %182 = vector.multi_reduction <maximumf>, %181, %cst_61 [1] : vector<18x18xf32> to vector<18xf32>
    %183 = vector.shape_cast %182 : vector<18xf32> to vector<18x1xf32>
    %184 = vector.broadcast %183 : vector<18x1xf32> to vector<18x18xf32>
    %185 = arith.subf %181, %184 : vector<18x18xf32>
    %186 = math.exp %185 : vector<18x18xf32>
    %cst_62 = arith.constant dense<0.000000e+00> : vector<18xf32>
    %187 = vector.multi_reduction <add>, %186, %cst_62 [1] : vector<18x18xf32> to vector<18xf32>
    %188 = vector.shape_cast %187 : vector<18xf32> to vector<18x1xf32>
    %189 = tpu.reciprocal %188 {approx = true} : vector<18x1xf32> -> vector<18x1xf32>
    %190 = vector.broadcast %189 : vector<18x1xf32> to vector<18x18xf32>
    %191 = arith.mulf %186, %190 : vector<18x18xf32>
    %192 = vector.broadcast %68 : vector<1x64xf32> to vector<18x64xf32>
    %193 = arith.mulf %176, %192 : vector<18x64xf32>
    %cst_63 = arith.constant dense<0.000000e+00> : vector<18x64xf32>
    %194 = tpu.matmul %191, %193, %cst_63 {dimension_numbers = #tpu.dot_dimension_numbers<[1], [0], [0], [1], [0, 0, 1, 1], [], []>} : vector<18x18xf32>, vector<18x64xf32>, vector<18x64xf32> -> vector<18x64xf32>
    %195 = arith.addf %177, %194 : vector<18x64xf32>
    %196 = vector.broadcast %75 : vector<1x64xf32> to vector<18x64xf32>
    %197 = arith.mulf %174, %196 : vector<18x64xf32>
    %cst_64 = arith.constant dense<0.000000e+00> : vector<18x18xf32>
    %198 = tpu.matmul %197, %175, %cst_64 {dimension_numbers = #tpu.dot_dimension_numbers<[1], [1], [0], [0], [0, 0, 1, 0], [], []>} : vector<18x64xf32>, vector<18x64xf32>, vector<18x18xf32> -> vector<18x18xf32>
    %199 = arith.addf %198, %57 : vector<18x18xf32>
    %cst_65 = arith.constant dense<0xFF800000> : vector<18xf32>
    %200 = vector.multi_reduction <maximumf>, %199, %cst_65 [1] : vector<18x18xf32> to vector<18xf32>
    %201 = vector.shape_cast %200 : vector<18xf32> to vector<18x1xf32>
    %202 = vector.broadcast %201 : vector<18x1xf32> to vector<18x18xf32>
    %203 = arith.subf %199, %202 : vector<18x18xf32>
    %204 = math.exp %203 : vector<18x18xf32>
    %cst_66 = arith.constant dense<0.000000e+00> : vector<18xf32>
    %205 = vector.multi_reduction <add>, %204, %cst_66 [1] : vector<18x18xf32> to vector<18xf32>
    %206 = vector.shape_cast %205 : vector<18xf32> to vector<18x1xf32>
    %207 = tpu.reciprocal %206 {approx = true} : vector<18x1xf32> -> vector<18x1xf32>
    %208 = vector.broadcast %207 : vector<18x1xf32> to vector<18x18xf32>
    %209 = arith.mulf %204, %208 : vector<18x18xf32>
    %210 = vector.broadcast %75 : vector<1x64xf32> to vector<18x64xf32>
    %211 = arith.mulf %176, %210 : vector<18x64xf32>
    %cst_67 = arith.constant dense<0.000000e+00> : vector<18x64xf32>
    %212 = tpu.matmul %209, %211, %cst_67 {dimension_numbers = #tpu.dot_dimension_numbers<[1], [0], [0], [1], [0, 0, 1, 1], [], []>} : vector<18x18xf32>, vector<18x64xf32>, vector<18x64xf32> -> vector<18x64xf32>
    %213 = arith.addf %195, %212 : vector<18x64xf32>
    %214 = vector.broadcast %82 : vector<1x64xf32> to vector<18x64xf32>
    %215 = arith.mulf %174, %214 : vector<18x64xf32>
    %cst_68 = arith.constant dense<0.000000e+00> : vector<18x18xf32>
    %216 = tpu.matmul %215, %175, %cst_68 {dimension_numbers = #tpu.dot_dimension_numbers<[1], [1], [0], [0], [0, 0, 1, 0], [], []>} : vector<18x64xf32>, vector<18x64xf32>, vector<18x18xf32> -> vector<18x18xf32>
    %217 = arith.addf %216, %57 : vector<18x18xf32>
    %cst_69 = arith.constant dense<0xFF800000> : vector<18xf32>
    %218 = vector.multi_reduction <maximumf>, %217, %cst_69 [1] : vector<18x18xf32> to vector<18xf32>
    %219 = vector.shape_cast %218 : vector<18xf32> to vector<18x1xf32>
    %220 = vector.broadcast %219 : vector<18x1xf32> to vector<18x18xf32>
    %221 = arith.subf %217, %220 : vector<18x18xf32>
    %222 = math.exp %221 : vector<18x18xf32>
    %cst_70 = arith.constant dense<0.000000e+00> : vector<18xf32>
    %223 = vector.multi_reduction <add>, %222, %cst_70 [1] : vector<18x18xf32> to vector<18xf32>
    %224 = vector.shape_cast %223 : vector<18xf32> to vector<18x1xf32>
    %225 = tpu.reciprocal %224 {approx = true} : vector<18x1xf32> -> vector<18x1xf32>
    %226 = vector.broadcast %225 : vector<18x1xf32> to vector<18x18xf32>
    %227 = arith.mulf %222, %226 : vector<18x18xf32>
    %228 = vector.broadcast %82 : vector<1x64xf32> to vector<18x64xf32>
    %229 = arith.mulf %176, %228 : vector<18x64xf32>
    %cst_71 = arith.constant dense<0.000000e+00> : vector<18x64xf32>
    %230 = tpu.matmul %227, %229, %cst_71 {dimension_numbers = #tpu.dot_dimension_numbers<[1], [0], [0], [1], [0, 0, 1, 1], [], []>} : vector<18x18xf32>, vector<18x64xf32>, vector<18x64xf32> -> vector<18x64xf32>
    %231 = arith.addf %213, %230 : vector<18x64xf32>
    %232 = vector.broadcast %89 : vector<1x64xf32> to vector<18x64xf32>
    %233 = arith.mulf %174, %232 : vector<18x64xf32>
    %cst_72 = arith.constant dense<0.000000e+00> : vector<18x18xf32>
    %234 = tpu.matmul %233, %175, %cst_72 {dimension_numbers = #tpu.dot_dimension_numbers<[1], [1], [0], [0], [0, 0, 1, 0], [], []>} : vector<18x64xf32>, vector<18x64xf32>, vector<18x18xf32> -> vector<18x18xf32>
    %235 = arith.addf %234, %57 : vector<18x18xf32>
    %cst_73 = arith.constant dense<0xFF800000> : vector<18xf32>
    %236 = vector.multi_reduction <maximumf>, %235, %cst_73 [1] : vector<18x18xf32> to vector<18xf32>
    %237 = vector.shape_cast %236 : vector<18xf32> to vector<18x1xf32>
    %238 = vector.broadcast %237 : vector<18x1xf32> to vector<18x18xf32>
    %239 = arith.subf %235, %238 : vector<18x18xf32>
    %240 = math.exp %239 : vector<18x18xf32>
    %cst_74 = arith.constant dense<0.000000e+00> : vector<18xf32>
    %241 = vector.multi_reduction <add>, %240, %cst_74 [1] : vector<18x18xf32> to vector<18xf32>
    %242 = vector.shape_cast %241 : vector<18xf32> to vector<18x1xf32>
    %243 = tpu.reciprocal %242 {approx = true} : vector<18x1xf32> -> vector<18x1xf32>
    %244 = vector.broadcast %243 : vector<18x1xf32> to vector<18x18xf32>
    %245 = arith.mulf %240, %244 : vector<18x18xf32>
    %246 = vector.broadcast %89 : vector<1x64xf32> to vector<18x64xf32>
    %247 = arith.mulf %176, %246 : vector<18x64xf32>
    %cst_75 = arith.constant dense<0.000000e+00> : vector<18x64xf32>
    %248 = tpu.matmul %245, %247, %cst_75 {dimension_numbers = #tpu.dot_dimension_numbers<[1], [0], [0], [1], [0, 0, 1, 1], [], []>} : vector<18x18xf32>, vector<18x64xf32>, vector<18x64xf32> -> vector<18x64xf32>
    %249 = arith.addf %231, %248 : vector<18x64xf32>
    %cst_76 = arith.constant dense<0.000000e+00> : vector<18x48xf32>
    %250 = tpu.matmul %249, %142, %cst_76 {dimension_numbers = #tpu.dot_dimension_numbers<[1], [0], [0], [1], [0, 0, 1, 1], [], []>} : vector<18x64xf32>, vector<64x48xf32>, vector<18x48xf32> -> vector<18x48xf32>
    %251 = arith.addf %128, %250 : vector<18x48xf32>
    %252 = vector.broadcast %133 : vector<1x48xf32> to vector<18x48xf32>
    %253 = arith.addf %251, %252 : vector<18x48xf32>
    %cst_77 = arith.constant dense<0.000000e+00> : vector<18xf32>
    %254 = vector.multi_reduction <add>, %253, %cst_77 [1] : vector<18x48xf32> to vector<18xf32>
    %255 = vector.shape_cast %254 : vector<18xf32> to vector<18x1xf32>
    %cst_78 = arith.constant 4.800000e+01 : f32
    %256 = vector.broadcast %cst_78 : f32 to vector<18x1xf32>
    %257 = arith.divf %255, %256 : vector<18x1xf32>
    %258 = vector.broadcast %257 : vector<18x1xf32> to vector<18x48xf32>
    %259 = arith.subf %253, %258 : vector<18x48xf32>
    %260 = arith.mulf %259, %259 : vector<18x48xf32>
    %cst_79 = arith.constant dense<0.000000e+00> : vector<18xf32>
    %261 = vector.multi_reduction <add>, %260, %cst_79 [1] : vector<18x48xf32> to vector<18xf32>
    %262 = vector.shape_cast %261 : vector<18xf32> to vector<18x1xf32>
    %cst_80 = arith.constant 4.800000e+01 : f32
    %263 = vector.broadcast %cst_80 : f32 to vector<18x1xf32>
    %264 = arith.divf %262, %263 : vector<18x1xf32>
    %265 = vector.broadcast %257 : vector<18x1xf32> to vector<18x48xf32>
    %266 = arith.subf %253, %265 : vector<18x48xf32>
    %cst_81 = arith.constant 9.99999997E-7 : f32
    %267 = vector.broadcast %cst_81 : f32 to vector<18x1xf32>
    %268 = arith.addf %264, %267 : vector<18x1xf32>
    %269 = math.rsqrt %268 : vector<18x1xf32>
    %270 = vector.broadcast %269 : vector<18x1xf32> to vector<18x48xf32>
    %271 = arith.mulf %266, %270 : vector<18x48xf32>
    %272 = vector.broadcast %134 : vector<1x48xf32> to vector<18x48xf32>
    %273 = arith.mulf %271, %272 : vector<18x48xf32>
    %274 = vector.broadcast %135 : vector<1x48xf32> to vector<18x48xf32>
    %275 = arith.addf %273, %274 : vector<18x48xf32>
    %cst_82 = arith.constant dense<0.000000e+00> : vector<18x192xf32>
    %276 = tpu.matmul %275, %144, %cst_82 {dimension_numbers = #tpu.dot_dimension_numbers<[1], [0], [0], [1], [0, 0, 1, 1], [], []>} : vector<18x48xf32>, vector<48x192xf32>, vector<18x192xf32> -> vector<18x192xf32>
    %277 = vector.broadcast %138 : vector<1x192xf32> to vector<18x192xf32>
    %278 = arith.addf %276, %277 : vector<18x192xf32>
    %cst_83 = arith.constant 5.000000e-01 : f32
    %279 = vector.broadcast %cst_83 : f32 to vector<18x192xf32>
    %280 = arith.mulf %279, %278 : vector<18x192xf32>
    %cst_84 = arith.constant 0.707106769 : f32
    %281 = vector.broadcast %cst_84 : f32 to vector<18x192xf32>
    %282 = arith.mulf %278, %281 : vector<18x192xf32>
    %283 = math.absf %282 : vector<18x192xf32>
    %cst_85 = arith.constant 0.327591091 : f32
    %284 = vector.broadcast %cst_85 : f32 to vector<18x192xf32>
    %285 = arith.mulf %284, %283 : vector<18x192xf32>
    %cst_86 = arith.constant 1.000000e+00 : f32
    %286 = vector.broadcast %cst_86 : f32 to vector<18x192xf32>
    %287 = arith.addf %286, %285 : vector<18x192xf32>
    %cst_87 = arith.constant 1.000000e+00 : f32
    %288 = vector.broadcast %cst_87 : f32 to vector<18x192xf32>
    %289 = arith.divf %288, %287 : vector<18x192xf32>
    %cst_88 = arith.constant 1.06140542 : f32
    %290 = vector.broadcast %cst_88 : f32 to vector<18x192xf32>
    %291 = arith.mulf %290, %289 : vector<18x192xf32>
    %cst_89 = arith.constant 1.45315206 : f32
    %292 = vector.broadcast %cst_89 : f32 to vector<18x192xf32>
    %293 = arith.subf %291, %292 : vector<18x192xf32>
    %294 = arith.mulf %293, %289 : vector<18x192xf32>
    %cst_90 = arith.constant 1.42141378 : f32
    %295 = vector.broadcast %cst_90 : f32 to vector<18x192xf32>
    %296 = arith.addf %294, %295 : vector<18x192xf32>
    %297 = arith.mulf %296, %289 : vector<18x192xf32>
    %cst_91 = arith.constant 0.284496725 : f32
    %298 = vector.broadcast %cst_91 : f32 to vector<18x192xf32>
    %299 = arith.subf %297, %298 : vector<18x192xf32>
    %300 = arith.mulf %299, %289 : vector<18x192xf32>
    %cst_92 = arith.constant 0.254829586 : f32
    %301 = vector.broadcast %cst_92 : f32 to vector<18x192xf32>
    %302 = arith.addf %300, %301 : vector<18x192xf32>
    %303 = arith.mulf %302, %289 : vector<18x192xf32>
    %304 = arith.mulf %283, %283 : vector<18x192xf32>
    %cst_93 = arith.constant 0.000000e+00 : f32
    %305 = vector.broadcast %cst_93 : f32 to vector<18x192xf32>
    %306 = arith.subf %305, %304 : vector<18x192xf32>
    %307 = math.exp %306 : vector<18x192xf32>
    %308 = arith.mulf %303, %307 : vector<18x192xf32>
    %cst_94 = arith.constant 1.000000e+00 : f32
    %309 = vector.broadcast %cst_94 : f32 to vector<18x192xf32>
    %310 = arith.subf %309, %308 : vector<18x192xf32>
    %cst_95 = arith.constant 0.000000e+00 : f32
    %311 = vector.broadcast %cst_95 : f32 to vector<18x192xf32>
    %312 = arith.cmpf olt, %282, %311 : vector<18x192xf32>
    %cst_96 = arith.constant 0.000000e+00 : f32
    %313 = vector.broadcast %cst_96 : f32 to vector<18x192xf32>
    %314 = arith.subf %313, %310 : vector<18x192xf32>
    %315 = arith.select %312, %314, %310 : vector<18x192xi1>, vector<18x192xf32>
    %cst_97 = arith.constant 1.000000e+00 : f32
    %316 = vector.broadcast %cst_97 : f32 to vector<18x192xf32>
    %317 = arith.addf %316, %315 : vector<18x192xf32>
    %318 = arith.mulf %280, %317 : vector<18x192xf32>
    %cst_98 = arith.constant dense<0.000000e+00> : vector<18x48xf32>
    %319 = tpu.matmul %318, %146, %cst_98 {dimension_numbers = #tpu.dot_dimension_numbers<[1], [0], [0], [1], [0, 0, 1, 1], [], []>} : vector<18x192xf32>, vector<192x48xf32>, vector<18x48xf32> -> vector<18x48xf32>
    %320 = vector.broadcast %136 : vector<1x48xf32> to vector<18x48xf32>
    %321 = arith.addf %319, %320 : vector<18x48xf32>
    %322 = arith.addf %253, %321 : vector<18x48xf32>
    %c1 = arith.constant 1 : index
    %c0_99 = arith.constant 0 : index
    %c0_100 = arith.constant 0 : index
    %323 = vector.load %arg12[%c1, %c0_99, %c0_100] : memref<2x8x192xf32, #tpu.memory_space<vmem>>, vector<1x8x192xf32>
    %324 = vector.shape_cast %323 : vector<1x8x192xf32> to vector<8x192xf32>
    %325 = vector.extract_strided_slice %324 {offsets = [0, 0], sizes = [1, 48], strides = [1, 1]} : vector<8x192xf32> to vector<1x48xf32>
    %326 = vector.extract_strided_slice %324 {offsets = [1, 0], sizes = [1, 48], strides = [1, 1]} : vector<8x192xf32> to vector<1x48xf32>
    %327 = vector.extract_strided_slice %324 {offsets = [2, 0], sizes = [1, 48], strides = [1, 1]} : vector<8x192xf32> to vector<1x48xf32>
    %328 = vector.extract_strided_slice %324 {offsets = [3, 0], sizes = [1, 48], strides = [1, 1]} : vector<8x192xf32> to vector<1x48xf32>
    %329 = vector.extract_strided_slice %324 {offsets = [4, 0], sizes = [1, 48], strides = [1, 1]} : vector<8x192xf32> to vector<1x48xf32>
    %330 = vector.extract_strided_slice %324 {offsets = [5, 0], sizes = [1, 48], strides = [1, 1]} : vector<8x192xf32> to vector<1x48xf32>
    %331 = vector.extract_strided_slice %324 {offsets = [6, 0], sizes = [1, 192], strides = [1, 1]} : vector<8x192xf32> to vector<1x192xf32>
    %332 = vector.extract_strided_slice %324 {offsets = [7, 0], sizes = [1, 192], strides = [1, 1]} : vector<8x192xf32> to vector<1x192xf32>
    %c1_101 = arith.constant 1 : index
    %c0_102 = arith.constant 0 : index
    %c0_103 = arith.constant 0 : index
    %333 = vector.load %arg8[%c1_101, %c0_102, %c0_103] : memref<2x48x192xf32, #tpu.memory_space<vmem>>, vector<1x48x192xf32>
    %334 = vector.shape_cast %333 : vector<1x48x192xf32> to vector<48x192xf32>
    %c1_104 = arith.constant 1 : index
    %c0_105 = arith.constant 0 : index
    %c0_106 = arith.constant 0 : index
    %335 = vector.load %arg9[%c1_104, %c0_105, %c0_106] : memref<2x64x48xf32, #tpu.memory_space<vmem>>, vector<1x64x48xf32>
    %336 = vector.shape_cast %335 : vector<1x64x48xf32> to vector<64x48xf32>
    %c1_107 = arith.constant 1 : index
    %c0_108 = arith.constant 0 : index
    %c0_109 = arith.constant 0 : index
    %337 = vector.load %arg10[%c1_107, %c0_108, %c0_109] : memref<2x48x192xf32, #tpu.memory_space<vmem>>, vector<1x48x192xf32>
    %338 = vector.shape_cast %337 : vector<1x48x192xf32> to vector<48x192xf32>
    %c1_110 = arith.constant 1 : index
    %c0_111 = arith.constant 0 : index
    %c0_112 = arith.constant 0 : index
    %339 = vector.load %arg11[%c1_110, %c0_111, %c0_112] : memref<2x192x48xf32, #tpu.memory_space<vmem>>, vector<1x192x48xf32>
    %340 = vector.shape_cast %339 : vector<1x192x48xf32> to vector<192x48xf32>
    %cst_113 = arith.constant dense<0.000000e+00> : vector<18xf32>
    %341 = vector.multi_reduction <add>, %322, %cst_113 [1] : vector<18x48xf32> to vector<18xf32>
    %342 = vector.shape_cast %341 : vector<18xf32> to vector<18x1xf32>
    %cst_114 = arith.constant 4.800000e+01 : f32
    %343 = vector.broadcast %cst_114 : f32 to vector<18x1xf32>
    %344 = arith.divf %342, %343 : vector<18x1xf32>
    %345 = vector.broadcast %344 : vector<18x1xf32> to vector<18x48xf32>
    %346 = arith.subf %322, %345 : vector<18x48xf32>
    %347 = arith.mulf %346, %346 : vector<18x48xf32>
    %cst_115 = arith.constant dense<0.000000e+00> : vector<18xf32>
    %348 = vector.multi_reduction <add>, %347, %cst_115 [1] : vector<18x48xf32> to vector<18xf32>
    %349 = vector.shape_cast %348 : vector<18xf32> to vector<18x1xf32>
    %cst_116 = arith.constant 4.800000e+01 : f32
    %350 = vector.broadcast %cst_116 : f32 to vector<18x1xf32>
    %351 = arith.divf %349, %350 : vector<18x1xf32>
    %352 = vector.broadcast %344 : vector<18x1xf32> to vector<18x48xf32>
    %353 = arith.subf %322, %352 : vector<18x48xf32>
    %cst_117 = arith.constant 9.99999997E-7 : f32
    %354 = vector.broadcast %cst_117 : f32 to vector<18x1xf32>
    %355 = arith.addf %351, %354 : vector<18x1xf32>
    %356 = math.rsqrt %355 : vector<18x1xf32>
    %357 = vector.broadcast %356 : vector<18x1xf32> to vector<18x48xf32>
    %358 = arith.mulf %353, %357 : vector<18x48xf32>
    %359 = vector.broadcast %325 : vector<1x48xf32> to vector<18x48xf32>
    %360 = arith.mulf %358, %359 : vector<18x48xf32>
    %361 = vector.broadcast %326 : vector<1x48xf32> to vector<18x48xf32>
    %362 = arith.addf %360, %361 : vector<18x48xf32>
    %cst_118 = arith.constant dense<0.000000e+00> : vector<18x192xf32>
    %363 = tpu.matmul %362, %334, %cst_118 {dimension_numbers = #tpu.dot_dimension_numbers<[1], [0], [0], [1], [0, 0, 1, 1], [], []>} : vector<18x48xf32>, vector<48x192xf32>, vector<18x192xf32> -> vector<18x192xf32>
    %364 = vector.broadcast %331 : vector<1x192xf32> to vector<18x192xf32>
    %365 = arith.addf %363, %364 : vector<18x192xf32>
    %366 = vector.extract_strided_slice %365 {offsets = [0, 0], sizes = [18, 64], strides = [1, 1]} : vector<18x192xf32> to vector<18x64xf32>
    %cst_119 = arith.constant 0.288675129 : f32
    %367 = vector.broadcast %cst_119 : f32 to vector<18x64xf32>
    %368 = arith.mulf %366, %367 : vector<18x64xf32>
    %369 = vector.extract_strided_slice %365 {offsets = [0, 64], sizes = [18, 64], strides = [1, 1]} : vector<18x192xf32> to vector<18x64xf32>
    %370 = vector.extract_strided_slice %365 {offsets = [0, 128], sizes = [18, 64], strides = [1, 1]} : vector<18x192xf32> to vector<18x64xf32>
    %cst_120 = arith.constant 0.000000e+00 : f32
    %371 = vector.broadcast %cst_120 : f32 to vector<18x64xf32>
    %372 = vector.broadcast %68 : vector<1x64xf32> to vector<18x64xf32>
    %373 = arith.mulf %368, %372 : vector<18x64xf32>
    %cst_121 = arith.constant dense<0.000000e+00> : vector<18x18xf32>
    %374 = tpu.matmul %373, %369, %cst_121 {dimension_numbers = #tpu.dot_dimension_numbers<[1], [1], [0], [0], [0, 0, 1, 0], [], []>} : vector<18x64xf32>, vector<18x64xf32>, vector<18x18xf32> -> vector<18x18xf32>
    %375 = arith.addf %374, %57 : vector<18x18xf32>
    %cst_122 = arith.constant dense<0xFF800000> : vector<18xf32>
    %376 = vector.multi_reduction <maximumf>, %375, %cst_122 [1] : vector<18x18xf32> to vector<18xf32>
    %377 = vector.shape_cast %376 : vector<18xf32> to vector<18x1xf32>
    %378 = vector.broadcast %377 : vector<18x1xf32> to vector<18x18xf32>
    %379 = arith.subf %375, %378 : vector<18x18xf32>
    %380 = math.exp %379 : vector<18x18xf32>
    %cst_123 = arith.constant dense<0.000000e+00> : vector<18xf32>
    %381 = vector.multi_reduction <add>, %380, %cst_123 [1] : vector<18x18xf32> to vector<18xf32>
    %382 = vector.shape_cast %381 : vector<18xf32> to vector<18x1xf32>
    %383 = tpu.reciprocal %382 {approx = true} : vector<18x1xf32> -> vector<18x1xf32>
    %384 = vector.broadcast %383 : vector<18x1xf32> to vector<18x18xf32>
    %385 = arith.mulf %380, %384 : vector<18x18xf32>
    %386 = vector.broadcast %68 : vector<1x64xf32> to vector<18x64xf32>
    %387 = arith.mulf %370, %386 : vector<18x64xf32>
    %cst_124 = arith.constant dense<0.000000e+00> : vector<18x64xf32>
    %388 = tpu.matmul %385, %387, %cst_124 {dimension_numbers = #tpu.dot_dimension_numbers<[1], [0], [0], [1], [0, 0, 1, 1], [], []>} : vector<18x18xf32>, vector<18x64xf32>, vector<18x64xf32> -> vector<18x64xf32>
    %389 = arith.addf %371, %388 : vector<18x64xf32>
    %390 = vector.broadcast %75 : vector<1x64xf32> to vector<18x64xf32>
    %391 = arith.mulf %368, %390 : vector<18x64xf32>
    %cst_125 = arith.constant dense<0.000000e+00> : vector<18x18xf32>
    %392 = tpu.matmul %391, %369, %cst_125 {dimension_numbers = #tpu.dot_dimension_numbers<[1], [1], [0], [0], [0, 0, 1, 0], [], []>} : vector<18x64xf32>, vector<18x64xf32>, vector<18x18xf32> -> vector<18x18xf32>
    %393 = arith.addf %392, %57 : vector<18x18xf32>
    %cst_126 = arith.constant dense<0xFF800000> : vector<18xf32>
    %394 = vector.multi_reduction <maximumf>, %393, %cst_126 [1] : vector<18x18xf32> to vector<18xf32>
    %395 = vector.shape_cast %394 : vector<18xf32> to vector<18x1xf32>
    %396 = vector.broadcast %395 : vector<18x1xf32> to vector<18x18xf32>
    %397 = arith.subf %393, %396 : vector<18x18xf32>
    %398 = math.exp %397 : vector<18x18xf32>
    %cst_127 = arith.constant dense<0.000000e+00> : vector<18xf32>
    %399 = vector.multi_reduction <add>, %398, %cst_127 [1] : vector<18x18xf32> to vector<18xf32>
    %400 = vector.shape_cast %399 : vector<18xf32> to vector<18x1xf32>
    %401 = tpu.reciprocal %400 {approx = true} : vector<18x1xf32> -> vector<18x1xf32>
    %402 = vector.broadcast %401 : vector<18x1xf32> to vector<18x18xf32>
    %403 = arith.mulf %398, %402 : vector<18x18xf32>
    %404 = vector.broadcast %75 : vector<1x64xf32> to vector<18x64xf32>
    %405 = arith.mulf %370, %404 : vector<18x64xf32>
    %cst_128 = arith.constant dense<0.000000e+00> : vector<18x64xf32>
    %406 = tpu.matmul %403, %405, %cst_128 {dimension_numbers = #tpu.dot_dimension_numbers<[1], [0], [0], [1], [0, 0, 1, 1], [], []>} : vector<18x18xf32>, vector<18x64xf32>, vector<18x64xf32> -> vector<18x64xf32>
    %407 = arith.addf %389, %406 : vector<18x64xf32>
    %408 = vector.broadcast %82 : vector<1x64xf32> to vector<18x64xf32>
    %409 = arith.mulf %368, %408 : vector<18x64xf32>
    %cst_129 = arith.constant dense<0.000000e+00> : vector<18x18xf32>
    %410 = tpu.matmul %409, %369, %cst_129 {dimension_numbers = #tpu.dot_dimension_numbers<[1], [1], [0], [0], [0, 0, 1, 0], [], []>} : vector<18x64xf32>, vector<18x64xf32>, vector<18x18xf32> -> vector<18x18xf32>
    %411 = arith.addf %410, %57 : vector<18x18xf32>
    %cst_130 = arith.constant dense<0xFF800000> : vector<18xf32>
    %412 = vector.multi_reduction <maximumf>, %411, %cst_130 [1] : vector<18x18xf32> to vector<18xf32>
    %413 = vector.shape_cast %412 : vector<18xf32> to vector<18x1xf32>
    %414 = vector.broadcast %413 : vector<18x1xf32> to vector<18x18xf32>
    %415 = arith.subf %411, %414 : vector<18x18xf32>
    %416 = math.exp %415 : vector<18x18xf32>
    %cst_131 = arith.constant dense<0.000000e+00> : vector<18xf32>
    %417 = vector.multi_reduction <add>, %416, %cst_131 [1] : vector<18x18xf32> to vector<18xf32>
    %418 = vector.shape_cast %417 : vector<18xf32> to vector<18x1xf32>
    %419 = tpu.reciprocal %418 {approx = true} : vector<18x1xf32> -> vector<18x1xf32>
    %420 = vector.broadcast %419 : vector<18x1xf32> to vector<18x18xf32>
    %421 = arith.mulf %416, %420 : vector<18x18xf32>
    %422 = vector.broadcast %82 : vector<1x64xf32> to vector<18x64xf32>
    %423 = arith.mulf %370, %422 : vector<18x64xf32>
    %cst_132 = arith.constant dense<0.000000e+00> : vector<18x64xf32>
    %424 = tpu.matmul %421, %423, %cst_132 {dimension_numbers = #tpu.dot_dimension_numbers<[1], [0], [0], [1], [0, 0, 1, 1], [], []>} : vector<18x18xf32>, vector<18x64xf32>, vector<18x64xf32> -> vector<18x64xf32>
    %425 = arith.addf %407, %424 : vector<18x64xf32>
    %426 = vector.broadcast %89 : vector<1x64xf32> to vector<18x64xf32>
    %427 = arith.mulf %368, %426 : vector<18x64xf32>
    %cst_133 = arith.constant dense<0.000000e+00> : vector<18x18xf32>
    %428 = tpu.matmul %427, %369, %cst_133 {dimension_numbers = #tpu.dot_dimension_numbers<[1], [1], [0], [0], [0, 0, 1, 0], [], []>} : vector<18x64xf32>, vector<18x64xf32>, vector<18x18xf32> -> vector<18x18xf32>
    %429 = arith.addf %428, %57 : vector<18x18xf32>
    %cst_134 = arith.constant dense<0xFF800000> : vector<18xf32>
    %430 = vector.multi_reduction <maximumf>, %429, %cst_134 [1] : vector<18x18xf32> to vector<18xf32>
    %431 = vector.shape_cast %430 : vector<18xf32> to vector<18x1xf32>
    %432 = vector.broadcast %431 : vector<18x1xf32> to vector<18x18xf32>
    %433 = arith.subf %429, %432 : vector<18x18xf32>
    %434 = math.exp %433 : vector<18x18xf32>
    %cst_135 = arith.constant dense<0.000000e+00> : vector<18xf32>
    %435 = vector.multi_reduction <add>, %434, %cst_135 [1] : vector<18x18xf32> to vector<18xf32>
    %436 = vector.shape_cast %435 : vector<18xf32> to vector<18x1xf32>
    %437 = tpu.reciprocal %436 {approx = true} : vector<18x1xf32> -> vector<18x1xf32>
    %438 = vector.broadcast %437 : vector<18x1xf32> to vector<18x18xf32>
    %439 = arith.mulf %434, %438 : vector<18x18xf32>
    %440 = vector.broadcast %89 : vector<1x64xf32> to vector<18x64xf32>
    %441 = arith.mulf %370, %440 : vector<18x64xf32>
    %cst_136 = arith.constant dense<0.000000e+00> : vector<18x64xf32>
    %442 = tpu.matmul %439, %441, %cst_136 {dimension_numbers = #tpu.dot_dimension_numbers<[1], [0], [0], [1], [0, 0, 1, 1], [], []>} : vector<18x18xf32>, vector<18x64xf32>, vector<18x64xf32> -> vector<18x64xf32>
    %443 = arith.addf %425, %442 : vector<18x64xf32>
    %cst_137 = arith.constant dense<0.000000e+00> : vector<18x48xf32>
    %444 = tpu.matmul %443, %336, %cst_137 {dimension_numbers = #tpu.dot_dimension_numbers<[1], [0], [0], [1], [0, 0, 1, 1], [], []>} : vector<18x64xf32>, vector<64x48xf32>, vector<18x48xf32> -> vector<18x48xf32>
    %445 = arith.addf %322, %444 : vector<18x48xf32>
    %446 = vector.broadcast %327 : vector<1x48xf32> to vector<18x48xf32>
    %447 = arith.addf %445, %446 : vector<18x48xf32>
    %cst_138 = arith.constant dense<0.000000e+00> : vector<18xf32>
    %448 = vector.multi_reduction <add>, %447, %cst_138 [1] : vector<18x48xf32> to vector<18xf32>
    %449 = vector.shape_cast %448 : vector<18xf32> to vector<18x1xf32>
    %cst_139 = arith.constant 4.800000e+01 : f32
    %450 = vector.broadcast %cst_139 : f32 to vector<18x1xf32>
    %451 = arith.divf %449, %450 : vector<18x1xf32>
    %452 = vector.broadcast %451 : vector<18x1xf32> to vector<18x48xf32>
    %453 = arith.subf %447, %452 : vector<18x48xf32>
    %454 = arith.mulf %453, %453 : vector<18x48xf32>
    %cst_140 = arith.constant dense<0.000000e+00> : vector<18xf32>
    %455 = vector.multi_reduction <add>, %454, %cst_140 [1] : vector<18x48xf32> to vector<18xf32>
    %456 = vector.shape_cast %455 : vector<18xf32> to vector<18x1xf32>
    %cst_141 = arith.constant 4.800000e+01 : f32
    %457 = vector.broadcast %cst_141 : f32 to vector<18x1xf32>
    %458 = arith.divf %456, %457 : vector<18x1xf32>
    %459 = vector.broadcast %451 : vector<18x1xf32> to vector<18x48xf32>
    %460 = arith.subf %447, %459 : vector<18x48xf32>
    %cst_142 = arith.constant 9.99999997E-7 : f32
    %461 = vector.broadcast %cst_142 : f32 to vector<18x1xf32>
    %462 = arith.addf %458, %461 : vector<18x1xf32>
    %463 = math.rsqrt %462 : vector<18x1xf32>
    %464 = vector.broadcast %463 : vector<18x1xf32> to vector<18x48xf32>
    %465 = arith.mulf %460, %464 : vector<18x48xf32>
    %466 = vector.broadcast %328 : vector<1x48xf32> to vector<18x48xf32>
    %467 = arith.mulf %465, %466 : vector<18x48xf32>
    %468 = vector.broadcast %329 : vector<1x48xf32> to vector<18x48xf32>
    %469 = arith.addf %467, %468 : vector<18x48xf32>
    %cst_143 = arith.constant dense<0.000000e+00> : vector<18x192xf32>
    %470 = tpu.matmul %469, %338, %cst_143 {dimension_numbers = #tpu.dot_dimension_numbers<[1], [0], [0], [1], [0, 0, 1, 1], [], []>} : vector<18x48xf32>, vector<48x192xf32>, vector<18x192xf32> -> vector<18x192xf32>
    %471 = vector.broadcast %332 : vector<1x192xf32> to vector<18x192xf32>
    %472 = arith.addf %470, %471 : vector<18x192xf32>
    %cst_144 = arith.constant 5.000000e-01 : f32
    %473 = vector.broadcast %cst_144 : f32 to vector<18x192xf32>
    %474 = arith.mulf %473, %472 : vector<18x192xf32>
    %cst_145 = arith.constant 0.707106769 : f32
    %475 = vector.broadcast %cst_145 : f32 to vector<18x192xf32>
    %476 = arith.mulf %472, %475 : vector<18x192xf32>
    %477 = math.absf %476 : vector<18x192xf32>
    %cst_146 = arith.constant 0.327591091 : f32
    %478 = vector.broadcast %cst_146 : f32 to vector<18x192xf32>
    %479 = arith.mulf %478, %477 : vector<18x192xf32>
    %cst_147 = arith.constant 1.000000e+00 : f32
    %480 = vector.broadcast %cst_147 : f32 to vector<18x192xf32>
    %481 = arith.addf %480, %479 : vector<18x192xf32>
    %cst_148 = arith.constant 1.000000e+00 : f32
    %482 = vector.broadcast %cst_148 : f32 to vector<18x192xf32>
    %483 = arith.divf %482, %481 : vector<18x192xf32>
    %cst_149 = arith.constant 1.06140542 : f32
    %484 = vector.broadcast %cst_149 : f32 to vector<18x192xf32>
    %485 = arith.mulf %484, %483 : vector<18x192xf32>
    %cst_150 = arith.constant 1.45315206 : f32
    %486 = vector.broadcast %cst_150 : f32 to vector<18x192xf32>
    %487 = arith.subf %485, %486 : vector<18x192xf32>
    %488 = arith.mulf %487, %483 : vector<18x192xf32>
    %cst_151 = arith.constant 1.42141378 : f32
    %489 = vector.broadcast %cst_151 : f32 to vector<18x192xf32>
    %490 = arith.addf %488, %489 : vector<18x192xf32>
    %491 = arith.mulf %490, %483 : vector<18x192xf32>
    %cst_152 = arith.constant 0.284496725 : f32
    %492 = vector.broadcast %cst_152 : f32 to vector<18x192xf32>
    %493 = arith.subf %491, %492 : vector<18x192xf32>
    %494 = arith.mulf %493, %483 : vector<18x192xf32>
    %cst_153 = arith.constant 0.254829586 : f32
    %495 = vector.broadcast %cst_153 : f32 to vector<18x192xf32>
    %496 = arith.addf %494, %495 : vector<18x192xf32>
    %497 = arith.mulf %496, %483 : vector<18x192xf32>
    %498 = arith.mulf %477, %477 : vector<18x192xf32>
    %cst_154 = arith.constant 0.000000e+00 : f32
    %499 = vector.broadcast %cst_154 : f32 to vector<18x192xf32>
    %500 = arith.subf %499, %498 : vector<18x192xf32>
    %501 = math.exp %500 : vector<18x192xf32>
    %502 = arith.mulf %497, %501 : vector<18x192xf32>
    %cst_155 = arith.constant 1.000000e+00 : f32
    %503 = vector.broadcast %cst_155 : f32 to vector<18x192xf32>
    %504 = arith.subf %503, %502 : vector<18x192xf32>
    %cst_156 = arith.constant 0.000000e+00 : f32
    %505 = vector.broadcast %cst_156 : f32 to vector<18x192xf32>
    %506 = arith.cmpf olt, %476, %505 : vector<18x192xf32>
    %cst_157 = arith.constant 0.000000e+00 : f32
    %507 = vector.broadcast %cst_157 : f32 to vector<18x192xf32>
    %508 = arith.subf %507, %504 : vector<18x192xf32>
    %509 = arith.select %506, %508, %504 : vector<18x192xi1>, vector<18x192xf32>
    %cst_158 = arith.constant 1.000000e+00 : f32
    %510 = vector.broadcast %cst_158 : f32 to vector<18x192xf32>
    %511 = arith.addf %510, %509 : vector<18x192xf32>
    %512 = arith.mulf %474, %511 : vector<18x192xf32>
    %cst_159 = arith.constant dense<0.000000e+00> : vector<18x48xf32>
    %513 = tpu.matmul %512, %340, %cst_159 {dimension_numbers = #tpu.dot_dimension_numbers<[1], [0], [0], [1], [0, 0, 1, 1], [], []>} : vector<18x192xf32>, vector<192x48xf32>, vector<18x48xf32> -> vector<18x48xf32>
    %514 = vector.broadcast %330 : vector<1x48xf32> to vector<18x48xf32>
    %515 = arith.addf %513, %514 : vector<18x48xf32>
    %516 = arith.addf %447, %515 : vector<18x48xf32>
    %cst_160 = arith.constant dense<0.000000e+00> : vector<18xf32>
    %517 = vector.multi_reduction <add>, %516, %cst_160 [1] : vector<18x48xf32> to vector<18xf32>
    %518 = vector.shape_cast %517 : vector<18xf32> to vector<18x1xf32>
    %cst_161 = arith.constant 4.800000e+01 : f32
    %519 = vector.broadcast %cst_161 : f32 to vector<18x1xf32>
    %520 = arith.divf %518, %519 : vector<18x1xf32>
    %521 = vector.broadcast %520 : vector<18x1xf32> to vector<18x48xf32>
    %522 = arith.subf %516, %521 : vector<18x48xf32>
    %523 = arith.mulf %522, %522 : vector<18x48xf32>
    %cst_162 = arith.constant dense<0.000000e+00> : vector<18xf32>
    %524 = vector.multi_reduction <add>, %523, %cst_162 [1] : vector<18x48xf32> to vector<18xf32>
    %525 = vector.shape_cast %524 : vector<18xf32> to vector<18x1xf32>
    %cst_163 = arith.constant 4.800000e+01 : f32
    %526 = vector.broadcast %cst_163 : f32 to vector<18x1xf32>
    %527 = arith.divf %525, %526 : vector<18x1xf32>
    %528 = vector.broadcast %520 : vector<18x1xf32> to vector<18x48xf32>
    %529 = arith.subf %516, %528 : vector<18x48xf32>
    %cst_164 = arith.constant 9.99999997E-7 : f32
    %530 = vector.broadcast %cst_164 : f32 to vector<18x1xf32>
    %531 = arith.addf %527, %530 : vector<18x1xf32>
    %532 = math.rsqrt %531 : vector<18x1xf32>
    %533 = vector.broadcast %532 : vector<18x1xf32> to vector<18x48xf32>
    %534 = arith.mulf %529, %533 : vector<18x48xf32>
    %535 = vector.broadcast %10 : vector<1x48xf32> to vector<18x48xf32>
    %536 = arith.mulf %534, %535 : vector<18x48xf32>
    %537 = vector.broadcast %11 : vector<1x48xf32> to vector<18x48xf32>
    %538 = arith.addf %536, %537 : vector<18x48xf32>
    %c0_165 = arith.constant 0 : index
    %c0_166 = arith.constant 0 : index
    %539 = vector.load %arg5[%c0_165, %c0_166] : memref<48x24xf32, #tpu.memory_space<vmem>>, vector<48x24xf32>
    %cst_167 = arith.constant dense<0.000000e+00> : vector<18x24xf32>
    %540 = tpu.matmul %538, %539, %cst_167 {dimension_numbers = #tpu.dot_dimension_numbers<[1], [0], [0], [1], [0, 0, 1, 1], [], []>} : vector<18x48xf32>, vector<48x24xf32>, vector<18x24xf32> -> vector<18x24xf32>
    %541 = vector.broadcast %12 : vector<1x24xf32> to vector<18x24xf32>
    %542 = arith.addf %540, %541 : vector<18x24xf32>
    %543 = vector.shape_cast %30 : vector<18x1xi1> to vector<18x1xi1>
    %544 = vector.broadcast %543 : vector<18x1xi1> to vector<18x24xi1>
    %545 = vector.shape_cast %9 : vector<1x24xf32> to vector<1x24xf32>
    %546 = vector.broadcast %545 : vector<1x24xf32> to vector<18x24xf32>
    %547 = arith.select %544, %542, %546 : vector<18x24xi1>, vector<18x24xf32>
    %548 = arith.addf %547, %5 : vector<18x24xf32>
    %c0_168 = arith.constant 0 : index
    %c0_169 = arith.constant 0 : index
    %c0_170 = arith.constant 0 : index
    %549 = vector.load %arg17[%c0_168, %c0_169, %c0_170] : memref<2x8x96xf32, #tpu.memory_space<vmem>>, vector<1x8x96xf32>
    %550 = vector.shape_cast %549 : vector<1x8x96xf32> to vector<8x96xf32>
    %551 = vector.extract_strided_slice %550 {offsets = [0, 0], sizes = [1, 24], strides = [1, 1]} : vector<8x96xf32> to vector<1x24xf32>
    %552 = vector.extract_strided_slice %550 {offsets = [1, 0], sizes = [1, 24], strides = [1, 1]} : vector<8x96xf32> to vector<1x24xf32>
    %553 = vector.extract_strided_slice %550 {offsets = [2, 0], sizes = [1, 24], strides = [1, 1]} : vector<8x96xf32> to vector<1x24xf32>
    %554 = vector.extract_strided_slice %550 {offsets = [3, 0], sizes = [1, 24], strides = [1, 1]} : vector<8x96xf32> to vector<1x24xf32>
    %555 = vector.extract_strided_slice %550 {offsets = [4, 0], sizes = [1, 24], strides = [1, 1]} : vector<8x96xf32> to vector<1x24xf32>
    %556 = vector.extract_strided_slice %550 {offsets = [5, 0], sizes = [1, 24], strides = [1, 1]} : vector<8x96xf32> to vector<1x24xf32>
    %557 = vector.extract_strided_slice %550 {offsets = [6, 0], sizes = [1, 96], strides = [1, 1]} : vector<8x96xf32> to vector<1x96xf32>
    %558 = vector.extract_strided_slice %550 {offsets = [7, 0], sizes = [1, 96], strides = [1, 1]} : vector<8x96xf32> to vector<1x96xf32>
    %c0_171 = arith.constant 0 : index
    %c0_172 = arith.constant 0 : index
    %c0_173 = arith.constant 0 : index
    %559 = vector.load %arg13[%c0_171, %c0_172, %c0_173] : memref<2x24x96xf32, #tpu.memory_space<vmem>>, vector<1x24x96xf32>
    %560 = vector.shape_cast %559 : vector<1x24x96xf32> to vector<24x96xf32>
    %c0_174 = arith.constant 0 : index
    %c0_175 = arith.constant 0 : index
    %c0_176 = arith.constant 0 : index
    %561 = vector.load %arg14[%c0_174, %c0_175, %c0_176] : memref<2x32x24xf32, #tpu.memory_space<vmem>>, vector<1x32x24xf32>
    %562 = vector.shape_cast %561 : vector<1x32x24xf32> to vector<32x24xf32>
    %c0_177 = arith.constant 0 : index
    %c0_178 = arith.constant 0 : index
    %c0_179 = arith.constant 0 : index
    %563 = vector.load %arg15[%c0_177, %c0_178, %c0_179] : memref<2x24x96xf32, #tpu.memory_space<vmem>>, vector<1x24x96xf32>
    %564 = vector.shape_cast %563 : vector<1x24x96xf32> to vector<24x96xf32>
    %c0_180 = arith.constant 0 : index
    %c0_181 = arith.constant 0 : index
    %c0_182 = arith.constant 0 : index
    %565 = vector.load %arg16[%c0_180, %c0_181, %c0_182] : memref<2x96x24xf32, #tpu.memory_space<vmem>>, vector<1x96x24xf32>
    %566 = vector.shape_cast %565 : vector<1x96x24xf32> to vector<96x24xf32>
    %cst_183 = arith.constant dense<0.000000e+00> : vector<18xf32>
    %567 = vector.multi_reduction <add>, %548, %cst_183 [1] : vector<18x24xf32> to vector<18xf32>
    %568 = vector.shape_cast %567 : vector<18xf32> to vector<18x1xf32>
    %cst_184 = arith.constant 2.400000e+01 : f32
    %569 = vector.broadcast %cst_184 : f32 to vector<18x1xf32>
    %570 = arith.divf %568, %569 : vector<18x1xf32>
    %571 = vector.broadcast %570 : vector<18x1xf32> to vector<18x24xf32>
    %572 = arith.subf %548, %571 : vector<18x24xf32>
    %573 = arith.mulf %572, %572 : vector<18x24xf32>
    %cst_185 = arith.constant dense<0.000000e+00> : vector<18xf32>
    %574 = vector.multi_reduction <add>, %573, %cst_185 [1] : vector<18x24xf32> to vector<18xf32>
    %575 = vector.shape_cast %574 : vector<18xf32> to vector<18x1xf32>
    %cst_186 = arith.constant 2.400000e+01 : f32
    %576 = vector.broadcast %cst_186 : f32 to vector<18x1xf32>
    %577 = arith.divf %575, %576 : vector<18x1xf32>
    %578 = vector.broadcast %570 : vector<18x1xf32> to vector<18x24xf32>
    %579 = arith.subf %548, %578 : vector<18x24xf32>
    %cst_187 = arith.constant 9.99999997E-7 : f32
    %580 = vector.broadcast %cst_187 : f32 to vector<18x1xf32>
    %581 = arith.addf %577, %580 : vector<18x1xf32>
    %582 = math.rsqrt %581 : vector<18x1xf32>
    %583 = vector.broadcast %582 : vector<18x1xf32> to vector<18x24xf32>
    %584 = arith.mulf %579, %583 : vector<18x24xf32>
    %585 = vector.broadcast %551 : vector<1x24xf32> to vector<18x24xf32>
    %586 = arith.mulf %584, %585 : vector<18x24xf32>
    %587 = vector.broadcast %552 : vector<1x24xf32> to vector<18x24xf32>
    %588 = arith.addf %586, %587 : vector<18x24xf32>
    %cst_188 = arith.constant dense<0.000000e+00> : vector<18x96xf32>
    %589 = tpu.matmul %588, %560, %cst_188 {dimension_numbers = #tpu.dot_dimension_numbers<[1], [0], [0], [1], [0, 0, 1, 1], [], []>} : vector<18x24xf32>, vector<24x96xf32>, vector<18x96xf32> -> vector<18x96xf32>
    %590 = vector.broadcast %557 : vector<1x96xf32> to vector<18x96xf32>
    %591 = arith.addf %589, %590 : vector<18x96xf32>
    %592 = vector.extract_strided_slice %591 {offsets = [0, 0], sizes = [18, 32], strides = [1, 1]} : vector<18x96xf32> to vector<18x32xf32>
    %cst_189 = arith.constant 0.408248305 : f32
    %593 = vector.broadcast %cst_189 : f32 to vector<18x32xf32>
    %594 = arith.mulf %592, %593 : vector<18x32xf32>
    %595 = vector.extract_strided_slice %591 {offsets = [0, 32], sizes = [18, 32], strides = [1, 1]} : vector<18x96xf32> to vector<18x32xf32>
    %596 = vector.extract_strided_slice %591 {offsets = [0, 64], sizes = [18, 32], strides = [1, 1]} : vector<18x96xf32> to vector<18x32xf32>
    %cst_190 = arith.constant 0.000000e+00 : f32
    %597 = vector.broadcast %cst_190 : f32 to vector<18x32xf32>
    %598 = vector.broadcast %97 : vector<1x32xf32> to vector<18x32xf32>
    %599 = arith.mulf %594, %598 : vector<18x32xf32>
    %cst_191 = arith.constant dense<0.000000e+00> : vector<18x18xf32>
    %600 = tpu.matmul %599, %595, %cst_191 {dimension_numbers = #tpu.dot_dimension_numbers<[1], [1], [0], [0], [0, 0, 1, 0], [], []>} : vector<18x32xf32>, vector<18x32xf32>, vector<18x18xf32> -> vector<18x18xf32>
    %601 = arith.addf %600, %60 : vector<18x18xf32>
    %cst_192 = arith.constant dense<0xFF800000> : vector<18xf32>
    %602 = vector.multi_reduction <maximumf>, %601, %cst_192 [1] : vector<18x18xf32> to vector<18xf32>
    %603 = vector.shape_cast %602 : vector<18xf32> to vector<18x1xf32>
    %604 = vector.broadcast %603 : vector<18x1xf32> to vector<18x18xf32>
    %605 = arith.subf %601, %604 : vector<18x18xf32>
    %606 = math.exp %605 : vector<18x18xf32>
    %cst_193 = arith.constant dense<0.000000e+00> : vector<18xf32>
    %607 = vector.multi_reduction <add>, %606, %cst_193 [1] : vector<18x18xf32> to vector<18xf32>
    %608 = vector.shape_cast %607 : vector<18xf32> to vector<18x1xf32>
    %609 = tpu.reciprocal %608 {approx = true} : vector<18x1xf32> -> vector<18x1xf32>
    %610 = vector.broadcast %609 : vector<18x1xf32> to vector<18x18xf32>
    %611 = arith.mulf %606, %610 : vector<18x18xf32>
    %612 = vector.broadcast %97 : vector<1x32xf32> to vector<18x32xf32>
    %613 = arith.mulf %596, %612 : vector<18x32xf32>
    %cst_194 = arith.constant dense<0.000000e+00> : vector<18x32xf32>
    %614 = tpu.matmul %611, %613, %cst_194 {dimension_numbers = #tpu.dot_dimension_numbers<[1], [0], [0], [1], [0, 0, 1, 1], [], []>} : vector<18x18xf32>, vector<18x32xf32>, vector<18x32xf32> -> vector<18x32xf32>
    %615 = arith.addf %597, %614 : vector<18x32xf32>
    %616 = vector.broadcast %104 : vector<1x32xf32> to vector<18x32xf32>
    %617 = arith.mulf %594, %616 : vector<18x32xf32>
    %cst_195 = arith.constant dense<0.000000e+00> : vector<18x18xf32>
    %618 = tpu.matmul %617, %595, %cst_195 {dimension_numbers = #tpu.dot_dimension_numbers<[1], [1], [0], [0], [0, 0, 1, 0], [], []>} : vector<18x32xf32>, vector<18x32xf32>, vector<18x18xf32> -> vector<18x18xf32>
    %619 = arith.addf %618, %60 : vector<18x18xf32>
    %cst_196 = arith.constant dense<0xFF800000> : vector<18xf32>
    %620 = vector.multi_reduction <maximumf>, %619, %cst_196 [1] : vector<18x18xf32> to vector<18xf32>
    %621 = vector.shape_cast %620 : vector<18xf32> to vector<18x1xf32>
    %622 = vector.broadcast %621 : vector<18x1xf32> to vector<18x18xf32>
    %623 = arith.subf %619, %622 : vector<18x18xf32>
    %624 = math.exp %623 : vector<18x18xf32>
    %cst_197 = arith.constant dense<0.000000e+00> : vector<18xf32>
    %625 = vector.multi_reduction <add>, %624, %cst_197 [1] : vector<18x18xf32> to vector<18xf32>
    %626 = vector.shape_cast %625 : vector<18xf32> to vector<18x1xf32>
    %627 = tpu.reciprocal %626 {approx = true} : vector<18x1xf32> -> vector<18x1xf32>
    %628 = vector.broadcast %627 : vector<18x1xf32> to vector<18x18xf32>
    %629 = arith.mulf %624, %628 : vector<18x18xf32>
    %630 = vector.broadcast %104 : vector<1x32xf32> to vector<18x32xf32>
    %631 = arith.mulf %596, %630 : vector<18x32xf32>
    %cst_198 = arith.constant dense<0.000000e+00> : vector<18x32xf32>
    %632 = tpu.matmul %629, %631, %cst_198 {dimension_numbers = #tpu.dot_dimension_numbers<[1], [0], [0], [1], [0, 0, 1, 1], [], []>} : vector<18x18xf32>, vector<18x32xf32>, vector<18x32xf32> -> vector<18x32xf32>
    %633 = arith.addf %615, %632 : vector<18x32xf32>
    %634 = vector.broadcast %111 : vector<1x32xf32> to vector<18x32xf32>
    %635 = arith.mulf %594, %634 : vector<18x32xf32>
    %cst_199 = arith.constant dense<0.000000e+00> : vector<18x18xf32>
    %636 = tpu.matmul %635, %595, %cst_199 {dimension_numbers = #tpu.dot_dimension_numbers<[1], [1], [0], [0], [0, 0, 1, 0], [], []>} : vector<18x32xf32>, vector<18x32xf32>, vector<18x18xf32> -> vector<18x18xf32>
    %637 = arith.addf %636, %60 : vector<18x18xf32>
    %cst_200 = arith.constant dense<0xFF800000> : vector<18xf32>
    %638 = vector.multi_reduction <maximumf>, %637, %cst_200 [1] : vector<18x18xf32> to vector<18xf32>
    %639 = vector.shape_cast %638 : vector<18xf32> to vector<18x1xf32>
    %640 = vector.broadcast %639 : vector<18x1xf32> to vector<18x18xf32>
    %641 = arith.subf %637, %640 : vector<18x18xf32>
    %642 = math.exp %641 : vector<18x18xf32>
    %cst_201 = arith.constant dense<0.000000e+00> : vector<18xf32>
    %643 = vector.multi_reduction <add>, %642, %cst_201 [1] : vector<18x18xf32> to vector<18xf32>
    %644 = vector.shape_cast %643 : vector<18xf32> to vector<18x1xf32>
    %645 = tpu.reciprocal %644 {approx = true} : vector<18x1xf32> -> vector<18x1xf32>
    %646 = vector.broadcast %645 : vector<18x1xf32> to vector<18x18xf32>
    %647 = arith.mulf %642, %646 : vector<18x18xf32>
    %648 = vector.broadcast %111 : vector<1x32xf32> to vector<18x32xf32>
    %649 = arith.mulf %596, %648 : vector<18x32xf32>
    %cst_202 = arith.constant dense<0.000000e+00> : vector<18x32xf32>
    %650 = tpu.matmul %647, %649, %cst_202 {dimension_numbers = #tpu.dot_dimension_numbers<[1], [0], [0], [1], [0, 0, 1, 1], [], []>} : vector<18x18xf32>, vector<18x32xf32>, vector<18x32xf32> -> vector<18x32xf32>
    %651 = arith.addf %633, %650 : vector<18x32xf32>
    %652 = vector.broadcast %118 : vector<1x32xf32> to vector<18x32xf32>
    %653 = arith.mulf %594, %652 : vector<18x32xf32>
    %cst_203 = arith.constant dense<0.000000e+00> : vector<18x18xf32>
    %654 = tpu.matmul %653, %595, %cst_203 {dimension_numbers = #tpu.dot_dimension_numbers<[1], [1], [0], [0], [0, 0, 1, 0], [], []>} : vector<18x32xf32>, vector<18x32xf32>, vector<18x18xf32> -> vector<18x18xf32>
    %655 = arith.addf %654, %60 : vector<18x18xf32>
    %cst_204 = arith.constant dense<0xFF800000> : vector<18xf32>
    %656 = vector.multi_reduction <maximumf>, %655, %cst_204 [1] : vector<18x18xf32> to vector<18xf32>
    %657 = vector.shape_cast %656 : vector<18xf32> to vector<18x1xf32>
    %658 = vector.broadcast %657 : vector<18x1xf32> to vector<18x18xf32>
    %659 = arith.subf %655, %658 : vector<18x18xf32>
    %660 = math.exp %659 : vector<18x18xf32>
    %cst_205 = arith.constant dense<0.000000e+00> : vector<18xf32>
    %661 = vector.multi_reduction <add>, %660, %cst_205 [1] : vector<18x18xf32> to vector<18xf32>
    %662 = vector.shape_cast %661 : vector<18xf32> to vector<18x1xf32>
    %663 = tpu.reciprocal %662 {approx = true} : vector<18x1xf32> -> vector<18x1xf32>
    %664 = vector.broadcast %663 : vector<18x1xf32> to vector<18x18xf32>
    %665 = arith.mulf %660, %664 : vector<18x18xf32>
    %666 = vector.broadcast %118 : vector<1x32xf32> to vector<18x32xf32>
    %667 = arith.mulf %596, %666 : vector<18x32xf32>
    %cst_206 = arith.constant dense<0.000000e+00> : vector<18x32xf32>
    %668 = tpu.matmul %665, %667, %cst_206 {dimension_numbers = #tpu.dot_dimension_numbers<[1], [0], [0], [1], [0, 0, 1, 1], [], []>} : vector<18x18xf32>, vector<18x32xf32>, vector<18x32xf32> -> vector<18x32xf32>
    %669 = arith.addf %651, %668 : vector<18x32xf32>
    %cst_207 = arith.constant dense<0.000000e+00> : vector<18x24xf32>
    %670 = tpu.matmul %669, %562, %cst_207 {dimension_numbers = #tpu.dot_dimension_numbers<[1], [0], [0], [1], [0, 0, 1, 1], [], []>} : vector<18x32xf32>, vector<32x24xf32>, vector<18x24xf32> -> vector<18x24xf32>
    %671 = arith.addf %548, %670 : vector<18x24xf32>
    %672 = vector.broadcast %553 : vector<1x24xf32> to vector<18x24xf32>
    %673 = arith.addf %671, %672 : vector<18x24xf32>
    %cst_208 = arith.constant dense<0.000000e+00> : vector<18xf32>
    %674 = vector.multi_reduction <add>, %673, %cst_208 [1] : vector<18x24xf32> to vector<18xf32>
    %675 = vector.shape_cast %674 : vector<18xf32> to vector<18x1xf32>
    %cst_209 = arith.constant 2.400000e+01 : f32
    %676 = vector.broadcast %cst_209 : f32 to vector<18x1xf32>
    %677 = arith.divf %675, %676 : vector<18x1xf32>
    %678 = vector.broadcast %677 : vector<18x1xf32> to vector<18x24xf32>
    %679 = arith.subf %673, %678 : vector<18x24xf32>
    %680 = arith.mulf %679, %679 : vector<18x24xf32>
    %cst_210 = arith.constant dense<0.000000e+00> : vector<18xf32>
    %681 = vector.multi_reduction <add>, %680, %cst_210 [1] : vector<18x24xf32> to vector<18xf32>
    %682 = vector.shape_cast %681 : vector<18xf32> to vector<18x1xf32>
    %cst_211 = arith.constant 2.400000e+01 : f32
    %683 = vector.broadcast %cst_211 : f32 to vector<18x1xf32>
    %684 = arith.divf %682, %683 : vector<18x1xf32>
    %685 = vector.broadcast %677 : vector<18x1xf32> to vector<18x24xf32>
    %686 = arith.subf %673, %685 : vector<18x24xf32>
    %cst_212 = arith.constant 9.99999997E-7 : f32
    %687 = vector.broadcast %cst_212 : f32 to vector<18x1xf32>
    %688 = arith.addf %684, %687 : vector<18x1xf32>
    %689 = math.rsqrt %688 : vector<18x1xf32>
    %690 = vector.broadcast %689 : vector<18x1xf32> to vector<18x24xf32>
    %691 = arith.mulf %686, %690 : vector<18x24xf32>
    %692 = vector.broadcast %554 : vector<1x24xf32> to vector<18x24xf32>
    %693 = arith.mulf %691, %692 : vector<18x24xf32>
    %694 = vector.broadcast %555 : vector<1x24xf32> to vector<18x24xf32>
    %695 = arith.addf %693, %694 : vector<18x24xf32>
    %cst_213 = arith.constant dense<0.000000e+00> : vector<18x96xf32>
    %696 = tpu.matmul %695, %564, %cst_213 {dimension_numbers = #tpu.dot_dimension_numbers<[1], [0], [0], [1], [0, 0, 1, 1], [], []>} : vector<18x24xf32>, vector<24x96xf32>, vector<18x96xf32> -> vector<18x96xf32>
    %697 = vector.broadcast %558 : vector<1x96xf32> to vector<18x96xf32>
    %698 = arith.addf %696, %697 : vector<18x96xf32>
    %cst_214 = arith.constant 5.000000e-01 : f32
    %699 = vector.broadcast %cst_214 : f32 to vector<18x96xf32>
    %700 = arith.mulf %699, %698 : vector<18x96xf32>
    %cst_215 = arith.constant 0.707106769 : f32
    %701 = vector.broadcast %cst_215 : f32 to vector<18x96xf32>
    %702 = arith.mulf %698, %701 : vector<18x96xf32>
    %703 = math.absf %702 : vector<18x96xf32>
    %cst_216 = arith.constant 0.327591091 : f32
    %704 = vector.broadcast %cst_216 : f32 to vector<18x96xf32>
    %705 = arith.mulf %704, %703 : vector<18x96xf32>
    %cst_217 = arith.constant 1.000000e+00 : f32
    %706 = vector.broadcast %cst_217 : f32 to vector<18x96xf32>
    %707 = arith.addf %706, %705 : vector<18x96xf32>
    %cst_218 = arith.constant 1.000000e+00 : f32
    %708 = vector.broadcast %cst_218 : f32 to vector<18x96xf32>
    %709 = arith.divf %708, %707 : vector<18x96xf32>
    %cst_219 = arith.constant 1.06140542 : f32
    %710 = vector.broadcast %cst_219 : f32 to vector<18x96xf32>
    %711 = arith.mulf %710, %709 : vector<18x96xf32>
    %cst_220 = arith.constant 1.45315206 : f32
    %712 = vector.broadcast %cst_220 : f32 to vector<18x96xf32>
    %713 = arith.subf %711, %712 : vector<18x96xf32>
    %714 = arith.mulf %713, %709 : vector<18x96xf32>
    %cst_221 = arith.constant 1.42141378 : f32
    %715 = vector.broadcast %cst_221 : f32 to vector<18x96xf32>
    %716 = arith.addf %714, %715 : vector<18x96xf32>
    %717 = arith.mulf %716, %709 : vector<18x96xf32>
    %cst_222 = arith.constant 0.284496725 : f32
    %718 = vector.broadcast %cst_222 : f32 to vector<18x96xf32>
    %719 = arith.subf %717, %718 : vector<18x96xf32>
    %720 = arith.mulf %719, %709 : vector<18x96xf32>
    %cst_223 = arith.constant 0.254829586 : f32
    %721 = vector.broadcast %cst_223 : f32 to vector<18x96xf32>
    %722 = arith.addf %720, %721 : vector<18x96xf32>
    %723 = arith.mulf %722, %709 : vector<18x96xf32>
    %724 = arith.mulf %703, %703 : vector<18x96xf32>
    %cst_224 = arith.constant 0.000000e+00 : f32
    %725 = vector.broadcast %cst_224 : f32 to vector<18x96xf32>
    %726 = arith.subf %725, %724 : vector<18x96xf32>
    %727 = math.exp %726 : vector<18x96xf32>
    %728 = arith.mulf %723, %727 : vector<18x96xf32>
    %cst_225 = arith.constant 1.000000e+00 : f32
    %729 = vector.broadcast %cst_225 : f32 to vector<18x96xf32>
    %730 = arith.subf %729, %728 : vector<18x96xf32>
    %cst_226 = arith.constant 0.000000e+00 : f32
    %731 = vector.broadcast %cst_226 : f32 to vector<18x96xf32>
    %732 = arith.cmpf olt, %702, %731 : vector<18x96xf32>
    %cst_227 = arith.constant 0.000000e+00 : f32
    %733 = vector.broadcast %cst_227 : f32 to vector<18x96xf32>
    %734 = arith.subf %733, %730 : vector<18x96xf32>
    %735 = arith.select %732, %734, %730 : vector<18x96xi1>, vector<18x96xf32>
    %cst_228 = arith.constant 1.000000e+00 : f32
    %736 = vector.broadcast %cst_228 : f32 to vector<18x96xf32>
    %737 = arith.addf %736, %735 : vector<18x96xf32>
    %738 = arith.mulf %700, %737 : vector<18x96xf32>
    %cst_229 = arith.constant dense<0.000000e+00> : vector<18x24xf32>
    %739 = tpu.matmul %738, %566, %cst_229 {dimension_numbers = #tpu.dot_dimension_numbers<[1], [0], [0], [1], [0, 0, 1, 1], [], []>} : vector<18x96xf32>, vector<96x24xf32>, vector<18x24xf32> -> vector<18x24xf32>
    %740 = vector.broadcast %556 : vector<1x24xf32> to vector<18x24xf32>
    %741 = arith.addf %739, %740 : vector<18x24xf32>
    %742 = arith.addf %673, %741 : vector<18x24xf32>
    %c1_230 = arith.constant 1 : index
    %c0_231 = arith.constant 0 : index
    %c0_232 = arith.constant 0 : index
    %743 = vector.load %arg17[%c1_230, %c0_231, %c0_232] : memref<2x8x96xf32, #tpu.memory_space<vmem>>, vector<1x8x96xf32>
    %744 = vector.shape_cast %743 : vector<1x8x96xf32> to vector<8x96xf32>
    %745 = vector.extract_strided_slice %744 {offsets = [0, 0], sizes = [1, 24], strides = [1, 1]} : vector<8x96xf32> to vector<1x24xf32>
    %746 = vector.extract_strided_slice %744 {offsets = [1, 0], sizes = [1, 24], strides = [1, 1]} : vector<8x96xf32> to vector<1x24xf32>
    %747 = vector.extract_strided_slice %744 {offsets = [2, 0], sizes = [1, 24], strides = [1, 1]} : vector<8x96xf32> to vector<1x24xf32>
    %748 = vector.extract_strided_slice %744 {offsets = [3, 0], sizes = [1, 24], strides = [1, 1]} : vector<8x96xf32> to vector<1x24xf32>
    %749 = vector.extract_strided_slice %744 {offsets = [4, 0], sizes = [1, 24], strides = [1, 1]} : vector<8x96xf32> to vector<1x24xf32>
    %750 = vector.extract_strided_slice %744 {offsets = [5, 0], sizes = [1, 24], strides = [1, 1]} : vector<8x96xf32> to vector<1x24xf32>
    %751 = vector.extract_strided_slice %744 {offsets = [6, 0], sizes = [1, 96], strides = [1, 1]} : vector<8x96xf32> to vector<1x96xf32>
    %752 = vector.extract_strided_slice %744 {offsets = [7, 0], sizes = [1, 96], strides = [1, 1]} : vector<8x96xf32> to vector<1x96xf32>
    %c1_233 = arith.constant 1 : index
    %c0_234 = arith.constant 0 : index
    %c0_235 = arith.constant 0 : index
    %753 = vector.load %arg13[%c1_233, %c0_234, %c0_235] : memref<2x24x96xf32, #tpu.memory_space<vmem>>, vector<1x24x96xf32>
    %754 = vector.shape_cast %753 : vector<1x24x96xf32> to vector<24x96xf32>
    %c1_236 = arith.constant 1 : index
    %c0_237 = arith.constant 0 : index
    %c0_238 = arith.constant 0 : index
    %755 = vector.load %arg14[%c1_236, %c0_237, %c0_238] : memref<2x32x24xf32, #tpu.memory_space<vmem>>, vector<1x32x24xf32>
    %756 = vector.shape_cast %755 : vector<1x32x24xf32> to vector<32x24xf32>
    %c1_239 = arith.constant 1 : index
    %c0_240 = arith.constant 0 : index
    %c0_241 = arith.constant 0 : index
    %757 = vector.load %arg15[%c1_239, %c0_240, %c0_241] : memref<2x24x96xf32, #tpu.memory_space<vmem>>, vector<1x24x96xf32>
    %758 = vector.shape_cast %757 : vector<1x24x96xf32> to vector<24x96xf32>
    %c1_242 = arith.constant 1 : index
    %c0_243 = arith.constant 0 : index
    %c0_244 = arith.constant 0 : index
    %759 = vector.load %arg16[%c1_242, %c0_243, %c0_244] : memref<2x96x24xf32, #tpu.memory_space<vmem>>, vector<1x96x24xf32>
    %760 = vector.shape_cast %759 : vector<1x96x24xf32> to vector<96x24xf32>
    %cst_245 = arith.constant dense<0.000000e+00> : vector<18xf32>
    %761 = vector.multi_reduction <add>, %742, %cst_245 [1] : vector<18x24xf32> to vector<18xf32>
    %762 = vector.shape_cast %761 : vector<18xf32> to vector<18x1xf32>
    %cst_246 = arith.constant 2.400000e+01 : f32
    %763 = vector.broadcast %cst_246 : f32 to vector<18x1xf32>
    %764 = arith.divf %762, %763 : vector<18x1xf32>
    %765 = vector.broadcast %764 : vector<18x1xf32> to vector<18x24xf32>
    %766 = arith.subf %742, %765 : vector<18x24xf32>
    %767 = arith.mulf %766, %766 : vector<18x24xf32>
    %cst_247 = arith.constant dense<0.000000e+00> : vector<18xf32>
    %768 = vector.multi_reduction <add>, %767, %cst_247 [1] : vector<18x24xf32> to vector<18xf32>
    %769 = vector.shape_cast %768 : vector<18xf32> to vector<18x1xf32>
    %cst_248 = arith.constant 2.400000e+01 : f32
    %770 = vector.broadcast %cst_248 : f32 to vector<18x1xf32>
    %771 = arith.divf %769, %770 : vector<18x1xf32>
    %772 = vector.broadcast %764 : vector<18x1xf32> to vector<18x24xf32>
    %773 = arith.subf %742, %772 : vector<18x24xf32>
    %cst_249 = arith.constant 9.99999997E-7 : f32
    %774 = vector.broadcast %cst_249 : f32 to vector<18x1xf32>
    %775 = arith.addf %771, %774 : vector<18x1xf32>
    %776 = math.rsqrt %775 : vector<18x1xf32>
    %777 = vector.broadcast %776 : vector<18x1xf32> to vector<18x24xf32>
    %778 = arith.mulf %773, %777 : vector<18x24xf32>
    %779 = vector.broadcast %745 : vector<1x24xf32> to vector<18x24xf32>
    %780 = arith.mulf %778, %779 : vector<18x24xf32>
    %781 = vector.broadcast %746 : vector<1x24xf32> to vector<18x24xf32>
    %782 = arith.addf %780, %781 : vector<18x24xf32>
    %cst_250 = arith.constant dense<0.000000e+00> : vector<18x96xf32>
    %783 = tpu.matmul %782, %754, %cst_250 {dimension_numbers = #tpu.dot_dimension_numbers<[1], [0], [0], [1], [0, 0, 1, 1], [], []>} : vector<18x24xf32>, vector<24x96xf32>, vector<18x96xf32> -> vector<18x96xf32>
    %784 = vector.broadcast %751 : vector<1x96xf32> to vector<18x96xf32>
    %785 = arith.addf %783, %784 : vector<18x96xf32>
    %786 = vector.extract_strided_slice %785 {offsets = [0, 0], sizes = [18, 32], strides = [1, 1]} : vector<18x96xf32> to vector<18x32xf32>
    %cst_251 = arith.constant 0.408248305 : f32
    %787 = vector.broadcast %cst_251 : f32 to vector<18x32xf32>
    %788 = arith.mulf %786, %787 : vector<18x32xf32>
    %789 = vector.extract_strided_slice %785 {offsets = [0, 32], sizes = [18, 32], strides = [1, 1]} : vector<18x96xf32> to vector<18x32xf32>
    %790 = vector.extract_strided_slice %785 {offsets = [0, 64], sizes = [18, 32], strides = [1, 1]} : vector<18x96xf32> to vector<18x32xf32>
    %cst_252 = arith.constant 0.000000e+00 : f32
    %791 = vector.broadcast %cst_252 : f32 to vector<18x32xf32>
    %792 = vector.broadcast %97 : vector<1x32xf32> to vector<18x32xf32>
    %793 = arith.mulf %788, %792 : vector<18x32xf32>
    %cst_253 = arith.constant dense<0.000000e+00> : vector<18x18xf32>
    %794 = tpu.matmul %793, %789, %cst_253 {dimension_numbers = #tpu.dot_dimension_numbers<[1], [1], [0], [0], [0, 0, 1, 0], [], []>} : vector<18x32xf32>, vector<18x32xf32>, vector<18x18xf32> -> vector<18x18xf32>
    %795 = arith.addf %794, %60 : vector<18x18xf32>
    %cst_254 = arith.constant dense<0xFF800000> : vector<18xf32>
    %796 = vector.multi_reduction <maximumf>, %795, %cst_254 [1] : vector<18x18xf32> to vector<18xf32>
    %797 = vector.shape_cast %796 : vector<18xf32> to vector<18x1xf32>
    %798 = vector.broadcast %797 : vector<18x1xf32> to vector<18x18xf32>
    %799 = arith.subf %795, %798 : vector<18x18xf32>
    %800 = math.exp %799 : vector<18x18xf32>
    %cst_255 = arith.constant dense<0.000000e+00> : vector<18xf32>
    %801 = vector.multi_reduction <add>, %800, %cst_255 [1] : vector<18x18xf32> to vector<18xf32>
    %802 = vector.shape_cast %801 : vector<18xf32> to vector<18x1xf32>
    %803 = tpu.reciprocal %802 {approx = true} : vector<18x1xf32> -> vector<18x1xf32>
    %804 = vector.broadcast %803 : vector<18x1xf32> to vector<18x18xf32>
    %805 = arith.mulf %800, %804 : vector<18x18xf32>
    %806 = vector.broadcast %97 : vector<1x32xf32> to vector<18x32xf32>
    %807 = arith.mulf %790, %806 : vector<18x32xf32>
    %cst_256 = arith.constant dense<0.000000e+00> : vector<18x32xf32>
    %808 = tpu.matmul %805, %807, %cst_256 {dimension_numbers = #tpu.dot_dimension_numbers<[1], [0], [0], [1], [0, 0, 1, 1], [], []>} : vector<18x18xf32>, vector<18x32xf32>, vector<18x32xf32> -> vector<18x32xf32>
    %809 = arith.addf %791, %808 : vector<18x32xf32>
    %810 = vector.broadcast %104 : vector<1x32xf32> to vector<18x32xf32>
    %811 = arith.mulf %788, %810 : vector<18x32xf32>
    %cst_257 = arith.constant dense<0.000000e+00> : vector<18x18xf32>
    %812 = tpu.matmul %811, %789, %cst_257 {dimension_numbers = #tpu.dot_dimension_numbers<[1], [1], [0], [0], [0, 0, 1, 0], [], []>} : vector<18x32xf32>, vector<18x32xf32>, vector<18x18xf32> -> vector<18x18xf32>
    %813 = arith.addf %812, %60 : vector<18x18xf32>
    %cst_258 = arith.constant dense<0xFF800000> : vector<18xf32>
    %814 = vector.multi_reduction <maximumf>, %813, %cst_258 [1] : vector<18x18xf32> to vector<18xf32>
    %815 = vector.shape_cast %814 : vector<18xf32> to vector<18x1xf32>
    %816 = vector.broadcast %815 : vector<18x1xf32> to vector<18x18xf32>
    %817 = arith.subf %813, %816 : vector<18x18xf32>
    %818 = math.exp %817 : vector<18x18xf32>
    %cst_259 = arith.constant dense<0.000000e+00> : vector<18xf32>
    %819 = vector.multi_reduction <add>, %818, %cst_259 [1] : vector<18x18xf32> to vector<18xf32>
    %820 = vector.shape_cast %819 : vector<18xf32> to vector<18x1xf32>
    %821 = tpu.reciprocal %820 {approx = true} : vector<18x1xf32> -> vector<18x1xf32>
    %822 = vector.broadcast %821 : vector<18x1xf32> to vector<18x18xf32>
    %823 = arith.mulf %818, %822 : vector<18x18xf32>
    %824 = vector.broadcast %104 : vector<1x32xf32> to vector<18x32xf32>
    %825 = arith.mulf %790, %824 : vector<18x32xf32>
    %cst_260 = arith.constant dense<0.000000e+00> : vector<18x32xf32>
    %826 = tpu.matmul %823, %825, %cst_260 {dimension_numbers = #tpu.dot_dimension_numbers<[1], [0], [0], [1], [0, 0, 1, 1], [], []>} : vector<18x18xf32>, vector<18x32xf32>, vector<18x32xf32> -> vector<18x32xf32>
    %827 = arith.addf %809, %826 : vector<18x32xf32>
    %828 = vector.broadcast %111 : vector<1x32xf32> to vector<18x32xf32>
    %829 = arith.mulf %788, %828 : vector<18x32xf32>
    %cst_261 = arith.constant dense<0.000000e+00> : vector<18x18xf32>
    %830 = tpu.matmul %829, %789, %cst_261 {dimension_numbers = #tpu.dot_dimension_numbers<[1], [1], [0], [0], [0, 0, 1, 0], [], []>} : vector<18x32xf32>, vector<18x32xf32>, vector<18x18xf32> -> vector<18x18xf32>
    %831 = arith.addf %830, %60 : vector<18x18xf32>
    %cst_262 = arith.constant dense<0xFF800000> : vector<18xf32>
    %832 = vector.multi_reduction <maximumf>, %831, %cst_262 [1] : vector<18x18xf32> to vector<18xf32>
    %833 = vector.shape_cast %832 : vector<18xf32> to vector<18x1xf32>
    %834 = vector.broadcast %833 : vector<18x1xf32> to vector<18x18xf32>
    %835 = arith.subf %831, %834 : vector<18x18xf32>
    %836 = math.exp %835 : vector<18x18xf32>
    %cst_263 = arith.constant dense<0.000000e+00> : vector<18xf32>
    %837 = vector.multi_reduction <add>, %836, %cst_263 [1] : vector<18x18xf32> to vector<18xf32>
    %838 = vector.shape_cast %837 : vector<18xf32> to vector<18x1xf32>
    %839 = tpu.reciprocal %838 {approx = true} : vector<18x1xf32> -> vector<18x1xf32>
    %840 = vector.broadcast %839 : vector<18x1xf32> to vector<18x18xf32>
    %841 = arith.mulf %836, %840 : vector<18x18xf32>
    %842 = vector.broadcast %111 : vector<1x32xf32> to vector<18x32xf32>
    %843 = arith.mulf %790, %842 : vector<18x32xf32>
    %cst_264 = arith.constant dense<0.000000e+00> : vector<18x32xf32>
    %844 = tpu.matmul %841, %843, %cst_264 {dimension_numbers = #tpu.dot_dimension_numbers<[1], [0], [0], [1], [0, 0, 1, 1], [], []>} : vector<18x18xf32>, vector<18x32xf32>, vector<18x32xf32> -> vector<18x32xf32>
    %845 = arith.addf %827, %844 : vector<18x32xf32>
    %846 = vector.broadcast %118 : vector<1x32xf32> to vector<18x32xf32>
    %847 = arith.mulf %788, %846 : vector<18x32xf32>
    %cst_265 = arith.constant dense<0.000000e+00> : vector<18x18xf32>
    %848 = tpu.matmul %847, %789, %cst_265 {dimension_numbers = #tpu.dot_dimension_numbers<[1], [1], [0], [0], [0, 0, 1, 0], [], []>} : vector<18x32xf32>, vector<18x32xf32>, vector<18x18xf32> -> vector<18x18xf32>
    %849 = arith.addf %848, %60 : vector<18x18xf32>
    %cst_266 = arith.constant dense<0xFF800000> : vector<18xf32>
    %850 = vector.multi_reduction <maximumf>, %849, %cst_266 [1] : vector<18x18xf32> to vector<18xf32>
    %851 = vector.shape_cast %850 : vector<18xf32> to vector<18x1xf32>
    %852 = vector.broadcast %851 : vector<18x1xf32> to vector<18x18xf32>
    %853 = arith.subf %849, %852 : vector<18x18xf32>
    %854 = math.exp %853 : vector<18x18xf32>
    %cst_267 = arith.constant dense<0.000000e+00> : vector<18xf32>
    %855 = vector.multi_reduction <add>, %854, %cst_267 [1] : vector<18x18xf32> to vector<18xf32>
    %856 = vector.shape_cast %855 : vector<18xf32> to vector<18x1xf32>
    %857 = tpu.reciprocal %856 {approx = true} : vector<18x1xf32> -> vector<18x1xf32>
    %858 = vector.broadcast %857 : vector<18x1xf32> to vector<18x18xf32>
    %859 = arith.mulf %854, %858 : vector<18x18xf32>
    %860 = vector.broadcast %118 : vector<1x32xf32> to vector<18x32xf32>
    %861 = arith.mulf %790, %860 : vector<18x32xf32>
    %cst_268 = arith.constant dense<0.000000e+00> : vector<18x32xf32>
    %862 = tpu.matmul %859, %861, %cst_268 {dimension_numbers = #tpu.dot_dimension_numbers<[1], [0], [0], [1], [0, 0, 1, 1], [], []>} : vector<18x18xf32>, vector<18x32xf32>, vector<18x32xf32> -> vector<18x32xf32>
    %863 = arith.addf %845, %862 : vector<18x32xf32>
    %cst_269 = arith.constant dense<0.000000e+00> : vector<18x24xf32>
    %864 = tpu.matmul %863, %756, %cst_269 {dimension_numbers = #tpu.dot_dimension_numbers<[1], [0], [0], [1], [0, 0, 1, 1], [], []>} : vector<18x32xf32>, vector<32x24xf32>, vector<18x24xf32> -> vector<18x24xf32>
    %865 = arith.addf %742, %864 : vector<18x24xf32>
    %866 = vector.broadcast %747 : vector<1x24xf32> to vector<18x24xf32>
    %867 = arith.addf %865, %866 : vector<18x24xf32>
    %cst_270 = arith.constant dense<0.000000e+00> : vector<18xf32>
    %868 = vector.multi_reduction <add>, %867, %cst_270 [1] : vector<18x24xf32> to vector<18xf32>
    %869 = vector.shape_cast %868 : vector<18xf32> to vector<18x1xf32>
    %cst_271 = arith.constant 2.400000e+01 : f32
    %870 = vector.broadcast %cst_271 : f32 to vector<18x1xf32>
    %871 = arith.divf %869, %870 : vector<18x1xf32>
    %872 = vector.broadcast %871 : vector<18x1xf32> to vector<18x24xf32>
    %873 = arith.subf %867, %872 : vector<18x24xf32>
    %874 = arith.mulf %873, %873 : vector<18x24xf32>
    %cst_272 = arith.constant dense<0.000000e+00> : vector<18xf32>
    %875 = vector.multi_reduction <add>, %874, %cst_272 [1] : vector<18x24xf32> to vector<18xf32>
    %876 = vector.shape_cast %875 : vector<18xf32> to vector<18x1xf32>
    %cst_273 = arith.constant 2.400000e+01 : f32
    %877 = vector.broadcast %cst_273 : f32 to vector<18x1xf32>
    %878 = arith.divf %876, %877 : vector<18x1xf32>
    %879 = vector.broadcast %871 : vector<18x1xf32> to vector<18x24xf32>
    %880 = arith.subf %867, %879 : vector<18x24xf32>
    %cst_274 = arith.constant 9.99999997E-7 : f32
    %881 = vector.broadcast %cst_274 : f32 to vector<18x1xf32>
    %882 = arith.addf %878, %881 : vector<18x1xf32>
    %883 = math.rsqrt %882 : vector<18x1xf32>
    %884 = vector.broadcast %883 : vector<18x1xf32> to vector<18x24xf32>
    %885 = arith.mulf %880, %884 : vector<18x24xf32>
    %886 = vector.broadcast %748 : vector<1x24xf32> to vector<18x24xf32>
    %887 = arith.mulf %885, %886 : vector<18x24xf32>
    %888 = vector.broadcast %749 : vector<1x24xf32> to vector<18x24xf32>
    %889 = arith.addf %887, %888 : vector<18x24xf32>
    %cst_275 = arith.constant dense<0.000000e+00> : vector<18x96xf32>
    %890 = tpu.matmul %889, %758, %cst_275 {dimension_numbers = #tpu.dot_dimension_numbers<[1], [0], [0], [1], [0, 0, 1, 1], [], []>} : vector<18x24xf32>, vector<24x96xf32>, vector<18x96xf32> -> vector<18x96xf32>
    %891 = vector.broadcast %752 : vector<1x96xf32> to vector<18x96xf32>
    %892 = arith.addf %890, %891 : vector<18x96xf32>
    %cst_276 = arith.constant 5.000000e-01 : f32
    %893 = vector.broadcast %cst_276 : f32 to vector<18x96xf32>
    %894 = arith.mulf %893, %892 : vector<18x96xf32>
    %cst_277 = arith.constant 0.707106769 : f32
    %895 = vector.broadcast %cst_277 : f32 to vector<18x96xf32>
    %896 = arith.mulf %892, %895 : vector<18x96xf32>
    %897 = math.absf %896 : vector<18x96xf32>
    %cst_278 = arith.constant 0.327591091 : f32
    %898 = vector.broadcast %cst_278 : f32 to vector<18x96xf32>
    %899 = arith.mulf %898, %897 : vector<18x96xf32>
    %cst_279 = arith.constant 1.000000e+00 : f32
    %900 = vector.broadcast %cst_279 : f32 to vector<18x96xf32>
    %901 = arith.addf %900, %899 : vector<18x96xf32>
    %cst_280 = arith.constant 1.000000e+00 : f32
    %902 = vector.broadcast %cst_280 : f32 to vector<18x96xf32>
    %903 = arith.divf %902, %901 : vector<18x96xf32>
    %cst_281 = arith.constant 1.06140542 : f32
    %904 = vector.broadcast %cst_281 : f32 to vector<18x96xf32>
    %905 = arith.mulf %904, %903 : vector<18x96xf32>
    %cst_282 = arith.constant 1.45315206 : f32
    %906 = vector.broadcast %cst_282 : f32 to vector<18x96xf32>
    %907 = arith.subf %905, %906 : vector<18x96xf32>
    %908 = arith.mulf %907, %903 : vector<18x96xf32>
    %cst_283 = arith.constant 1.42141378 : f32
    %909 = vector.broadcast %cst_283 : f32 to vector<18x96xf32>
    %910 = arith.addf %908, %909 : vector<18x96xf32>
    %911 = arith.mulf %910, %903 : vector<18x96xf32>
    %cst_284 = arith.constant 0.284496725 : f32
    %912 = vector.broadcast %cst_284 : f32 to vector<18x96xf32>
    %913 = arith.subf %911, %912 : vector<18x96xf32>
    %914 = arith.mulf %913, %903 : vector<18x96xf32>
    %cst_285 = arith.constant 0.254829586 : f32
    %915 = vector.broadcast %cst_285 : f32 to vector<18x96xf32>
    %916 = arith.addf %914, %915 : vector<18x96xf32>
    %917 = arith.mulf %916, %903 : vector<18x96xf32>
    %918 = arith.mulf %897, %897 : vector<18x96xf32>
    %cst_286 = arith.constant 0.000000e+00 : f32
    %919 = vector.broadcast %cst_286 : f32 to vector<18x96xf32>
    %920 = arith.subf %919, %918 : vector<18x96xf32>
    %921 = math.exp %920 : vector<18x96xf32>
    %922 = arith.mulf %917, %921 : vector<18x96xf32>
    %cst_287 = arith.constant 1.000000e+00 : f32
    %923 = vector.broadcast %cst_287 : f32 to vector<18x96xf32>
    %924 = arith.subf %923, %922 : vector<18x96xf32>
    %cst_288 = arith.constant 0.000000e+00 : f32
    %925 = vector.broadcast %cst_288 : f32 to vector<18x96xf32>
    %926 = arith.cmpf olt, %896, %925 : vector<18x96xf32>
    %cst_289 = arith.constant 0.000000e+00 : f32
    %927 = vector.broadcast %cst_289 : f32 to vector<18x96xf32>
    %928 = arith.subf %927, %924 : vector<18x96xf32>
    %929 = arith.select %926, %928, %924 : vector<18x96xi1>, vector<18x96xf32>
    %cst_290 = arith.constant 1.000000e+00 : f32
    %930 = vector.broadcast %cst_290 : f32 to vector<18x96xf32>
    %931 = arith.addf %930, %929 : vector<18x96xf32>
    %932 = arith.mulf %894, %931 : vector<18x96xf32>
    %cst_291 = arith.constant dense<0.000000e+00> : vector<18x24xf32>
    %933 = tpu.matmul %932, %760, %cst_291 {dimension_numbers = #tpu.dot_dimension_numbers<[1], [0], [0], [1], [0, 0, 1, 1], [], []>} : vector<18x96xf32>, vector<96x24xf32>, vector<18x24xf32> -> vector<18x24xf32>
    %934 = vector.broadcast %750 : vector<1x24xf32> to vector<18x24xf32>
    %935 = arith.addf %933, %934 : vector<18x24xf32>
    %936 = arith.addf %867, %935 : vector<18x24xf32>
    %cst_292 = arith.constant dense<0.000000e+00> : vector<18xf32>
    %937 = vector.multi_reduction <add>, %936, %cst_292 [1] : vector<18x24xf32> to vector<18xf32>
    %938 = vector.shape_cast %937 : vector<18xf32> to vector<18x1xf32>
    %cst_293 = arith.constant 2.400000e+01 : f32
    %939 = vector.broadcast %cst_293 : f32 to vector<18x1xf32>
    %940 = arith.divf %938, %939 : vector<18x1xf32>
    %941 = vector.broadcast %940 : vector<18x1xf32> to vector<18x24xf32>
    %942 = arith.subf %936, %941 : vector<18x24xf32>
    %943 = arith.mulf %942, %942 : vector<18x24xf32>
    %cst_294 = arith.constant dense<0.000000e+00> : vector<18xf32>
    %944 = vector.multi_reduction <add>, %943, %cst_294 [1] : vector<18x24xf32> to vector<18xf32>
    %945 = vector.shape_cast %944 : vector<18xf32> to vector<18x1xf32>
    %cst_295 = arith.constant 2.400000e+01 : f32
    %946 = vector.broadcast %cst_295 : f32 to vector<18x1xf32>
    %947 = arith.divf %945, %946 : vector<18x1xf32>
    %948 = vector.broadcast %940 : vector<18x1xf32> to vector<18x24xf32>
    %949 = arith.subf %936, %948 : vector<18x24xf32>
    %cst_296 = arith.constant 9.99999997E-7 : f32
    %950 = vector.broadcast %cst_296 : f32 to vector<18x1xf32>
    %951 = arith.addf %947, %950 : vector<18x1xf32>
    %952 = math.rsqrt %951 : vector<18x1xf32>
    %953 = vector.broadcast %952 : vector<18x1xf32> to vector<18x24xf32>
    %954 = arith.mulf %949, %953 : vector<18x24xf32>
    %955 = vector.broadcast %13 : vector<1x24xf32> to vector<18x24xf32>
    %956 = arith.mulf %954, %955 : vector<18x24xf32>
    %957 = vector.broadcast %14 : vector<1x24xf32> to vector<18x24xf32>
    %958 = arith.addf %956, %957 : vector<18x24xf32>
    %c0_297 = arith.constant 0 : index
    %c0_298 = arith.constant 0 : index
    %959 = vector.load %arg6[%c0_297, %c0_298] : memref<24x144xf32, #tpu.memory_space<vmem>>, vector<24x144xf32>
    %cst_299 = arith.constant dense<0.000000e+00> : vector<18x144xf32>
    %960 = tpu.matmul %958, %959, %cst_299 {dimension_numbers = #tpu.dot_dimension_numbers<[1], [0], [0], [1], [0, 0, 1, 1], [], []>} : vector<18x24xf32>, vector<24x144xf32>, vector<18x144xf32> -> vector<18x144xf32>
    %961 = vector.broadcast %15 : vector<1x144xf32> to vector<18x144xf32>
    %962 = arith.addf %960, %961 : vector<18x144xf32>
    %cst_300 = arith.constant dense<0.000000e+00> : vector<18xf32>
    %963 = vector.multi_reduction <add>, %1, %cst_300 [1] : vector<18x144xf32> to vector<18xf32>
    %964 = vector.shape_cast %963 : vector<18xf32> to vector<18x1xf32>
    %cst_301 = arith.constant 1.440000e+02 : f32
    %965 = vector.broadcast %cst_301 : f32 to vector<18x1xf32>
    %966 = arith.divf %964, %965 : vector<18x1xf32>
    %967 = vector.broadcast %966 : vector<18x1xf32> to vector<18x144xf32>
    %968 = arith.subf %1, %967 : vector<18x144xf32>
    %969 = arith.mulf %968, %968 : vector<18x144xf32>
    %cst_302 = arith.constant dense<0.000000e+00> : vector<18xf32>
    %970 = vector.multi_reduction <add>, %969, %cst_302 [1] : vector<18x144xf32> to vector<18xf32>
    %971 = vector.shape_cast %970 : vector<18xf32> to vector<18x1xf32>
    %cst_303 = arith.constant 1.440000e+02 : f32
    %972 = vector.broadcast %cst_303 : f32 to vector<18x1xf32>
    %973 = arith.divf %971, %972 : vector<18x1xf32>
    %974 = vector.broadcast %966 : vector<18x1xf32> to vector<18x144xf32>
    %975 = arith.subf %1, %974 : vector<18x144xf32>
    %cst_304 = arith.constant 9.99999997E-7 : f32
    %976 = vector.broadcast %cst_304 : f32 to vector<18x1xf32>
    %977 = arith.addf %973, %976 : vector<18x1xf32>
    %978 = math.rsqrt %977 : vector<18x1xf32>
    %979 = vector.broadcast %978 : vector<18x1xf32> to vector<18x144xf32>
    %980 = arith.mulf %975, %979 : vector<18x144xf32>
    %981 = arith.subf %962, %980 : vector<18x144xf32>
    %982 = arith.mulf %981, %981 : vector<18x144xf32>
    %cst_305 = arith.constant 0.000000e+00 : f32
    %983 = vector.shape_cast %32 : vector<18x1xi1> to vector<18x1xi1>
    %984 = vector.broadcast %983 : vector<18x1xi1> to vector<18x144xi1>
    %985 = vector.broadcast %cst_305 : f32 to vector<18x144xf32>
    %986 = arith.select %984, %982, %985 : vector<18x144xi1>, vector<18x144xf32>
    %987 = vector.shape_cast %986 : vector<18x144xf32> to vector<1x18x144xf32>
    %cst_306 = arith.constant dense<0.000000e+00> : vector<1xf32>
    %988 = vector.multi_reduction <add>, %987, %cst_306 [1, 2] : vector<1x18x144xf32> to vector<1xf32>
    %989 = vector.shape_cast %988 : vector<1xf32> to vector<1x1x1xf32>
    %990 = vector.extract %989[0, 0, 0] : f32 from vector<1x1x1xf32>
    %cst_307 = arith.constant 0.000000e+00 : f32
    %991 = vector.broadcast %cst_307 : f32 to vector<1x8x128xf32>
    %992 = vector.broadcast %990 : f32 to vector<1x8x128xf32>
    %993 = arith.addf %991, %992 : vector<1x8x128xf32>
    %c0_308 = arith.constant 0 : index
    %c0_309 = arith.constant 0 : index
    %c0_310 = arith.constant 0 : index
    %994 = vector.load %arg18[%c0_308, %c0_309, %c0_310] : memref<1x8x128xf32, #tpu.memory_space<vmem>>, vector<1x8x128xf32>
    tpu.vector_store %arg18[%c0_308, %c0_309, %c0_310], %993 {strides = array<i32>} : memref<1x8x128xf32, #tpu.memory_space<vmem>>, vector<1x8x128xf32>,
    return
  }
  func.func @transform_0(%arg0: i32) -> (i32, i32, i32) {
    %c0_i32 = arith.constant 0 : i32
    %c0_i32_0 = arith.constant 0 : i32
    %c0_i32_1 = arith.constant 0 : i32
    return %arg0, %c0_i32, %c0_i32_0 : i32, i32, i32
  }
  func.func @transform_1(%arg0: i32) -> (i32, i32, i32) {
    %c0_i32 = arith.constant 0 : i32
    %c0_i32_0 = arith.constant 0 : i32
    %c0_i32_1 = arith.constant 0 : i32
    return %arg0, %c0_i32, %c0_i32_0 : i32, i32, i32
  }
  func.func @transform_2(%arg0: i32) -> (i32, i32, i32) {
    %c0_i32 = arith.constant 0 : i32
    %c0_i32_0 = arith.constant 0 : i32
    %c0_i32_1 = arith.constant 0 : i32
    return %arg0, %c0_i32, %c0_i32_0 : i32, i32, i32
  }
  func.func @transform_3(%arg0: i32) -> (i32, i32) {
    %c0_i32 = arith.constant 0 : i32
    %c0_i32_0 = arith.constant 0 : i32
    %c0_i32_1 = arith.constant 0 : i32
    return %c0_i32, %c0_i32_0 : i32, i32
  }
  func.func @transform_4(%arg0: i32) -> (i32, i32) {
    %c0_i32 = arith.constant 0 : i32
    %c0_i32_0 = arith.constant 0 : i32
    %c0_i32_1 = arith.constant 0 : i32
    return %c0_i32, %c0_i32_0 : i32, i32
  }
  func.func @transform_5(%arg0: i32) -> (i32, i32) {
    %c0_i32 = arith.constant 0 : i32
    %c0_i32_0 = arith.constant 0 : i32
    %c0_i32_1 = arith.constant 0 : i32
    return %c0_i32, %c0_i32_0 : i32, i32
  }
  func.func @transform_6(%arg0: i32) -> (i32, i32) {
    %c0_i32 = arith.constant 0 : i32
    %c0_i32_0 = arith.constant 0 : i32
    %c0_i32_1 = arith.constant 0 : i32
    return %c0_i32, %c0_i32_0 : i32, i32
  }
  func.func @transform_7(%arg0: i32) -> (i32, i32, i32) {
    %c0_i32 = arith.constant 0 : i32
    %c0_i32_0 = arith.constant 0 : i32
    %c0_i32_1 = arith.constant 0 : i32
    %c0_i32_2 = arith.constant 0 : i32
    return %c0_i32, %c0_i32_0, %c0_i32_1 : i32, i32, i32
  }
  func.func @transform_8(%arg0: i32) -> (i32, i32, i32) {
    %c0_i32 = arith.constant 0 : i32
    %c0_i32_0 = arith.constant 0 : i32
    %c0_i32_1 = arith.constant 0 : i32
    %c0_i32_2 = arith.constant 0 : i32
    return %c0_i32, %c0_i32_0, %c0_i32_1 : i32, i32, i32
  }
  func.func @transform_9(%arg0: i32) -> (i32, i32, i32) {
    %c0_i32 = arith.constant 0 : i32
    %c0_i32_0 = arith.constant 0 : i32
    %c0_i32_1 = arith.constant 0 : i32
    %c0_i32_2 = arith.constant 0 : i32
    return %c0_i32, %c0_i32_0, %c0_i32_1 : i32, i32, i32
  }
  func.func @transform_10(%arg0: i32) -> (i32, i32, i32) {
    %c0_i32 = arith.constant 0 : i32
    %c0_i32_0 = arith.constant 0 : i32
    %c0_i32_1 = arith.constant 0 : i32
    %c0_i32_2 = arith.constant 0 : i32
    return %c0_i32, %c0_i32_0, %c0_i32_1 : i32, i32, i32
  }
  func.func @transform_11(%arg0: i32) -> (i32, i32, i32) {
    %c0_i32 = arith.constant 0 : i32
    %c0_i32_0 = arith.constant 0 : i32
    %c0_i32_1 = arith.constant 0 : i32
    %c0_i32_2 = arith.constant 0 : i32
    return %c0_i32, %c0_i32_0, %c0_i32_1 : i32, i32, i32
  }
  func.func @transform_12(%arg0: i32) -> (i32, i32, i32) {
    %c0_i32 = arith.constant 0 : i32
    %c0_i32_0 = arith.constant 0 : i32
    %c0_i32_1 = arith.constant 0 : i32
    %c0_i32_2 = arith.constant 0 : i32
    return %c0_i32, %c0_i32_0, %c0_i32_1 : i32, i32, i32
  }
  func.func @transform_13(%arg0: i32) -> (i32, i32, i32) {
    %c0_i32 = arith.constant 0 : i32
    %c0_i32_0 = arith.constant 0 : i32
    %c0_i32_1 = arith.constant 0 : i32
    %c0_i32_2 = arith.constant 0 : i32
    return %c0_i32, %c0_i32_0, %c0_i32_1 : i32, i32, i32
  }
  func.func @transform_14(%arg0: i32) -> (i32, i32, i32) {
    %c0_i32 = arith.constant 0 : i32
    %c0_i32_0 = arith.constant 0 : i32
    %c0_i32_1 = arith.constant 0 : i32
    %c0_i32_2 = arith.constant 0 : i32
    return %c0_i32, %c0_i32_0, %c0_i32_1 : i32, i32, i32
  }
  func.func @transform_15(%arg0: i32) -> (i32, i32, i32) {
    %c0_i32 = arith.constant 0 : i32
    %c0_i32_0 = arith.constant 0 : i32
    %c0_i32_1 = arith.constant 0 : i32
    %c0_i32_2 = arith.constant 0 : i32
    return %c0_i32, %c0_i32_0, %c0_i32_1 : i32, i32, i32
  }
  func.func @transform_16(%arg0: i32) -> (i32, i32, i32) {
    %c0_i32 = arith.constant 0 : i32
    %c0_i32_0 = arith.constant 0 : i32
    %c0_i32_1 = arith.constant 0 : i32
    %c0_i32_2 = arith.constant 0 : i32
    return %c0_i32, %c0_i32_0, %c0_i32_1 : i32, i32, i32
  }
  func.func @transform_17(%arg0: i32) -> (i32, i32, i32) {
    %c0_i32 = arith.constant 0 : i32
    %c0_i32_0 = arith.constant 0 : i32
    %c0_i32_1 = arith.constant 0 : i32
    return %arg0, %c0_i32, %c0_i32_0 : i32, i32, i32
  }
}

</mosaic_0001>

<llo_original>
// kernel: mae3d_forward.1
$region0: #{mae3d_forward.1}
  #allocation0 [shape = 'u32[]', space=smem, size = 0x4, offset = 0x4, fixed_abs, tag = 'smem constant byte address 0x4 - core index']
  #allocation1 [shape = 'u32[144,128]{1,0:T(1,128)}', space=vmem, size = 0x12000, scoped, tag = 'internal scratch']
  %s0 = inlined_call_operand.vmem [shape: f32[1,18,144], index: 0, kind: input, shape index: {}]
  %s1 = inlined_call_operand.vmem [shape: f32[1,18,48], index: 1, kind: input, shape index: {}]
  %s2 = inlined_call_operand.vmem [shape: f32[1,18,24], index: 2, kind: input, shape index: {}]
  %s3 = inlined_call_operand.vmem [shape: f32[144,48], index: 3, kind: input, shape index: {}]
  %s4 = inlined_call_operand.vmem [shape: f32[48,24], index: 4, kind: input, shape index: {}]
  %s5 = inlined_call_operand.vmem [shape: f32[24,144], index: 5, kind: input, shape index: {}]
  %s6 = inlined_call_operand.vmem [shape: f32[9,144], index: 6, kind: input, shape index: {}]
  %s7 = inlined_call_operand.vmem [shape: f32[2,48,192], index: 7, kind: input, shape index: {}]
  %s8 = inlined_call_operand.vmem [shape: f32[2,64,48], index: 8, kind: input, shape index: {}]
  %s9 = inlined_call_operand.vmem [shape: f32[2,48,192], index: 9, kind: input, shape index: {}]
  %s10 = inlined_call_operand.vmem [shape: f32[2,192,48], index: 10, kind: input, shape index: {}]
  %s11 = inlined_call_operand.vmem [shape: f32[2,8,192], index: 11, kind: input, shape index: {}]
  %s12 = inlined_call_operand.vmem [shape: f32[2,24,96], index: 12, kind: input, shape index: {}]
  %s13 = inlined_call_operand.vmem [shape: f32[2,32,24], index: 13, kind: input, shape index: {}]
  %s14 = inlined_call_operand.vmem [shape: f32[2,24,96], index: 14, kind: input, shape index: {}]
  %s15 = inlined_call_operand.vmem [shape: f32[2,96,24], index: 15, kind: input, shape index: {}]
  %s16 = inlined_call_operand.vmem [shape: f32[2,8,96], index: 16, kind: input, shape index: {}]
  %s17 = inlined_call_operand.vmem [shape: f32[1,8,128], index: 17, kind: output, shape index: {}]
  %s18 = sld [smem:[#allocation0]]
  $region78: #{mae3d_forward.1} parent=0
    _
  %s20 = ssub.s32 1, %s18
  %s21 = scalar_select 0, %s20, %s18
  // Predicated region
  $region2: #{mae3d_forward.1} parent=0 // pred_check
    _
  $region3: #{mae3d_forward.1} parent=0 // pred_check_branch
    %23 = sbr.rel (0) target = $region5
  $region4: #{mae3d_forward.1} parent=0 // pred_region
    _
  $region5: #{mae3d_forward.1} parent=0 // pred_fallthru
    _
  // Predicated region
  $region6: #{mae3d_forward.1} parent=0 // pred_check
    _
  $region7: #{mae3d_forward.1} parent=0 // pred_check_branch
    %25 = sbr.rel (0) target = $region9
  $region8: #{mae3d_forward.1} parent=0 // pred_region
    _
  $region9: #{mae3d_forward.1} parent=0 // pred_fallthru
    _
  // Predicated region
  $region10: #{mae3d_forward.1} parent=0 // pred_check
    _
  $region11: #{mae3d_forward.1} parent=0 // pred_check_branch
    %27 = sbr.rel (0) target = $region13
  $region12: #{mae3d_forward.1} parent=0 // pred_region
    _
  $region13: #{mae3d_forward.1} parent=0 // pred_fallthru
    _
  // Predicated region
  $region14: #{mae3d_forward.1} parent=0 // pred_check
    _
  $region15: #{mae3d_forward.1} parent=0 // pred_check_branch
    %29 = sbr.rel (0) target = $region17
  $region16: #{mae3d_forward.1} parent=0 // pred_region
    _
  $region17: #{mae3d_forward.1} parent=0 // pred_fallthru
    _
  // Predicated region
  $region18: #{mae3d_forward.1} parent=0 // pred_check
    _
  $region19: #{mae3d_forward.1} parent=0 // pred_check_branch
    %31 = sbr.rel (0) target = $region21
  $region20: #{mae3d_forward.1} parent=0 // pred_region
    _
  $region21: #{mae3d_forward.1} parent=0 // pred_fallthru
    _
  // Predicated region
  $region22: #{mae3d_forward.1} parent=0 // pred_check
    _
  $region23: #{mae3d_forward.1} parent=0 // pred_check_branch
    %33 = sbr.rel (0) target = $region25
  $region24: #{mae3d_forward.1} parent=0 // pred_region
    _
  $region25: #{mae3d_forward.1} parent=0 // pred_fallthru
    _
  // Predicated region
  $region26: #{mae3d_forward.1} parent=0 // pred_check
    _
  $region27: #{mae3d_forward.1} parent=0 // pred_check_branch
    %35 = sbr.rel (0) target = $region29
  $region28: #{mae3d_forward.1} parent=0 // pred_region
    _
  $region29: #{mae3d_forward.1} parent=0 // pred_fallthru
    _
  // Predicated region
  $region30: #{mae3d_forward.1} parent=0 // pred_check
    _
  $region31: #{mae3d_forward.1} parent=0 // pred_check_branch
    %37 = sbr.rel (0) target = $region33
  $region32: #{mae3d_forward.1} parent=0 // pred_region
    _
  $region33: #{mae3d_forward.1} parent=0 // pred_fallthru
    _
  // Predicated region
  $region34: #{mae3d_forward.1} parent=0 // pred_check
    _
  $region35: #{mae3d_forward.1} parent=0 // pred_check_branch
    %39 = sbr.rel (0) target = $region37
  $region36: #{mae3d_forward.1} parent=0 // pred_region
    _
  $region37: #{mae3d_forward.1} parent=0 // pred_fallthru
    _
  // Predicated region
  $region38: #{mae3d_forward.1} parent=0 // pred_check
    _
  $region39: #{mae3d_forward.1} parent=0 // pred_check_branch
    %41 = sbr.rel (0) target = $region41
  $region40: #{mae3d_forward.1} parent=0 // pred_region
    _
  $region41: #{mae3d_forward.1} parent=0 // pred_fallthru
    _
  // Predicated region
  $region42: #{mae3d_forward.1} parent=0 // pred_check
    _
  $region43: #{mae3d_forward.1} parent=0 // pred_check_branch
    %43 = sbr.rel (0) target = $region45
  $region44: #{mae3d_forward.1} parent=0 // pred_region
    _
  $region45: #{mae3d_forward.1} parent=0 // pred_fallthru
    _
  // Predicated region
  $region46: #{mae3d_forward.1} parent=0 // pred_check
    _
  $region47: #{mae3d_forward.1} parent=0 // pred_check_branch
    %45 = sbr.rel (0) target = $region49
  $region48: #{mae3d_forward.1} parent=0 // pred_region
    _
  $region49: #{mae3d_forward.1} parent=0 // pred_fallthru
    _
  // Predicated region
  $region50: #{mae3d_forward.1} parent=0 // pred_check
    _
  $region51: #{mae3d_forward.1} parent=0 // pred_check_branch
    %47 = sbr.rel (0) target = $region53
  $region52: #{mae3d_forward.1} parent=0 // pred_region
    _
  $region53: #{mae3d_forward.1} parent=0 // pred_fallthru
    _
  // Predicated region
  $region54: #{mae3d_forward.1} parent=0 // pred_check
    _
  $region55: #{mae3d_forward.1} parent=0 // pred_check_branch
    %49 = sbr.rel (0) target = $region57
  $region56: #{mae3d_forward.1} parent=0 // pred_region
    _
  $region57: #{mae3d_forward.1} parent=0 // pred_fallthru
    _
  // Predicated region
  $region58: #{mae3d_forward.1} parent=0 // pred_check
    _
  $region59: #{mae3d_forward.1} parent=0 // pred_check_branch
    %51 = sbr.rel (0) target = $region61
  $region60: #{mae3d_forward.1} parent=0 // pred_region
    _
  $region61: #{mae3d_forward.1} parent=0 // pred_fallthru
    _
  // Predicated region
  $region62: #{mae3d_forward.1} parent=0 // pred_check
    _
  $region63: #{mae3d_forward.1} parent=0 // pred_check_branch
    %53 = sbr.rel (0) target = $region65
  $region64: #{mae3d_forward.1} parent=0 // pred_region
    _
  $region65: #{mae3d_forward.1} parent=0 // pred_fallthru
    _
  // Predicated region
  $region66: #{mae3d_forward.1} parent=0 // pred_check
    _
  $region67: #{mae3d_forward.1} parent=0 // pred_check_branch
    %55 = sbr.rel (0) target = $region69
  $region68: #{mae3d_forward.1} parent=0 // pred_region
    _
  $region69: #{mae3d_forward.1} parent=0 // pred_fallthru
    _
  %v56 = vld [vmem:[%s0] sm:$0xff]
  %v57 = vld [vmem:[%s0 + $0x8] sm:$0xff]
  %v58 = vld [vmem:[%s0 + $0x10] sm:$0xff]
  %v59 = vld [vmem:[%s0 + $0x18] sm:$0xff]
  %v60 = vld [vmem:[%s0 + $0x20] sm:$0x3]
  %v61 = vld [vmem:[%s0 + $0x28] sm:$0x3]
  %v62 = vld [vmem:[%s1] sm:$0xff]
  %v63 = vld [vmem:[%s1 + $0x8] sm:$0xff]
  %v64 = vld [vmem:[%s1 + $0x10] sm:$0x3]
  %v65 = vld [vmem:[%s2] sm:$0xff]
  %v66 = vld [vmem:[%s2 + $0x8] sm:$0xff]
  %v67 = vld [vmem:[%s2 + $0x10] sm:$0x3]
  %v68 = vld [vmem:[%s6] sm:$0xff]
  %v69 = vld [vmem:[%s6 + $0x10] sm:$0x1]
  %v70 = vld [vmem:[%s6 + $0x18] sm:$0x1]
  %v71 = vlaneseq
  %v72 = vshrl.u32 %v71, 7
  %v73 = vadd.s32 %v72, 8
  %v74 = vadd.s32 %v72, 16
  %v75 = vcvt.s32.f32 %v72
  %v76 = vcvt.s32.f32 %v73
  %v77 = vcvt.s32.f32 %v74
  %v78 = vadd.f32 %v75, 0.5
  %v79 = vadd.f32 %v76, 0.5
  %v80 = vadd.f32 %v77, 0.5
  %v81 = vmul.f32 %v78, 0.11111111
  %v82 = vmul.f32 %v79, 0.11111111
  %v83 = vmul.f32 %v80, 0.11111111
  %v84 = vfloor.f32 %v81
  %v85 = vfloor.f32 %v82
  %v86 = vfloor.f32 %v83
  %v87 = vmul.f32 %v84, 9.0
  %v88 = vmul.f32 %v85, 9.0
  %v89 = vmul.f32 %v86, 9.0
  %v90 = vsub.f32 %v75, %v87
  %v91 = vsub.f32 %v76, %v88
  %v92 = vsub.f32 %v77, %v89
  %vm93 = vcmp.eq.f32.partialorder %v90, 0.0
  %vm94 = vcmp.eq.f32.partialorder %v91, 0.0
  %vm95 = vcmp.eq.f32.partialorder %v92, 0.0
  %vm96 = vcmp.lt.f32.partialorder %v90, 3.0
  %vm97 = vcmp.lt.f32.partialorder %v91, 3.0
  %vm98 = vcmp.lt.f32.partialorder %v92, 3.0
  %vm99 = vcmp.ge.f32.partialorder %v90, 3.0
  %vm100 = vcmp.ge.f32.partialorder %v91, 3.0
  %vm101 = vcmp.ge.f32.partialorder %v92, 3.0
  %v102 = vlaneseq
  %v103 = vand.u32 %v102, 127
  %v104 = vcvt.s32.f32 %v103
  %v105 = vadd.f32 %v104, 0.5
  %v106 = vmul.f32 %v105, 0.11111111
  %v107 = vfloor.f32 %v106
  %v108 = vmul.f32 %v107, 9.0
  %v109 = vsub.f32 %v104, %v108
  %vm110 = vcmp.eq.f32.partialorder %v84, %v107
  %vm111 = vcmp.eq.f32.partialorder %v85, %v107
  %vm112 = vcmp.eq.f32.partialorder %v86, %v107
  %vm113 = vcmp.lt.f32.partialorder %v109, 3.0
  %vm114 = vmand %vm110, %vm113
  %vm115 = vmand %vm111, %vm113
  %vm116 = vmand %vm112, %vm113
  %v117 = vsel %vm114, 0.0, -1e+30
  %v118 = vsel %vm115, 0.0, -1e+30
  %v119 = vsel %vm116, 0.0, -1e+30
  %v120 = vsel %vm110, 0.0, -1e+30
  %v121 = vsel %vm111, 0.0, -1e+30
  %v122 = vsel %vm112, 0.0, -1e+30
  %vm123 = vcmp.ge.s32.totalorder %v103, 0
  %vm124 = vcmp.lt.s32.totalorder %v103, 12
  %vm125 = vmand %vm123, %vm124
  %v126 = vsel %vm125, 1, 0
  %v127 = vcvt.s32.f32 %v126
  %vm128 = vcmp.ge.s32.totalorder %v103, 12
  %vm129 = vcmp.lt.s32.totalorder %v103, 24
  %vm130 = vmand %vm128, %vm129
  %v131 = vsel %vm130, 1, 0
  %v132 = vcvt.s32.f32 %v131
  %vm133 = vcmp.ge.s32.totalorder %v103, 24
  %vm134 = vcmp.lt.s32.totalorder %v103, 36
  %vm135 = vmand %vm133, %vm134
  %v136 = vsel %vm135, 1, 0
  %v137 = vcvt.s32.f32 %v136
  %vm138 = vcmp.ge.s32.totalorder %v103, 36
  %vm139 = vcmp.lt.s32.totalorder %v103, 48
  %vm140 = vmand %vm138, %vm139
  %v141 = vsel %vm140, 1, 0
  %v142 = vcvt.s32.f32 %v141
  %vm143 = vcmp.lt.s32.totalorder %v103, 6
  %vm144 = vmand %vm123, %vm143
  %v145 = vsel %vm144, 1, 0
  %v146 = vcvt.s32.f32 %v145
  %vm147 = vcmp.ge.s32.totalorder %v103, 6
  %vm148 = vmand %vm147, %vm124
  %v149 = vsel %vm148, 1, 0
  %v150 = vcvt.s32.f32 %v149
  %vm151 = vcmp.lt.s32.totalorder %v103, 18
  %vm152 = vmand %vm128, %vm151
  %v153 = vsel %vm152, 1, 0
  %v154 = vcvt.s32.f32 %v153
  %vm155 = vcmp.ge.s32.totalorder %v103, 18
  %vm156 = vmand %vm155, %vm129
  %v157 = vsel %vm156, 1, 0
  %v158 = vcvt.s32.f32 %v157
  %v159 = vld [vmem:[%s3] sm:$0xff]
  %v160 = vld [vmem:[%s3 + $0x8] sm:$0xff]
  %v161 = vld [vmem:[%s3 + $0x10] sm:$0xff]
  %v162 = vld [vmem:[%s3 + $0x18] sm:$0xff]
  %v163 = vld [vmem:[%s3 + $0x20] sm:$0xff]
  %v164 = vld [vmem:[%s3 + $0x28] sm:$0xff]
  %v165 = vld [vmem:[%s3 + $0x30] sm:$0xff]
  %v166 = vld [vmem:[%s3 + $0x38] sm:$0xff]
  %v167 = vld [vmem:[%s3 + $0x40] sm:$0xff]
  %v168 = vld [vmem:[%s3 + $0x48] sm:$0xff]
  %v169 = vld [vmem:[%s3 + $0x50] sm:$0xff]
  %v170 = vld [vmem:[%s3 + $0x58] sm:$0xff]
  %v171 = vld [vmem:[%s3 + $0x60] sm:$0xff]
  %v172 = vld [vmem:[%s3 + $0x68] sm:$0xff]
  %v173 = vld [vmem:[%s3 + $0x70] sm:$0xff]
  %v174 = vld [vmem:[%s3 + $0x78] sm:$0xff]
  %v175 = vld [vmem:[%s3 + $0x80] sm:$0xff]
  %v176 = vld [vmem:[%s3 + $0x88] sm:$0xff]
  %v177 = vlaneseq
  %v178 = vshrl.u32 %v177, 7
  %v179 = vsub.s32 0, %v178
  %v180 = vrot.slane %v68, %v179
  %vm181 = vcmask 130048
  %v183 = vsel %vm181, %v57, 0
  %v186 = vsel %vm181, %v59, 0
  %v189 = vsel %vm181, %v61, 0
  %191 = vmatprep.subr.mxu0 0.0
  %192 = vmatpush1.msra.mxu0 %v159
  %193 = vmatprep.subr.mxu0 0.0
  %194 = vmatpush1.msra.mxu0 %v160
  %195 = vmatprep.subr.mxu0 0.0
  %196 = vmatpush1.msra.mxu0 %v161
  %197 = vmatprep.subr.mxu0 0.0
  %198 = vmatpush1.msra.mxu0 %v162
  %199 = vmatprep.subr.mxu0 0.0
  %200 = vmatpush1.msra.mxu0 %v163
  %201 = vmatprep.subr.mxu0 0.0
  %202 = vmatpush1.msra.mxu0 %v164
  %203 = vmatprep.subr.mxu0 0.0
  %204 = vmatpush1.msra.mxu0 %v165
  %205 = vmatprep.subr.mxu0 0.0
  %206 = vmatpush1.msra.mxu0 %v166
  %207 = vmatprep.subr.mxu0 0.0
  %208 = vmatpush1.msra.mxu0 %v167
  %209 = vmatprep.subr.mxu0 0.0
  %210 = vmatpush1.msra.mxu0 %v168
  %211 = vmatprep.subr.mxu0 0.0
  %212 = vmatpush1.msra.mxu0 %v169
  %213 = vmatprep.subr.mxu0 0.0
  %214 = vmatpush1.msra.mxu0 %v170
  %215 = vmatprep.subr.mxu0 0.0
  %216 = vmatpush1.msra.mxu0 %v171
  %217 = vmatprep.subr.mxu0 0.0
  %218 = vmatpush1.msra.mxu0 %v172
  %219 = vmatprep.subr.mxu0 0.0
  %220 = vmatpush1.msra.mxu0 %v173
  %221 = vmatprep.subr.mxu0 0.0
  %222 = vmatpush1.msra.mxu0 %v174
  %223 = vmatprep.subr.mxu0 0.0
  %224 = vmatpush1.msra.mxu0 %v175
  %225 = vmatprep.subr.mxu0 0.0
  %226 = vmatpush1.msra.mxu0 %v176
  %227 = vmatprep.subr.mxu0 0.0
  %228 = vmatpush1.msra.mxu0 0.0
  %229 = vmatprep.subr.mxu0 0.0
  %230 = vmatpush1.msra.mxu0 0.0
  %231 = vmatprep.subr.mxu0 0.0
  %232 = vmatpush1.msra.mxu0 0.0
  %233 = vmatprep.subr.mxu0 0.0
  %234 = vmatpush1.msra.mxu0 0.0
  %235 = vmatprep.subr.mxu0 0.0
  %236 = vmatpush1.msra.mxu0 0.0
  %237 = vmatprep.subr.mxu0 0.0
  %238 = vmatpush1.msra.mxu0 0.0
  %239 = vmatprep.subr.mxu0 0.0
  %240 = vmatpush1.msra.mxu0 0.0
  %241 = vmatprep.subr.mxu0 0.0
  %242 = vmatpush1.msra.mxu0 0.0
  %243 = vmatprep.subr.mxu0 0.0
  %244 = vmatpush1.msra.mxu0 0.0
  %245 = vmatprep.subr.mxu0 0.0
  %246 = vmatpush1.msra.mxu0 0.0
  %247 = vmatprep.subr.mxu0 0.0
  %248 = vmatpush1.msra.mxu0 0.0
  %249 = vmatprep.subr.mxu0 0.0
  %250 = vmatpush1.msra.mxu0 0.0
  %251 = vmatprep.subr.mxu0 0.0
  %252 = vmatpush1.msra.mxu0 0.0
  %253 = vmatprep.subr.mxu0 0.0
  %254 = vmatpush1.msra.mxu0 0.0
  %255 = vmatprep.mubr.f32.mxu0 %v183
  %256 = vmatmul.mubr.f32.gmra.mrb[0].mxu0 %v56
  %v257 = vpop.f32.mrb[0].mxu0
  %v258 = vadd.f32 %v180, %v257
  %v259 = vpop.f32.mrb[0].mxu0
  %260 = vmatprep.mubr.f32.mxu0 %v186
  %261 = vmatmul.mubr.f32.gmra.mrb[0].mxu0 %v58
  %v262 = vpop.f32.mrb[0].mxu0
  %v263 = vadd.f32 %v180, %v262
  %v264 = vpop.f32.mrb[0].mxu0
  %265 = vmatprep.mubr.f32.mxu0 %v189
  %266 = vmatmul.mubr.f32.gmra.mrb[0].mxu0 %v60
  %v267 = vpop.f32.mrb[0].mxu0
  %v268 = vadd.f32 %v180, %v267
  %v269 = vpop.f32.mrb[0].mxu0
  %270 = vdwg.mxu0
  %v271 = vsel %vm93, 1, 0
  %v272 = vsel %vm94, 1, 0
  %v273 = vsel %vm95, 1, 0
  %vm274 = vcmp.eq.s32.totalorder %v271, 1
  %vm275 = vcmp.eq.s32.totalorder %v272, 1
  %vm276 = vcmp.eq.s32.totalorder %v273, 1
  %v277 = vlaneseq
  %v278 = vshrl.u32 %v277, 7
  %v279 = vsub.s32 1, %v278
  %v280 = vrot.slane %v68, %v279
  %v281 = vsel %vm274, %v280, %v258
  %v282 = vsel %vm275, %v280, %v263
  %v283 = vsel %vm276, %v280, %v268
  %v284 = vadd.f32 %v281, %v62
  %v285 = vadd.f32 %v282, %v63
  %v286 = vadd.f32 %v283, %v64
  %v287 = vld [vmem:[%s11] sm:$0xff]
  %v288 = vld [vmem:[%s11 + $0x8] sm:$0xff]
  %v289 = vld [vmem:[%s7] sm:$0xff]
  %v290 = vld [vmem:[%s7 + $0x8] sm:$0xff]
  %v291 = vld [vmem:[%s7 + $0x10] sm:$0xff]
  %v292 = vld [vmem:[%s7 + $0x18] sm:$0xff]
  %v293 = vld [vmem:[%s7 + $0x20] sm:$0xff]
  %v294 = vld [vmem:[%s7 + $0x28] sm:$0xff]
  %v295 = vld [vmem:[%s7 + $0x30] sm:$0xff]
  %v296 = vld [vmem:[%s7 + $0x38] sm:$0xff]
  %v297 = vld [vmem:[%s7 + $0x40] sm:$0xff]
  %v298 = vld [vmem:[%s7 + $0x48] sm:$0xff]
  %v299 = vld [vmem:[%s7 + $0x50] sm:$0xff]
  %v300 = vld [vmem:[%s7 + $0x58] sm:$0xff]
  %v301 = vld [vmem:[%s8] sm:$0xff]
  %v302 = vld [vmem:[%s8 + $0x8] sm:$0xff]
  %v303 = vld [vmem:[%s8 + $0x10] sm:$0xff]
  %v304 = vld [vmem:[%s8 + $0x18] sm:$0xff]
  %v305 = vld [vmem:[%s8 + $0x20] sm:$0xff]
  %v306 = vld [vmem:[%s8 + $0x28] sm:$0xff]
  %v307 = vld [vmem:[%s8 + $0x30] sm:$0xff]
  %v308 = vld [vmem:[%s8 + $0x38] sm:$0xff]
  %v309 = vld [vmem:[%s9] sm:$0xff]
  %v310 = vld [vmem:[%s9 + $0x8] sm:$0xff]
  %v311 = vld [vmem:[%s9 + $0x10] sm:$0xff]
  %v312 = vld [vmem:[%s9 + $0x18] sm:$0xff]
  %v313 = vld [vmem:[%s9 + $0x20] sm:$0xff]
  %v314 = vld [vmem:[%s9 + $0x28] sm:$0xff]
  %v315 = vld [vmem:[%s9 + $0x30] sm:$0xff]
  %v316 = vld [vmem:[%s9 + $0x38] sm:$0xff]
  %v317 = vld [vmem:[%s9 + $0x40] sm:$0xff]
  %v318 = vld [vmem:[%s9 + $0x48] sm:$0xff]
  %v319 = vld [vmem:[%s9 + $0x50] sm:$0xff]
  %v320 = vld [vmem:[%s9 + $0x58] sm:$0xff]
  %v321 = vld [vmem:[%s10] sm:$0xff]
  %v322 = vld [vmem:[%s10 + $0x8] sm:$0xff]
  %v323 = vld [vmem:[%s10 + $0x10] sm:$0xff]
  %v324 = vld [vmem:[%s10 + $0x18] sm:$0xff]
  %v325 = vld [vmem:[%s10 + $0x20] sm:$0xff]
  %v326 = vld [vmem:[%s10 + $0x28] sm:$0xff]
  %v327 = vld [vmem:[%s10 + $0x30] sm:$0xff]
  %v328 = vld [vmem:[%s10 + $0x38] sm:$0xff]
  %v329 = vld [vmem:[%s10 + $0x40] sm:$0xff]
  %v330 = vld [vmem:[%s10 + $0x48] sm:$0xff]
  %v331 = vld [vmem:[%s10 + $0x50] sm:$0xff]
  %v332 = vld [vmem:[%s10 + $0x58] sm:$0xff]
  %v333 = vld [vmem:[%s10 + $0x60] sm:$0xff]
  %v334 = vld [vmem:[%s10 + $0x68] sm:$0xff]
  %v335 = vld [vmem:[%s10 + $0x70] sm:$0xff]
  %v336 = vld [vmem:[%s10 + $0x78] sm:$0xff]
  %v337 = vld [vmem:[%s10 + $0x80] sm:$0xff]
  %v338 = vld [vmem:[%s10 + $0x88] sm:$0xff]
  %v339 = vld [vmem:[%s10 + $0x90] sm:$0xff]
  %v340 = vld [vmem:[%s10 + $0x98] sm:$0xff]
  %v341 = vld [vmem:[%s10 + $0xa0] sm:$0xff]
  %v342 = vld [vmem:[%s10 + $0xa8] sm:$0xff]
  %v343 = vld [vmem:[%s10 + $0xb0] sm:$0xff]
  %v344 = vld [vmem:[%s10 + $0xb8] sm:$0xff]
  %vm345 = vcmask 392192
  %v346 = vsel %vm345, %v284, 0.0
  %347 = vadd.xlane.f32.xlu0 %v346
  %v348 = vpop.xlane.xlu0 %347
  %v349 = vsel %vm345, %v285, 0.0
  %350 = vadd.xlane.f32.xlu0 %v349
  %v351 = vpop.xlane.xlu0 %350
  %vm352 = vcmask 386048
  %v353 = vsel %vm352, %v286, 0.0
  %354 = vadd.xlane.f32.xlu0 %v353
  %v355 = vpop.xlane.xlu0 %354
  %v356 = vrcp.pop 48.0
  %v357 = vmul.f32 %v348, %v356
  %v358 = vmul.f32 %v351, %v356
  %v359 = vmul.f32 %v355, %v356
  %v360 = vsub.f32 %v284, %v357
  %v361 = vsub.f32 %v285, %v358
  %v362 = vsub.f32 %v286, %v359
  %v363 = vmul.f32 %v360, %v360
  %v364 = vmul.f32 %v361, %v361
  %v365 = vmul.f32 %v362, %v362
  %v366 = vsel %vm345, %v363, 0.0
  %367 = vadd.xlane.f32.xlu0 %v366
  %v368 = vpop.xlane.xlu0 %367
  %v369 = vsel %vm345, %v364, 0.0
  %370 = vadd.xlane.f32.xlu0 %v369
  %v371 = vpop.xlane.xlu0 %370
  %v372 = vsel %vm352, %v365, 0.0
  %373 = vadd.xlane.f32.xlu0 %v372
  %v374 = vpop.xlane.xlu0 %373
  %v375 = vmul.f32 %v368, %v356
  %v376 = vmul.f32 %v371, %v356
  %v377 = vmul.f32 %v374, %v356
  %v378 = vadd.f32 %v375, 1e-06
  %v379 = vadd.f32 %v376, 1e-06
  %v380 = vadd.f32 %v377, 1e-06
  %v381 = vrsqrt.pop %v378
  %v382 = vrsqrt.pop %v379
  %v383 = vrsqrt.pop %v380
  %v384 = vmul.f32 %v360, %v381
  %v385 = vmul.f32 %v361, %v382
  %v386 = vmul.f32 %v362, %v383
  %v387 = vlaneseq
  %v388 = vshrl.u32 %v387, 7
  %v389 = vsub.s32 0, %v388
  %v390 = vrot.slane %v287, %v389
  %v391 = vmul.f32 %v384, %v390
  %v392 = vmul.f32 %v385, %v390
  %v393 = vmul.f32 %v386, %v390
  %v394 = vlaneseq
  %v395 = vshrl.u32 %v394, 7
  %v396 = vsub.s32 1, %v395
  %v397 = vrot.slane %v287, %v396
  %v398 = vadd.f32 %v391, %v397
  %v399 = vadd.f32 %v392, %v397
  %v400 = vadd.f32 %v393, %v397
  %v401 = vlaneseq
  %v402 = vshrl.u32 %v401, 7
  %v403 = vsub.s32 6, %v402
  %v404 = vrot.slane %v287, %v403
  %v405 = vlaneseq
  %v406 = vshrl.u32 %v405, 7
  %v407 = vsub.s32 6, %v406
  %v408 = vrot.slane %v288, %v407
  %v410 = vsel %vm345, %v398, 0
  %v413 = vsel %vm345, %v399, 0
  %v416 = vsel %vm345, %v400, 0
  %418 = vmatprep.subr.mxu0 %v290
  %419 = vmatpush1.msra.mxu0 %v289
  %420 = vmatprep.subr.mxu0 %v292
  %421 = vmatpush1.msra.mxu0 %v291
  %422 = vmatprep.subr.mxu0 %v294
  %423 = vmatpush1.msra.mxu0 %v293
  %424 = vmatprep.subr.mxu0 %v296
  %425 = vmatpush1.msra.mxu0 %v295
  %426 = vmatprep.subr.mxu0 %v298
  %427 = vmatpush1.msra.mxu0 %v297
  %428 = vmatprep.subr.mxu0 %v300
  %429 = vmatpush1.msra.mxu0 %v299
  %430 = vmatprep.subr.mxu0 0.0
  %431 = vmatpush1.msra.mxu0 0.0
  %432 = vmatprep.subr.mxu0 0.0
  %433 = vmatpush1.msra.mxu0 0.0
  %434 = vmatprep.subr.mxu0 0.0
  %435 = vmatpush1.msra.mxu0 0.0
  %436 = vmatprep.subr.mxu0 0.0
  %437 = vmatpush1.msra.mxu0 0.0
  %438 = vmatprep.subr.mxu0 0.0
  %439 = vmatpush1.msra.mxu0 0.0
  %440 = vmatprep.subr.mxu0 0.0
  %441 = vmatpush1.msra.mxu0 0.0
  %442 = vmatprep.subr.mxu0 0.0
  %443 = vmatpush1.msra.mxu0 0.0
  %444 = vmatprep.subr.mxu0 0.0
  %445 = vmatpush1.msra.mxu0 0.0
  %446 = vmatprep.subr.mxu0 0.0
  %447 = vmatpush1.msra.mxu0 0.0
  %448 = vmatprep.subr.mxu0 0.0
  %449 = vmatpush1.msra.mxu0 0.0
  %450 = vmatprep.subr.mxu0 0.0
  %451 = vmatpush1.msra.mxu0 0.0
  %452 = vmatprep.subr.mxu0 0.0
  %453 = vmatpush1.msra.mxu0 0.0
  %454 = vmatprep.subr.mxu0 0.0
  %455 = vmatpush1.msra.mxu0 0.0
  %456 = vmatprep.subr.mxu0 0.0
  %457 = vmatpush1.msra.mxu0 0.0
  %458 = vmatprep.subr.mxu0 0.0
  %459 = vmatpush1.msra.mxu0 0.0
  %460 = vmatprep.subr.mxu0 0.0
  %461 = vmatpush1.msra.mxu0 0.0
  %462 = vmatprep.subr.mxu0 0.0
  %463 = vmatpush1.msra.mxu0 0.0
  %464 = vmatprep.subr.mxu0 0.0
  %465 = vmatpush1.msra.mxu0 0.0
  %466 = vmatprep.subr.mxu0 0.0
  %467 = vmatpush1.msra.mxu0 0.0
  %468 = vmatprep.subr.mxu0 0.0
  %469 = vmatpush1.msra.mxu0 0.0
  %470 = vmatprep.subr.mxu0 0.0
  %471 = vmatpush1.msra.mxu0 0.0
  %472 = vmatprep.subr.mxu0 0.0
  %473 = vmatpush1.msra.mxu0 0.0
  %474 = vmatprep.subr.mxu0 0.0
  %475 = vmatpush1.msra.mxu0 0.0
  %476 = vmatprep.subr.mxu0 0.0
  %477 = vmatpush1.msra.mxu0 0.0
  %478 = vmatprep.subr.mxu0 0.0
  %479 = vmatpush1.msra.mxu0 0.0
  %480 = vmatprep.subr.mxu0 0.0
  %481 = vmatpush1.msra.mxu0 0.0
  %482 = vmatprep.mubr.f32.mxu0 0.0
  %483 = vmatmul.mubr.f32.gmra.mrb[0].mxu0 %v410
  %v484 = vpop.f32.mrb[0].mxu0
  %v485 = vadd.f32 %v404, %v484
  %v486 = vpop.f32.mrb[0].mxu0
  %v487 = vadd.f32 %v408, %v486
  %488 = vmatprep.mubr.f32.mxu0 0.0
  %489 = vmatmul.mubr.f32.gmra.mrb[0].mxu0 %v413
  %v490 = vpop.f32.mrb[0].mxu0
  %v491 = vadd.f32 %v404, %v490
  %v492 = vpop.f32.mrb[0].mxu0
  %v493 = vadd.f32 %v408, %v492
  %494 = vmatprep.mubr.f32.mxu0 0.0
  %495 = vmatmul.mubr.f32.gmra.mrb[0].mxu0 %v416
  %v496 = vpop.f32.mrb[0].mxu0
  %v497 = vadd.f32 %v404, %v496
  %v498 = vpop.f32.mrb[0].mxu0
  %v499 = vadd.f32 %v408, %v498
  %500 = vdwg.mxu0
  %v501 = vmul.f32 %v485, 0.28867513
  %v502 = vmul.f32 %v491, 0.28867513
  %v503 = vmul.f32 %v497, 0.28867513
  %v504 = vmul.f32 %v501, %v127
  %v505 = vmul.f32 %v502, %v127
  %v506 = vmul.f32 %v503, %v127
  %510 = vrot.lane.b32.xlu0 %v485, 64
  %v511 = vpop.permute.xlu0 %510
  %512 = vrot.lane.b32.xlu0 %v491, 64
  %v513 = vpop.permute.xlu0 %512
  %514 = vrot.lane.b32.xlu0 %v497, 64
  %v515 = vpop.permute.xlu0 %514
  %vm516 = vcmask 523264
  %v518 = vsel %vm516, %v504, 0
  %v521 = vsel %vm516, %v505, 0
  %v524 = vsel %vm516, %v506, 0
  %v526 = vsel %vm516, %v511, 0
  %v528 = vsel %vm516, %v513, 0
  %v530 = vsel %vm516, %v515, 0
  %532 = vmatprep.subr.mxu0 0.0
  %533 = vmatpush1.xpose.msra.mxu0 %v526
  %534 = vmatprep.subr.mxu0 0.0
  %535 = vmatpush1.xpose.msra.mxu0 %v528
  %536 = vmatprep.subr.mxu0 0.0
  %537 = vmatpush1.xpose.msra.mxu0 %v530
  %538 = vmatprep.subr.mxu0 0.0
  %539 = vmatpush1.xpose.msra.mxu0 0.0
  %540 = vmatprep.subr.mxu0 0.0
  %541 = vmatpush1.xpose.msra.mxu0 0.0
  %542 = vmatprep.subr.mxu0 0.0
  %543 = vmatpush1.xpose.msra.mxu0 0.0
  %544 = vmatprep.subr.mxu0 0.0
  %545 = vmatpush1.xpose.msra.mxu0 0.0
  %546 = vmatprep.subr.mxu0 0.0
  %547 = vmatpush1.xpose.msra.mxu0 0.0
  %548 = vmatprep.subr.mxu0 0.0
  %549 = vmatpush1.xpose.msra.mxu0 0.0
  %550 = vmatprep.subr.mxu0 0.0
  %551 = vmatpush1.xpose.msra.mxu0 0.0
  %552 = vmatprep.subr.mxu0 0.0
  %553 = vmatpush1.xpose.msra.mxu0 0.0
  %554 = vmatprep.subr.mxu0 0.0
  %555 = vmatpush1.xpose.msra.mxu0 0.0
  %556 = vmatprep.subr.mxu0 0.0
  %557 = vmatpush1.xpose.msra.mxu0 0.0
  %558 = vmatprep.subr.mxu0 0.0
  %559 = vmatpush1.xpose.msra.mxu0 0.0
  %560 = vmatprep.subr.mxu0 0.0
  %561 = vmatpush1.xpose.msra.mxu0 0.0
  %562 = vmatprep.subr.mxu0 0.0
  %563 = vmatpush1.xpose.msra.mxu0 0.0
  %564 = vmatprep.subr.mxu0 0.0
  %565 = vmatpush1.xpose.msra.mxu0 0.0
  %566 = vmatprep.subr.mxu0 0.0
  %567 = vmatpush1.xpose.msra.mxu0 0.0
  %568 = vmatprep.subr.mxu0 0.0
  %569 = vmatpush1.xpose.msra.mxu0 0.0
  %570 = vmatprep.subr.mxu0 0.0
  %571 = vmatpush1.xpose.msra.mxu0 0.0
  %572 = vmatprep.subr.mxu0 0.0
  %573 = vmatpush1.xpose.msra.mxu0 0.0
  %574 = vmatprep.subr.mxu0 0.0
  %575 = vmatpush1.xpose.msra.mxu0 0.0
  %576 = vmatprep.subr.mxu0 0.0
  %577 = vmatpush1.xpose.msra.mxu0 0.0
  %578 = vmatprep.subr.mxu0 0.0
  %579 = vmatpush1.xpose.msra.mxu0 0.0
  %580 = vmatprep.subr.mxu0 0.0
  %581 = vmatpush1.xpose.msra.mxu0 0.0
  %582 = vmatprep.subr.mxu0 0.0
  %583 = vmatpush1.xpose.msra.mxu0 0.0
  %584 = vmatprep.subr.mxu0 0.0
  %585 = vmatpush1.xpose.msra.mxu0 0.0
  %586 = vmatprep.subr.mxu0 0.0
  %587 = vmatpush1.xpose.msra.mxu0 0.0
  %588 = vmatprep.subr.mxu0 0.0
  %589 = vmatpush1.xpose.msra.mxu0 0.0
  %590 = vmatprep.subr.mxu0 0.0
  %591 = vmatpush1.xpose.msra.mxu0 0.0
  %592 = vmatprep.subr.mxu0 0.0
  %593 = vmatpush1.xpose.msra.mxu0 0.0
  %594 = vmatprep.subr.mxu0 0.0
  %595 = vmatpush1.xpose.msra.mxu0 0.0
  %596 = vmatprep.mubr.f32.mxu0 0.0
  %597 = vmatmul.mubr.f32.gmra.mrb[0].mxu0 %v518
  %v598 = vpop.f32.mrb[0].mxu0
  %v599 = vadd.f32 %v117, %v598
  %v600 = vpop.f32.mrb[0].mxu0
  %601 = vmatprep.mubr.f32.mxu0 0.0
  %602 = vmatmul.mubr.f32.gmra.mrb[0].mxu0 %v521
  %v603 = vpop.f32.mrb[0].mxu0
  %v604 = vadd.f32 %v118, %v603
  %v605 = vpop.f32.mrb[0].mxu0
  %606 = vmatprep.mubr.f32.mxu0 0.0
  %607 = vmatmul.mubr.f32.gmra.mrb[0].mxu0 %v524
  %v608 = vpop.f32.mrb[0].mxu0
  %v609 = vadd.f32 %v119, %v608
  %v610 = vpop.f32.mrb[0].mxu0
  %611 = vdwg.mxu0
  %vm612 = vcmask 146432
  %v613 = vsel %vm612, %v599, -inf
  %614 = vmax.xlane.f32.xlu0 %v613
  %v615 = vpop.xlane.xlu0 %614
  %v616 = vsel %vm612, %v604, -inf
  %617 = vmax.xlane.f32.xlu0 %v616
  %v618 = vpop.xlane.xlu0 %617
  %vm619 = vcmask 140288
  %v620 = vsel %vm619, %v609, -inf
  %621 = vmax.xlane.f32.xlu0 %v620
  %v622 = vpop.xlane.xlu0 %621
  %v623 = vsub.f32 %v599, %v615
  %v624 = vsub.f32 %v604, %v618
  %v625 = vsub.f32 %v609, %v622
  %v626 = vmul.f32 %v623, 1.442695
  %v627 = vpow.pop %v626
  %v628 = vmul.f32 %v624, 1.442695
  %v629 = vpow.pop %v628
  %v630 = vmul.f32 %v625, 1.442695
  %v631 = vpow.pop %v630
  %v632 = vsel %vm612, %v627, 0.0
  %633 = vadd.xlane.f32.xlu0 %v632
  %v634 = vpop.xlane.xlu0 %633
  %v635 = vsel %vm612, %v629, 0.0
  %636 = vadd.xlane.f32.xlu0 %v635
  %v637 = vpop.xlane.xlu0 %636
  %v638 = vsel %vm619, %v631, 0.0
  %639 = vadd.xlane.f32.xlu0 %v638
  %v640 = vpop.xlane.xlu0 %639
  %v641 = vrcp.pop %v634
  %v642 = vrcp.pop %v637
  %v643 = vrcp.pop %v640
  %v644 = vmul.f32 %v627, %v641
  %v645 = vmul.f32 %v629, %v642
  %v646 = vmul.f32 %v631, %v643
  %v647 = vmul.f32 %v487, %v127
  %v648 = vmul.f32 %v493, %v127
  %v649 = vmul.f32 %v499, %v127
  %v650 = vmul.f32 %v501, %v132
  %v651 = vmul.f32 %v502, %v132
  %v652 = vmul.f32 %v503, %v132
  %v654 = vsel %vm516, %v650, 0
  %v657 = vsel %vm516, %v651, 0
  %v660 = vsel %vm516, %v652, 0
  %662 = vmatprep.subr.mxu0 0.0
  %663 = vmatpush1.xpose.msra.mxu0 %v526
  %664 = vmatprep.subr.mxu0 0.0
  %665 = vmatpush1.xpose.msra.mxu0 %v528
  %666 = vmatprep.subr.mxu0 0.0
  %667 = vmatpush1.xpose.msra.mxu0 %v530
  %668 = vmatprep.subr.mxu0 0.0
  %669 = vmatpush1.xpose.msra.mxu0 0.0
  %670 = vmatprep.subr.mxu0 0.0
  %671 = vmatpush1.xpose.msra.mxu0 0.0
  %672 = vmatprep.subr.mxu0 0.0
  %673 = vmatpush1.xpose.msra.mxu0 0.0
  %674 = vmatprep.subr.mxu0 0.0
  %675 = vmatpush1.xpose.msra.mxu0 0.0
  %676 = vmatprep.subr.mxu0 0.0
  %677 = vmatpush1.xpose.msra.mxu0 0.0
  %678 = vmatprep.subr.mxu0 0.0
  %679 = vmatpush1.xpose.msra.mxu0 0.0
  %680 = vmatprep.subr.mxu0 0.0
  %681 = vmatpush1.xpose.msra.mxu0 0.0
  %682 = vmatprep.subr.mxu0 0.0
  %683 = vmatpush1.xpose.msra.mxu0 0.0
  %684 = vmatprep.subr.mxu0 0.0
  %685 = vmatpush1.xpose.msra.mxu0 0.0
  %686 = vmatprep.subr.mxu0 0.0
  %687 = vmatpush1.xpose.msra.mxu0 0.0
  %688 = vmatprep.subr.mxu0 0.0
  %689 = vmatpush1.xpose.msra.mxu0 0.0
  %690 = vmatprep.subr.mxu0 0.0
  %691 = vmatpush1.xpose.msra.mxu0 0.0
  %692 = vmatprep.subr.mxu0 0.0
  %693 = vmatpush1.xpose.msra.mxu0 0.0
  %694 = vmatprep.subr.mxu0 0.0
  %695 = vmatpush1.xpose.msra.mxu0 0.0
  %696 = vmatprep.subr.mxu0 0.0
  %697 = vmatpush1.xpose.msra.mxu0 0.0
  %698 = vmatprep.subr.mxu0 0.0
  %699 = vmatpush1.xpose.msra.mxu0 0.0
  %700 = vmatprep.subr.mxu0 0.0
  %701 = vmatpush1.xpose.msra.mxu0 0.0
  %702 = vmatprep.subr.mxu0 0.0
  %703 = vmatpush1.xpose.msra.mxu0 0.0
  %704 = vmatprep.subr.mxu0 0.0
  %705 = vmatpush1.xpose.msra.mxu0 0.0
  %706 = vmatprep.subr.mxu0 0.0
  %707 = vmatpush1.xpose.msra.mxu0 0.0
  %708 = vmatprep.subr.mxu0 0.0
  %709 = vmatpush1.xpose.msra.mxu0 0.0
  %710 = vmatprep.subr.mxu0 0.0
  %711 = vmatpush1.xpose.msra.mxu0 0.0
  %712 = vmatprep.subr.mxu0 0.0
  %713 = vmatpush1.xpose.msra.mxu0 0.0
  %714 = vmatprep.subr.mxu0 0.0
  %715 = vmatpush1.xpose.msra.mxu0 0.0
  %716 = vmatprep.subr.mxu0 0.0
  %717 = vmatpush1.xpose.msra.mxu0 0.0
  %718 = vmatprep.subr.mxu0 0.0
  %719 = vmatpush1.xpose.msra.mxu0 0.0
  %720 = vmatprep.subr.mxu0 0.0
  %721 = vmatpush1.xpose.msra.mxu0 0.0
  %722 = vmatprep.subr.mxu0 0.0
  %723 = vmatpush1.xpose.msra.mxu0 0.0
  %724 = vmatprep.subr.mxu0 0.0
  %725 = vmatpush1.xpose.msra.mxu0 0.0
  %726 = vmatprep.mubr.f32.mxu0 0.0
  %727 = vmatmul.mubr.f32.gmra.mrb[0].mxu0 %v654
  %v728 = vpop.f32.mrb[0].mxu0
  %v729 = vadd.f32 %v117, %v728
  %v730 = vpop.f32.mrb[0].mxu0
  %731 = vmatprep.mubr.f32.mxu0 0.0
  %732 = vmatmul.mubr.f32.gmra.mrb[0].mxu0 %v657
  %v733 = vpop.f32.mrb[0].mxu0
  %v734 = vadd.f32 %v118, %v733
  %v735 = vpop.f32.mrb[0].mxu0
  %736 = vmatprep.mubr.f32.mxu0 0.0
  %737 = vmatmul.mubr.f32.gmra.mrb[0].mxu0 %v660
  %v738 = vpop.f32.mrb[0].mxu0
  %v739 = vadd.f32 %v119, %v738
  %v740 = vpop.f32.mrb[0].mxu0
  %741 = vdwg.mxu0
  %v742 = vsel %vm612, %v729, -inf
  %743 = vmax.xlane.f32.xlu0 %v742
  %v744 = vpop.xlane.xlu0 %743
  %v745 = vsel %vm612, %v734, -inf
  %746 = vmax.xlane.f32.xlu0 %v745
  %v747 = vpop.xlane.xlu0 %746
  %v748 = vsel %vm619, %v739, -inf
  %749 = vmax.xlane.f32.xlu0 %v748
  %v750 = vpop.xlane.xlu0 %749
  %v751 = vsub.f32 %v729, %v744
  %v752 = vsub.f32 %v734, %v747
  %v753 = vsub.f32 %v739, %v750
  %v754 = vmul.f32 %v751, 1.442695
  %v755 = vpow.pop %v754
  %v756 = vmul.f32 %v752, 1.442695
  %v757 = vpow.pop %v756
  %v758 = vmul.f32 %v753, 1.442695
  %v759 = vpow.pop %v758
  %v760 = vsel %vm612, %v755, 0.0
  %761 = vadd.xlane.f32.xlu0 %v760
  %v762 = vpop.xlane.xlu0 %761
  %v763 = vsel %vm612, %v757, 0.0
  %764 = vadd.xlane.f32.xlu0 %v763
  %v765 = vpop.xlane.xlu0 %764
  %v766 = vsel %vm619, %v759, 0.0
  %767 = vadd.xlane.f32.xlu0 %v766
  %v768 = vpop.xlane.xlu0 %767
  %v769 = vrcp.pop %v762
  %v770 = vrcp.pop %v765
  %v771 = vrcp.pop %v768
  %v772 = vmul.f32 %v755, %v769
  %v773 = vmul.f32 %v757, %v770
  %v774 = vmul.f32 %v759, %v771
  %v775 = vmul.f32 %v487, %v132
  %v776 = vmul.f32 %v493, %v132
  %v777 = vmul.f32 %v499, %v132
  %v779 = vsel %vm612, %v772, 0
  %v782 = vsel %vm612, %v773, 0
  %v785 = vsel %vm612, %v774, 0
  %vm787 = vcmask 1041408
  %v789 = vsel %vm787, %v777, 0
  %791 = vmatprep.subr.mxu0 0.0
  %792 = vmatpush1.msra.mxu0 %v775
  %793 = vmatprep.subr.mxu0 0.0
  %794 = vmatpush1.msra.mxu0 %v776
  %795 = vmatprep.subr.mxu0 0.0
  %796 = vmatpush1.msra.mxu0 %v789
  %797 = vmatprep.subr.mxu0 0.0
  %798 = vmatpush1.msra.mxu0 0.0
  %799 = vmatprep.subr.mxu0 0.0
  %800 = vmatpush1.msra.mxu0 0.0
  %801 = vmatprep.subr.mxu0 0.0
  %802 = vmatpush1.msra.mxu0 0.0
  %803 = vmatprep.subr.mxu0 0.0
  %804 = vmatpush1.msra.mxu0 0.0
  %805 = vmatprep.subr.mxu0 0.0
  %806 = vmatpush1.msra.mxu0 0.0
  %807 = vmatprep.subr.mxu0 0.0
  %808 = vmatpush1.msra.mxu0 0.0
  %809 = vmatprep.subr.mxu0 0.0
  %810 = vmatpush1.msra.mxu0 0.0
  %811 = vmatprep.subr.mxu0 0.0
  %812 = vmatpush1.msra.mxu0 0.0
  %813 = vmatprep.subr.mxu0 0.0
  %814 = vmatpush1.msra.mxu0 0.0
  %815 = vmatprep.subr.mxu0 0.0
  %816 = vmatpush1.msra.mxu0 0.0
  %817 = vmatprep.subr.mxu0 0.0
  %818 = vmatpush1.msra.mxu0 0.0
  %819 = vmatprep.subr.mxu0 0.0
  %820 = vmatpush1.msra.mxu0 0.0
  %821 = vmatprep.subr.mxu0 0.0
  %822 = vmatpush1.msra.mxu0 0.0
  %823 = vmatprep.subr.mxu0 0.0
  %824 = vmatpush1.msra.mxu0 0.0
  %825 = vmatprep.subr.mxu0 0.0
  %826 = vmatpush1.msra.mxu0 0.0
  %827 = vmatprep.subr.mxu0 0.0
  %828 = vmatpush1.msra.mxu0 0.0
  %829 = vmatprep.subr.mxu0 0.0
  %830 = vmatpush1.msra.mxu0 0.0
  %831 = vmatprep.subr.mxu0 0.0
  %832 = vmatpush1.msra.mxu0 0.0
  %833 = vmatprep.subr.mxu0 0.0
  %834 = vmatpush1.msra.mxu0 0.0
  %835 = vmatprep.subr.mxu0 0.0
  %836 = vmatpush1.msra.mxu0 0.0
  %837 = vmatprep.subr.mxu0 0.0
  %838 = vmatpush1.msra.mxu0 0.0
  %839 = vmatprep.subr.mxu0 0.0
  %840 = vmatpush1.msra.mxu0 0.0
  %841 = vmatprep.subr.mxu0 0.0
  %842 = vmatpush1.msra.mxu0 0.0
  %843 = vmatprep.subr.mxu0 0.0
  %844 = vmatpush1.msra.mxu0 0.0
  %845 = vmatprep.subr.mxu0 0.0
  %846 = vmatpush1.msra.mxu0 0.0
  %847 = vmatprep.subr.mxu0 0.0
  %848 = vmatpush1.msra.mxu0 0.0
  %849 = vmatprep.subr.mxu0 0.0
  %850 = vmatpush1.msra.mxu0 0.0
  %851 = vmatprep.subr.mxu0 0.0
  %852 = vmatpush1.msra.mxu0 0.0
  %853 = vmatprep.subr.mxu0 0.0
  %854 = vmatpush1.msra.mxu0 0.0
  %855 = vmatprep.mubr.f32.mxu0 0.0
  %856 = vmatmul.mubr.f32.gmra.mrb[0].mxu0 %v779
  %v857 = vpop.f32.mrb[0].mxu0
  %v858 = vadd.f32 0.0, %v857
  %v859 = vpop.f32.mrb[0].mxu0
  %860 = vmatprep.mubr.f32.mxu0 0.0
  %861 = vmatmul.mubr.f32.gmra.mrb[0].mxu0 %v782
  %v862 = vpop.f32.mrb[0].mxu0
  %v863 = vadd.f32 0.0, %v862
  %v864 = vpop.f32.mrb[0].mxu0
  %865 = vmatprep.mubr.f32.mxu0 0.0
  %866 = vmatmul.mubr.f32.gmra.mrb[0].mxu0 %v785
  %v867 = vpop.f32.mrb[0].mxu0
  %v868 = vadd.f32 0.0, %v867
  %v869 = vpop.f32.mrb[0].mxu0
  %870 = vdwg.mxu0
  %v872 = vsel %vm612, %v644, 0
  %v875 = vsel %vm612, %v645, 0
  %v878 = vsel %vm612, %v646, 0
  %v881 = vsel %vm787, %v649, 0
  %883 = vmatprep.subr.mxu0 0.0
  %884 = vmatpush1.msra.mxu0 %v647
  %885 = vmatprep.subr.mxu0 0.0
  %886 = vmatpush1.msra.mxu0 %v648
  %887 = vmatprep.subr.mxu0 0.0
  %888 = vmatpush1.msra.mxu0 %v881
  %889 = vmatprep.subr.mxu0 0.0
  %890 = vmatpush1.msra.mxu0 0.0
  %891 = vmatprep.subr.mxu0 0.0
  %892 = vmatpush1.msra.mxu0 0.0
  %893 = vmatprep.subr.mxu0 0.0
  %894 = vmatpush1.msra.mxu0 0.0
  %895 = vmatprep.subr.mxu0 0.0
  %896 = vmatpush1.msra.mxu0 0.0
  %897 = vmatprep.subr.mxu0 0.0
  %898 = vmatpush1.msra.mxu0 0.0
  %899 = vmatprep.subr.mxu0 0.0
  %900 = vmatpush1.msra.mxu0 0.0
  %901 = vmatprep.subr.mxu0 0.0
  %902 = vmatpush1.msra.mxu0 0.0
  %903 = vmatprep.subr.mxu0 0.0
  %904 = vmatpush1.msra.mxu0 0.0
  %905 = vmatprep.subr.mxu0 0.0
  %906 = vmatpush1.msra.mxu0 0.0
  %907 = vmatprep.subr.mxu0 0.0
  %908 = vmatpush1.msra.mxu0 0.0
  %909 = vmatprep.subr.mxu0 0.0
  %910 = vmatpush1.msra.mxu0 0.0
  %911 = vmatprep.subr.mxu0 0.0
  %912 = vmatpush1.msra.mxu0 0.0
  %913 = vmatprep.subr.mxu0 0.0
  %914 = vmatpush1.msra.mxu0 0.0
  %915 = vmatprep.subr.mxu0 0.0
  %916 = vmatpush1.msra.mxu0 0.0
  %917 = vmatprep.subr.mxu0 0.0
  %918 = vmatpush1.msra.mxu0 0.0
  %919 = vmatprep.subr.mxu0 0.0
  %920 = vmatpush1.msra.mxu0 0.0
  %921 = vmatprep.subr.mxu0 0.0
  %922 = vmatpush1.msra.mxu0 0.0
  %923 = vmatprep.subr.mxu0 0.0
  %924 = vmatpush1.msra.mxu0 0.0
  %925 = vmatprep.subr.mxu0 0.0
  %926 = vmatpush1.msra.mxu0 0.0
  %927 = vmatprep.subr.mxu0 0.0
  %928 = vmatpush1.msra.mxu0 0.0
  %929 = vmatprep.subr.mxu0 0.0
  %930 = vmatpush1.msra.mxu0 0.0
  %931 = vmatprep.subr.mxu0 0.0
  %932 = vmatpush1.msra.mxu0 0.0
  %933 = vmatprep.subr.mxu0 0.0
  %934 = vmatpush1.msra.mxu0 0.0
  %935 = vmatprep.subr.mxu0 0.0
  %936 = vmatpush1.msra.mxu0 0.0
  %937 = vmatprep.subr.mxu0 0.0
  %938 = vmatpush1.msra.mxu0 0.0
  %939 = vmatprep.subr.mxu0 0.0
  %940 = vmatpush1.msra.mxu0 0.0
  %941 = vmatprep.subr.mxu0 0.0
  %942 = vmatpush1.msra.mxu0 0.0
  %943 = vmatprep.subr.mxu0 0.0
  %944 = vmatpush1.msra.mxu0 0.0
  %945 = vmatprep.subr.mxu0 0.0
  %946 = vmatpush1.msra.mxu0 0.0
  %947 = vmatprep.mubr.f32.mxu0 0.0
  %948 = vmatmul.mubr.f32.gmra.mrb[0].mxu0 %v872
  %v949 = vpop.f32.mrb[0].mxu0
  %v950 = vadd.f32 %v858, %v949
  %v951 = vpop.f32.mrb[0].mxu0
  %952 = vmatprep.mubr.f32.mxu0 0.0
  %953 = vmatmul.mubr.f32.gmra.mrb[0].mxu0 %v875
  %v954 = vpop.f32.mrb[0].mxu0
  %v955 = vadd.f32 %v863, %v954
  %v956 = vpop.f32.mrb[0].mxu0
  %957 = vmatprep.mubr.f32.mxu0 0.0
  %958 = vmatmul.mubr.f32.gmra.mrb[0].mxu0 %v878
  %v959 = vpop.f32.mrb[0].mxu0
  %v960 = vadd.f32 %v868, %v959
  %v961 = vpop.f32.mrb[0].mxu0
  %962 = vdwg.mxu0
  %v963 = vmul.f32 %v501, %v137
  %v964 = vmul.f32 %v502, %v137
  %v965 = vmul.f32 %v503, %v137
  %v967 = vsel %vm516, %v963, 0
  %v970 = vsel %vm516, %v964, 0
  %v973 = vsel %vm516, %v965, 0
  %975 = vmatprep.subr.mxu0 0.0
  %976 = vmatpush1.xpose.msra.mxu0 %v526
  %977 = vmatprep.subr.mxu0 0.0
  %978 = vmatpush1.xpose.msra.mxu0 %v528
  %979 = vmatprep.subr.mxu0 0.0
  %980 = vmatpush1.xpose.msra.mxu0 %v530
  %981 = vmatprep.subr.mxu0 0.0
  %982 = vmatpush1.xpose.msra.mxu0 0.0
  %983 = vmatprep.subr.mxu0 0.0
  %984 = vmatpush1.xpose.msra.mxu0 0.0
  %985 = vmatprep.subr.mxu0 0.0
  %986 = vmatpush1.xpose.msra.mxu0 0.0
  %987 = vmatprep.subr.mxu0 0.0
  %988 = vmatpush1.xpose.msra.mxu0 0.0
  %989 = vmatprep.subr.mxu0 0.0
  %990 = vmatpush1.xpose.msra.mxu0 0.0
  %991 = vmatprep.subr.mxu0 0.0
  %992 = vmatpush1.xpose.msra.mxu0 0.0
  %993 = vmatprep.subr.mxu0 0.0
  %994 = vmatpush1.xpose.msra.mxu0 0.0
  %995 = vmatprep.subr.mxu0 0.0
  %996 = vmatpush1.xpose.msra.mxu0 0.0
  %997 = vmatprep.subr.mxu0 0.0
  %998 = vmatpush1.xpose.msra.mxu0 0.0
  %999 = vmatprep.subr.mxu0 0.0
  %1000 = vmatpush1.xpose.msra.mxu0 0.0
  %1001 = vmatprep.subr.mxu0 0.0
  %1002 = vmatpush1.xpose.msra.mxu0 0.0
  %1003 = vmatprep.subr.mxu0 0.0
  %1004 = vmatpush1.xpose.msra.mxu0 0.0
  %1005 = vmatprep.subr.mxu0 0.0
  %1006 = vmatpush1.xpose.msra.mxu0 0.0
  %1007 = vmatprep.subr.mxu0 0.0
  %1008 = vmatpush1.xpose.msra.mxu0 0.0
  %1009 = vmatprep.subr.mxu0 0.0
  %1010 = vmatpush1.xpose.msra.mxu0 0.0
  %1011 = vmatprep.subr.mxu0 0.0
  %1012 = vmatpush1.xpose.msra.mxu0 0.0
  %1013 = vmatprep.subr.mxu0 0.0
  %1014 = vmatpush1.xpose.msra.mxu0 0.0
  %1015 = vmatprep.subr.mxu0 0.0
  %1016 = vmatpush1.xpose.msra.mxu0 0.0
  %1017 = vmatprep.subr.mxu0 0.0
  %1018 = vmatpush1.xpose.msra.mxu0 0.0
  %1019 = vmatprep.subr.mxu0 0.0
  %1020 = vmatpush1.xpose.msra.mxu0 0.0
  %1021 = vmatprep.subr.mxu0 0.0
  %1022 = vmatpush1.xpose.msra.mxu0 0.0
  %1023 = vmatprep.subr.mxu0 0.0
  %1024 = vmatpush1.xpose.msra.mxu0 0.0
  %1025 = vmatprep.subr.mxu0 0.0
  %1026 = vmatpush1.xpose.msra.mxu0 0.0
  %1027 = vmatprep.subr.mxu0 0.0
  %1028 = vmatpush1.xpose.msra.mxu0 0.0
  %1029 = vmatprep.subr.mxu0 0.0
  %1030 = vmatpush1.xpose.msra.mxu0 0.0
  %1031 = vmatprep.subr.mxu0 0.0
  %1032 = vmatpush1.xpose.msra.mxu0 0.0
  %1033 = vmatprep.subr.mxu0 0.0
  %1034 = vmatpush1.xpose.msra.mxu0 0.0
  %1035 = vmatprep.subr.mxu0 0.0
  %1036 = vmatpush1.xpose.msra.mxu0 0.0
  %1037 = vmatprep.subr.mxu0 0.0
  %1038 = vmatpush1.xpose.msra.mxu0 0.0
  %1039 = vmatprep.mubr.f32.mxu0 0.0
  %1040 = vmatmul.mubr.f32.gmra.mrb[0].mxu0 %v967
  %v1041 = vpop.f32.mrb[0].mxu0
  %v1042 = vadd.f32 %v117, %v1041
  %v1043 = vpop.f32.mrb[0].mxu0
  %1044 = vmatprep.mubr.f32.mxu0 0.0
  %1045 = vmatmul.mubr.f32.gmra.mrb[0].mxu0 %v970
  %v1046 = vpop.f32.mrb[0].mxu0
  %v1047 = vadd.f32 %v118, %v1046
  %v1048 = vpop.f32.mrb[0].mxu0
  %1049 = vmatprep.mubr.f32.mxu0 0.0
  %1050 = vmatmul.mubr.f32.gmra.mrb[0].mxu0 %v973
  %v1051 = vpop.f32.mrb[0].mxu0
  %v1052 = vadd.f32 %v119, %v1051
  %v1053 = vpop.f32.mrb[0].mxu0
  %1054 = vdwg.mxu0
  %v1055 = vsel %vm612, %v1042, -inf
  %1056 = vmax.xlane.f32.xlu0 %v1055
  %v1057 = vpop.xlane.xlu0 %1056
  %v1058 = vsel %vm612, %v1047, -inf
  %1059 = vmax.xlane.f32.xlu0 %v1058
  %v1060 = vpop.xlane.xlu0 %1059
  %v1061 = vsel %vm619, %v1052, -inf
  %1062 = vmax.xlane.f32.xlu0 %v1061
  %v1063 = vpop.xlane.xlu0 %1062
  %v1064 = vsub.f32 %v1042, %v1057
  %v1065 = vsub.f32 %v1047, %v1060
  %v1066 = vsub.f32 %v1052, %v1063
  %v1067 = vmul.f32 %v1064, 1.442695
  %v1068 = vpow.pop %v1067
  %v1069 = vmul.f32 %v1065, 1.442695
  %v1070 = vpow.pop %v1069
  %v1071 = vmul.f32 %v1066, 1.442695
  %v1072 = vpow.pop %v1071
  %v1073 = vsel %vm612, %v1068, 0.0
  %1074 = vadd.xlane.f32.xlu0 %v1073
  %v1075 = vpop.xlane.xlu0 %1074
  %v1076 = vsel %vm612, %v1070, 0.0
  %1077 = vadd.xlane.f32.xlu0 %v1076
  %v1078 = vpop.xlane.xlu0 %1077
  %v1079 = vsel %vm619, %v1072, 0.0
  %1080 = vadd.xlane.f32.xlu0 %v1079
  %v1081 = vpop.xlane.xlu0 %1080
  %v1082 = vrcp.pop %v1075
  %v1083 = vrcp.pop %v1078
  %v1084 = vrcp.pop %v1081
  %v1085 = vmul.f32 %v1068, %v1082
  %v1086 = vmul.f32 %v1070, %v1083
  %v1087 = vmul.f32 %v1072, %v1084
  %v1088 = vmul.f32 %v487, %v137
  %v1089 = vmul.f32 %v493, %v137
  %v1090 = vmul.f32 %v499, %v137
  %v1092 = vsel %vm612, %v1085, 0
  %v1095 = vsel %vm612, %v1086, 0
  %v1098 = vsel %vm612, %v1087, 0
  %v1101 = vsel %vm787, %v1090, 0
  %1103 = vmatprep.subr.mxu0 0.0
  %1104 = vmatpush1.msra.mxu0 %v1088
  %1105 = vmatprep.subr.mxu0 0.0
  %1106 = vmatpush1.msra.mxu0 %v1089
  %1107 = vmatprep.subr.mxu0 0.0
  %1108 = vmatpush1.msra.mxu0 %v1101
  %1109 = vmatprep.subr.mxu0 0.0
  %1110 = vmatpush1.msra.mxu0 0.0
  %1111 = vmatprep.subr.mxu0 0.0
  %1112 = vmatpush1.msra.mxu0 0.0
  %1113 = vmatprep.subr.mxu0 0.0
  %1114 = vmatpush1.msra.mxu0 0.0
  %1115 = vmatprep.subr.mxu0 0.0
  %1116 = vmatpush1.msra.mxu0 0.0
  %1117 = vmatprep.subr.mxu0 0.0
  %1118 = vmatpush1.msra.mxu0 0.0
  %1119 = vmatprep.subr.mxu0 0.0
  %1120 = vmatpush1.msra.mxu0 0.0
  %1121 = vmatprep.subr.mxu0 0.0
  %1122 = vmatpush1.msra.mxu0 0.0
  %1123 = vmatprep.subr.mxu0 0.0
  %1124 = vmatpush1.msra.mxu0 0.0
  %1125 = vmatprep.subr.mxu0 0.0
  %1126 = vmatpush1.msra.mxu0 0.0
  %1127 = vmatprep.subr.mxu0 0.0
  %1128 = vmatpush1.msra.mxu0 0.0
  %1129 = vmatprep.subr.mxu0 0.0
  %1130 = vmatpush1.msra.mxu0 0.0
  %1131 = vmatprep.subr.mxu0 0.0
  %1132 = vmatpush1.msra.mxu0 0.0
  %1133 = vmatprep.subr.mxu0 0.0
  %1134 = vmatpush1.msra.mxu0 0.0
  %1135 = vmatprep.subr.mxu0 0.0
  %1136 = vmatpush1.msra.mxu0 0.0
  %1137 = vmatprep.subr.mxu0 0.0
  %1138 = vmatpush1.msra.mxu0 0.0
  %1139 = vmatprep.subr.mxu0 0.0
  %1140 = vmatpush1.msra.mxu0 0.0
  %1141 = vmatprep.subr.mxu0 0.0
  %1142 = vmatpush1.msra.mxu0 0.0
  %1143 = vmatprep.subr.mxu0 0.0
  %1144 = vmatpush1.msra.mxu0 0.0
  %1145 = vmatprep.subr.mxu0 0.0
  %1146 = vmatpush1.msra.mxu0 0.0
  %1147 = vmatprep.subr.mxu0 0.0
  %1148 = vmatpush1.msra.mxu0 0.0
  %1149 = vmatprep.subr.mxu0 0.0
  %1150 = vmatpush1.msra.mxu0 0.0
  %1151 = vmatprep.subr.mxu0 0.0
  %1152 = vmatpush1.msra.mxu0 0.0
  %1153 = vmatprep.subr.mxu0 0.0
  %1154 = vmatpush1.msra.mxu0 0.0
  %1155 = vmatprep.subr.mxu0 0.0
  %1156 = vmatpush1.msra.mxu0 0.0
  %1157 = vmatprep.subr.mxu0 0.0
  %1158 = vmatpush1.msra.mxu0 0.0
  %1159 = vmatprep.subr.mxu0 0.0
  %1160 = vmatpush1.msra.mxu0 0.0
  %1161 = vmatprep.subr.mxu0 0.0
  %1162 = vmatpush1.msra.mxu0 0.0
  %1163 = vmatprep.subr.mxu0 0.0
  %1164 = vmatpush1.msra.mxu0 0.0
  %1165 = vmatprep.subr.mxu0 0.0
  %1166 = vmatpush1.msra.mxu0 0.0
  %1167 = vmatprep.mubr.f32.mxu0 0.0
  %1168 = vmatmul.mubr.f32.gmra.mrb[0].mxu0 %v1092
  %v1169 = vpop.f32.mrb[0].mxu0
  %v1170 = vadd.f32 0.0, %v1169
  %v1171 = vpop.f32.mrb[0].mxu0
  %1172 = vmatprep.mubr.f32.mxu0 0.0
  %1173 = vmatmul.mubr.f32.gmra.mrb[0].mxu0 %v1095
  %v1174 = vpop.f32.mrb[0].mxu0
  %v1175 = vadd.f32 0.0, %v1174
  %v1176 = vpop.f32.mrb[0].mxu0
  %1177 = vmatprep.mubr.f32.mxu0 0.0
  %1178 = vmatmul.mubr.f32.gmra.mrb[0].mxu0 %v1098
  %v1179 = vpop.f32.mrb[0].mxu0
  %v1180 = vadd.f32 0.0, %v1179
  %v1181 = vpop.f32.mrb[0].mxu0
  %1182 = vdwg.mxu0
  %v1183 = vadd.f32 %v950, %v1170
  %v1184 = vadd.f32 %v955, %v1175
  %v1185 = vadd.f32 %v960, %v1180
  %v1186 = vmul.f32 %v501, %v142
  %v1187 = vmul.f32 %v502, %v142
  %v1188 = vmul.f32 %v503, %v142
  %v1190 = vsel %vm516, %v1186, 0
  %v1193 = vsel %vm516, %v1187, 0
  %v1196 = vsel %vm516, %v1188, 0
  %1198 = vmatprep.subr.mxu0 0.0
  %1199 = vmatpush1.xpose.msra.mxu0 %v526
  %1200 = vmatprep.subr.mxu0 0.0
  %1201 = vmatpush1.xpose.msra.mxu0 %v528
  %1202 = vmatprep.subr.mxu0 0.0
  %1203 = vmatpush1.xpose.msra.mxu0 %v530
  %1204 = vmatprep.subr.mxu0 0.0
  %1205 = vmatpush1.xpose.msra.mxu0 0.0
  %1206 = vmatprep.subr.mxu0 0.0
  %1207 = vmatpush1.xpose.msra.mxu0 0.0
  %1208 = vmatprep.subr.mxu0 0.0
  %1209 = vmatpush1.xpose.msra.mxu0 0.0
  %1210 = vmatprep.subr.mxu0 0.0
  %1211 = vmatpush1.xpose.msra.mxu0 0.0
  %1212 = vmatprep.subr.mxu0 0.0
  %1213 = vmatpush1.xpose.msra.mxu0 0.0
  %1214 = vmatprep.subr.mxu0 0.0
  %1215 = vmatpush1.xpose.msra.mxu0 0.0
  %1216 = vmatprep.subr.mxu0 0.0
  %1217 = vmatpush1.xpose.msra.mxu0 0.0
  %1218 = vmatprep.subr.mxu0 0.0
  %1219 = vmatpush1.xpose.msra.mxu0 0.0
  %1220 = vmatprep.subr.mxu0 0.0
  %1221 = vmatpush1.xpose.msra.mxu0 0.0
  %1222 = vmatprep.subr.mxu0 0.0
  %1223 = vmatpush1.xpose.msra.mxu0 0.0
  %1224 = vmatprep.subr.mxu0 0.0
  %1225 = vmatpush1.xpose.msra.mxu0 0.0
  %1226 = vmatprep.subr.mxu0 0.0
  %1227 = vmatpush1.xpose.msra.mxu0 0.0
  %1228 = vmatprep.subr.mxu0 0.0
  %1229 = vmatpush1.xpose.msra.mxu0 0.0
  %1230 = vmatprep.subr.mxu0 0.0
  %1231 = vmatpush1.xpose.msra.mxu0 0.0
  %1232 = vmatprep.subr.mxu0 0.0
  %1233 = vmatpush1.xpose.msra.mxu0 0.0
  %1234 = vmatprep.subr.mxu0 0.0
  %1235 = vmatpush1.xpose.msra.mxu0 0.0
  %1236 = vmatprep.subr.mxu0 0.0
  %1237 = vmatpush1.xpose.msra.mxu0 0.0
  %1238 = vmatprep.subr.mxu0 0.0
  %1239 = vmatpush1.xpose.msra.mxu0 0.0
  %1240 = vmatprep.subr.mxu0 0.0
  %1241 = vmatpush1.xpose.msra.mxu0 0.0
  %1242 = vmatprep.subr.mxu0 0.0
  %1243 = vmatpush1.xpose.msra.mxu0 0.0
  %1244 = vmatprep.subr.mxu0 0.0
  %1245 = vmatpush1.xpose.msra.mxu0 0.0
  %1246 = vmatprep.subr.mxu0 0.0
  %1247 = vmatpush1.xpose.msra.mxu0 0.0
  %1248 = vmatprep.subr.mxu0 0.0
  %1249 = vmatpush1.xpose.msra.mxu0 0.0
  %1250 = vmatprep.subr.mxu0 0.0
  %1251 = vmatpush1.xpose.msra.mxu0 0.0
  %1252 = vmatprep.subr.mxu0 0.0
  %1253 = vmatpush1.xpose.msra.mxu0 0.0
  %1254 = vmatprep.subr.mxu0 0.0
  %1255 = vmatpush1.xpose.msra.mxu0 0.0
  %1256 = vmatprep.subr.mxu0 0.0
  %1257 = vmatpush1.xpose.msra.mxu0 0.0
  %1258 = vmatprep.subr.mxu0 0.0
  %1259 = vmatpush1.xpose.msra.mxu0 0.0
  %1260 = vmatprep.subr.mxu0 0.0
  %1261 = vmatpush1.xpose.msra.mxu0 0.0
  %1262 = vmatprep.mubr.f32.mxu0 0.0
  %1263 = vmatmul.mubr.f32.gmra.mrb[0].mxu0 %v1190
  %v1264 = vpop.f32.mrb[0].mxu0
  %v1265 = vadd.f32 %v117, %v1264
  %v1266 = vpop.f32.mrb[0].mxu0
  %1267 = vmatprep.mubr.f32.mxu0 0.0
  %1268 = vmatmul.mubr.f32.gmra.mrb[0].mxu0 %v1193
  %v1269 = vpop.f32.mrb[0].mxu0
  %v1270 = vadd.f32 %v118, %v1269
  %v1271 = vpop.f32.mrb[0].mxu0
  %1272 = vmatprep.mubr.f32.mxu0 0.0
  %1273 = vmatmul.mubr.f32.gmra.mrb[0].mxu0 %v1196
  %v1274 = vpop.f32.mrb[0].mxu0
  %v1275 = vadd.f32 %v119, %v1274
  %v1276 = vpop.f32.mrb[0].mxu0
  %1277 = vdwg.mxu0
  %v1278 = vsel %vm612, %v1265, -inf
  %1279 = vmax.xlane.f32.xlu0 %v1278
  %v1280 = vpop.xlane.xlu0 %1279
  %v1281 = vsel %vm612, %v1270, -inf
  %1282 = vmax.xlane.f32.xlu0 %v1281
  %v1283 = vpop.xlane.xlu0 %1282
  %v1284 = vsel %vm619, %v1275, -inf
  %1285 = vmax.xlane.f32.xlu0 %v1284
  %v1286 = vpop.xlane.xlu0 %1285
  %v1287 = vsub.f32 %v1265, %v1280
  %v1288 = vsub.f32 %v1270, %v1283
  %v1289 = vsub.f32 %v1275, %v1286
  %v1290 = vmul.f32 %v1287, 1.442695
  %v1291 = vpow.pop %v1290
  %v1292 = vmul.f32 %v1288, 1.442695
  %v1293 = vpow.pop %v1292
  %v1294 = vmul.f32 %v1289, 1.442695
  %v1295 = vpow.pop %v1294
  %v1296 = vsel %vm612, %v1291, 0.0
  %1297 = vadd.xlane.f32.xlu0 %v1296
  %v1298 = vpop.xlane.xlu0 %1297
  %v1299 = vsel %vm612, %v1293, 0.0
  %1300 = vadd.xlane.f32.xlu0 %v1299
  %v1301 = vpop.xlane.xlu0 %1300
  %v1302 = vsel %vm619, %v1295, 0.0
  %1303 = vadd.xlane.f32.xlu0 %v1302
  %v1304 = vpop.xlane.xlu0 %1303
  %v1305 = vrcp.pop %v1298
  %v1306 = vrcp.pop %v1301
  %v1307 = vrcp.pop %v1304
  %v1308 = vmul.f32 %v1291, %v1305
  %v1309 = vmul.f32 %v1293, %v1306
  %v1310 = vmul.f32 %v1295, %v1307
  %v1311 = vmul.f32 %v487, %v142
  %v1312 = vmul.f32 %v493, %v142
  %v1313 = vmul.f32 %v499, %v142
  %v1315 = vsel %vm612, %v1308, 0
  %v1318 = vsel %vm612, %v1309, 0
  %v1321 = vsel %vm612, %v1310, 0
  %v1324 = vsel %vm787, %v1313, 0
  %1326 = vmatprep.subr.mxu0 0.0
  %1327 = vmatpush1.msra.mxu0 %v1311
  %1328 = vmatprep.subr.mxu0 0.0
  %1329 = vmatpush1.msra.mxu0 %v1312
  %1330 = vmatprep.subr.mxu0 0.0
  %1331 = vmatpush1.msra.mxu0 %v1324
  %1332 = vmatprep.subr.mxu0 0.0
  %1333 = vmatpush1.msra.mxu0 0.0
  %1334 = vmatprep.subr.mxu0 0.0
  %1335 = vmatpush1.msra.mxu0 0.0
  %1336 = vmatprep.subr.mxu0 0.0
  %1337 = vmatpush1.msra.mxu0 0.0
  %1338 = vmatprep.subr.mxu0 0.0
  %1339 = vmatpush1.msra.mxu0 0.0
  %1340 = vmatprep.subr.mxu0 0.0
  %1341 = vmatpush1.msra.mxu0 0.0
  %1342 = vmatprep.subr.mxu0 0.0
  %1343 = vmatpush1.msra.mxu0 0.0
  %1344 = vmatprep.subr.mxu0 0.0
  %1345 = vmatpush1.msra.mxu0 0.0
  %1346 = vmatprep.subr.mxu0 0.0
  %1347 = vmatpush1.msra.mxu0 0.0
  %1348 = vmatprep.subr.mxu0 0.0
  %1349 = vmatpush1.msra.mxu0 0.0
  %1350 = vmatprep.subr.mxu0 0.0
  %1351 = vmatpush1.msra.mxu0 0.0
  %1352 = vmatprep.subr.mxu0 0.0
  %1353 = vmatpush1.msra.mxu0 0.0
  %1354 = vmatprep.subr.mxu0 0.0
  %1355 = vmatpush1.msra.mxu0 0.0
  %1356 = vmatprep.subr.mxu0 0.0
  %1357 = vmatpush1.msra.mxu0 0.0
  %1358 = vmatprep.subr.mxu0 0.0
  %1359 = vmatpush1.msra.mxu0 0.0
  %1360 = vmatprep.subr.mxu0 0.0
  %1361 = vmatpush1.msra.mxu0 0.0
  %1362 = vmatprep.subr.mxu0 0.0
  %1363 = vmatpush1.msra.mxu0 0.0
  %1364 = vmatprep.subr.mxu0 0.0
  %1365 = vmatpush1.msra.mxu0 0.0
  %1366 = vmatprep.subr.mxu0 0.0
  %1367 = vmatpush1.msra.mxu0 0.0
  %1368 = vmatprep.subr.mxu0 0.0
  %1369 = vmatpush1.msra.mxu0 0.0
  %1370 = vmatprep.subr.mxu0 0.0
  %1371 = vmatpush1.msra.mxu0 0.0
  %1372 = vmatprep.subr.mxu0 0.0
  %1373 = vmatpush1.msra.mxu0 0.0
  %1374 = vmatprep.subr.mxu0 0.0
  %1375 = vmatpush1.msra.mxu0 0.0
  %1376 = vmatprep.subr.mxu0 0.0
  %1377 = vmatpush1.msra.mxu0 0.0
  %1378 = vmatprep.subr.mxu0 0.0
  %1379 = vmatpush1.msra.mxu0 0.0
  %1380 = vmatprep.subr.mxu0 0.0
  %1381 = vmatpush1.msra.mxu0 0.0
  %1382 = vmatprep.subr.mxu0 0.0
  %1383 = vmatpush1.msra.mxu0 0.0
  %1384 = vmatprep.subr.mxu0 0.0
  %1385 = vmatpush1.msra.mxu0 0.0
  %1386 = vmatprep.subr.mxu0 0.0
  %1387 = vmatpush1.msra.mxu0 0.0
  %1388 = vmatprep.subr.mxu0 0.0
  %1389 = vmatpush1.msra.mxu0 0.0
  %1390 = vmatprep.mubr.f32.mxu0 0.0
  %1391 = vmatmul.mubr.f32.gmra.mrb[0].mxu0 %v1315
  %v1392 = vpop.f32.mrb[0].mxu0
  %v1393 = vadd.f32 0.0, %v1392
  %v1394 = vpop.f32.mrb[0].mxu0
  %1395 = vmatprep.mubr.f32.mxu0 0.0
  %1396 = vmatmul.mubr.f32.gmra.mrb[0].mxu0 %v1318
  %v1397 = vpop.f32.mrb[0].mxu0
  %v1398 = vadd.f32 0.0, %v1397
  %v1399 = vpop.f32.mrb[0].mxu0
  %1400 = vmatprep.mubr.f32.mxu0 0.0
  %1401 = vmatmul.mubr.f32.gmra.mrb[0].mxu0 %v1321
  %v1402 = vpop.f32.mrb[0].mxu0
  %v1403 = vadd.f32 0.0, %v1402
  %v1404 = vpop.f32.mrb[0].mxu0
  %1405 = vdwg.mxu0
  %v1406 = vadd.f32 %v1183, %v1393
  %v1407 = vadd.f32 %v1184, %v1398
  %v1408 = vadd.f32 %v1185, %v1403
  %v1410 = vsel %vm516, %v1406, 0
  %v1413 = vsel %vm516, %v1407, 0
  %v1416 = vsel %vm516, %v1408, 0
  %1418 = vmatprep.subr.mxu0 0.0
  %1419 = vmatpush1.msra.mxu0 %v301
  %1420 = vmatprep.subr.mxu0 0.0
  %1421 = vmatpush1.msra.mxu0 %v302
  %1422 = vmatprep.subr.mxu0 0.0
  %1423 = vmatpush1.msra.mxu0 %v303
  %1424 = vmatprep.subr.mxu0 0.0
  %1425 = vmatpush1.msra.mxu0 %v304
  %1426 = vmatprep.subr.mxu0 0.0
  %1427 = vmatpush1.msra.mxu0 %v305
  %1428 = vmatprep.subr.mxu0 0.0
  %1429 = vmatpush1.msra.mxu0 %v306
  %1430 = vmatprep.subr.mxu0 0.0
  %1431 = vmatpush1.msra.mxu0 %v307
  %1432 = vmatprep.subr.mxu0 0.0
  %1433 = vmatpush1.msra.mxu0 %v308
  %1434 = vmatprep.subr.mxu0 0.0
  %1435 = vmatpush1.msra.mxu0 0.0
  %1436 = vmatprep.subr.mxu0 0.0
  %1437 = vmatpush1.msra.mxu0 0.0
  %1438 = vmatprep.subr.mxu0 0.0
  %1439 = vmatpush1.msra.mxu0 0.0
  %1440 = vmatprep.subr.mxu0 0.0
  %1441 = vmatpush1.msra.mxu0 0.0
  %1442 = vmatprep.subr.mxu0 0.0
  %1443 = vmatpush1.msra.mxu0 0.0
  %1444 = vmatprep.subr.mxu0 0.0
  %1445 = vmatpush1.msra.mxu0 0.0
  %1446 = vmatprep.subr.mxu0 0.0
  %1447 = vmatpush1.msra.mxu0 0.0
  %1448 = vmatprep.subr.mxu0 0.0
  %1449 = vmatpush1.msra.mxu0 0.0
  %1450 = vmatprep.subr.mxu0 0.0
  %1451 = vmatpush1.msra.mxu0 0.0
  %1452 = vmatprep.subr.mxu0 0.0
  %1453 = vmatpush1.msra.mxu0 0.0
  %1454 = vmatprep.subr.mxu0 0.0
  %1455 = vmatpush1.msra.mxu0 0.0
  %1456 = vmatprep.subr.mxu0 0.0
  %1457 = vmatpush1.msra.mxu0 0.0
  %1458 = vmatprep.subr.mxu0 0.0
  %1459 = vmatpush1.msra.mxu0 0.0
  %1460 = vmatprep.subr.mxu0 0.0
  %1461 = vmatpush1.msra.mxu0 0.0
  %1462 = vmatprep.subr.mxu0 0.0
  %1463 = vmatpush1.msra.mxu0 0.0
  %1464 = vmatprep.subr.mxu0 0.0
  %1465 = vmatpush1.msra.mxu0 0.0
  %1466 = vmatprep.subr.mxu0 0.0
  %1467 = vmatpush1.msra.mxu0 0.0
  %1468 = vmatprep.subr.mxu0 0.0
  %1469 = vmatpush1.msra.mxu0 0.0
  %1470 = vmatprep.subr.mxu0 0.0
  %1471 = vmatpush1.msra.mxu0 0.0
  %1472 = vmatprep.subr.mxu0 0.0
  %1473 = vmatpush1.msra.mxu0 0.0
  %1474 = vmatprep.subr.mxu0 0.0
  %1475 = vmatpush1.msra.mxu0 0.0
  %1476 = vmatprep.subr.mxu0 0.0
  %1477 = vmatpush1.msra.mxu0 0.0
  %1478 = vmatprep.subr.mxu0 0.0
  %1479 = vmatpush1.msra.mxu0 0.0
  %1480 = vmatprep.subr.mxu0 0.0
  %1481 = vmatpush1.msra.mxu0 0.0
  %1482 = vmatprep.mubr.f32.mxu0 0.0
  %1483 = vmatmul.mubr.f32.gmra.mrb[0].mxu0 %v1410
  %v1484 = vpop.f32.mrb[0].mxu0
  %v1485 = vadd.f32 0.0, %v1484
  %v1486 = vpop.f32.mrb[0].mxu0
  %1487 = vmatprep.mubr.f32.mxu0 0.0
  %1488 = vmatmul.mubr.f32.gmra.mrb[0].mxu0 %v1413
  %v1489 = vpop.f32.mrb[0].mxu0
  %v1490 = vadd.f32 0.0, %v1489
  %v1491 = vpop.f32.mrb[0].mxu0
  %1492 = vmatprep.mubr.f32.mxu0 0.0
  %1493 = vmatmul.mubr.f32.gmra.mrb[0].mxu0 %v1416
  %v1494 = vpop.f32.mrb[0].mxu0
  %v1495 = vadd.f32 0.0, %v1494
  %v1496 = vpop.f32.mrb[0].mxu0
  %1497 = vdwg.mxu0
  %v1498 = vadd.f32 %v284, %v1485
  %v1499 = vadd.f32 %v285, %v1490
  %v1500 = vadd.f32 %v286, %v1495
  %v1501 = vlaneseq
  %v1502 = vshrl.u32 %v1501, 7
  %v1503 = vsub.s32 2, %v1502
  %v1504 = vrot.slane %v287, %v1503
  %v1505 = vadd.f32 %v1498, %v1504
  %v1506 = vadd.f32 %v1499, %v1504
  %v1507 = vadd.f32 %v1500, %v1504
  %v1508 = vsel %vm345, %v1505, 0.0
  %1509 = vadd.xlane.f32.xlu0 %v1508
  %v1510 = vpop.xlane.xlu0 %1509
  %v1511 = vsel %vm345, %v1506, 0.0
  %1512 = vadd.xlane.f32.xlu0 %v1511
  %v1513 = vpop.xlane.xlu0 %1512
  %v1514 = vsel %vm352, %v1507, 0.0
  %1515 = vadd.xlane.f32.xlu0 %v1514
  %v1516 = vpop.xlane.xlu0 %1515
  %v1517 = vmul.f32 %v1510, %v356
  %v1518 = vmul.f32 %v1513, %v356
  %v1519 = vmul.f32 %v1516, %v356
  %v1520 = vsub.f32 %v1505, %v1517
  %v1521 = vsub.f32 %v1506, %v1518
  %v1522 = vsub.f32 %v1507, %v1519
  %v1523 = vmul.f32 %v1520, %v1520
  %v1524 = vmul.f32 %v1521, %v1521
  %v1525 = vmul.f32 %v1522, %v1522
  %v1526 = vsel %vm345, %v1523, 0.0
  %1527 = vadd.xlane.f32.xlu0 %v1526
  %v1528 = vpop.xlane.xlu0 %1527
  %v1529 = vsel %vm345, %v1524, 0.0
  %1530 = vadd.xlane.f32.xlu0 %v1529
  %v1531 = vpop.xlane.xlu0 %1530
  %v1532 = vsel %vm352, %v1525, 0.0
  %1533 = vadd.xlane.f32.xlu0 %v1532
  %v1534 = vpop.xlane.xlu0 %1533
  %v1535 = vmul.f32 %v1528, %v356
  %v1536 = vmul.f32 %v1531, %v356
  %v1537 = vmul.f32 %v1534, %v356
  %v1538 = vadd.f32 %v1535, 1e-06
  %v1539 = vadd.f32 %v1536, 1e-06
  %v1540 = vadd.f32 %v1537, 1e-06
  %v1541 = vrsqrt.pop %v1538
  %v1542 = vrsqrt.pop %v1539
  %v1543 = vrsqrt.pop %v1540
  %v1544 = vmul.f32 %v1520, %v1541
  %v1545 = vmul.f32 %v1521, %v1542
  %v1546 = vmul.f32 %v1522, %v1543
  %v1547 = vlaneseq
  %v1548 = vshrl.u32 %v1547, 7
  %v1549 = vsub.s32 3, %v1548
  %v1550 = vrot.slane %v287, %v1549
  %v1551 = vmul.f32 %v1544, %v1550
  %v1552 = vmul.f32 %v1545, %v1550
  %v1553 = vmul.f32 %v1546, %v1550
  %v1554 = vlaneseq
  %v1555 = vshrl.u32 %v1554, 7
  %v1556 = vsub.s32 4, %v1555
  %v1557 = vrot.slane %v287, %v1556
  %v1558 = vadd.f32 %v1551, %v1557
  %v1559 = vadd.f32 %v1552, %v1557
  %v1560 = vadd.f32 %v1553, %v1557
  %v1561 = vlaneseq
  %v1562 = vshrl.u32 %v1561, 7
  %v1563 = vsub.s32 7, %v1562
  %v1564 = vrot.slane %v287, %v1563
  %v1565 = vlaneseq
  %v1566 = vshrl.u32 %v1565, 7
  %v1567 = vsub.s32 7, %v1566
  %v1568 = vrot.slane %v288, %v1567
  %v1570 = vsel %vm345, %v1558, 0
  %v1573 = vsel %vm345, %v1559, 0
  %v1576 = vsel %vm345, %v1560, 0
  %1578 = vmatprep.subr.mxu0 %v310
  %1579 = vmatpush1.msra.mxu0 %v309
  %1580 = vmatprep.subr.mxu0 %v312
  %1581 = vmatpush1.msra.mxu0 %v311
  %1582 = vmatprep.subr.mxu0 %v314
  %1583 = vmatpush1.msra.mxu0 %v313
  %1584 = vmatprep.subr.mxu0 %v316
  %1585 = vmatpush1.msra.mxu0 %v315
  %1586 = vmatprep.subr.mxu0 %v318
  %1587 = vmatpush1.msra.mxu0 %v317
  %1588 = vmatprep.subr.mxu0 %v320
  %1589 = vmatpush1.msra.mxu0 %v319
  %1590 = vmatprep.subr.mxu0 0.0
  %1591 = vmatpush1.msra.mxu0 0.0
  %1592 = vmatprep.subr.mxu0 0.0
  %1593 = vmatpush1.msra.mxu0 0.0
  %1594 = vmatprep.subr.mxu0 0.0
  %1595 = vmatpush1.msra.mxu0 0.0
  %1596 = vmatprep.subr.mxu0 0.0
  %1597 = vmatpush1.msra.mxu0 0.0
  %1598 = vmatprep.subr.mxu0 0.0
  %1599 = vmatpush1.msra.mxu0 0.0
  %1600 = vmatprep.subr.mxu0 0.0
  %1601 = vmatpush1.msra.mxu0 0.0
  %1602 = vmatprep.subr.mxu0 0.0
  %1603 = vmatpush1.msra.mxu0 0.0
  %1604 = vmatprep.subr.mxu0 0.0
  %1605 = vmatpush1.msra.mxu0 0.0
  %1606 = vmatprep.subr.mxu0 0.0
  %1607 = vmatpush1.msra.mxu0 0.0
  %1608 = vmatprep.subr.mxu0 0.0
  %1609 = vmatpush1.msra.mxu0 0.0
  %1610 = vmatprep.subr.mxu0 0.0
  %1611 = vmatpush1.msra.mxu0 0.0
  %1612 = vmatprep.subr.mxu0 0.0
  %1613 = vmatpush1.msra.mxu0 0.0
  %1614 = vmatprep.subr.mxu0 0.0
  %1615 = vmatpush1.msra.mxu0 0.0
  %1616 = vmatprep.subr.mxu0 0.0
  %1617 = vmatpush1.msra.mxu0 0.0
  %1618 = vmatprep.subr.mxu0 0.0
  %1619 = vmatpush1.msra.mxu0 0.0
  %1620 = vmatprep.subr.mxu0 0.0
  %1621 = vmatpush1.msra.mxu0 0.0
  %1622 = vmatprep.subr.mxu0 0.0
  %1623 = vmatpush1.msra.mxu0 0.0
  %1624 = vmatprep.subr.mxu0 0.0
  %1625 = vmatpush1.msra.mxu0 0.0
  %1626 = vmatprep.subr.mxu0 0.0
  %1627 = vmatpush1.msra.mxu0 0.0
  %1628 = vmatprep.subr.mxu0 0.0
  %1629 = vmatpush1.msra.mxu0 0.0
  %1630 = vmatprep.subr.mxu0 0.0
  %1631 = vmatpush1.msra.mxu0 0.0
  %1632 = vmatprep.subr.mxu0 0.0
  %1633 = vmatpush1.msra.mxu0 0.0
  %1634 = vmatprep.subr.mxu0 0.0
  %1635 = vmatpush1.msra.mxu0 0.0
  %1636 = vmatprep.subr.mxu0 0.0
  %1637 = vmatpush1.msra.mxu0 0.0
  %1638 = vmatprep.subr.mxu0 0.0
  %1639 = vmatpush1.msra.mxu0 0.0
  %1640 = vmatprep.subr.mxu0 0.0
  %1641 = vmatpush1.msra.mxu0 0.0
  %1642 = vmatprep.mubr.f32.mxu0 0.0
  %1643 = vmatmul.mubr.f32.gmra.mrb[0].mxu0 %v1570
  %v1644 = vpop.f32.mrb[0].mxu0
  %v1645 = vadd.f32 %v1564, %v1644
  %v1646 = vpop.f32.mrb[0].mxu0
  %v1647 = vadd.f32 %v1568, %v1646
  %1648 = vmatprep.mubr.f32.mxu0 0.0
  %1649 = vmatmul.mubr.f32.gmra.mrb[0].mxu0 %v1573
  %v1650 = vpop.f32.mrb[0].mxu0
  %v1651 = vadd.f32 %v1564, %v1650
  %v1652 = vpop.f32.mrb[0].mxu0
  %v1653 = vadd.f32 %v1568, %v1652
  %1654 = vmatprep.mubr.f32.mxu0 0.0
  %1655 = vmatmul.mubr.f32.gmra.mrb[0].mxu0 %v1576
  %v1656 = vpop.f32.mrb[0].mxu0
  %v1657 = vadd.f32 %v1564, %v1656
  %v1658 = vpop.f32.mrb[0].mxu0
  %v1659 = vadd.f32 %v1568, %v1658
  %1660 = vdwg.mxu0
  %v1661 = vmul.f32 %v1645, 0.5
  %v1662 = vmul.f32 %v1647, 0.5
  %v1663 = vmul.f32 %v1651, 0.5
  %v1664 = vmul.f32 %v1653, 0.5
  %v1665 = vmul.f32 %v1657, 0.5
  %v1666 = vmul.f32 %v1659, 0.5
  %v1667 = vmul.f32 %v1645, 0.70710677
  %v1668 = vmul.f32 %v1647, 0.70710677
  %v1669 = vmul.f32 %v1651, 0.70710677
  %v1670 = vmul.f32 %v1653, 0.70710677
  %v1671 = vmul.f32 %v1657, 0.70710677
  %v1672 = vmul.f32 %v1659, 0.70710677
  %v1673 = vand.u32 2147483647, %v1667
  %v1674 = vand.u32 2147483647, %v1668
  %v1675 = vand.u32 2147483647, %v1669
  %v1676 = vand.u32 2147483647, %v1670
  %v1677 = vand.u32 2147483647, %v1671
  %v1678 = vand.u32 2147483647, %v1672
  %v1679 = vmul.f32 %v1673, 0.3275911
  %v1680 = vmul.f32 %v1674, 0.3275911
  %v1681 = vmul.f32 %v1675, 0.3275911
  %v1682 = vmul.f32 %v1676, 0.3275911
  %v1683 = vmul.f32 %v1677, 0.3275911
  %v1684 = vmul.f32 %v1678, 0.3275911
  %v1685 = vadd.f32 %v1679, 1.0
  %v1686 = vadd.f32 %v1680, 1.0
  %v1687 = vadd.f32 %v1681, 1.0
  %v1688 = vadd.f32 %v1682, 1.0
  %v1689 = vadd.f32 %v1683, 1.0
  %v1690 = vadd.f32 %v1684, 1.0
  %v1691 = vrcp.pop %v1685
  %v1692 = vmul.f32 1.0, %v1691
  %v1693 = vrcp.pop %v1686
  %v1694 = vmul.f32 1.0, %v1693
  %v1695 = vrcp.pop %v1687
  %v1696 = vmul.f32 1.0, %v1695
  %v1697 = vrcp.pop %v1688
  %v1698 = vmul.f32 1.0, %v1697
  %v1699 = vrcp.pop %v1689
  %v1700 = vmul.f32 1.0, %v1699
  %v1701 = vrcp.pop %v1690
  %v1702 = vmul.f32 1.0, %v1701
  %v1703 = vmul.f32 %v1692, 1.0614054
  %v1704 = vmul.f32 %v1694, 1.0614054
  %v1705 = vmul.f32 %v1696, 1.0614054
  %v1706 = vmul.f32 %v1698, 1.0614054
  %v1707 = vmul.f32 %v1700, 1.0614054
  %v1708 = vmul.f32 %v1702, 1.0614054
  %v1709 = vsub.f32 %v1703, 1.4531521
  %v1710 = vsub.f32 %v1704, 1.4531521
  %v1711 = vsub.f32 %v1705, 1.4531521
  %v1712 = vsub.f32 %v1706, 1.4531521
  %v1713 = vsub.f32 %v1707, 1.4531521
  %v1714 = vsub.f32 %v1708, 1.4531521
  %v1715 = vmul.f32 %v1709, %v1692
  %v1716 = vmul.f32 %v1710, %v1694
  %v1717 = vmul.f32 %v1711, %v1696
  %v1718 = vmul.f32 %v1712, %v1698
  %v1719 = vmul.f32 %v1713, %v1700
  %v1720 = vmul.f32 %v1714, %v1702
  %v1721 = vadd.f32 %v1715, 1.4214138
  %v1722 = vadd.f32 %v1716, 1.4214138
  %v1723 = vadd.f32 %v1717, 1.4214138
  %v1724 = vadd.f32 %v1718, 1.4214138
  %v1725 = vadd.f32 %v1719, 1.4214138
  %v1726 = vadd.f32 %v1720, 1.4214138
  %v1727 = vmul.f32 %v1721, %v1692
  %v1728 = vmul.f32 %v1722, %v1694
  %v1729 = vmul.f32 %v1723, %v1696
  %v1730 = vmul.f32 %v1724, %v1698
  %v1731 = vmul.f32 %v1725, %v1700
  %v1732 = vmul.f32 %v1726, %v1702
  %v1733 = vsub.f32 %v1727, 0.28449672
  %v1734 = vsub.f32 %v1728, 0.28449672
  %v1735 = vsub.f32 %v1729, 0.28449672
  %v1736 = vsub.f32 %v1730, 0.28449672
  %v1737 = vsub.f32 %v1731, 0.28449672
  %v1738 = vsub.f32 %v1732, 0.28449672
  %v1739 = vmul.f32 %v1733, %v1692
  %v1740 = vmul.f32 %v1734, %v1694
  %v1741 = vmul.f32 %v1735, %v1696
  %v1742 = vmul.f32 %v1736, %v1698
  %v1743 = vmul.f32 %v1737, %v1700
  %v1744 = vmul.f32 %v1738, %v1702
  %v1745 = vadd.f32 %v1739, 0.2548296
  %v1746 = vadd.f32 %v1740, 0.2548296
  %v1747 = vadd.f32 %v1741, 0.2548296
  %v1748 = vadd.f32 %v1742, 0.2548296
  %v1749 = vadd.f32 %v1743, 0.2548296
  %v1750 = vadd.f32 %v1744, 0.2548296
  %v1751 = vmul.f32 %v1745, %v1692
  %v1752 = vmul.f32 %v1746, %v1694
  %v1753 = vmul.f32 %v1747, %v1696
  %v1754 = vmul.f32 %v1748, %v1698
  %v1755 = vmul.f32 %v1749, %v1700
  %v1756 = vmul.f32 %v1750, %v1702
  %v1757 = vmul.f32 %v1673, %v1673
  %v1758 = vmul.f32 %v1674, %v1674
  %v1759 = vmul.f32 %v1675, %v1675
  %v1760 = vmul.f32 %v1676, %v1676
  %v1761 = vmul.f32 %v1677, %v1677
  %v1762 = vmul.f32 %v1678, %v1678
  %v1763 = vsub.f32 0.0, %v1757
  %v1764 = vsub.f32 0.0, %v1758
  %v1765 = vsub.f32 0.0, %v1759
  %v1766 = vsub.f32 0.0, %v1760
  %v1767 = vsub.f32 0.0, %v1761
  %v1768 = vsub.f32 0.0, %v1762
  %v1769 = vmul.f32 %v1763, 1.442695
  %v1770 = vpow.pop %v1769
  %v1771 = vmul.f32 %v1764, 1.442695
  %v1772 = vpow.pop %v1771
  %v1773 = vmul.f32 %v1765, 1.442695
  %v1774 = vpow.pop %v1773
  %v1775 = vmul.f32 %v1766, 1.442695
  %v1776 = vpow.pop %v1775
  %v1777 = vmul.f32 %v1767, 1.442695
  %v1778 = vpow.pop %v1777
  %v1779 = vmul.f32 %v1768, 1.442695
  %v1780 = vpow.pop %v1779
  %v1781 = vmul.f32 %v1751, %v1770
  %v1782 = vmul.f32 %v1752, %v1772
  %v1783 = vmul.f32 %v1753, %v1774
  %v1784 = vmul.f32 %v1754, %v1776
  %v1785 = vmul.f32 %v1755, %v1778
  %v1786 = vmul.f32 %v1756, %v1780
  %v1787 = vsub.f32 1.0, %v1781
  %v1788 = vsub.f32 1.0, %v1782
  %v1789 = vsub.f32 1.0, %v1783
  %v1790 = vsub.f32 1.0, %v1784
  %v1791 = vsub.f32 1.0, %v1785
  %v1792 = vsub.f32 1.0, %v1786
  %vm1793 = vcmp.lt.f32.partialorder %v1667, 0.0
  %vm1794 = vcmp.lt.f32.partialorder %v1668, 0.0
  %vm1795 = vcmp.lt.f32.partialorder %v1669, 0.0
  %vm1796 = vcmp.lt.f32.partialorder %v1670, 0.0
  %vm1797 = vcmp.lt.f32.partialorder %v1671, 0.0
  %vm1798 = vcmp.lt.f32.partialorder %v1672, 0.0
  %v1799 = vsub.f32 0.0, %v1787
  %v1800 = vsub.f32 0.0, %v1788
  %v1801 = vsub.f32 0.0, %v1789
  %v1802 = vsub.f32 0.0, %v1790
  %v1803 = vsub.f32 0.0, %v1791
  %v1804 = vsub.f32 0.0, %v1792
  %v1805 = vsel %vm1793, %v1799, %v1787
  %v1806 = vsel %vm1794, %v1800, %v1788
  %v1807 = vsel %vm1795, %v1801, %v1789
  %v1808 = vsel %vm1796, %v1802, %v1790
  %v1809 = vsel %vm1797, %v1803, %v1791
  %v1810 = vsel %vm1798, %v1804, %v1792
  %v1811 = vadd.f32 %v1805, 1.0
  %v1812 = vadd.f32 %v1806, 1.0
  %v1813 = vadd.f32 %v1807, 1.0
  %v1814 = vadd.f32 %v1808, 1.0
  %v1815 = vadd.f32 %v1809, 1.0
  %v1816 = vadd.f32 %v1810, 1.0
  %v1817 = vmul.f32 %v1661, %v1811
  %v1818 = vmul.f32 %v1662, %v1812
  %v1819 = vmul.f32 %v1663, %v1813
  %v1820 = vmul.f32 %v1664, %v1814
  %v1821 = vmul.f32 %v1665, %v1815
  %v1822 = vmul.f32 %v1666, %v1816
  %v1823 = vlaneseq
  %v1824 = vshrl.u32 %v1823, 7
  %v1825 = vsub.s32 5, %v1824
  %v1826 = vrot.slane %v287, %v1825
  %v1828 = vsel %vm516, %v1818, 0
  %v1831 = vsel %vm516, %v1820, 0
  %v1834 = vsel %vm516, %v1822, 0
  %1836 = vmatprep.subr.mxu0 0.0
  %1837 = vmatpush1.msra.mxu0 %v321
  %1838 = vmatprep.subr.mxu0 0.0
  %1839 = vmatpush1.msra.mxu0 %v322
  %1840 = vmatprep.subr.mxu0 0.0
  %1841 = vmatpush1.msra.mxu0 %v323
  %1842 = vmatprep.subr.mxu0 0.0
  %1843 = vmatpush1.msra.mxu0 %v324
  %1844 = vmatprep.subr.mxu0 0.0
  %1845 = vmatpush1.msra.mxu0 %v325
  %1846 = vmatprep.subr.mxu0 0.0
  %1847 = vmatpush1.msra.mxu0 %v326
  %1848 = vmatprep.subr.mxu0 0.0
  %1849 = vmatpush1.msra.mxu0 %v327
  %1850 = vmatprep.subr.mxu0 0.0
  %1851 = vmatpush1.msra.mxu0 %v328
  %1852 = vmatprep.subr.mxu0 0.0
  %1853 = vmatpush1.msra.mxu0 %v329
  %1854 = vmatprep.subr.mxu0 0.0
  %1855 = vmatpush1.msra.mxu0 %v330
  %1856 = vmatprep.subr.mxu0 0.0
  %1857 = vmatpush1.msra.mxu0 %v331
  %1858 = vmatprep.subr.mxu0 0.0
  %1859 = vmatpush1.msra.mxu0 %v332
  %1860 = vmatprep.subr.mxu0 0.0
  %1861 = vmatpush1.msra.mxu0 %v333
  %1862 = vmatprep.subr.mxu0 0.0
  %1863 = vmatpush1.msra.mxu0 %v334
  %1864 = vmatprep.subr.mxu0 0.0
  %1865 = vmatpush1.msra.mxu0 %v335
  %1866 = vmatprep.subr.mxu0 0.0
  %1867 = vmatpush1.msra.mxu0 %v336
  %1868 = vmatprep.subr.mxu0 0.0
  %1869 = vmatpush1.msra.mxu0 %v337
  %1870 = vmatprep.subr.mxu0 0.0
  %1871 = vmatpush1.msra.mxu0 %v338
  %1872 = vmatprep.subr.mxu0 0.0
  %1873 = vmatpush1.msra.mxu0 %v339
  %1874 = vmatprep.subr.mxu0 0.0
  %1875 = vmatpush1.msra.mxu0 %v340
  %1876 = vmatprep.subr.mxu0 0.0
  %1877 = vmatpush1.msra.mxu0 %v341
  %1878 = vmatprep.subr.mxu0 0.0
  %1879 = vmatpush1.msra.mxu0 %v342
  %1880 = vmatprep.subr.mxu0 0.0
  %1881 = vmatpush1.msra.mxu0 %v343
  %1882 = vmatprep.subr.mxu0 0.0
  %1883 = vmatpush1.msra.mxu0 %v344
  %1884 = vmatprep.subr.mxu0 0.0
  %1885 = vmatpush1.msra.mxu0 0.0
  %1886 = vmatprep.subr.mxu0 0.0
  %1887 = vmatpush1.msra.mxu0 0.0
  %1888 = vmatprep.subr.mxu0 0.0
  %1889 = vmatpush1.msra.mxu0 0.0
  %1890 = vmatprep.subr.mxu0 0.0
  %1891 = vmatpush1.msra.mxu0 0.0
  %1892 = vmatprep.subr.mxu0 0.0
  %1893 = vmatpush1.msra.mxu0 0.0
  %1894 = vmatprep.subr.mxu0 0.0
  %1895 = vmatpush1.msra.mxu0 0.0
  %1896 = vmatprep.subr.mxu0 0.0
  %1897 = vmatpush1.msra.mxu0 0.0
  %1898 = vmatprep.subr.mxu0 0.0
  %1899 = vmatpush1.msra.mxu0 0.0
  %1900 = vmatprep.mubr.f32.mxu0 %v1828
  %1901 = vmatmul.mubr.f32.gmra.mrb[0].mxu0 %v1817
  %v1902 = vpop.f32.mrb[0].mxu0
  %v1903 = vadd.f32 %v1826, %v1902
  %v1904 = vpop.f32.mrb[0].mxu0
  %1905 = vmatprep.mubr.f32.mxu0 %v1831
  %1906 = vmatmul.mubr.f32.gmra.mrb[0].mxu0 %v1819
  %v1907 = vpop.f32.mrb[0].mxu0
  %v1908 = vadd.f32 %v1826, %v1907
  %v1909 = vpop.f32.mrb[0].mxu0
  %1910 = vmatprep.mubr.f32.mxu0 %v1834
  %1911 = vmatmul.mubr.f32.gmra.mrb[0].mxu0 %v1821
  %v1912 = vpop.f32.mrb[0].mxu0
  %v1913 = vadd.f32 %v1826, %v1912
  %v1914 = vpop.f32.mrb[0].mxu0
  %1915 = vdwg.mxu0
  %v1916 = vadd.f32 %v1505, %v1903
  %v1917 = vadd.f32 %v1506, %v1908
  %v1918 = vadd.f32 %v1507, %v1913
  %s1919 = scalar_lea.vmem %s11, 16
  %v1920 = vld [vmem:[%s1919] sm:$0xff]
  %v1921 = vld [vmem:[%s1919 + $0x8] sm:$0xff]
  %s1922 = scalar_lea.vmem %s7, 96
  %v1923 = vld [vmem:[%s1922] sm:$0xff]
  %v1924 = vld [vmem:[%s1922 + $0x8] sm:$0xff]
  %v1925 = vld [vmem:[%s1922 + $0x10] sm:$0xff]
  %v1926 = vld [vmem:[%s1922 + $0x18] sm:$0xff]
  %v1927 = vld [vmem:[%s1922 + $0x20] sm:$0xff]
  %v1928 = vld [vmem:[%s1922 + $0x28] sm:$0xff]
  %v1929 = vld [vmem:[%s1922 + $0x30] sm:$0xff]
  %v1930 = vld [vmem:[%s1922 + $0x38] sm:$0xff]
  %v1931 = vld [vmem:[%s1922 + $0x40] sm:$0xff]
  %v1932 = vld [vmem:[%s1922 + $0x48] sm:$0xff]
  %v1933 = vld [vmem:[%s1922 + $0x50] sm:$0xff]
  %v1934 = vld [vmem:[%s1922 + $0x58] sm:$0xff]
  %s1935 = scalar_lea.vmem %s8, 64
  %v1936 = vld [vmem:[%s1935] sm:$0xff]
  %v1937 = vld [vmem:[%s1935 + $0x8] sm:$0xff]
  %v1938 = vld [vmem:[%s1935 + $0x10] sm:$0xff]
  %v1939 = vld [vmem:[%s1935 + $0x18] sm:$0xff]
  %v1940 = vld [vmem:[%s1935 + $0x20] sm:$0xff]
  %v1941 = vld [vmem:[%s1935 + $0x28] sm:$0xff]
  %v1942 = vld [vmem:[%s1935 + $0x30] sm:$0xff]
  %v1943 = vld [vmem:[%s1935 + $0x38] sm:$0xff]
  %s1944 = scalar_lea.vmem %s9, 96
  %v1945 = vld [vmem:[%s1944] sm:$0xff]
  %v1946 = vld [vmem:[%s1944 + $0x8] sm:$0xff]
  %v1947 = vld [vmem:[%s1944 + $0x10] sm:$0xff]
  %v1948 = vld [vmem:[%s1944 + $0x18] sm:$0xff]
  %v1949 = vld [vmem:[%s1944 + $0x20] sm:$0xff]
  %v1950 = vld [vmem:[%s1944 + $0x28] sm:$0xff]
  %v1951 = vld [vmem:[%s1944 + $0x30] sm:$0xff]
  %v1952 = vld [vmem:[%s1944 + $0x38] sm:$0xff]
  %v1953 = vld [vmem:[%s1944 + $0x40] sm:$0xff]
  %v1954 = vld [vmem:[%s1944 + $0x48] sm:$0xff]
  %v1955 = vld [vmem:[%s1944 + $0x50] sm:$0xff]
  %v1956 = vld [vmem:[%s1944 + $0x58] sm:$0xff]
  %s1957 = scalar_lea.vmem %s10, 192
  %v1958 = vld [vmem:[%s1957] sm:$0xff]
  %v1959 = vld [vmem:[%s1957 + $0x8] sm:$0xff]
  %v1960 = vld [vmem:[%s1957 + $0x10] sm:$0xff]
  %v1961 = vld [vmem:[%s1957 + $0x18] sm:$0xff]
  %v1962 = vld [vmem:[%s1957 + $0x20] sm:$0xff]
  %v1963 = vld [vmem:[%s1957 + $0x28] sm:$0xff]
  %v1964 = vld [vmem:[%s1957 + $0x30] sm:$0xff]
  %v1965 = vld [vmem:[%s1957 + $0x38] sm:$0xff]
  %v1966 = vld [vmem:[%s1957 + $0x40] sm:$0xff]
  %v1967 = vld [vmem:[%s1957 + $0x48] sm:$0xff]
  %v1968 = vld [vmem:[%s1957 + $0x50] sm:$0xff]
  %v1969 = vld [vmem:[%s1957 + $0x58] sm:$0xff]
  %v1970 = vld [vmem:[%s1957 + $0x60] sm:$0xff]
  %v1971 = vld [vmem:[%s1957 + $0x68] sm:$0xff]
  %v1972 = vld [vmem:[%s1957 + $0x70] sm:$0xff]
  %v1973 = vld [vmem:[%s1957 + $0x78] sm:$0xff]
  %v1974 = vld [vmem:[%s1957 + $0x80] sm:$0xff]
  %v1975 = vld [vmem:[%s1957 + $0x88] sm:$0xff]
  %v1976 = vld [vmem:[%s1957 + $0x90] sm:$0xff]
  %v1977 = vld [vmem:[%s1957 + $0x98] sm:$0xff]
  %v1978 = vld [vmem:[%s1957 + $0xa0] sm:$0xff]
  %v1979 = vld [vmem:[%s1957 + $0xa8] sm:$0xff]
  %v1980 = vld [vmem:[%s1957 + $0xb0] sm:$0xff]
  %v1981 = vld [vmem:[%s1957 + $0xb8] sm:$0xff]
  %v1982 = vsel %vm345, %v1916, 0.0
  %1983 = vadd.xlane.f32.xlu0 %v1982
  %v1984 = vpop.xlane.xlu0 %1983
  %v1985 = vsel %vm345, %v1917, 0.0
  %1986 = vadd.xlane.f32.xlu0 %v1985
  %v1987 = vpop.xlane.xlu0 %1986
  %v1988 = vsel %vm352, %v1918, 0.0
  %1989 = vadd.xlane.f32.xlu0 %v1988
  %v1990 = vpop.xlane.xlu0 %1989
  %v1991 = vmul.f32 %v1984, %v356
  %v1992 = vmul.f32 %v1987, %v356
  %v1993 = vmul.f32 %v1990, %v356
  %v1994 = vsub.f32 %v1916, %v1991
  %v1995 = vsub.f32 %v1917, %v1992
  %v1996 = vsub.f32 %v1918, %v1993
  %v1997 = vmul.f32 %v1994, %v1994
  %v1998 = vmul.f32 %v1995, %v1995
  %v1999 = vmul.f32 %v1996, %v1996
  %v2000 = vsel %vm345, %v1997, 0.0
  %2001 = vadd.xlane.f32.xlu0 %v2000
  %v2002 = vpop.xlane.xlu0 %2001
  %v2003 = vsel %vm345, %v1998, 0.0
  %2004 = vadd.xlane.f32.xlu0 %v2003
  %v2005 = vpop.xlane.xlu0 %2004
  %v2006 = vsel %vm352, %v1999, 0.0
  %2007 = vadd.xlane.f32.xlu0 %v2006
  %v2008 = vpop.xlane.xlu0 %2007
  %v2009 = vmul.f32 %v2002, %v356
  %v2010 = vmul.f32 %v2005, %v356
  %v2011 = vmul.f32 %v2008, %v356
  %v2012 = vadd.f32 %v2009, 1e-06
  %v2013 = vadd.f32 %v2010, 1e-06
  %v2014 = vadd.f32 %v2011, 1e-06
  %v2015 = vrsqrt.pop %v2012
  %v2016 = vrsqrt.pop %v2013
  %v2017 = vrsqrt.pop %v2014
  %v2018 = vmul.f32 %v1994, %v2015
  %v2019 = vmul.f32 %v1995, %v2016
  %v2020 = vmul.f32 %v1996, %v2017
  %v2021 = vlaneseq
  %v2022 = vshrl.u32 %v2021, 7
  %v2023 = vsub.s32 0, %v2022
  %v2024 = vrot.slane %v1920, %v2023
  %v2025 = vmul.f32 %v2018, %v2024
  %v2026 = vmul.f32 %v2019, %v2024
  %v2027 = vmul.f32 %v2020, %v2024
  %v2028 = vlaneseq
  %v2029 = vshrl.u32 %v2028, 7
  %v2030 = vsub.s32 1, %v2029
  %v2031 = vrot.slane %v1920, %v2030
  %v2032 = vadd.f32 %v2025, %v2031
  %v2033 = vadd.f32 %v2026, %v2031
  %v2034 = vadd.f32 %v2027, %v2031
  %v2035 = vlaneseq
  %v2036 = vshrl.u32 %v2035, 7
  %v2037 = vsub.s32 6, %v2036
  %v2038 = vrot.slane %v1920, %v2037
  %v2039 = vlaneseq
  %v2040 = vshrl.u32 %v2039, 7
  %v2041 = vsub.s32 6, %v2040
  %v2042 = vrot.slane %v1921, %v2041
  %v2044 = vsel %vm345, %v2032, 0
  %v2047 = vsel %vm345, %v2033, 0
  %v2050 = vsel %vm345, %v2034, 0
  %2052 = vmatprep.subr.mxu0 %v1924
  %2053 = vmatpush1.msra.mxu0 %v1923
  %2054 = vmatprep.subr.mxu0 %v1926
  %2055 = vmatpush1.msra.mxu0 %v1925
  %2056 = vmatprep.subr.mxu0 %v1928
  %2057 = vmatpush1.msra.mxu0 %v1927
  %2058 = vmatprep.subr.mxu0 %v1930
  %2059 = vmatpush1.msra.mxu0 %v1929
  %2060 = vmatprep.subr.mxu0 %v1932
  %2061 = vmatpush1.msra.mxu0 %v1931
  %2062 = vmatprep.subr.mxu0 %v1934
  %2063 = vmatpush1.msra.mxu0 %v1933
  %2064 = vmatprep.subr.mxu0 0.0
  %2065 = vmatpush1.msra.mxu0 0.0
  %2066 = vmatprep.subr.mxu0 0.0
  %2067 = vmatpush1.msra.mxu0 0.0
  %2068 = vmatprep.subr.mxu0 0.0
  %2069 = vmatpush1.msra.mxu0 0.0
  %2070 = vmatprep.subr.mxu0 0.0
  %2071 = vmatpush1.msra.mxu0 0.0
  %2072 = vmatprep.subr.mxu0 0.0
  %2073 = vmatpush1.msra.mxu0 0.0
  %2074 = vmatprep.subr.mxu0 0.0
  %2075 = vmatpush1.msra.mxu0 0.0
  %2076 = vmatprep.subr.mxu0 0.0
  %2077 = vmatpush1.msra.mxu0 0.0
  %2078 = vmatprep.subr.mxu0 0.0
  %2079 = vmatpush1.msra.mxu0 0.0
  %2080 = vmatprep.subr.mxu0 0.0
  %2081 = vmatpush1.msra.mxu0 0.0
  %2082 = vmatprep.subr.mxu0 0.0
  %2083 = vmatpush1.msra.mxu0 0.0
  %2084 = vmatprep.subr.mxu0 0.0
  %2085 = vmatpush1.msra.mxu0 0.0
  %2086 = vmatprep.subr.mxu0 0.0
  %2087 = vmatpush1.msra.mxu0 0.0
  %2088 = vmatprep.subr.mxu0 0.0
  %2089 = vmatpush1.msra.mxu0 0.0
  %2090 = vmatprep.subr.mxu0 0.0
  %2091 = vmatpush1.msra.mxu0 0.0
  %2092 = vmatprep.subr.mxu0 0.0
  %2093 = vmatpush1.msra.mxu0 0.0
  %2094 = vmatprep.subr.mxu0 0.0
  %2095 = vmatpush1.msra.mxu0 0.0
  %2096 = vmatprep.subr.mxu0 0.0
  %2097 = vmatpush1.msra.mxu0 0.0
  %2098 = vmatprep.subr.mxu0 0.0
  %2099 = vmatpush1.msra.mxu0 0.0
  %2100 = vmatprep.subr.mxu0 0.0
  %2101 = vmatpush1.msra.mxu0 0.0
  %2102 = vmatprep.subr.mxu0 0.0
  %2103 = vmatpush1.msra.mxu0 0.0
  %2104 = vmatprep.subr.mxu0 0.0
  %2105 = vmatpush1.msra.mxu0 0.0
  %2106 = vmatprep.subr.mxu0 0.0
  %2107 = vmatpush1.msra.mxu0 0.0
  %2108 = vmatprep.subr.mxu0 0.0
  %2109 = vmatpush1.msra.mxu0 0.0
  %2110 = vmatprep.subr.mxu0 0.0
  %2111 = vmatpush1.msra.mxu0 0.0
  %2112 = vmatprep.subr.mxu0 0.0
  %2113 = vmatpush1.msra.mxu0 0.0
  %2114 = vmatprep.subr.mxu0 0.0
  %2115 = vmatpush1.msra.mxu0 0.0
  %2116 = vmatprep.mubr.f32.mxu0 0.0
  %2117 = vmatmul.mubr.f32.gmra.mrb[0].mxu0 %v2044
  %v2118 = vpop.f32.mrb[0].mxu0
  %v2119 = vadd.f32 %v2038, %v2118
  %v2120 = vpop.f32.mrb[0].mxu0
  %v2121 = vadd.f32 %v2042, %v2120
  %2122 = vmatprep.mubr.f32.mxu0 0.0
  %2123 = vmatmul.mubr.f32.gmra.mrb[0].mxu0 %v2047
  %v2124 = vpop.f32.mrb[0].mxu0
  %v2125 = vadd.f32 %v2038, %v2124
  %v2126 = vpop.f32.mrb[0].mxu0
  %v2127 = vadd.f32 %v2042, %v2126
  %2128 = vmatprep.mubr.f32.mxu0 0.0
  %2129 = vmatmul.mubr.f32.gmra.mrb[0].mxu0 %v2050
  %v2130 = vpop.f32.mrb[0].mxu0
  %v2131 = vadd.f32 %v2038, %v2130
  %v2132 = vpop.f32.mrb[0].mxu0
  %v2133 = vadd.f32 %v2042, %v2132
  %2134 = vdwg.mxu0
  %v2135 = vmul.f32 %v2119, 0.28867513
  %v2136 = vmul.f32 %v2125, 0.28867513
  %v2137 = vmul.f32 %v2131, 0.28867513
  %v2138 = vmul.f32 %v2135, %v127
  %v2139 = vmul.f32 %v2136, %v127
  %v2140 = vmul.f32 %v2137, %v127
  %2144 = vrot.lane.b32.xlu0 %v2119, 64
  %v2145 = vpop.permute.xlu0 %2144
  %2146 = vrot.lane.b32.xlu0 %v2125, 64
  %v2147 = vpop.permute.xlu0 %2146
  %2148 = vrot.lane.b32.xlu0 %v2131, 64
  %v2149 = vpop.permute.xlu0 %2148
  %v2151 = vsel %vm516, %v2138, 0
  %v2154 = vsel %vm516, %v2139, 0
  %v2157 = vsel %vm516, %v2140, 0
  %v2159 = vsel %vm516, %v2145, 0
  %v2161 = vsel %vm516, %v2147, 0
  %v2163 = vsel %vm516, %v2149, 0
  %2165 = vmatprep.subr.mxu0 0.0
  %2166 = vmatpush1.xpose.msra.mxu0 %v2159
  %2167 = vmatprep.subr.mxu0 0.0
  %2168 = vmatpush1.xpose.msra.mxu0 %v2161
  %2169 = vmatprep.subr.mxu0 0.0
  %2170 = vmatpush1.xpose.msra.mxu0 %v2163
  %2171 = vmatprep.subr.mxu0 0.0
  %2172 = vmatpush1.xpose.msra.mxu0 0.0
  %2173 = vmatprep.subr.mxu0 0.0
  %2174 = vmatpush1.xpose.msra.mxu0 0.0
  %2175 = vmatprep.subr.mxu0 0.0
  %2176 = vmatpush1.xpose.msra.mxu0 0.0
  %2177 = vmatprep.subr.mxu0 0.0
  %2178 = vmatpush1.xpose.msra.mxu0 0.0
  %2179 = vmatprep.subr.mxu0 0.0
  %2180 = vmatpush1.xpose.msra.mxu0 0.0
  %2181 = vmatprep.subr.mxu0 0.0
  %2182 = vmatpush1.xpose.msra.mxu0 0.0
  %2183 = vmatprep.subr.mxu0 0.0
  %2184 = vmatpush1.xpose.msra.mxu0 0.0
  %2185 = vmatprep.subr.mxu0 0.0
  %2186 = vmatpush1.xpose.msra.mxu0 0.0
  %2187 = vmatprep.subr.mxu0 0.0
  %2188 = vmatpush1.xpose.msra.mxu0 0.0
  %2189 = vmatprep.subr.mxu0 0.0
  %2190 = vmatpush1.xpose.msra.mxu0 0.0
  %2191 = vmatprep.subr.mxu0 0.0
  %2192 = vmatpush1.xpose.msra.mxu0 0.0
  %2193 = vmatprep.subr.mxu0 0.0
  %2194 = vmatpush1.xpose.msra.mxu0 0.0
  %2195 = vmatprep.subr.mxu0 0.0
  %2196 = vmatpush1.xpose.msra.mxu0 0.0
  %2197 = vmatprep.subr.mxu0 0.0
  %2198 = vmatpush1.xpose.msra.mxu0 0.0
  %2199 = vmatprep.subr.mxu0 0.0
  %2200 = vmatpush1.xpose.msra.mxu0 0.0
  %2201 = vmatprep.subr.mxu0 0.0
  %2202 = vmatpush1.xpose.msra.mxu0 0.0
  %2203 = vmatprep.subr.mxu0 0.0
  %2204 = vmatpush1.xpose.msra.mxu0 0.0
  %2205 = vmatprep.subr.mxu0 0.0
  %2206 = vmatpush1.xpose.msra.mxu0 0.0
  %2207 = vmatprep.subr.mxu0 0.0
  %2208 = vmatpush1.xpose.msra.mxu0 0.0
  %2209 = vmatprep.subr.mxu0 0.0
  %2210 = vmatpush1.xpose.msra.mxu0 0.0
  %2211 = vmatprep.subr.mxu0 0.0
  %2212 = vmatpush1.xpose.msra.mxu0 0.0
  %2213 = vmatprep.subr.mxu0 0.0
  %2214 = vmatpush1.xpose.msra.mxu0 0.0
  %2215 = vmatprep.subr.mxu0 0.0
  %2216 = vmatpush1.xpose.msra.mxu0 0.0
  %2217 = vmatprep.subr.mxu0 0.0
  %2218 = vmatpush1.xpose.msra.mxu0 0.0
  %2219 = vmatprep.subr.mxu0 0.0
  %2220 = vmatpush1.xpose.msra.mxu0 0.0
  %2221 = vmatprep.subr.mxu0 0.0
  %2222 = vmatpush1.xpose.msra.mxu0 0.0
  %2223 = vmatprep.subr.mxu0 0.0
  %2224 = vmatpush1.xpose.msra.mxu0 0.0
  %2225 = vmatprep.subr.mxu0 0.0
  %2226 = vmatpush1.xpose.msra.mxu0 0.0
  %2227 = vmatprep.subr.mxu0 0.0
  %2228 = vmatpush1.xpose.msra.mxu0 0.0
  %2229 = vmatprep.mubr.f32.mxu0 0.0
  %2230 = vmatmul.mubr.f32.gmra.mrb[0].mxu0 %v2151
  %v2231 = vpop.f32.mrb[0].mxu0
  %v2232 = vadd.f32 %v117, %v2231
  %v2233 = vpop.f32.mrb[0].mxu0
  %2234 = vmatprep.mubr.f32.mxu0 0.0
  %2235 = vmatmul.mubr.f32.gmra.mrb[0].mxu0 %v2154
  %v2236 = vpop.f32.mrb[0].mxu0
  %v2237 = vadd.f32 %v118, %v2236
  %v2238 = vpop.f32.mrb[0].mxu0
  %2239 = vmatprep.mubr.f32.mxu0 0.0
  %2240 = vmatmul.mubr.f32.gmra.mrb[0].mxu0 %v2157
  %v2241 = vpop.f32.mrb[0].mxu0
  %v2242 = vadd.f32 %v119, %v2241
  %v2243 = vpop.f32.mrb[0].mxu0
  %2244 = vdwg.mxu0
  %v2245 = vsel %vm612, %v2232, -inf
  %2246 = vmax.xlane.f32.xlu0 %v2245
  %v2247 = vpop.xlane.xlu0 %2246
  %v2248 = vsel %vm612, %v2237, -inf
  %2249 = vmax.xlane.f32.xlu0 %v2248
  %v2250 = vpop.xlane.xlu0 %2249
  %v2251 = vsel %vm619, %v2242, -inf
  %2252 = vmax.xlane.f32.xlu0 %v2251
  %v2253 = vpop.xlane.xlu0 %2252
  %v2254 = vsub.f32 %v2232, %v2247
  %v2255 = vsub.f32 %v2237, %v2250
  %v2256 = vsub.f32 %v2242, %v2253
  %v2257 = vmul.f32 %v2254, 1.442695
  %v2258 = vpow.pop %v2257
  %v2259 = vmul.f32 %v2255, 1.442695
  %v2260 = vpow.pop %v2259
  %v2261 = vmul.f32 %v2256, 1.442695
  %v2262 = vpow.pop %v2261
  %v2263 = vsel %vm612, %v2258, 0.0
  %2264 = vadd.xlane.f32.xlu0 %v2263
  %v2265 = vpop.xlane.xlu0 %2264
  %v2266 = vsel %vm612, %v2260, 0.0
  %2267 = vadd.xlane.f32.xlu0 %v2266
  %v2268 = vpop.xlane.xlu0 %2267
  %v2269 = vsel %vm619, %v2262, 0.0
  %2270 = vadd.xlane.f32.xlu0 %v2269
  %v2271 = vpop.xlane.xlu0 %2270
  %v2272 = vrcp.pop %v2265
  %v2273 = vrcp.pop %v2268
  %v2274 = vrcp.pop %v2271
  %v2275 = vmul.f32 %v2258, %v2272
  %v2276 = vmul.f32 %v2260, %v2273
  %v2277 = vmul.f32 %v2262, %v2274
  %v2278 = vmul.f32 %v2121, %v127
  %v2279 = vmul.f32 %v2127, %v127
  %v2280 = vmul.f32 %v2133, %v127
  %v2281 = vmul.f32 %v2135, %v132
  %v2282 = vmul.f32 %v2136, %v132
  %v2283 = vmul.f32 %v2137, %v132
  %v2285 = vsel %vm516, %v2281, 0
  %v2288 = vsel %vm516, %v2282, 0
  %v2291 = vsel %vm516, %v2283, 0
  %2293 = vmatprep.subr.mxu0 0.0
  %2294 = vmatpush1.xpose.msra.mxu0 %v2159
  %2295 = vmatprep.subr.mxu0 0.0
  %2296 = vmatpush1.xpose.msra.mxu0 %v2161
  %2297 = vmatprep.subr.mxu0 0.0
  %2298 = vmatpush1.xpose.msra.mxu0 %v2163
  %2299 = vmatprep.subr.mxu0 0.0
  %2300 = vmatpush1.xpose.msra.mxu0 0.0
  %2301 = vmatprep.subr.mxu0 0.0
  %2302 = vmatpush1.xpose.msra.mxu0 0.0
  %2303 = vmatprep.subr.mxu0 0.0
  %2304 = vmatpush1.xpose.msra.mxu0 0.0
  %2305 = vmatprep.subr.mxu0 0.0
  %2306 = vmatpush1.xpose.msra.mxu0 0.0
  %2307 = vmatprep.subr.mxu0 0.0
  %2308 = vmatpush1.xpose.msra.mxu0 0.0
  %2309 = vmatprep.subr.mxu0 0.0
  %2310 = vmatpush1.xpose.msra.mxu0 0.0
  %2311 = vmatprep.subr.mxu0 0.0
  %2312 = vmatpush1.xpose.msra.mxu0 0.0
  %2313 = vmatprep.subr.mxu0 0.0
  %2314 = vmatpush1.xpose.msra.mxu0 0.0
  %2315 = vmatprep.subr.mxu0 0.0
  %2316 = vmatpush1.xpose.msra.mxu0 0.0
  %2317 = vmatprep.subr.mxu0 0.0
  %2318 = vmatpush1.xpose.msra.mxu0 0.0
  %2319 = vmatprep.subr.mxu0 0.0
  %2320 = vmatpush1.xpose.msra.mxu0 0.0
  %2321 = vmatprep.subr.mxu0 0.0
  %2322 = vmatpush1.xpose.msra.mxu0 0.0
  %2323 = vmatprep.subr.mxu0 0.0
  %2324 = vmatpush1.xpose.msra.mxu0 0.0
  %2325 = vmatprep.subr.mxu0 0.0
  %2326 = vmatpush1.xpose.msra.mxu0 0.0
  %2327 = vmatprep.subr.mxu0 0.0
  %2328 = vmatpush1.xpose.msra.mxu0 0.0
  %2329 = vmatprep.subr.mxu0 0.0
  %2330 = vmatpush1.xpose.msra.mxu0 0.0
  %2331 = vmatprep.subr.mxu0 0.0
  %2332 = vmatpush1.xpose.msra.mxu0 0.0
  %2333 = vmatprep.subr.mxu0 0.0
  %2334 = vmatpush1.xpose.msra.mxu0 0.0
  %2335 = vmatprep.subr.mxu0 0.0
  %2336 = vmatpush1.xpose.msra.mxu0 0.0
  %2337 = vmatprep.subr.mxu0 0.0
  %2338 = vmatpush1.xpose.msra.mxu0 0.0
  %2339 = vmatprep.subr.mxu0 0.0
  %2340 = vmatpush1.xpose.msra.mxu0 0.0
  %2341 = vmatprep.subr.mxu0 0.0
  %2342 = vmatpush1.xpose.msra.mxu0 0.0
  %2343 = vmatprep.subr.mxu0 0.0
  %2344 = vmatpush1.xpose.msra.mxu0 0.0
  %2345 = vmatprep.subr.mxu0 0.0
  %2346 = vmatpush1.xpose.msra.mxu0 0.0
  %2347 = vmatprep.subr.mxu0 0.0
  %2348 = vmatpush1.xpose.msra.mxu0 0.0
  %2349 = vmatprep.subr.mxu0 0.0
  %2350 = vmatpush1.xpose.msra.mxu0 0.0
  %2351 = vmatprep.subr.mxu0 0.0
  %2352 = vmatpush1.xpose.msra.mxu0 0.0
  %2353 = vmatprep.subr.mxu0 0.0
  %2354 = vmatpush1.xpose.msra.mxu0 0.0
  %2355 = vmatprep.subr.mxu0 0.0
  %2356 = vmatpush1.xpose.msra.mxu0 0.0
  %2357 = vmatprep.mubr.f32.mxu0 0.0
  %2358 = vmatmul.mubr.f32.gmra.mrb[0].mxu0 %v2285
  %v2359 = vpop.f32.mrb[0].mxu0
  %v2360 = vadd.f32 %v117, %v2359
  %v2361 = vpop.f32.mrb[0].mxu0
  %2362 = vmatprep.mubr.f32.mxu0 0.0
  %2363 = vmatmul.mubr.f32.gmra.mrb[0].mxu0 %v2288
  %v2364 = vpop.f32.mrb[0].mxu0
  %v2365 = vadd.f32 %v118, %v2364
  %v2366 = vpop.f32.mrb[0].mxu0
  %2367 = vmatprep.mubr.f32.mxu0 0.0
  %2368 = vmatmul.mubr.f32.gmra.mrb[0].mxu0 %v2291
  %v2369 = vpop.f32.mrb[0].mxu0
  %v2370 = vadd.f32 %v119, %v2369
  %v2371 = vpop.f32.mrb[0].mxu0
  %2372 = vdwg.mxu0
  %v2373 = vsel %vm612, %v2360, -inf
  %2374 = vmax.xlane.f32.xlu0 %v2373
  %v2375 = vpop.xlane.xlu0 %2374
  %v2376 = vsel %vm612, %v2365, -inf
  %2377 = vmax.xlane.f32.xlu0 %v2376
  %v2378 = vpop.xlane.xlu0 %2377
  %v2379 = vsel %vm619, %v2370, -inf
  %2380 = vmax.xlane.f32.xlu0 %v2379
  %v2381 = vpop.xlane.xlu0 %2380
  %v2382 = vsub.f32 %v2360, %v2375
  %v2383 = vsub.f32 %v2365, %v2378
  %v2384 = vsub.f32 %v2370, %v2381
  %v2385 = vmul.f32 %v2382, 1.442695
  %v2386 = vpow.pop %v2385
  %v2387 = vmul.f32 %v2383, 1.442695
  %v2388 = vpow.pop %v2387
  %v2389 = vmul.f32 %v2384, 1.442695
  %v2390 = vpow.pop %v2389
  %v2391 = vsel %vm612, %v2386, 0.0
  %2392 = vadd.xlane.f32.xlu0 %v2391
  %v2393 = vpop.xlane.xlu0 %2392
  %v2394 = vsel %vm612, %v2388, 0.0
  %2395 = vadd.xlane.f32.xlu0 %v2394
  %v2396 = vpop.xlane.xlu0 %2395
  %v2397 = vsel %vm619, %v2390, 0.0
  %2398 = vadd.xlane.f32.xlu0 %v2397
  %v2399 = vpop.xlane.xlu0 %2398
  %v2400 = vrcp.pop %v2393
  %v2401 = vrcp.pop %v2396
  %v2402 = vrcp.pop %v2399
  %v2403 = vmul.f32 %v2386, %v2400
  %v2404 = vmul.f32 %v2388, %v2401
  %v2405 = vmul.f32 %v2390, %v2402
  %v2406 = vmul.f32 %v2121, %v132
  %v2407 = vmul.f32 %v2127, %v132
  %v2408 = vmul.f32 %v2133, %v132
  %v2410 = vsel %vm612, %v2403, 0
  %v2413 = vsel %vm612, %v2404, 0
  %v2416 = vsel %vm612, %v2405, 0
  %v2419 = vsel %vm787, %v2408, 0
  %2421 = vmatprep.subr.mxu0 0.0
  %2422 = vmatpush1.msra.mxu0 %v2406
  %2423 = vmatprep.subr.mxu0 0.0
  %2424 = vmatpush1.msra.mxu0 %v2407
  %2425 = vmatprep.subr.mxu0 0.0
  %2426 = vmatpush1.msra.mxu0 %v2419
  %2427 = vmatprep.subr.mxu0 0.0
  %2428 = vmatpush1.msra.mxu0 0.0
  %2429 = vmatprep.subr.mxu0 0.0
  %2430 = vmatpush1.msra.mxu0 0.0
  %2431 = vmatprep.subr.mxu0 0.0
  %2432 = vmatpush1.msra.mxu0 0.0
  %2433 = vmatprep.subr.mxu0 0.0
  %2434 = vmatpush1.msra.mxu0 0.0
  %2435 = vmatprep.subr.mxu0 0.0
  %2436 = vmatpush1.msra.mxu0 0.0
  %2437 = vmatprep.subr.mxu0 0.0
  %2438 = vmatpush1.msra.mxu0 0.0
  %2439 = vmatprep.subr.mxu0 0.0
  %2440 = vmatpush1.msra.mxu0 0.0
  %2441 = vmatprep.subr.mxu0 0.0
  %2442 = vmatpush1.msra.mxu0 0.0
  %2443 = vmatprep.subr.mxu0 0.0
  %2444 = vmatpush1.msra.mxu0 0.0
  %2445 = vmatprep.subr.mxu0 0.0
  %2446 = vmatpush1.msra.mxu0 0.0
  %2447 = vmatprep.subr.mxu0 0.0
  %2448 = vmatpush1.msra.mxu0 0.0
  %2449 = vmatprep.subr.mxu0 0.0
  %2450 = vmatpush1.msra.mxu0 0.0
  %2451 = vmatprep.subr.mxu0 0.0
  %2452 = vmatpush1.msra.mxu0 0.0
  %2453 = vmatprep.subr.mxu0 0.0
  %2454 = vmatpush1.msra.mxu0 0.0
  %2455 = vmatprep.subr.mxu0 0.0
  %2456 = vmatpush1.msra.mxu0 0.0
  %2457 = vmatprep.subr.mxu0 0.0
  %2458 = vmatpush1.msra.mxu0 0.0
  %2459 = vmatprep.subr.mxu0 0.0
  %2460 = vmatpush1.msra.mxu0 0.0
  %2461 = vmatprep.subr.mxu0 0.0
  %2462 = vmatpush1.msra.mxu0 0.0
  %2463 = vmatprep.subr.mxu0 0.0
  %2464 = vmatpush1.msra.mxu0 0.0
  %2465 = vmatprep.subr.mxu0 0.0
  %2466 = vmatpush1.msra.mxu0 0.0
  %2467 = vmatprep.subr.mxu0 0.0
  %2468 = vmatpush1.msra.mxu0 0.0
  %2469 = vmatprep.subr.mxu0 0.0
  %2470 = vmatpush1.msra.mxu0 0.0
  %2471 = vmatprep.subr.mxu0 0.0
  %2472 = vmatpush1.msra.mxu0 0.0
  %2473 = vmatprep.subr.mxu0 0.0
  %2474 = vmatpush1.msra.mxu0 0.0
  %2475 = vmatprep.subr.mxu0 0.0
  %2476 = vmatpush1.msra.mxu0 0.0
  %2477 = vmatprep.subr.mxu0 0.0
  %2478 = vmatpush1.msra.mxu0 0.0
  %2479 = vmatprep.subr.mxu0 0.0
  %2480 = vmatpush1.msra.mxu0 0.0
  %2481 = vmatprep.subr.mxu0 0.0
  %2482 = vmatpush1.msra.mxu0 0.0
  %2483 = vmatprep.subr.mxu0 0.0
  %2484 = vmatpush1.msra.mxu0 0.0
  %2485 = vmatprep.mubr.f32.mxu0 0.0
  %2486 = vmatmul.mubr.f32.gmra.mrb[0].mxu0 %v2410
  %v2487 = vpop.f32.mrb[0].mxu0
  %v2488 = vadd.f32 0.0, %v2487
  %v2489 = vpop.f32.mrb[0].mxu0
  %2490 = vmatprep.mubr.f32.mxu0 0.0
  %2491 = vmatmul.mubr.f32.gmra.mrb[0].mxu0 %v2413
  %v2492 = vpop.f32.mrb[0].mxu0
  %v2493 = vadd.f32 0.0, %v2492
  %v2494 = vpop.f32.mrb[0].mxu0
  %2495 = vmatprep.mubr.f32.mxu0 0.0
  %2496 = vmatmul.mubr.f32.gmra.mrb[0].mxu0 %v2416
  %v2497 = vpop.f32.mrb[0].mxu0
  %v2498 = vadd.f32 0.0, %v2497
  %v2499 = vpop.f32.mrb[0].mxu0
  %2500 = vdwg.mxu0
  %v2502 = vsel %vm612, %v2275, 0
  %v2505 = vsel %vm612, %v2276, 0
  %v2508 = vsel %vm612, %v2277, 0
  %v2511 = vsel %vm787, %v2280, 0
  %2513 = vmatprep.subr.mxu0 0.0
  %2514 = vmatpush1.msra.mxu0 %v2278
  %2515 = vmatprep.subr.mxu0 0.0
  %2516 = vmatpush1.msra.mxu0 %v2279
  %2517 = vmatprep.subr.mxu0 0.0
  %2518 = vmatpush1.msra.mxu0 %v2511
  %2519 = vmatprep.subr.mxu0 0.0
  %2520 = vmatpush1.msra.mxu0 0.0
  %2521 = vmatprep.subr.mxu0 0.0
  %2522 = vmatpush1.msra.mxu0 0.0
  %2523 = vmatprep.subr.mxu0 0.0
  %2524 = vmatpush1.msra.mxu0 0.0
  %2525 = vmatprep.subr.mxu0 0.0
  %2526 = vmatpush1.msra.mxu0 0.0
  %2527 = vmatprep.subr.mxu0 0.0
  %2528 = vmatpush1.msra.mxu0 0.0
  %2529 = vmatprep.subr.mxu0 0.0
  %2530 = vmatpush1.msra.mxu0 0.0
  %2531 = vmatprep.subr.mxu0 0.0
  %2532 = vmatpush1.msra.mxu0 0.0
  %2533 = vmatprep.subr.mxu0 0.0
  %2534 = vmatpush1.msra.mxu0 0.0
  %2535 = vmatprep.subr.mxu0 0.0
  %2536 = vmatpush1.msra.mxu0 0.0
  %2537 = vmatprep.subr.mxu0 0.0
  %2538 = vmatpush1.msra.mxu0 0.0
  %2539 = vmatprep.subr.mxu0 0.0
  %2540 = vmatpush1.msra.mxu0 0.0
  %2541 = vmatprep.subr.mxu0 0.0
  %2542 = vmatpush1.msra.mxu0 0.0
  %2543 = vmatprep.subr.mxu0 0.0
  %2544 = vmatpush1.msra.mxu0 0.0
  %2545 = vmatprep.subr.mxu0 0.0
  %2546 = vmatpush1.msra.mxu0 0.0
  %2547 = vmatprep.subr.mxu0 0.0
  %2548 = vmatpush1.msra.mxu0 0.0
  %2549 = vmatprep.subr.mxu0 0.0
  %2550 = vmatpush1.msra.mxu0 0.0
  %2551 = vmatprep.subr.mxu0 0.0
  %2552 = vmatpush1.msra.mxu0 0.0
  %2553 = vmatprep.subr.mxu0 0.0
  %2554 = vmatpush1.msra.mxu0 0.0
  %2555 = vmatprep.subr.mxu0 0.0
  %2556 = vmatpush1.msra.mxu0 0.0
  %2557 = vmatprep.subr.mxu0 0.0
  %2558 = vmatpush1.msra.mxu0 0.0
  %2559 = vmatprep.subr.mxu0 0.0
  %2560 = vmatpush1.msra.mxu0 0.0
  %2561 = vmatprep.subr.mxu0 0.0
  %2562 = vmatpush1.msra.mxu0 0.0
  %2563 = vmatprep.subr.mxu0 0.0
  %2564 = vmatpush1.msra.mxu0 0.0
  %2565 = vmatprep.subr.mxu0 0.0
  %2566 = vmatpush1.msra.mxu0 0.0
  %2567 = vmatprep.subr.mxu0 0.0
  %2568 = vmatpush1.msra.mxu0 0.0
  %2569 = vmatprep.subr.mxu0 0.0
  %2570 = vmatpush1.msra.mxu0 0.0
  %2571 = vmatprep.subr.mxu0 0.0
  %2572 = vmatpush1.msra.mxu0 0.0
  %2573 = vmatprep.subr.mxu0 0.0
  %2574 = vmatpush1.msra.mxu0 0.0
  %2575 = vmatprep.subr.mxu0 0.0
  %2576 = vmatpush1.msra.mxu0 0.0
  %2577 = vmatprep.mubr.f32.mxu0 0.0
  %2578 = vmatmul.mubr.f32.gmra.mrb[0].mxu0 %v2502
  %v2579 = vpop.f32.mrb[0].mxu0
  %v2580 = vadd.f32 %v2488, %v2579
  %v2581 = vpop.f32.mrb[0].mxu0
  %2582 = vmatprep.mubr.f32.mxu0 0.0
  %2583 = vmatmul.mubr.f32.gmra.mrb[0].mxu0 %v2505
  %v2584 = vpop.f32.mrb[0].mxu0
  %v2585 = vadd.f32 %v2493, %v2584
  %v2586 = vpop.f32.mrb[0].mxu0
  %2587 = vmatprep.mubr.f32.mxu0 0.0
  %2588 = vmatmul.mubr.f32.gmra.mrb[0].mxu0 %v2508
  %v2589 = vpop.f32.mrb[0].mxu0
  %v2590 = vadd.f32 %v2498, %v2589
  %v2591 = vpop.f32.mrb[0].mxu0
  %2592 = vdwg.mxu0
  %v2593 = vmul.f32 %v2135, %v137
  %v2594 = vmul.f32 %v2136, %v137
  %v2595 = vmul.f32 %v2137, %v137
  %v2597 = vsel %vm516, %v2593, 0
  %v2600 = vsel %vm516, %v2594, 0
  %v2603 = vsel %vm516, %v2595, 0
  %2605 = vmatprep.subr.mxu0 0.0
  %2606 = vmatpush1.xpose.msra.mxu0 %v2159
  %2607 = vmatprep.subr.mxu0 0.0
  %2608 = vmatpush1.xpose.msra.mxu0 %v2161
  %2609 = vmatprep.subr.mxu0 0.0
  %2610 = vmatpush1.xpose.msra.mxu0 %v2163
  %2611 = vmatprep.subr.mxu0 0.0
  %2612 = vmatpush1.xpose.msra.mxu0 0.0
  %2613 = vmatprep.subr.mxu0 0.0
  %2614 = vmatpush1.xpose.msra.mxu0 0.0
  %2615 = vmatprep.subr.mxu0 0.0
  %2616 = vmatpush1.xpose.msra.mxu0 0.0
  %2617 = vmatprep.subr.mxu0 0.0
  %2618 = vmatpush1.xpose.msra.mxu0 0.0
  %2619 = vmatprep.subr.mxu0 0.0
  %2620 = vmatpush1.xpose.msra.mxu0 0.0
  %2621 = vmatprep.subr.mxu0 0.0
  %2622 = vmatpush1.xpose.msra.mxu0 0.0
  %2623 = vmatprep.subr.mxu0 0.0
  %2624 = vmatpush1.xpose.msra.mxu0 0.0
  %2625 = vmatprep.subr.mxu0 0.0
  %2626 = vmatpush1.xpose.msra.mxu0 0.0
  %2627 = vmatprep.subr.mxu0 0.0
  %2628 = vmatpush1.xpose.msra.mxu0 0.0
  %2629 = vmatprep.subr.mxu0 0.0
  %2630 = vmatpush1.xpose.msra.mxu0 0.0
  %2631 = vmatprep.subr.mxu0 0.0
  %2632 = vmatpush1.xpose.msra.mxu0 0.0
  %2633 = vmatprep.subr.mxu0 0.0
  %2634 = vmatpush1.xpose.msra.mxu0 0.0
  %2635 = vmatprep.subr.mxu0 0.0
  %2636 = vmatpush1.xpose.msra.mxu0 0.0
  %2637 = vmatprep.subr.mxu0 0.0
  %2638 = vmatpush1.xpose.msra.mxu0 0.0
  %2639 = vmatprep.subr.mxu0 0.0
  %2640 = vmatpush1.xpose.msra.mxu0 0.0
  %2641 = vmatprep.subr.mxu0 0.0
  %2642 = vmatpush1.xpose.msra.mxu0 0.0
  %2643 = vmatprep.subr.mxu0 0.0
  %2644 = vmatpush1.xpose.msra.mxu0 0.0
  %2645 = vmatprep.subr.mxu0 0.0
  %2646 = vmatpush1.xpose.msra.mxu0 0.0
  %2647 = vmatprep.subr.mxu0 0.0
  %2648 = vmatpush1.xpose.msra.mxu0 0.0
  %2649 = vmatprep.subr.mxu0 0.0
  %2650 = vmatpush1.xpose.msra.mxu0 0.0
  %2651 = vmatprep.subr.mxu0 0.0
  %2652 = vmatpush1.xpose.msra.mxu0 0.0
  %2653 = vmatprep.subr.mxu0 0.0
  %2654 = vmatpush1.xpose.msra.mxu0 0.0
  %2655 = vmatprep.subr.mxu0 0.0
  %2656 = vmatpush1.xpose.msra.mxu0 0.0
  %2657 = vmatprep.subr.mxu0 0.0
  %2658 = vmatpush1.xpose.msra.mxu0 0.0
  %2659 = vmatprep.subr.mxu0 0.0
  %2660 = vmatpush1.xpose.msra.mxu0 0.0
  %2661 = vmatprep.subr.mxu0 0.0
  %2662 = vmatpush1.xpose.msra.mxu0 0.0
  %2663 = vmatprep.subr.mxu0 0.0
  %2664 = vmatpush1.xpose.msra.mxu0 0.0
  %2665 = vmatprep.subr.mxu0 0.0
  %2666 = vmatpush1.xpose.msra.mxu0 0.0
  %2667 = vmatprep.subr.mxu0 0.0
  %2668 = vmatpush1.xpose.msra.mxu0 0.0
  %2669 = vmatprep.mubr.f32.mxu0 0.0
  %2670 = vmatmul.mubr.f32.gmra.mrb[0].mxu0 %v2597
  %v2671 = vpop.f32.mrb[0].mxu0
  %v2672 = vadd.f32 %v117, %v2671
  %v2673 = vpop.f32.mrb[0].mxu0
  %2674 = vmatprep.mubr.f32.mxu0 0.0
  %2675 = vmatmul.mubr.f32.gmra.mrb[0].mxu0 %v2600
  %v2676 = vpop.f32.mrb[0].mxu0
  %v2677 = vadd.f32 %v118, %v2676
  %v2678 = vpop.f32.mrb[0].mxu0
  %2679 = vmatprep.mubr.f32.mxu0 0.0
  %2680 = vmatmul.mubr.f32.gmra.mrb[0].mxu0 %v2603
  %v2681 = vpop.f32.mrb[0].mxu0
  %v2682 = vadd.f32 %v119, %v2681
  %v2683 = vpop.f32.mrb[0].mxu0
  %2684 = vdwg.mxu0
  %v2685 = vsel %vm612, %v2672, -inf
  %2686 = vmax.xlane.f32.xlu0 %v2685
  %v2687 = vpop.xlane.xlu0 %2686
  %v2688 = vsel %vm612, %v2677, -inf
  %2689 = vmax.xlane.f32.xlu0 %v2688
  %v2690 = vpop.xlane.xlu0 %2689
  %v2691 = vsel %vm619, %v2682, -inf
  %2692 = vmax.xlane.f32.xlu0 %v2691
  %v2693 = vpop.xlane.xlu0 %2692
  %v2694 = vsub.f32 %v2672, %v2687
  %v2695 = vsub.f32 %v2677, %v2690
  %v2696 = vsub.f32 %v2682, %v2693
  %v2697 = vmul.f32 %v2694, 1.442695
  %v2698 = vpow.pop %v2697
  %v2699 = vmul.f32 %v2695, 1.442695
  %v2700 = vpow.pop %v2699
  %v2701 = vmul.f32 %v2696, 1.442695
  %v2702 = vpow.pop %v2701
  %v2703 = vsel %vm612, %v2698, 0.0
  %2704 = vadd.xlane.f32.xlu0 %v2703
  %v2705 = vpop.xlane.xlu0 %2704
  %v2706 = vsel %vm612, %v2700, 0.0
  %2707 = vadd.xlane.f32.xlu0 %v2706
  %v2708 = vpop.xlane.xlu0 %2707
  %v2709 = vsel %vm619, %v2702, 0.0
  %2710 = vadd.xlane.f32.xlu0 %v2709
  %v2711 = vpop.xlane.xlu0 %2710
  %v2712 = vrcp.pop %v2705
  %v2713 = vrcp.pop %v2708
  %v2714 = vrcp.pop %v2711
  %v2715 = vmul.f32 %v2698, %v2712
  %v2716 = vmul.f32 %v2700, %v2713
  %v2717 = vmul.f32 %v2702, %v2714
  %v2718 = vmul.f32 %v2121, %v137
  %v2719 = vmul.f32 %v2127, %v137
  %v2720 = vmul.f32 %v2133, %v137
  %v2722 = vsel %vm612, %v2715, 0
  %v2725 = vsel %vm612, %v2716, 0
  %v2728 = vsel %vm612, %v2717, 0
  %v2731 = vsel %vm787, %v2720, 0
  %2733 = vmatprep.subr.mxu0 0.0
  %2734 = vmatpush1.msra.mxu0 %v2718
  %2735 = vmatprep.subr.mxu0 0.0
  %2736 = vmatpush1.msra.mxu0 %v2719
  %2737 = vmatprep.subr.mxu0 0.0
  %2738 = vmatpush1.msra.mxu0 %v2731
  %2739 = vmatprep.subr.mxu0 0.0
  %2740 = vmatpush1.msra.mxu0 0.0
  %2741 = vmatprep.subr.mxu0 0.0
  %2742 = vmatpush1.msra.mxu0 0.0
  %2743 = vmatprep.subr.mxu0 0.0
  %2744 = vmatpush1.msra.mxu0 0.0
  %2745 = vmatprep.subr.mxu0 0.0
  %2746 = vmatpush1.msra.mxu0 0.0
  %2747 = vmatprep.subr.mxu0 0.0
  %2748 = vmatpush1.msra.mxu0 0.0
  %2749 = vmatprep.subr.mxu0 0.0
  %2750 = vmatpush1.msra.mxu0 0.0
  %2751 = vmatprep.subr.mxu0 0.0
  %2752 = vmatpush1.msra.mxu0 0.0
  %2753 = vmatprep.subr.mxu0 0.0
  %2754 = vmatpush1.msra.mxu0 0.0
  %2755 = vmatprep.subr.mxu0 0.0
  %2756 = vmatpush1.msra.mxu0 0.0
  %2757 = vmatprep.subr.mxu0 0.0
  %2758 = vmatpush1.msra.mxu0 0.0
  %2759 = vmatprep.subr.mxu0 0.0
  %2760 = vmatpush1.msra.mxu0 0.0
  %2761 = vmatprep.subr.mxu0 0.0
  %2762 = vmatpush1.msra.mxu0 0.0
  %2763 = vmatprep.subr.mxu0 0.0
  %2764 = vmatpush1.msra.mxu0 0.0
  %2765 = vmatprep.subr.mxu0 0.0
  %2766 = vmatpush1.msra.mxu0 0.0
  %2767 = vmatprep.subr.mxu0 0.0
  %2768 = vmatpush1.msra.mxu0 0.0
  %2769 = vmatprep.subr.mxu0 0.0
  %2770 = vmatpush1.msra.mxu0 0.0
  %2771 = vmatprep.subr.mxu0 0.0
  %2772 = vmatpush1.msra.mxu0 0.0
  %2773 = vmatprep.subr.mxu0 0.0
  %2774 = vmatpush1.msra.mxu0 0.0
  %2775 = vmatprep.subr.mxu0 0.0
  %2776 = vmatpush1.msra.mxu0 0.0
  %2777 = vmatprep.subr.mxu0 0.0
  %2778 = vmatpush1.msra.mxu0 0.0
  %2779 = vmatprep.subr.mxu0 0.0
  %2780 = vmatpush1.msra.mxu0 0.0
  %2781 = vmatprep.subr.mxu0 0.0
  %2782 = vmatpush1.msra.mxu0 0.0
  %2783 = vmatprep.subr.mxu0 0.0
  %2784 = vmatpush1.msra.mxu0 0.0
  %2785 = vmatprep.subr.mxu0 0.0
  %2786 = vmatpush1.msra.mxu0 0.0
  %2787 = vmatprep.subr.mxu0 0.0
  %2788 = vmatpush1.msra.mxu0 0.0
  %2789 = vmatprep.subr.mxu0 0.0
  %2790 = vmatpush1.msra.mxu0 0.0
  %2791 = vmatprep.subr.mxu0 0.0
  %2792 = vmatpush1.msra.mxu0 0.0
  %2793 = vmatprep.subr.mxu0 0.0
  %2794 = vmatpush1.msra.mxu0 0.0
  %2795 = vmatprep.subr.mxu0 0.0
  %2796 = vmatpush1.msra.mxu0 0.0
  %2797 = vmatprep.mubr.f32.mxu0 0.0
  %2798 = vmatmul.mubr.f32.gmra.mrb[0].mxu0 %v2722
  %v2799 = vpop.f32.mrb[0].mxu0
  %v2800 = vadd.f32 0.0, %v2799
  %v2801 = vpop.f32.mrb[0].mxu0
  %2802 = vmatprep.mubr.f32.mxu0 0.0
  %2803 = vmatmul.mubr.f32.gmra.mrb[0].mxu0 %v2725
  %v2804 = vpop.f32.mrb[0].mxu0
  %v2805 = vadd.f32 0.0, %v2804
  %v2806 = vpop.f32.mrb[0].mxu0
  %2807 = vmatprep.mubr.f32.mxu0 0.0
  %2808 = vmatmul.mubr.f32.gmra.mrb[0].mxu0 %v2728
  %v2809 = vpop.f32.mrb[0].mxu0
  %v2810 = vadd.f32 0.0, %v2809
  %v2811 = vpop.f32.mrb[0].mxu0
  %2812 = vdwg.mxu0
  %v2813 = vadd.f32 %v2580, %v2800
  %v2814 = vadd.f32 %v2585, %v2805
  %v2815 = vadd.f32 %v2590, %v2810
  %v2816 = vmul.f32 %v2135, %v142
  %v2817 = vmul.f32 %v2136, %v142
  %v2818 = vmul.f32 %v2137, %v142
  %v2820 = vsel %vm516, %v2816, 0
  %v2823 = vsel %vm516, %v2817, 0
  %v2826 = vsel %vm516, %v2818, 0
  %2828 = vmatprep.subr.mxu0 0.0
  %2829 = vmatpush1.xpose.msra.mxu0 %v2159
  %2830 = vmatprep.subr.mxu0 0.0
  %2831 = vmatpush1.xpose.msra.mxu0 %v2161
  %2832 = vmatprep.subr.mxu0 0.0
  %2833 = vmatpush1.xpose.msra.mxu0 %v2163
  %2834 = vmatprep.subr.mxu0 0.0
  %2835 = vmatpush1.xpose.msra.mxu0 0.0
  %2836 = vmatprep.subr.mxu0 0.0
  %2837 = vmatpush1.xpose.msra.mxu0 0.0
  %2838 = vmatprep.subr.mxu0 0.0
  %2839 = vmatpush1.xpose.msra.mxu0 0.0
  %2840 = vmatprep.subr.mxu0 0.0
  %2841 = vmatpush1.xpose.msra.mxu0 0.0
  %2842 = vmatprep.subr.mxu0 0.0
  %2843 = vmatpush1.xpose.msra.mxu0 0.0
  %2844 = vmatprep.subr.mxu0 0.0
  %2845 = vmatpush1.xpose.msra.mxu0 0.0
  %2846 = vmatprep.subr.mxu0 0.0
  %2847 = vmatpush1.xpose.msra.mxu0 0.0
  %2848 = vmatprep.subr.mxu0 0.0
  %2849 = vmatpush1.xpose.msra.mxu0 0.0
  %2850 = vmatprep.subr.mxu0 0.0
  %2851 = vmatpush1.xpose.msra.mxu0 0.0
  %2852 = vmatprep.subr.mxu0 0.0
  %2853 = vmatpush1.xpose.msra.mxu0 0.0
  %2854 = vmatprep.subr.mxu0 0.0
  %2855 = vmatpush1.xpose.msra.mxu0 0.0
  %2856 = vmatprep.subr.mxu0 0.0
  %2857 = vmatpush1.xpose.msra.mxu0 0.0
  %2858 = vmatprep.subr.mxu0 0.0
  %2859 = vmatpush1.xpose.msra.mxu0 0.0
  %2860 = vmatprep.subr.mxu0 0.0
  %2861 = vmatpush1.xpose.msra.mxu0 0.0
  %2862 = vmatprep.subr.mxu0 0.0
  %2863 = vmatpush1.xpose.msra.mxu0 0.0
  %2864 = vmatprep.subr.mxu0 0.0
  %2865 = vmatpush1.xpose.msra.mxu0 0.0
  %2866 = vmatprep.subr.mxu0 0.0
  %2867 = vmatpush1.xpose.msra.mxu0 0.0
  %2868 = vmatprep.subr.mxu0 0.0
  %2869 = vmatpush1.xpose.msra.mxu0 0.0
  %2870 = vmatprep.subr.mxu0 0.0
  %2871 = vmatpush1.xpose.msra.mxu0 0.0
  %2872 = vmatprep.subr.mxu0 0.0
  %2873 = vmatpush1.xpose.msra.mxu0 0.0
  %2874 = vmatprep.subr.mxu0 0.0
  %2875 = vmatpush1.xpose.msra.mxu0 0.0
  %2876 = vmatprep.subr.mxu0 0.0
  %2877 = vmatpush1.xpose.msra.mxu0 0.0
  %2878 = vmatprep.subr.mxu0 0.0
  %2879 = vmatpush1.xpose.msra.mxu0 0.0
  %2880 = vmatprep.subr.mxu0 0.0
  %2881 = vmatpush1.xpose.msra.mxu0 0.0
  %2882 = vmatprep.subr.mxu0 0.0
  %2883 = vmatpush1.xpose.msra.mxu0 0.0
  %2884 = vmatprep.subr.mxu0 0.0
  %2885 = vmatpush1.xpose.msra.mxu0 0.0
  %2886 = vmatprep.subr.mxu0 0.0
  %2887 = vmatpush1.xpose.msra.mxu0 0.0
  %2888 = vmatprep.subr.mxu0 0.0
  %2889 = vmatpush1.xpose.msra.mxu0 0.0
  %2890 = vmatprep.subr.mxu0 0.0
  %2891 = vmatpush1.xpose.msra.mxu0 0.0
  %2892 = vmatprep.mubr.f32.mxu0 0.0
  %2893 = vmatmul.mubr.f32.gmra.mrb[0].mxu0 %v2820
  %v2894 = vpop.f32.mrb[0].mxu0
  %v2895 = vadd.f32 %v117, %v2894
  %v2896 = vpop.f32.mrb[0].mxu0
  %2897 = vmatprep.mubr.f32.mxu0 0.0
  %2898 = vmatmul.mubr.f32.gmra.mrb[0].mxu0 %v2823
  %v2899 = vpop.f32.mrb[0].mxu0
  %v2900 = vadd.f32 %v118, %v2899
  %v2901 = vpop.f32.mrb[0].mxu0
  %2902 = vmatprep.mubr.f32.mxu0 0.0
  %2903 = vmatmul.mubr.f32.gmra.mrb[0].mxu0 %v2826
  %v2904 = vpop.f32.mrb[0].mxu0
  %v2905 = vadd.f32 %v119, %v2904
  %v2906 = vpop.f32.mrb[0].mxu0
  %2907 = vdwg.mxu0
  %v2908 = vsel %vm612, %v2895, -inf
  %2909 = vmax.xlane.f32.xlu0 %v2908
  %v2910 = vpop.xlane.xlu0 %2909
  %v2911 = vsel %vm612, %v2900, -inf
  %2912 = vmax.xlane.f32.xlu0 %v2911
  %v2913 = vpop.xlane.xlu0 %2912
  %v2914 = vsel %vm619, %v2905, -inf
  %2915 = vmax.xlane.f32.xlu0 %v2914
  %v2916 = vpop.xlane.xlu0 %2915
  %v2917 = vsub.f32 %v2895, %v2910
  %v2918 = vsub.f32 %v2900, %v2913
  %v2919 = vsub.f32 %v2905, %v2916
  %v2920 = vmul.f32 %v2917, 1.442695
  %v2921 = vpow.pop %v2920
  %v2922 = vmul.f32 %v2918, 1.442695
  %v2923 = vpow.pop %v2922
  %v2924 = vmul.f32 %v2919, 1.442695
  %v2925 = vpow.pop %v2924
  %v2926 = vsel %vm612, %v2921, 0.0
  %2927 = vadd.xlane.f32.xlu0 %v2926
  %v2928 = vpop.xlane.xlu0 %2927
  %v2929 = vsel %vm612, %v2923, 0.0
  %2930 = vadd.xlane.f32.xlu0 %v2929
  %v2931 = vpop.xlane.xlu0 %2930
  %v2932 = vsel %vm619, %v2925, 0.0
  %2933 = vadd.xlane.f32.xlu0 %v2932
  %v2934 = vpop.xlane.xlu0 %2933
  %v2935 = vrcp.pop %v2928
  %v2936 = vrcp.pop %v2931
  %v2937 = vrcp.pop %v2934
  %v2938 = vmul.f32 %v2921, %v2935
  %v2939 = vmul.f32 %v2923, %v2936
  %v2940 = vmul.f32 %v2925, %v2937
  %v2941 = vmul.f32 %v2121, %v142
  %v2942 = vmul.f32 %v2127, %v142
  %v2943 = vmul.f32 %v2133, %v142
  %v2945 = vsel %vm612, %v2938, 0
  %v2948 = vsel %vm612, %v2939, 0
  %v2951 = vsel %vm612, %v2940, 0
  %v2954 = vsel %vm787, %v2943, 0
  %2956 = vmatprep.subr.mxu0 0.0
  %2957 = vmatpush1.msra.mxu0 %v2941
  %2958 = vmatprep.subr.mxu0 0.0
  %2959 = vmatpush1.msra.mxu0 %v2942
  %2960 = vmatprep.subr.mxu0 0.0
  %2961 = vmatpush1.msra.mxu0 %v2954
  %2962 = vmatprep.subr.mxu0 0.0
  %2963 = vmatpush1.msra.mxu0 0.0
  %2964 = vmatprep.subr.mxu0 0.0
  %2965 = vmatpush1.msra.mxu0 0.0
  %2966 = vmatprep.subr.mxu0 0.0
  %2967 = vmatpush1.msra.mxu0 0.0
  %2968 = vmatprep.subr.mxu0 0.0
  %2969 = vmatpush1.msra.mxu0 0.0
  %2970 = vmatprep.subr.mxu0 0.0
  %2971 = vmatpush1.msra.mxu0 0.0
  %2972 = vmatprep.subr.mxu0 0.0
  %2973 = vmatpush1.msra.mxu0 0.0
  %2974 = vmatprep.subr.mxu0 0.0
  %2975 = vmatpush1.msra.mxu0 0.0
  %2976 = vmatprep.subr.mxu0 0.0
  %2977 = vmatpush1.msra.mxu0 0.0
  %2978 = vmatprep.subr.mxu0 0.0
  %2979 = vmatpush1.msra.mxu0 0.0
  %2980 = vmatprep.subr.mxu0 0.0
  %2981 = vmatpush1.msra.mxu0 0.0
  %2982 = vmatprep.subr.mxu0 0.0
  %2983 = vmatpush1.msra.mxu0 0.0
  %2984 = vmatprep.subr.mxu0 0.0
  %2985 = vmatpush1.msra.mxu0 0.0
  %2986 = vmatprep.subr.mxu0 0.0
  %2987 = vmatpush1.msra.mxu0 0.0
  %2988 = vmatprep.subr.mxu0 0.0
  %2989 = vmatpush1.msra.mxu0 0.0
  %2990 = vmatprep.subr.mxu0 0.0
  %2991 = vmatpush1.msra.mxu0 0.0
  %2992 = vmatprep.subr.mxu0 0.0
  %2993 = vmatpush1.msra.mxu0 0.0
  %2994 = vmatprep.subr.mxu0 0.0
  %2995 = vmatpush1.msra.mxu0 0.0
  %2996 = vmatprep.subr.mxu0 0.0
  %2997 = vmatpush1.msra.mxu0 0.0
  %2998 = vmatprep.subr.mxu0 0.0
  %2999 = vmatpush1.msra.mxu0 0.0
  %3000 = vmatprep.subr.mxu0 0.0
  %3001 = vmatpush1.msra.mxu0 0.0
  %3002 = vmatprep.subr.mxu0 0.0
  %3003 = vmatpush1.msra.mxu0 0.0
  %3004 = vmatprep.subr.mxu0 0.0
  %3005 = vmatpush1.msra.mxu0 0.0
  %3006 = vmatprep.subr.mxu0 0.0
  %3007 = vmatpush1.msra.mxu0 0.0
  %3008 = vmatprep.subr.mxu0 0.0
  %3009 = vmatpush1.msra.mxu0 0.0
  %3010 = vmatprep.subr.mxu0 0.0
  %3011 = vmatpush1.msra.mxu0 0.0
  %3012 = vmatprep.subr.mxu0 0.0
  %3013 = vmatpush1.msra.mxu0 0.0
  %3014 = vmatprep.subr.mxu0 0.0
  %3015 = vmatpush1.msra.mxu0 0.0
  %3016 = vmatprep.subr.mxu0 0.0
  %3017 = vmatpush1.msra.mxu0 0.0
  %3018 = vmatprep.subr.mxu0 0.0
  %3019 = vmatpush1.msra.mxu0 0.0
  %3020 = vmatprep.mubr.f32.mxu0 0.0
  %3021 = vmatmul.mubr.f32.gmra.mrb[0].mxu0 %v2945
  %v3022 = vpop.f32.mrb[0].mxu0
  %v3023 = vadd.f32 0.0, %v3022
  %v3024 = vpop.f32.mrb[0].mxu0
  %3025 = vmatprep.mubr.f32.mxu0 0.0
  %3026 = vmatmul.mubr.f32.gmra.mrb[0].mxu0 %v2948
  %v3027 = vpop.f32.mrb[0].mxu0
  %v3028 = vadd.f32 0.0, %v3027
  %v3029 = vpop.f32.mrb[0].mxu0
  %3030 = vmatprep.mubr.f32.mxu0 0.0
  %3031 = vmatmul.mubr.f32.gmra.mrb[0].mxu0 %v2951
  %v3032 = vpop.f32.mrb[0].mxu0
  %v3033 = vadd.f32 0.0, %v3032
  %v3034 = vpop.f32.mrb[0].mxu0
  %3035 = vdwg.mxu0
  %v3036 = vadd.f32 %v2813, %v3023
  %v3037 = vadd.f32 %v2814, %v3028
  %v3038 = vadd.f32 %v2815, %v3033
  %v3040 = vsel %vm516, %v3036, 0
  %v3043 = vsel %vm516, %v3037, 0
  %v3046 = vsel %vm516, %v3038, 0
  %3048 = vmatprep.subr.mxu0 0.0
  %3049 = vmatpush1.msra.mxu0 %v1936
  %3050 = vmatprep.subr.mxu0 0.0
  %3051 = vmatpush1.msra.mxu0 %v1937
  %3052 = vmatprep.subr.mxu0 0.0
  %3053 = vmatpush1.msra.mxu0 %v1938
  %3054 = vmatprep.subr.mxu0 0.0
  %3055 = vmatpush1.msra.mxu0 %v1939
  %3056 = vmatprep.subr.mxu0 0.0
  %3057 = vmatpush1.msra.mxu0 %v1940
  %3058 = vmatprep.subr.mxu0 0.0
  %3059 = vmatpush1.msra.mxu0 %v1941
  %3060 = vmatprep.subr.mxu0 0.0
  %3061 = vmatpush1.msra.mxu0 %v1942
  %3062 = vmatprep.subr.mxu0 0.0
  %3063 = vmatpush1.msra.mxu0 %v1943
  %3064 = vmatprep.subr.mxu0 0.0
  %3065 = vmatpush1.msra.mxu0 0.0
  %3066 = vmatprep.subr.mxu0 0.0
  %3067 = vmatpush1.msra.mxu0 0.0
  %3068 = vmatprep.subr.mxu0 0.0
  %3069 = vmatpush1.msra.mxu0 0.0
  %3070 = vmatprep.subr.mxu0 0.0
  %3071 = vmatpush1.msra.mxu0 0.0
  %3072 = vmatprep.subr.mxu0 0.0
  %3073 = vmatpush1.msra.mxu0 0.0
  %3074 = vmatprep.subr.mxu0 0.0
  %3075 = vmatpush1.msra.mxu0 0.0
  %3076 = vmatprep.subr.mxu0 0.0
  %3077 = vmatpush1.msra.mxu0 0.0
  %3078 = vmatprep.subr.mxu0 0.0
  %3079 = vmatpush1.msra.mxu0 0.0
  %3080 = vmatprep.subr.mxu0 0.0
  %3081 = vmatpush1.msra.mxu0 0.0
  %3082 = vmatprep.subr.mxu0 0.0
  %3083 = vmatpush1.msra.mxu0 0.0
  %3084 = vmatprep.subr.mxu0 0.0
  %3085 = vmatpush1.msra.mxu0 0.0
  %3086 = vmatprep.subr.mxu0 0.0
  %3087 = vmatpush1.msra.mxu0 0.0
  %3088 = vmatprep.subr.mxu0 0.0
  %3089 = vmatpush1.msra.mxu0 0.0
  %3090 = vmatprep.subr.mxu0 0.0
  %3091 = vmatpush1.msra.mxu0 0.0
  %3092 = vmatprep.subr.mxu0 0.0
  %3093 = vmatpush1.msra.mxu0 0.0
  %3094 = vmatprep.subr.mxu0 0.0
  %3095 = vmatpush1.msra.mxu0 0.0
  %3096 = vmatprep.subr.mxu0 0.0
  %3097 = vmatpush1.msra.mxu0 0.0
  %3098 = vmatprep.subr.mxu0 0.0
  %3099 = vmatpush1.msra.mxu0 0.0
  %3100 = vmatprep.subr.mxu0 0.0
  %3101 = vmatpush1.msra.mxu0 0.0
  %3102 = vmatprep.subr.mxu0 0.0
  %3103 = vmatpush1.msra.mxu0 0.0
  %3104 = vmatprep.subr.mxu0 0.0
  %3105 = vmatpush1.msra.mxu0 0.0
  %3106 = vmatprep.subr.mxu0 0.0
  %3107 = vmatpush1.msra.mxu0 0.0
  %3108 = vmatprep.subr.mxu0 0.0
  %3109 = vmatpush1.msra.mxu0 0.0
  %3110 = vmatprep.subr.mxu0 0.0
  %3111 = vmatpush1.msra.mxu0 0.0
  %3112 = vmatprep.mubr.f32.mxu0 0.0
  %3113 = vmatmul.mubr.f32.gmra.mrb[0].mxu0 %v3040
  %v3114 = vpop.f32.mrb[0].mxu0
  %v3115 = vadd.f32 0.0, %v3114
  %v3116 = vpop.f32.mrb[0].mxu0
  %3117 = vmatprep.mubr.f32.mxu0 0.0
  %3118 = vmatmul.mubr.f32.gmra.mrb[0].mxu0 %v3043
  %v3119 = vpop.f32.mrb[0].mxu0
  %v3120 = vadd.f32 0.0, %v3119
  %v3121 = vpop.f32.mrb[0].mxu0
  %3122 = vmatprep.mubr.f32.mxu0 0.0
  %3123 = vmatmul.mubr.f32.gmra.mrb[0].mxu0 %v3046
  %v3124 = vpop.f32.mrb[0].mxu0
  %v3125 = vadd.f32 0.0, %v3124
  %v3126 = vpop.f32.mrb[0].mxu0
  %3127 = vdwg.mxu0
  %v3128 = vadd.f32 %v1916, %v3115
  %v3129 = vadd.f32 %v1917, %v3120
  %v3130 = vadd.f32 %v1918, %v3125
  %v3131 = vlaneseq
  %v3132 = vshrl.u32 %v3131, 7
  %v3133 = vsub.s32 2, %v3132
  %v3134 = vrot.slane %v1920, %v3133
  %v3135 = vadd.f32 %v3128, %v3134
  %v3136 = vadd.f32 %v3129, %v3134
  %v3137 = vadd.f32 %v3130, %v3134
  %v3138 = vsel %vm345, %v3135, 0.0
  %3139 = vadd.xlane.f32.xlu0 %v3138
  %v3140 = vpop.xlane.xlu0 %3139
  %v3141 = vsel %vm345, %v3136, 0.0
  %3142 = vadd.xlane.f32.xlu0 %v3141
  %v3143 = vpop.xlane.xlu0 %3142
  %v3144 = vsel %vm352, %v3137, 0.0
  %3145 = vadd.xlane.f32.xlu0 %v3144
  %v3146 = vpop.xlane.xlu0 %3145
  %v3147 = vmul.f32 %v3140, %v356
  %v3148 = vmul.f32 %v3143, %v356
  %v3149 = vmul.f32 %v3146, %v356
  %v3150 = vsub.f32 %v3135, %v3147
  %v3151 = vsub.f32 %v3136, %v3148
  %v3152 = vsub.f32 %v3137, %v3149
  %v3153 = vmul.f32 %v3150, %v3150
  %v3154 = vmul.f32 %v3151, %v3151
  %v3155 = vmul.f32 %v3152, %v3152
  %v3156 = vsel %vm345, %v3153, 0.0
  %3157 = vadd.xlane.f32.xlu0 %v3156
  %v3158 = vpop.xlane.xlu0 %3157
  %v3159 = vsel %vm345, %v3154, 0.0
  %3160 = vadd.xlane.f32.xlu0 %v3159
  %v3161 = vpop.xlane.xlu0 %3160
  %v3162 = vsel %vm352, %v3155, 0.0
  %3163 = vadd.xlane.f32.xlu0 %v3162
  %v3164 = vpop.xlane.xlu0 %3163
  %v3165 = vmul.f32 %v3158, %v356
  %v3166 = vmul.f32 %v3161, %v356
  %v3167 = vmul.f32 %v3164, %v356
  %v3168 = vadd.f32 %v3165, 1e-06
  %v3169 = vadd.f32 %v3166, 1e-06
  %v3170 = vadd.f32 %v3167, 1e-06
  %v3171 = vrsqrt.pop %v3168
  %v3172 = vrsqrt.pop %v3169
  %v3173 = vrsqrt.pop %v3170
  %v3174 = vmul.f32 %v3150, %v3171
  %v3175 = vmul.f32 %v3151, %v3172
  %v3176 = vmul.f32 %v3152, %v3173
  %v3177 = vlaneseq
  %v3178 = vshrl.u32 %v3177, 7
  %v3179 = vsub.s32 3, %v3178
  %v3180 = vrot.slane %v1920, %v3179
  %v3181 = vmul.f32 %v3174, %v3180
  %v3182 = vmul.f32 %v3175, %v3180
  %v3183 = vmul.f32 %v3176, %v3180
  %v3184 = vlaneseq
  %v3185 = vshrl.u32 %v3184, 7
  %v3186 = vsub.s32 4, %v3185
  %v3187 = vrot.slane %v1920, %v3186
  %v3188 = vadd.f32 %v3181, %v3187
  %v3189 = vadd.f32 %v3182, %v3187
  %v3190 = vadd.f32 %v3183, %v3187
  %v3191 = vlaneseq
  %v3192 = vshrl.u32 %v3191, 7
  %v3193 = vsub.s32 7, %v3192
  %v3194 = vrot.slane %v1920, %v3193
  %v3195 = vlaneseq
  %v3196 = vshrl.u32 %v3195, 7
  %v3197 = vsub.s32 7, %v3196
  %v3198 = vrot.slane %v1921, %v3197
  %v3200 = vsel %vm345, %v3188, 0
  %v3203 = vsel %vm345, %v3189, 0
  %v3206 = vsel %vm345, %v3190, 0
  %3208 = vmatprep.subr.mxu0 %v1946
  %3209 = vmatpush1.msra.mxu0 %v1945
  %3210 = vmatprep.subr.mxu0 %v1948
  %3211 = vmatpush1.msra.mxu0 %v1947
  %3212 = vmatprep.subr.mxu0 %v1950
  %3213 = vmatpush1.msra.mxu0 %v1949
  %3214 = vmatprep.subr.mxu0 %v1952
  %3215 = vmatpush1.msra.mxu0 %v1951
  %3216 = vmatprep.subr.mxu0 %v1954
  %3217 = vmatpush1.msra.mxu0 %v1953
  %3218 = vmatprep.subr.mxu0 %v1956
  %3219 = vmatpush1.msra.mxu0 %v1955
  %3220 = vmatprep.subr.mxu0 0.0
  %3221 = vmatpush1.msra.mxu0 0.0
  %3222 = vmatprep.subr.mxu0 0.0
  %3223 = vmatpush1.msra.mxu0 0.0
  %3224 = vmatprep.subr.mxu0 0.0
  %3225 = vmatpush1.msra.mxu0 0.0
  %3226 = vmatprep.subr.mxu0 0.0
  %3227 = vmatpush1.msra.mxu0 0.0
  %3228 = vmatprep.subr.mxu0 0.0
  %3229 = vmatpush1.msra.mxu0 0.0
  %3230 = vmatprep.subr.mxu0 0.0
  %3231 = vmatpush1.msra.mxu0 0.0
  %3232 = vmatprep.subr.mxu0 0.0
  %3233 = vmatpush1.msra.mxu0 0.0
  %3234 = vmatprep.subr.mxu0 0.0
  %3235 = vmatpush1.msra.mxu0 0.0
  %3236 = vmatprep.subr.mxu0 0.0
  %3237 = vmatpush1.msra.mxu0 0.0
  %3238 = vmatprep.subr.mxu0 0.0
  %3239 = vmatpush1.msra.mxu0 0.0
  %3240 = vmatprep.subr.mxu0 0.0
  %3241 = vmatpush1.msra.mxu0 0.0
  %3242 = vmatprep.subr.mxu0 0.0
  %3243 = vmatpush1.msra.mxu0 0.0
  %3244 = vmatprep.subr.mxu0 0.0
  %3245 = vmatpush1.msra.mxu0 0.0
  %3246 = vmatprep.subr.mxu0 0.0
  %3247 = vmatpush1.msra.mxu0 0.0
  %3248 = vmatprep.subr.mxu0 0.0
  %3249 = vmatpush1.msra.mxu0 0.0
  %3250 = vmatprep.subr.mxu0 0.0
  %3251 = vmatpush1.msra.mxu0 0.0
  %3252 = vmatprep.subr.mxu0 0.0
  %3253 = vmatpush1.msra.mxu0 0.0
  %3254 = vmatprep.subr.mxu0 0.0
  %3255 = vmatpush1.msra.mxu0 0.0
  %3256 = vmatprep.subr.mxu0 0.0
  %3257 = vmatpush1.msra.mxu0 0.0
  %3258 = vmatprep.subr.mxu0 0.0
  %3259 = vmatpush1.msra.mxu0 0.0
  %3260 = vmatprep.subr.mxu0 0.0
  %3261 = vmatpush1.msra.mxu0 0.0
  %3262 = vmatprep.subr.mxu0 0.0
  %3263 = vmatpush1.msra.mxu0 0.0
  %3264 = vmatprep.subr.mxu0 0.0
  %3265 = vmatpush1.msra.mxu0 0.0
  %3266 = vmatprep.subr.mxu0 0.0
  %3267 = vmatpush1.msra.mxu0 0.0
  %3268 = vmatprep.subr.mxu0 0.0
  %3269 = vmatpush1.msra.mxu0 0.0
  %3270 = vmatprep.subr.mxu0 0.0
  %3271 = vmatpush1.msra.mxu0 0.0
  %3272 = vmatprep.mubr.f32.mxu0 0.0
  %3273 = vmatmul.mubr.f32.gmra.mrb[0].mxu0 %v3200
  %v3274 = vpop.f32.mrb[0].mxu0
  %v3275 = vadd.f32 %v3194, %v3274
  %v3276 = vpop.f32.mrb[0].mxu0
  %v3277 = vadd.f32 %v3198, %v3276
  %3278 = vmatprep.mubr.f32.mxu0 0.0
  %3279 = vmatmul.mubr.f32.gmra.mrb[0].mxu0 %v3203
  %v3280 = vpop.f32.mrb[0].mxu0
  %v3281 = vadd.f32 %v3194, %v3280
  %v3282 = vpop.f32.mrb[0].mxu0
  %v3283 = vadd.f32 %v3198, %v3282
  %3284 = vmatprep.mubr.f32.mxu0 0.0
  %3285 = vmatmul.mubr.f32.gmra.mrb[0].mxu0 %v3206
  %v3286 = vpop.f32.mrb[0].mxu0
  %v3287 = vadd.f32 %v3194, %v3286
  %v3288 = vpop.f32.mrb[0].mxu0
  %v3289 = vadd.f32 %v3198, %v3288
  %3290 = vdwg.mxu0
  %v3291 = vmul.f32 %v3275, 0.5
  %v3292 = vmul.f32 %v3277, 0.5
  %v3293 = vmul.f32 %v3281, 0.5
  %v3294 = vmul.f32 %v3283, 0.5
  %v3295 = vmul.f32 %v3287, 0.5
  %v3296 = vmul.f32 %v3289, 0.5
  %v3297 = vmul.f32 %v3275, 0.70710677
  %v3298 = vmul.f32 %v3277, 0.70710677
  %v3299 = vmul.f32 %v3281, 0.70710677
  %v3300 = vmul.f32 %v3283, 0.70710677
  %v3301 = vmul.f32 %v3287, 0.70710677
  %v3302 = vmul.f32 %v3289, 0.70710677
  %v3303 = vand.u32 2147483647, %v3297
  %v3304 = vand.u32 2147483647, %v3298
  %v3305 = vand.u32 2147483647, %v3299
  %v3306 = vand.u32 2147483647, %v3300
  %v3307 = vand.u32 2147483647, %v3301
  %v3308 = vand.u32 2147483647, %v3302
  %v3309 = vmul.f32 %v3303, 0.3275911
  %v3310 = vmul.f32 %v3304, 0.3275911
  %v3311 = vmul.f32 %v3305, 0.3275911
  %v3312 = vmul.f32 %v3306, 0.3275911
  %v3313 = vmul.f32 %v3307, 0.3275911
  %v3314 = vmul.f32 %v3308, 0.3275911
  %v3315 = vadd.f32 %v3309, 1.0
  %v3316 = vadd.f32 %v3310, 1.0
  %v3317 = vadd.f32 %v3311, 1.0
  %v3318 = vadd.f32 %v3312, 1.0
  %v3319 = vadd.f32 %v3313, 1.0
  %v3320 = vadd.f32 %v3314, 1.0
  %v3321 = vrcp.pop %v3315
  %v3322 = vmul.f32 1.0, %v3321
  %v3323 = vrcp.pop %v3316
  %v3324 = vmul.f32 1.0, %v3323
  %v3325 = vrcp.pop %v3317
  %v3326 = vmul.f32 1.0, %v3325
  %v3327 = vrcp.pop %v3318
  %v3328 = vmul.f32 1.0, %v3327
  %v3329 = vrcp.pop %v3319
  %v3330 = vmul.f32 1.0, %v3329
  %v3331 = vrcp.pop %v3320
  %v3332 = vmul.f32 1.0, %v3331
  %v3333 = vmul.f32 %v3322, 1.0614054
  %v3334 = vmul.f32 %v3324, 1.0614054
  %v3335 = vmul.f32 %v3326, 1.0614054
  %v3336 = vmul.f32 %v3328, 1.0614054
  %v3337 = vmul.f32 %v3330, 1.0614054
  %v3338 = vmul.f32 %v3332, 1.0614054
  %v3339 = vsub.f32 %v3333, 1.4531521
  %v3340 = vsub.f32 %v3334, 1.4531521
  %v3341 = vsub.f32 %v3335, 1.4531521
  %v3342 = vsub.f32 %v3336, 1.4531521
  %v3343 = vsub.f32 %v3337, 1.4531521
  %v3344 = vsub.f32 %v3338, 1.4531521
  %v3345 = vmul.f32 %v3339, %v3322
  %v3346 = vmul.f32 %v3340, %v3324
  %v3347 = vmul.f32 %v3341, %v3326
  %v3348 = vmul.f32 %v3342, %v3328
  %v3349 = vmul.f32 %v3343, %v3330
  %v3350 = vmul.f32 %v3344, %v3332
  %v3351 = vadd.f32 %v3345, 1.4214138
  %v3352 = vadd.f32 %v3346, 1.4214138
  %v3353 = vadd.f32 %v3347, 1.4214138
  %v3354 = vadd.f32 %v3348, 1.4214138
  %v3355 = vadd.f32 %v3349, 1.4214138
  %v3356 = vadd.f32 %v3350, 1.4214138
  %v3357 = vmul.f32 %v3351, %v3322
  %v3358 = vmul.f32 %v3352, %v3324
  %v3359 = vmul.f32 %v3353, %v3326
  %v3360 = vmul.f32 %v3354, %v3328
  %v3361 = vmul.f32 %v3355, %v3330
  %v3362 = vmul.f32 %v3356, %v3332
  %v3363 = vsub.f32 %v3357, 0.28449672
  %v3364 = vsub.f32 %v3358, 0.28449672
  %v3365 = vsub.f32 %v3359, 0.28449672
  %v3366 = vsub.f32 %v3360, 0.28449672
  %v3367 = vsub.f32 %v3361, 0.28449672
  %v3368 = vsub.f32 %v3362, 0.28449672
  %v3369 = vmul.f32 %v3363, %v3322
  %v3370 = vmul.f32 %v3364, %v3324
  %v3371 = vmul.f32 %v3365, %v3326
  %v3372 = vmul.f32 %v3366, %v3328
  %v3373 = vmul.f32 %v3367, %v3330
  %v3374 = vmul.f32 %v3368, %v3332
  %v3375 = vadd.f32 %v3369, 0.2548296
  %v3376 = vadd.f32 %v3370, 0.2548296
  %v3377 = vadd.f32 %v3371, 0.2548296
  %v3378 = vadd.f32 %v3372, 0.2548296
  %v3379 = vadd.f32 %v3373, 0.2548296
  %v3380 = vadd.f32 %v3374, 0.2548296
  %v3381 = vmul.f32 %v3375, %v3322
  %v3382 = vmul.f32 %v3376, %v3324
  %v3383 = vmul.f32 %v3377, %v3326
  %v3384 = vmul.f32 %v3378, %v3328
  %v3385 = vmul.f32 %v3379, %v3330
  %v3386 = vmul.f32 %v3380, %v3332
  %v3387 = vmul.f32 %v3303, %v3303
  %v3388 = vmul.f32 %v3304, %v3304
  %v3389 = vmul.f32 %v3305, %v3305
  %v3390 = vmul.f32 %v3306, %v3306
  %v3391 = vmul.f32 %v3307, %v3307
  %v3392 = vmul.f32 %v3308, %v3308
  %v3393 = vsub.f32 0.0, %v3387
  %v3394 = vsub.f32 0.0, %v3388
  %v3395 = vsub.f32 0.0, %v3389
  %v3396 = vsub.f32 0.0, %v3390
  %v3397 = vsub.f32 0.0, %v3391
  %v3398 = vsub.f32 0.0, %v3392
  %v3399 = vmul.f32 %v3393, 1.442695
  %v3400 = vpow.pop %v3399
  %v3401 = vmul.f32 %v3394, 1.442695
  %v3402 = vpow.pop %v3401
  %v3403 = vmul.f32 %v3395, 1.442695
  %v3404 = vpow.pop %v3403
  %v3405 = vmul.f32 %v3396, 1.442695
  %v3406 = vpow.pop %v3405
  %v3407 = vmul.f32 %v3397, 1.442695
  %v3408 = vpow.pop %v3407
  %v3409 = vmul.f32 %v3398, 1.442695
  %v3410 = vpow.pop %v3409
  %v3411 = vmul.f32 %v3381, %v3400
  %v3412 = vmul.f32 %v3382, %v3402
  %v3413 = vmul.f32 %v3383, %v3404
  %v3414 = vmul.f32 %v3384, %v3406
  %v3415 = vmul.f32 %v3385, %v3408
  %v3416 = vmul.f32 %v3386, %v3410
  %v3417 = vsub.f32 1.0, %v3411
  %v3418 = vsub.f32 1.0, %v3412
  %v3419 = vsub.f32 1.0, %v3413
  %v3420 = vsub.f32 1.0, %v3414
  %v3421 = vsub.f32 1.0, %v3415
  %v3422 = vsub.f32 1.0, %v3416
  %vm3423 = vcmp.lt.f32.partialorder %v3297, 0.0
  %vm3424 = vcmp.lt.f32.partialorder %v3298, 0.0
  %vm3425 = vcmp.lt.f32.partialorder %v3299, 0.0
  %vm3426 = vcmp.lt.f32.partialorder %v3300, 0.0
  %vm3427 = vcmp.lt.f32.partialorder %v3301, 0.0
  %vm3428 = vcmp.lt.f32.partialorder %v3302, 0.0
  %v3429 = vsub.f32 0.0, %v3417
  %v3430 = vsub.f32 0.0, %v3418
  %v3431 = vsub.f32 0.0, %v3419
  %v3432 = vsub.f32 0.0, %v3420
  %v3433 = vsub.f32 0.0, %v3421
  %v3434 = vsub.f32 0.0, %v3422
  %v3435 = vsel %vm3423, %v3429, %v3417
  %v3436 = vsel %vm3424, %v3430, %v3418
  %v3437 = vsel %vm3425, %v3431, %v3419
  %v3438 = vsel %vm3426, %v3432, %v3420
  %v3439 = vsel %vm3427, %v3433, %v3421
  %v3440 = vsel %vm3428, %v3434, %v3422
  %v3441 = vadd.f32 %v3435, 1.0
  %v3442 = vadd.f32 %v3436, 1.0
  %v3443 = vadd.f32 %v3437, 1.0
  %v3444 = vadd.f32 %v3438, 1.0
  %v3445 = vadd.f32 %v3439, 1.0
  %v3446 = vadd.f32 %v3440, 1.0
  %v3447 = vmul.f32 %v3291, %v3441
  %v3448 = vmul.f32 %v3292, %v3442
  %v3449 = vmul.f32 %v3293, %v3443
  %v3450 = vmul.f32 %v3294, %v3444
  %v3451 = vmul.f32 %v3295, %v3445
  %v3452 = vmul.f32 %v3296, %v3446
  %v3453 = vlaneseq
  %v3454 = vshrl.u32 %v3453, 7
  %v3455 = vsub.s32 5, %v3454
  %v3456 = vrot.slane %v1920, %v3455
  %v3458 = vsel %vm516, %v3448, 0
  %v3461 = vsel %vm516, %v3450, 0
  %v3464 = vsel %vm516, %v3452, 0
  %3466 = vmatprep.subr.mxu0 0.0
  %3467 = vmatpush1.msra.mxu0 %v1958
  %3468 = vmatprep.subr.mxu0 0.0
  %3469 = vmatpush1.msra.mxu0 %v1959
  %3470 = vmatprep.subr.mxu0 0.0
  %3471 = vmatpush1.msra.mxu0 %v1960
  %3472 = vmatprep.subr.mxu0 0.0
  %3473 = vmatpush1.msra.mxu0 %v1961
  %3474 = vmatprep.subr.mxu0 0.0
  %3475 = vmatpush1.msra.mxu0 %v1962
  %3476 = vmatprep.subr.mxu0 0.0
  %3477 = vmatpush1.msra.mxu0 %v1963
  %3478 = vmatprep.subr.mxu0 0.0
  %3479 = vmatpush1.msra.mxu0 %v1964
  %3480 = vmatprep.subr.mxu0 0.0
  %3481 = vmatpush1.msra.mxu0 %v1965
  %3482 = vmatprep.subr.mxu0 0.0
  %3483 = vmatpush1.msra.mxu0 %v1966
  %3484 = vmatprep.subr.mxu0 0.0
  %3485 = vmatpush1.msra.mxu0 %v1967
  %3486 = vmatprep.subr.mxu0 0.0
  %3487 = vmatpush1.msra.mxu0 %v1968
  %3488 = vmatprep.subr.mxu0 0.0
  %3489 = vmatpush1.msra.mxu0 %v1969
  %3490 = vmatprep.subr.mxu0 0.0
  %3491 = vmatpush1.msra.mxu0 %v1970
  %3492 = vmatprep.subr.mxu0 0.0
  %3493 = vmatpush1.msra.mxu0 %v1971
  %3494 = vmatprep.subr.mxu0 0.0
  %3495 = vmatpush1.msra.mxu0 %v1972
  %3496 = vmatprep.subr.mxu0 0.0
  %3497 = vmatpush1.msra.mxu0 %v1973
  %3498 = vmatprep.subr.mxu0 0.0
  %3499 = vmatpush1.msra.mxu0 %v1974
  %3500 = vmatprep.subr.mxu0 0.0
  %3501 = vmatpush1.msra.mxu0 %v1975
  %3502 = vmatprep.subr.mxu0 0.0
  %3503 = vmatpush1.msra.mxu0 %v1976
  %3504 = vmatprep.subr.mxu0 0.0
  %3505 = vmatpush1.msra.mxu0 %v1977
  %3506 = vmatprep.subr.mxu0 0.0
  %3507 = vmatpush1.msra.mxu0 %v1978
  %3508 = vmatprep.subr.mxu0 0.0
  %3509 = vmatpush1.msra.mxu0 %v1979
  %3510 = vmatprep.subr.mxu0 0.0
  %3511 = vmatpush1.msra.mxu0 %v1980
  %3512 = vmatprep.subr.mxu0 0.0
  %3513 = vmatpush1.msra.mxu0 %v1981
  %3514 = vmatprep.subr.mxu0 0.0
  %3515 = vmatpush1.msra.mxu0 0.0
  %3516 = vmatprep.subr.mxu0 0.0
  %3517 = vmatpush1.msra.mxu0 0.0
  %3518 = vmatprep.subr.mxu0 0.0
  %3519 = vmatpush1.msra.mxu0 0.0
  %3520 = vmatprep.subr.mxu0 0.0
  %3521 = vmatpush1.msra.mxu0 0.0
  %3522 = vmatprep.subr.mxu0 0.0
  %3523 = vmatpush1.msra.mxu0 0.0
  %3524 = vmatprep.subr.mxu0 0.0
  %3525 = vmatpush1.msra.mxu0 0.0
  %3526 = vmatprep.subr.mxu0 0.0
  %3527 = vmatpush1.msra.mxu0 0.0
  %3528 = vmatprep.subr.mxu0 0.0
  %3529 = vmatpush1.msra.mxu0 0.0
  %3530 = vmatprep.mubr.f32.mxu0 %v3458
  %3531 = vmatmul.mubr.f32.gmra.mrb[0].mxu0 %v3447
  %v3532 = vpop.f32.mrb[0].mxu0
  %v3533 = vadd.f32 %v3456, %v3532
  %v3534 = vpop.f32.mrb[0].mxu0
  %3535 = vmatprep.mubr.f32.mxu0 %v3461
  %3536 = vmatmul.mubr.f32.gmra.mrb[0].mxu0 %v3449
  %v3537 = vpop.f32.mrb[0].mxu0
  %v3538 = vadd.f32 %v3456, %v3537
  %v3539 = vpop.f32.mrb[0].mxu0
  %3540 = vmatprep.mubr.f32.mxu0 %v3464
  %3541 = vmatmul.mubr.f32.gmra.mrb[0].mxu0 %v3451
  %v3542 = vpop.f32.mrb[0].mxu0
  %v3543 = vadd.f32 %v3456, %v3542
  %v3544 = vpop.f32.mrb[0].mxu0
  %3545 = vdwg.mxu0
  %v3546 = vadd.f32 %v3135, %v3533
  %v3547 = vadd.f32 %v3136, %v3538
  %v3548 = vadd.f32 %v3137, %v3543
  %v3549 = vsel %vm345, %v3546, 0.0
  %3550 = vadd.xlane.f32.xlu0 %v3549
  %v3551 = vpop.xlane.xlu0 %3550
  %v3552 = vsel %vm345, %v3547, 0.0
  %3553 = vadd.xlane.f32.xlu0 %v3552
  %v3554 = vpop.xlane.xlu0 %3553
  %v3555 = vsel %vm352, %v3548, 0.0
  %3556 = vadd.xlane.f32.xlu0 %v3555
  %v3557 = vpop.xlane.xlu0 %3556
  %v3558 = vmul.f32 %v3551, %v356
  %v3559 = vmul.f32 %v3554, %v356
  %v3560 = vmul.f32 %v3557, %v356
  %v3561 = vsub.f32 %v3546, %v3558
  %v3562 = vsub.f32 %v3547, %v3559
  %v3563 = vsub.f32 %v3548, %v3560
  %v3564 = vmul.f32 %v3561, %v3561
  %v3565 = vmul.f32 %v3562, %v3562
  %v3566 = vmul.f32 %v3563, %v3563
  %v3567 = vsel %vm345, %v3564, 0.0
  %3568 = vadd.xlane.f32.xlu0 %v3567
  %v3569 = vpop.xlane.xlu0 %3568
  %v3570 = vsel %vm345, %v3565, 0.0
  %3571 = vadd.xlane.f32.xlu0 %v3570
  %v3572 = vpop.xlane.xlu0 %3571
  %v3573 = vsel %vm352, %v3566, 0.0
  %3574 = vadd.xlane.f32.xlu0 %v3573
  %v3575 = vpop.xlane.xlu0 %3574
  %v3576 = vmul.f32 %v3569, %v356
  %v3577 = vmul.f32 %v3572, %v356
  %v3578 = vmul.f32 %v3575, %v356
  %v3579 = vadd.f32 %v3576, 1e-06
  %v3580 = vadd.f32 %v3577, 1e-06
  %v3581 = vadd.f32 %v3578, 1e-06
  %v3582 = vrsqrt.pop %v3579
  %v3583 = vrsqrt.pop %v3580
  %v3584 = vrsqrt.pop %v3581
  %v3585 = vmul.f32 %v3561, %v3582
  %v3586 = vmul.f32 %v3562, %v3583
  %v3587 = vmul.f32 %v3563, %v3584
  %v3588 = vlaneseq
  %v3589 = vshrl.u32 %v3588, 7
  %v3590 = vsub.s32 3, %v3589
  %v3591 = vrot.slane %v68, %v3590
  %v3592 = vmul.f32 %v3585, %v3591
  %v3593 = vmul.f32 %v3586, %v3591
  %v3594 = vmul.f32 %v3587, %v3591
  %v3595 = vlaneseq
  %v3596 = vshrl.u32 %v3595, 7
  %v3597 = vsub.s32 4, %v3596
  %v3598 = vrot.slane %v68, %v3597
  %v3599 = vadd.f32 %v3592, %v3598
  %v3600 = vadd.f32 %v3593, %v3598
  %v3601 = vadd.f32 %v3594, %v3598
  %v3602 = vld [vmem:[%s4] sm:$0xff]
  %v3603 = vld [vmem:[%s4 + $0x8] sm:$0xff]
  %v3604 = vld [vmem:[%s4 + $0x10] sm:$0xff]
  %v3605 = vld [vmem:[%s4 + $0x18] sm:$0xff]
  %v3606 = vld [vmem:[%s4 + $0x20] sm:$0xff]
  %v3607 = vld [vmem:[%s4 + $0x28] sm:$0xff]
  %v3608 = vlaneseq
  %v3609 = vshrl.u32 %v3608, 7
  %v3610 = vsub.s32 5, %v3609
  %v3611 = vrot.slane %v68, %v3610
  %v3613 = vsel %vm345, %v3599, 0
  %v3616 = vsel %vm345, %v3600, 0
  %v3619 = vsel %vm345, %v3601, 0
  %3621 = vmatprep.subr.mxu0 0.0
  %3622 = vmatpush1.msra.mxu0 %v3602
  %3623 = vmatprep.subr.mxu0 0.0
  %3624 = vmatpush1.msra.mxu0 %v3603
  %3625 = vmatprep.subr.mxu0 0.0
  %3626 = vmatpush1.msra.mxu0 %v3604
  %3627 = vmatprep.subr.mxu0 0.0
  %3628 = vmatpush1.msra.mxu0 %v3605
  %3629 = vmatprep.subr.mxu0 0.0
  %3630 = vmatpush1.msra.mxu0 %v3606
  %3631 = vmatprep.subr.mxu0 0.0
  %3632 = vmatpush1.msra.mxu0 %v3607
  %3633 = vmatprep.subr.mxu0 0.0
  %3634 = vmatpush1.msra.mxu0 0.0
  %3635 = vmatprep.subr.mxu0 0.0
  %3636 = vmatpush1.msra.mxu0 0.0
  %3637 = vmatprep.subr.mxu0 0.0
  %3638 = vmatpush1.msra.mxu0 0.0
  %3639 = vmatprep.subr.mxu0 0.0
  %3640 = vmatpush1.msra.mxu0 0.0
  %3641 = vmatprep.subr.mxu0 0.0
  %3642 = vmatpush1.msra.mxu0 0.0
  %3643 = vmatprep.subr.mxu0 0.0
  %3644 = vmatpush1.msra.mxu0 0.0
  %3645 = vmatprep.subr.mxu0 0.0
  %3646 = vmatpush1.msra.mxu0 0.0
  %3647 = vmatprep.subr.mxu0 0.0
  %3648 = vmatpush1.msra.mxu0 0.0
  %3649 = vmatprep.subr.mxu0 0.0
  %3650 = vmatpush1.msra.mxu0 0.0
  %3651 = vmatprep.subr.mxu0 0.0
  %3652 = vmatpush1.msra.mxu0 0.0
  %3653 = vmatprep.subr.mxu0 0.0
  %3654 = vmatpush1.msra.mxu0 0.0
  %3655 = vmatprep.subr.mxu0 0.0
  %3656 = vmatpush1.msra.mxu0 0.0
  %3657 = vmatprep.subr.mxu0 0.0
  %3658 = vmatpush1.msra.mxu0 0.0
  %3659 = vmatprep.subr.mxu0 0.0
  %3660 = vmatpush1.msra.mxu0 0.0
  %3661 = vmatprep.subr.mxu0 0.0
  %3662 = vmatpush1.msra.mxu0 0.0
  %3663 = vmatprep.subr.mxu0 0.0
  %3664 = vmatpush1.msra.mxu0 0.0
  %3665 = vmatprep.subr.mxu0 0.0
  %3666 = vmatpush1.msra.mxu0 0.0
  %3667 = vmatprep.subr.mxu0 0.0
  %3668 = vmatpush1.msra.mxu0 0.0
  %3669 = vmatprep.subr.mxu0 0.0
  %3670 = vmatpush1.msra.mxu0 0.0
  %3671 = vmatprep.subr.mxu0 0.0
  %3672 = vmatpush1.msra.mxu0 0.0
  %3673 = vmatprep.subr.mxu0 0.0
  %3674 = vmatpush1.msra.mxu0 0.0
  %3675 = vmatprep.subr.mxu0 0.0
  %3676 = vmatpush1.msra.mxu0 0.0
  %3677 = vmatprep.subr.mxu0 0.0
  %3678 = vmatpush1.msra.mxu0 0.0
  %3679 = vmatprep.subr.mxu0 0.0
  %3680 = vmatpush1.msra.mxu0 0.0
  %3681 = vmatprep.subr.mxu0 0.0
  %3682 = vmatpush1.msra.mxu0 0.0
  %3683 = vmatprep.subr.mxu0 0.0
  %3684 = vmatpush1.msra.mxu0 0.0
  %3685 = vmatprep.mubr.f32.mxu0 0.0
  %3686 = vmatmul.mubr.f32.gmra.mrb[0].mxu0 %v3613
  %v3687 = vpop.f32.mrb[0].mxu0
  %v3688 = vadd.f32 %v3611, %v3687
  %v3689 = vpop.f32.mrb[0].mxu0
  %3690 = vmatprep.mubr.f32.mxu0 0.0
  %3691 = vmatmul.mubr.f32.gmra.mrb[0].mxu0 %v3616
  %v3692 = vpop.f32.mrb[0].mxu0
  %v3693 = vadd.f32 %v3611, %v3692
  %v3694 = vpop.f32.mrb[0].mxu0
  %3695 = vmatprep.mubr.f32.mxu0 0.0
  %3696 = vmatmul.mubr.f32.gmra.mrb[0].mxu0 %v3619
  %v3697 = vpop.f32.mrb[0].mxu0
  %v3698 = vadd.f32 %v3611, %v3697
  %v3699 = vpop.f32.mrb[0].mxu0
  %3700 = vdwg.mxu0
  %v3701 = vsel %vm96, 1, 0
  %v3702 = vsel %vm97, 1, 0
  %v3703 = vsel %vm98, 1, 0
  %vm3704 = vcmp.eq.s32.totalorder %v3701, 1
  %vm3705 = vcmp.eq.s32.totalorder %v3702, 1
  %vm3706 = vcmp.eq.s32.totalorder %v3703, 1
  %v3707 = vlaneseq
  %v3708 = vshrl.u32 %v3707, 7
  %v3709 = vsub.s32 2, %v3708
  %v3710 = vrot.slane %v68, %v3709
  %v3711 = vsel %vm3704, %v3688, %v3710
  %v3712 = vsel %vm3705, %v3693, %v3710
  %v3713 = vsel %vm3706, %v3698, %v3710
  %v3714 = vadd.f32 %v3711, %v65
  %v3715 = vadd.f32 %v3712, %v66
  %v3716 = vadd.f32 %v3713, %v67
  %v3717 = vld [vmem:[%s16] sm:$0xff]
  %v3718 = vld [vmem:[%s12] sm:$0xff]
  %v3719 = vld [vmem:[%s12 + $0x8] sm:$0xff]
  %v3720 = vld [vmem:[%s12 + $0x10] sm:$0xff]
  %v3721 = vld [vmem:[%s13] sm:$0xff]
  %v3722 = vld [vmem:[%s13 + $0x8] sm:$0xff]
  %v3723 = vld [vmem:[%s13 + $0x10] sm:$0xff]
  %v3724 = vld [vmem:[%s13 + $0x18] sm:$0xff]
  %v3725 = vld [vmem:[%s14] sm:$0xff]
  %v3726 = vld [vmem:[%s14 + $0x8] sm:$0xff]
  %v3727 = vld [vmem:[%s14 + $0x10] sm:$0xff]
  %v3728 = vld [vmem:[%s15] sm:$0xff]
  %v3729 = vld [vmem:[%s15 + $0x8] sm:$0xff]
  %v3730 = vld [vmem:[%s15 + $0x10] sm:$0xff]
  %v3731 = vld [vmem:[%s15 + $0x18] sm:$0xff]
  %v3732 = vld [vmem:[%s15 + $0x20] sm:$0xff]
  %v3733 = vld [vmem:[%s15 + $0x28] sm:$0xff]
  %v3734 = vld [vmem:[%s15 + $0x30] sm:$0xff]
  %v3735 = vld [vmem:[%s15 + $0x38] sm:$0xff]
  %v3736 = vld [vmem:[%s15 + $0x40] sm:$0xff]
  %v3737 = vld [vmem:[%s15 + $0x48] sm:$0xff]
  %v3738 = vld [vmem:[%s15 + $0x50] sm:$0xff]
  %v3739 = vld [vmem:[%s15 + $0x58] sm:$0xff]
  %vm3740 = vcmask 195584
  %v3741 = vsel %vm3740, %v3714, 0.0
  %3742 = vadd.xlane.f32.xlu0 %v3741
  %v3743 = vpop.xlane.xlu0 %3742
  %v3744 = vsel %vm3740, %v3715, 0.0
  %3745 = vadd.xlane.f32.xlu0 %v3744
  %v3746 = vpop.xlane.xlu0 %3745
  %vm3747 = vcmask 189440
  %v3748 = vsel %vm3747, %v3716, 0.0
  %3749 = vadd.xlane.f32.xlu0 %v3748
  %v3750 = vpop.xlane.xlu0 %3749
  %v3751 = vrcp.pop 24.0
  %v3752 = vmul.f32 %v3743, %v3751
  %v3753 = vmul.f32 %v3746, %v3751
  %v3754 = vmul.f32 %v3750, %v3751
  %v3755 = vsub.f32 %v3714, %v3752
  %v3756 = vsub.f32 %v3715, %v3753
  %v3757 = vsub.f32 %v3716, %v3754
  %v3758 = vmul.f32 %v3755, %v3755
  %v3759 = vmul.f32 %v3756, %v3756
  %v3760 = vmul.f32 %v3757, %v3757
  %v3761 = vsel %vm3740, %v3758, 0.0
  %3762 = vadd.xlane.f32.xlu0 %v3761
  %v3763 = vpop.xlane.xlu0 %3762
  %v3764 = vsel %vm3740, %v3759, 0.0
  %3765 = vadd.xlane.f32.xlu0 %v3764
  %v3766 = vpop.xlane.xlu0 %3765
  %v3767 = vsel %vm3747, %v3760, 0.0
  %3768 = vadd.xlane.f32.xlu0 %v3767
  %v3769 = vpop.xlane.xlu0 %3768
  %v3770 = vmul.f32 %v3763, %v3751
  %v3771 = vmul.f32 %v3766, %v3751
  %v3772 = vmul.f32 %v3769, %v3751
  %v3773 = vadd.f32 %v3770, 1e-06
  %v3774 = vadd.f32 %v3771, 1e-06
  %v3775 = vadd.f32 %v3772, 1e-06
  %v3776 = vrsqrt.pop %v3773
  %v3777 = vrsqrt.pop %v3774
  %v3778 = vrsqrt.pop %v3775
  %v3779 = vmul.f32 %v3755, %v3776
  %v3780 = vmul.f32 %v3756, %v3777
  %v3781 = vmul.f32 %v3757, %v3778
  %v3782 = vlaneseq
  %v3783 = vshrl.u32 %v3782, 7
  %v3784 = vsub.s32 0, %v3783
  %v3785 = vrot.slane %v3717, %v3784
  %v3786 = vmul.f32 %v3779, %v3785
  %v3787 = vmul.f32 %v3780, %v3785
  %v3788 = vmul.f32 %v3781, %v3785
  %v3789 = vlaneseq
  %v3790 = vshrl.u32 %v3789, 7
  %v3791 = vsub.s32 1, %v3790
  %v3792 = vrot.slane %v3717, %v3791
  %v3793 = vadd.f32 %v3786, %v3792
  %v3794 = vadd.f32 %v3787, %v3792
  %v3795 = vadd.f32 %v3788, %v3792
  %v3796 = vlaneseq
  %v3797 = vshrl.u32 %v3796, 7
  %v3798 = vsub.s32 6, %v3797
  %v3799 = vrot.slane %v3717, %v3798
  %v3801 = vsel %vm3740, %v3793, 0
  %v3804 = vsel %vm3740, %v3794, 0
  %v3807 = vsel %vm3740, %v3795, 0
  %3809 = vmatprep.subr.mxu0 0.0
  %3810 = vmatpush1.msra.mxu0 %v3718
  %3811 = vmatprep.subr.mxu0 0.0
  %3812 = vmatpush1.msra.mxu0 %v3719
  %3813 = vmatprep.subr.mxu0 0.0
  %3814 = vmatpush1.msra.mxu0 %v3720
  %3815 = vmatprep.subr.mxu0 0.0
  %3816 = vmatpush1.msra.mxu0 0.0
  %3817 = vmatprep.subr.mxu0 0.0
  %3818 = vmatpush1.msra.mxu0 0.0
  %3819 = vmatprep.subr.mxu0 0.0
  %3820 = vmatpush1.msra.mxu0 0.0
  %3821 = vmatprep.subr.mxu0 0.0
  %3822 = vmatpush1.msra.mxu0 0.0
  %3823 = vmatprep.subr.mxu0 0.0
  %3824 = vmatpush1.msra.mxu0 0.0
  %3825 = vmatprep.subr.mxu0 0.0
  %3826 = vmatpush1.msra.mxu0 0.0
  %3827 = vmatprep.subr.mxu0 0.0
  %3828 = vmatpush1.msra.mxu0 0.0
  %3829 = vmatprep.subr.mxu0 0.0
  %3830 = vmatpush1.msra.mxu0 0.0
  %3831 = vmatprep.subr.mxu0 0.0
  %3832 = vmatpush1.msra.mxu0 0.0
  %3833 = vmatprep.subr.mxu0 0.0
  %3834 = vmatpush1.msra.mxu0 0.0
  %3835 = vmatprep.subr.mxu0 0.0
  %3836 = vmatpush1.msra.mxu0 0.0
  %3837 = vmatprep.subr.mxu0 0.0
  %3838 = vmatpush1.msra.mxu0 0.0
  %3839 = vmatprep.subr.mxu0 0.0
  %3840 = vmatpush1.msra.mxu0 0.0
  %3841 = vmatprep.subr.mxu0 0.0
  %3842 = vmatpush1.msra.mxu0 0.0
  %3843 = vmatprep.subr.mxu0 0.0
  %3844 = vmatpush1.msra.mxu0 0.0
  %3845 = vmatprep.subr.mxu0 0.0
  %3846 = vmatpush1.msra.mxu0 0.0
  %3847 = vmatprep.subr.mxu0 0.0
  %3848 = vmatpush1.msra.mxu0 0.0
  %3849 = vmatprep.subr.mxu0 0.0
  %3850 = vmatpush1.msra.mxu0 0.0
  %3851 = vmatprep.subr.mxu0 0.0
  %3852 = vmatpush1.msra.mxu0 0.0
  %3853 = vmatprep.subr.mxu0 0.0
  %3854 = vmatpush1.msra.mxu0 0.0
  %3855 = vmatprep.subr.mxu0 0.0
  %3856 = vmatpush1.msra.mxu0 0.0
  %3857 = vmatprep.subr.mxu0 0.0
  %3858 = vmatpush1.msra.mxu0 0.0
  %3859 = vmatprep.subr.mxu0 0.0
  %3860 = vmatpush1.msra.mxu0 0.0
  %3861 = vmatprep.subr.mxu0 0.0
  %3862 = vmatpush1.msra.mxu0 0.0
  %3863 = vmatprep.subr.mxu0 0.0
  %3864 = vmatpush1.msra.mxu0 0.0
  %3865 = vmatprep.subr.mxu0 0.0
  %3866 = vmatpush1.msra.mxu0 0.0
  %3867 = vmatprep.subr.mxu0 0.0
  %3868 = vmatpush1.msra.mxu0 0.0
  %3869 = vmatprep.subr.mxu0 0.0
  %3870 = vmatpush1.msra.mxu0 0.0
  %3871 = vmatprep.subr.mxu0 0.0
  %3872 = vmatpush1.msra.mxu0 0.0
  %3873 = vmatprep.mubr.f32.mxu0 0.0
  %3874 = vmatmul.mubr.f32.gmra.mrb[0].mxu0 %v3801
  %v3875 = vpop.f32.mrb[0].mxu0
  %v3876 = vadd.f32 %v3799, %v3875
  %v3877 = vpop.f32.mrb[0].mxu0
  %3878 = vmatprep.mubr.f32.mxu0 0.0
  %3879 = vmatmul.mubr.f32.gmra.mrb[0].mxu0 %v3804
  %v3880 = vpop.f32.mrb[0].mxu0
  %v3881 = vadd.f32 %v3799, %v3880
  %v3882 = vpop.f32.mrb[0].mxu0
  %3883 = vmatprep.mubr.f32.mxu0 0.0
  %3884 = vmatmul.mubr.f32.gmra.mrb[0].mxu0 %v3807
  %v3885 = vpop.f32.mrb[0].mxu0
  %v3886 = vadd.f32 %v3799, %v3885
  %v3887 = vpop.f32.mrb[0].mxu0
  %3888 = vdwg.mxu0
  %v3889 = vmul.f32 %v3876, 0.4082483
  %v3890 = vmul.f32 %v3881, 0.4082483
  %v3891 = vmul.f32 %v3886, 0.4082483
  %v3892 = vmul.f32 %v3889, %v146
  %v3893 = vmul.f32 %v3890, %v146
  %v3894 = vmul.f32 %v3891, %v146
  %3898 = vrot.lane.b32.xlu0 %v3876, 96
  %v3899 = vpop.permute.xlu0 %3898
  %3900 = vrot.lane.b32.xlu0 %v3881, 96
  %v3901 = vpop.permute.xlu0 %3900
  %3902 = vrot.lane.b32.xlu0 %v3886, 96
  %v3903 = vpop.permute.xlu0 %3902
  %vm3904 = vcmask 261120
  %v3906 = vsel %vm3904, %v3892, 0
  %v3909 = vsel %vm3904, %v3893, 0
  %v3912 = vsel %vm3904, %v3894, 0
  %v3914 = vsel %vm3904, %v3899, 0
  %v3916 = vsel %vm3904, %v3901, 0
  %v3918 = vsel %vm3904, %v3903, 0
  %3920 = vmatprep.subr.mxu0 0.0
  %3921 = vmatpush1.xpose.msra.mxu0 %v3914
  %3922 = vmatprep.subr.mxu0 0.0
  %3923 = vmatpush1.xpose.msra.mxu0 %v3916
  %3924 = vmatprep.subr.mxu0 0.0
  %3925 = vmatpush1.xpose.msra.mxu0 %v3918
  %3926 = vmatprep.subr.mxu0 0.0
  %3927 = vmatpush1.xpose.msra.mxu0 0.0
  %3928 = vmatprep.subr.mxu0 0.0
  %3929 = vmatpush1.xpose.msra.mxu0 0.0
  %3930 = vmatprep.subr.mxu0 0.0
  %3931 = vmatpush1.xpose.msra.mxu0 0.0
  %3932 = vmatprep.subr.mxu0 0.0
  %3933 = vmatpush1.xpose.msra.mxu0 0.0
  %3934 = vmatprep.subr.mxu0 0.0
  %3935 = vmatpush1.xpose.msra.mxu0 0.0
  %3936 = vmatprep.subr.mxu0 0.0
  %3937 = vmatpush1.xpose.msra.mxu0 0.0
  %3938 = vmatprep.subr.mxu0 0.0
  %3939 = vmatpush1.xpose.msra.mxu0 0.0
  %3940 = vmatprep.subr.mxu0 0.0
  %3941 = vmatpush1.xpose.msra.mxu0 0.0
  %3942 = vmatprep.subr.mxu0 0.0
  %3943 = vmatpush1.xpose.msra.mxu0 0.0
  %3944 = vmatprep.subr.mxu0 0.0
  %3945 = vmatpush1.xpose.msra.mxu0 0.0
  %3946 = vmatprep.subr.mxu0 0.0
  %3947 = vmatpush1.xpose.msra.mxu0 0.0
  %3948 = vmatprep.subr.mxu0 0.0
  %3949 = vmatpush1.xpose.msra.mxu0 0.0
  %3950 = vmatprep.subr.mxu0 0.0
  %3951 = vmatpush1.xpose.msra.mxu0 0.0
  %3952 = vmatprep.subr.mxu0 0.0
  %3953 = vmatpush1.xpose.msra.mxu0 0.0
  %3954 = vmatprep.subr.mxu0 0.0
  %3955 = vmatpush1.xpose.msra.mxu0 0.0
  %3956 = vmatprep.subr.mxu0 0.0
  %3957 = vmatpush1.xpose.msra.mxu0 0.0
  %3958 = vmatprep.subr.mxu0 0.0
  %3959 = vmatpush1.xpose.msra.mxu0 0.0
  %3960 = vmatprep.subr.mxu0 0.0
  %3961 = vmatpush1.xpose.msra.mxu0 0.0
  %3962 = vmatprep.subr.mxu0 0.0
  %3963 = vmatpush1.xpose.msra.mxu0 0.0
  %3964 = vmatprep.subr.mxu0 0.0
  %3965 = vmatpush1.xpose.msra.mxu0 0.0
  %3966 = vmatprep.subr.mxu0 0.0
  %3967 = vmatpush1.xpose.msra.mxu0 0.0
  %3968 = vmatprep.subr.mxu0 0.0
  %3969 = vmatpush1.xpose.msra.mxu0 0.0
  %3970 = vmatprep.subr.mxu0 0.0
  %3971 = vmatpush1.xpose.msra.mxu0 0.0
  %3972 = vmatprep.subr.mxu0 0.0
  %3973 = vmatpush1.xpose.msra.mxu0 0.0
  %3974 = vmatprep.subr.mxu0 0.0
  %3975 = vmatpush1.xpose.msra.mxu0 0.0
  %3976 = vmatprep.subr.mxu0 0.0
  %3977 = vmatpush1.xpose.msra.mxu0 0.0
  %3978 = vmatprep.subr.mxu0 0.0
  %3979 = vmatpush1.xpose.msra.mxu0 0.0
  %3980 = vmatprep.subr.mxu0 0.0
  %3981 = vmatpush1.xpose.msra.mxu0 0.0
  %3982 = vmatprep.subr.mxu0 0.0
  %3983 = vmatpush1.xpose.msra.mxu0 0.0
  %3984 = vmatprep.mubr.f32.mxu0 0.0
  %3985 = vmatmul.mubr.f32.gmra.mrb[0].mxu0 %v3906
  %v3986 = vpop.f32.mrb[0].mxu0
  %v3987 = vadd.f32 %v120, %v3986
  %v3988 = vpop.f32.mrb[0].mxu0
  %3989 = vmatprep.mubr.f32.mxu0 0.0
  %3990 = vmatmul.mubr.f32.gmra.mrb[0].mxu0 %v3909
  %v3991 = vpop.f32.mrb[0].mxu0
  %v3992 = vadd.f32 %v121, %v3991
  %v3993 = vpop.f32.mrb[0].mxu0
  %3994 = vmatprep.mubr.f32.mxu0 0.0
  %3995 = vmatmul.mubr.f32.gmra.mrb[0].mxu0 %v3912
  %v3996 = vpop.f32.mrb[0].mxu0
  %v3997 = vadd.f32 %v122, %v3996
  %v3998 = vpop.f32.mrb[0].mxu0
  %3999 = vdwg.mxu0
  %v4000 = vsel %vm612, %v3987, -inf
  %4001 = vmax.xlane.f32.xlu0 %v4000
  %v4002 = vpop.xlane.xlu0 %4001
  %v4003 = vsel %vm612, %v3992, -inf
  %4004 = vmax.xlane.f32.xlu0 %v4003
  %v4005 = vpop.xlane.xlu0 %4004
  %v4006 = vsel %vm619, %v3997, -inf
  %4007 = vmax.xlane.f32.xlu0 %v4006
  %v4008 = vpop.xlane.xlu0 %4007
  %v4009 = vsub.f32 %v3987, %v4002
  %v4010 = vsub.f32 %v3992, %v4005
  %v4011 = vsub.f32 %v3997, %v4008
  %v4012 = vmul.f32 %v4009, 1.442695
  %v4013 = vpow.pop %v4012
  %v4014 = vmul.f32 %v4010, 1.442695
  %v4015 = vpow.pop %v4014
  %v4016 = vmul.f32 %v4011, 1.442695
  %v4017 = vpow.pop %v4016
  %v4018 = vsel %vm612, %v4013, 0.0
  %4019 = vadd.xlane.f32.xlu0 %v4018
  %v4020 = vpop.xlane.xlu0 %4019
  %v4021 = vsel %vm612, %v4015, 0.0
  %4022 = vadd.xlane.f32.xlu0 %v4021
  %v4023 = vpop.xlane.xlu0 %4022
  %v4024 = vsel %vm619, %v4017, 0.0
  %4025 = vadd.xlane.f32.xlu0 %v4024
  %v4026 = vpop.xlane.xlu0 %4025
  %v4027 = vrcp.pop %v4020
  %v4028 = vrcp.pop %v4023
  %v4029 = vrcp.pop %v4026
  %v4030 = vmul.f32 %v4013, %v4027
  %v4031 = vmul.f32 %v4015, %v4028
  %v4032 = vmul.f32 %v4017, %v4029
  %4034 = vrot.lane.b32.xlu0 %v146, 64
  %v4035 = vpop.permute.xlu0 %4034
  %v4037 = vmul.f32 %v3876, %v4035
  %v4038 = vmul.f32 %v3881, %v4035
  %v4039 = vmul.f32 %v3886, %v4035
  %v4040 = vmul.f32 %v3889, %v150
  %v4041 = vmul.f32 %v3890, %v150
  %v4042 = vmul.f32 %v3891, %v150
  %v4044 = vsel %vm3904, %v4040, 0
  %v4047 = vsel %vm3904, %v4041, 0
  %v4050 = vsel %vm3904, %v4042, 0
  %4052 = vmatprep.subr.mxu0 0.0
  %4053 = vmatpush1.xpose.msra.mxu0 %v3914
  %4054 = vmatprep.subr.mxu0 0.0
  %4055 = vmatpush1.xpose.msra.mxu0 %v3916
  %4056 = vmatprep.subr.mxu0 0.0
  %4057 = vmatpush1.xpose.msra.mxu0 %v3918
  %4058 = vmatprep.subr.mxu0 0.0
  %4059 = vmatpush1.xpose.msra.mxu0 0.0
  %4060 = vmatprep.subr.mxu0 0.0
  %4061 = vmatpush1.xpose.msra.mxu0 0.0
  %4062 = vmatprep.subr.mxu0 0.0
  %4063 = vmatpush1.xpose.msra.mxu0 0.0
  %4064 = vmatprep.subr.mxu0 0.0
  %4065 = vmatpush1.xpose.msra.mxu0 0.0
  %4066 = vmatprep.subr.mxu0 0.0
  %4067 = vmatpush1.xpose.msra.mxu0 0.0
  %4068 = vmatprep.subr.mxu0 0.0
  %4069 = vmatpush1.xpose.msra.mxu0 0.0
  %4070 = vmatprep.subr.mxu0 0.0
  %4071 = vmatpush1.xpose.msra.mxu0 0.0
  %4072 = vmatprep.subr.mxu0 0.0
  %4073 = vmatpush1.xpose.msra.mxu0 0.0
  %4074 = vmatprep.subr.mxu0 0.0
  %4075 = vmatpush1.xpose.msra.mxu0 0.0
  %4076 = vmatprep.subr.mxu0 0.0
  %4077 = vmatpush1.xpose.msra.mxu0 0.0
  %4078 = vmatprep.subr.mxu0 0.0
  %4079 = vmatpush1.xpose.msra.mxu0 0.0
  %4080 = vmatprep.subr.mxu0 0.0
  %4081 = vmatpush1.xpose.msra.mxu0 0.0
  %4082 = vmatprep.subr.mxu0 0.0
  %4083 = vmatpush1.xpose.msra.mxu0 0.0
  %4084 = vmatprep.subr.mxu0 0.0
  %4085 = vmatpush1.xpose.msra.mxu0 0.0
  %4086 = vmatprep.subr.mxu0 0.0
  %4087 = vmatpush1.xpose.msra.mxu0 0.0
  %4088 = vmatprep.subr.mxu0 0.0
  %4089 = vmatpush1.xpose.msra.mxu0 0.0
  %4090 = vmatprep.subr.mxu0 0.0
  %4091 = vmatpush1.xpose.msra.mxu0 0.0
  %4092 = vmatprep.subr.mxu0 0.0
  %4093 = vmatpush1.xpose.msra.mxu0 0.0
  %4094 = vmatprep.subr.mxu0 0.0
  %4095 = vmatpush1.xpose.msra.mxu0 0.0
  %4096 = vmatprep.subr.mxu0 0.0
  %4097 = vmatpush1.xpose.msra.mxu0 0.0
  %4098 = vmatprep.subr.mxu0 0.0
  %4099 = vmatpush1.xpose.msra.mxu0 0.0
  %4100 = vmatprep.subr.mxu0 0.0
  %4101 = vmatpush1.xpose.msra.mxu0 0.0
  %4102 = vmatprep.subr.mxu0 0.0
  %4103 = vmatpush1.xpose.msra.mxu0 0.0
  %4104 = vmatprep.subr.mxu0 0.0
  %4105 = vmatpush1.xpose.msra.mxu0 0.0
  %4106 = vmatprep.subr.mxu0 0.0
  %4107 = vmatpush1.xpose.msra.mxu0 0.0
  %4108 = vmatprep.subr.mxu0 0.0
  %4109 = vmatpush1.xpose.msra.mxu0 0.0
  %4110 = vmatprep.subr.mxu0 0.0
  %4111 = vmatpush1.xpose.msra.mxu0 0.0
  %4112 = vmatprep.subr.mxu0 0.0
  %4113 = vmatpush1.xpose.msra.mxu0 0.0
  %4114 = vmatprep.subr.mxu0 0.0
  %4115 = vmatpush1.xpose.msra.mxu0 0.0
  %4116 = vmatprep.mubr.f32.mxu0 0.0
  %4117 = vmatmul.mubr.f32.gmra.mrb[0].mxu0 %v4044
  %v4118 = vpop.f32.mrb[0].mxu0
  %v4119 = vadd.f32 %v120, %v4118
  %v4120 = vpop.f32.mrb[0].mxu0
  %4121 = vmatprep.mubr.f32.mxu0 0.0
  %4122 = vmatmul.mubr.f32.gmra.mrb[0].mxu0 %v4047
  %v4123 = vpop.f32.mrb[0].mxu0
  %v4124 = vadd.f32 %v121, %v4123
  %v4125 = vpop.f32.mrb[0].mxu0
  %4126 = vmatprep.mubr.f32.mxu0 0.0
  %4127 = vmatmul.mubr.f32.gmra.mrb[0].mxu0 %v4050
  %v4128 = vpop.f32.mrb[0].mxu0
  %v4129 = vadd.f32 %v122, %v4128
  %v4130 = vpop.f32.mrb[0].mxu0
  %4131 = vdwg.mxu0
  %v4132 = vsel %vm612, %v4119, -inf
  %4133 = vmax.xlane.f32.xlu0 %v4132
  %v4134 = vpop.xlane.xlu0 %4133
  %v4135 = vsel %vm612, %v4124, -inf
  %4136 = vmax.xlane.f32.xlu0 %v4135
  %v4137 = vpop.xlane.xlu0 %4136
  %v4138 = vsel %vm619, %v4129, -inf
  %4139 = vmax.xlane.f32.xlu0 %v4138
  %v4140 = vpop.xlane.xlu0 %4139
  %v4141 = vsub.f32 %v4119, %v4134
  %v4142 = vsub.f32 %v4124, %v4137
  %v4143 = vsub.f32 %v4129, %v4140
  %v4144 = vmul.f32 %v4141, 1.442695
  %v4145 = vpow.pop %v4144
  %v4146 = vmul.f32 %v4142, 1.442695
  %v4147 = vpow.pop %v4146
  %v4148 = vmul.f32 %v4143, 1.442695
  %v4149 = vpow.pop %v4148
  %v4150 = vsel %vm612, %v4145, 0.0
  %4151 = vadd.xlane.f32.xlu0 %v4150
  %v4152 = vpop.xlane.xlu0 %4151
  %v4153 = vsel %vm612, %v4147, 0.0
  %4154 = vadd.xlane.f32.xlu0 %v4153
  %v4155 = vpop.xlane.xlu0 %4154
  %v4156 = vsel %vm619, %v4149, 0.0
  %4157 = vadd.xlane.f32.xlu0 %v4156
  %v4158 = vpop.xlane.xlu0 %4157
  %v4159 = vrcp.pop %v4152
  %v4160 = vrcp.pop %v4155
  %v4161 = vrcp.pop %v4158
  %v4162 = vmul.f32 %v4145, %v4159
  %v4163 = vmul.f32 %v4147, %v4160
  %v4164 = vmul.f32 %v4149, %v4161
  %4166 = vrot.lane.b32.xlu0 %v150, 64
  %v4167 = vpop.permute.xlu0 %4166
  %v4169 = vmul.f32 %v3876, %v4167
  %v4170 = vmul.f32 %v3881, %v4167
  %v4171 = vmul.f32 %v3886, %v4167
  %4175 = vrot.lane.b32.xlu0 %v4169, 64
  %v4176 = vpop.permute.xlu0 %4175
  %4177 = vrot.lane.b32.xlu0 %v4170, 64
  %v4178 = vpop.permute.xlu0 %4177
  %4179 = vrot.lane.b32.xlu0 %v4171, 64
  %v4180 = vpop.permute.xlu0 %4179
  %v4184 = vsel %vm612, %v4162, 0
  %v4187 = vsel %vm612, %v4163, 0
  %v4190 = vsel %vm612, %v4164, 0
  %v4192 = vsel %vm787, %v4180, 0
  %4194 = vmatprep.subr.mxu0 0.0
  %4195 = vmatpush1.msra.mxu0 %v4176
  %4196 = vmatprep.subr.mxu0 0.0
  %4197 = vmatpush1.msra.mxu0 %v4178
  %4198 = vmatprep.subr.mxu0 0.0
  %4199 = vmatpush1.msra.mxu0 %v4192
  %4200 = vmatprep.subr.mxu0 0.0
  %4201 = vmatpush1.msra.mxu0 0.0
  %4202 = vmatprep.subr.mxu0 0.0
  %4203 = vmatpush1.msra.mxu0 0.0
  %4204 = vmatprep.subr.mxu0 0.0
  %4205 = vmatpush1.msra.mxu0 0.0
  %4206 = vmatprep.subr.mxu0 0.0
  %4207 = vmatpush1.msra.mxu0 0.0
  %4208 = vmatprep.subr.mxu0 0.0
  %4209 = vmatpush1.msra.mxu0 0.0
  %4210 = vmatprep.subr.mxu0 0.0
  %4211 = vmatpush1.msra.mxu0 0.0
  %4212 = vmatprep.subr.mxu0 0.0
  %4213 = vmatpush1.msra.mxu0 0.0
  %4214 = vmatprep.subr.mxu0 0.0
  %4215 = vmatpush1.msra.mxu0 0.0
  %4216 = vmatprep.subr.mxu0 0.0
  %4217 = vmatpush1.msra.mxu0 0.0
  %4218 = vmatprep.subr.mxu0 0.0
  %4219 = vmatpush1.msra.mxu0 0.0
  %4220 = vmatprep.subr.mxu0 0.0
  %4221 = vmatpush1.msra.mxu0 0.0
  %4222 = vmatprep.subr.mxu0 0.0
  %4223 = vmatpush1.msra.mxu0 0.0
  %4224 = vmatprep.subr.mxu0 0.0
  %4225 = vmatpush1.msra.mxu0 0.0
  %4226 = vmatprep.subr.mxu0 0.0
  %4227 = vmatpush1.msra.mxu0 0.0
  %4228 = vmatprep.subr.mxu0 0.0
  %4229 = vmatpush1.msra.mxu0 0.0
  %4230 = vmatprep.subr.mxu0 0.0
  %4231 = vmatpush1.msra.mxu0 0.0
  %4232 = vmatprep.subr.mxu0 0.0
  %4233 = vmatpush1.msra.mxu0 0.0
  %4234 = vmatprep.subr.mxu0 0.0
  %4235 = vmatpush1.msra.mxu0 0.0
  %4236 = vmatprep.subr.mxu0 0.0
  %4237 = vmatpush1.msra.mxu0 0.0
  %4238 = vmatprep.subr.mxu0 0.0
  %4239 = vmatpush1.msra.mxu0 0.0
  %4240 = vmatprep.subr.mxu0 0.0
  %4241 = vmatpush1.msra.mxu0 0.0
  %4242 = vmatprep.subr.mxu0 0.0
  %4243 = vmatpush1.msra.mxu0 0.0
  %4244 = vmatprep.subr.mxu0 0.0
  %4245 = vmatpush1.msra.mxu0 0.0
  %4246 = vmatprep.subr.mxu0 0.0
  %4247 = vmatpush1.msra.mxu0 0.0
  %4248 = vmatprep.subr.mxu0 0.0
  %4249 = vmatpush1.msra.mxu0 0.0
  %4250 = vmatprep.subr.mxu0 0.0
  %4251 = vmatpush1.msra.mxu0 0.0
  %4252 = vmatprep.subr.mxu0 0.0
  %4253 = vmatpush1.msra.mxu0 0.0
  %4254 = vmatprep.subr.mxu0 0.0
  %4255 = vmatpush1.msra.mxu0 0.0
  %4256 = vmatprep.subr.mxu0 0.0
  %4257 = vmatpush1.msra.mxu0 0.0
  %4258 = vmatprep.mubr.f32.mxu0 0.0
  %4259 = vmatmul.mubr.f32.gmra.mrb[0].mxu0 %v4184
  %v4260 = vpop.f32.mrb[0].mxu0
  %v4261 = vadd.f32 0.0, %v4260
  %v4262 = vpop.f32.mrb[0].mxu0
  %4263 = vmatprep.mubr.f32.mxu0 0.0
  %4264 = vmatmul.mubr.f32.gmra.mrb[0].mxu0 %v4187
  %v4265 = vpop.f32.mrb[0].mxu0
  %v4266 = vadd.f32 0.0, %v4265
  %v4267 = vpop.f32.mrb[0].mxu0
  %4268 = vmatprep.mubr.f32.mxu0 0.0
  %4269 = vmatmul.mubr.f32.gmra.mrb[0].mxu0 %v4190
  %v4270 = vpop.f32.mrb[0].mxu0
  %v4271 = vadd.f32 0.0, %v4270
  %v4272 = vpop.f32.mrb[0].mxu0
  %4273 = vdwg.mxu0
  %4277 = vrot.lane.b32.xlu0 %v4037, 64
  %v4278 = vpop.permute.xlu0 %4277
  %4279 = vrot.lane.b32.xlu0 %v4038, 64
  %v4280 = vpop.permute.xlu0 %4279
  %4281 = vrot.lane.b32.xlu0 %v4039, 64
  %v4282 = vpop.permute.xlu0 %4281
  %v4286 = vsel %vm612, %v4030, 0
  %v4289 = vsel %vm612, %v4031, 0
  %v4292 = vsel %vm612, %v4032, 0
  %v4294 = vsel %vm787, %v4282, 0
  %4296 = vmatprep.subr.mxu0 0.0
  %4297 = vmatpush1.msra.mxu0 %v4278
  %4298 = vmatprep.subr.mxu0 0.0
  %4299 = vmatpush1.msra.mxu0 %v4280
  %4300 = vmatprep.subr.mxu0 0.0
  %4301 = vmatpush1.msra.mxu0 %v4294
  %4302 = vmatprep.subr.mxu0 0.0
  %4303 = vmatpush1.msra.mxu0 0.0
  %4304 = vmatprep.subr.mxu0 0.0
  %4305 = vmatpush1.msra.mxu0 0.0
  %4306 = vmatprep.subr.mxu0 0.0
  %4307 = vmatpush1.msra.mxu0 0.0
  %4308 = vmatprep.subr.mxu0 0.0
  %4309 = vmatpush1.msra.mxu0 0.0
  %4310 = vmatprep.subr.mxu0 0.0
  %4311 = vmatpush1.msra.mxu0 0.0
  %4312 = vmatprep.subr.mxu0 0.0
  %4313 = vmatpush1.msra.mxu0 0.0
  %4314 = vmatprep.subr.mxu0 0.0
  %4315 = vmatpush1.msra.mxu0 0.0
  %4316 = vmatprep.subr.mxu0 0.0
  %4317 = vmatpush1.msra.mxu0 0.0
  %4318 = vmatprep.subr.mxu0 0.0
  %4319 = vmatpush1.msra.mxu0 0.0
  %4320 = vmatprep.subr.mxu0 0.0
  %4321 = vmatpush1.msra.mxu0 0.0
  %4322 = vmatprep.subr.mxu0 0.0
  %4323 = vmatpush1.msra.mxu0 0.0
  %4324 = vmatprep.subr.mxu0 0.0
  %4325 = vmatpush1.msra.mxu0 0.0
  %4326 = vmatprep.subr.mxu0 0.0
  %4327 = vmatpush1.msra.mxu0 0.0
  %4328 = vmatprep.subr.mxu0 0.0
  %4329 = vmatpush1.msra.mxu0 0.0
  %4330 = vmatprep.subr.mxu0 0.0
  %4331 = vmatpush1.msra.mxu0 0.0
  %4332 = vmatprep.subr.mxu0 0.0
  %4333 = vmatpush1.msra.mxu0 0.0
  %4334 = vmatprep.subr.mxu0 0.0
  %4335 = vmatpush1.msra.mxu0 0.0
  %4336 = vmatprep.subr.mxu0 0.0
  %4337 = vmatpush1.msra.mxu0 0.0
  %4338 = vmatprep.subr.mxu0 0.0
  %4339 = vmatpush1.msra.mxu0 0.0
  %4340 = vmatprep.subr.mxu0 0.0
  %4341 = vmatpush1.msra.mxu0 0.0
  %4342 = vmatprep.subr.mxu0 0.0
  %4343 = vmatpush1.msra.mxu0 0.0
  %4344 = vmatprep.subr.mxu0 0.0
  %4345 = vmatpush1.msra.mxu0 0.0
  %4346 = vmatprep.subr.mxu0 0.0
  %4347 = vmatpush1.msra.mxu0 0.0
  %4348 = vmatprep.subr.mxu0 0.0
  %4349 = vmatpush1.msra.mxu0 0.0
  %4350 = vmatprep.subr.mxu0 0.0
  %4351 = vmatpush1.msra.mxu0 0.0
  %4352 = vmatprep.subr.mxu0 0.0
  %4353 = vmatpush1.msra.mxu0 0.0
  %4354 = vmatprep.subr.mxu0 0.0
  %4355 = vmatpush1.msra.mxu0 0.0
  %4356 = vmatprep.subr.mxu0 0.0
  %4357 = vmatpush1.msra.mxu0 0.0
  %4358 = vmatprep.subr.mxu0 0.0
  %4359 = vmatpush1.msra.mxu0 0.0
  %4360 = vmatprep.mubr.f32.mxu0 0.0
  %4361 = vmatmul.mubr.f32.gmra.mrb[0].mxu0 %v4286
  %v4362 = vpop.f32.mrb[0].mxu0
  %v4363 = vadd.f32 %v4261, %v4362
  %v4364 = vpop.f32.mrb[0].mxu0
  %4365 = vmatprep.mubr.f32.mxu0 0.0
  %4366 = vmatmul.mubr.f32.gmra.mrb[0].mxu0 %v4289
  %v4367 = vpop.f32.mrb[0].mxu0
  %v4368 = vadd.f32 %v4266, %v4367
  %v4369 = vpop.f32.mrb[0].mxu0
  %4370 = vmatprep.mubr.f32.mxu0 0.0
  %4371 = vmatmul.mubr.f32.gmra.mrb[0].mxu0 %v4292
  %v4372 = vpop.f32.mrb[0].mxu0
  %v4373 = vadd.f32 %v4271, %v4372
  %v4374 = vpop.f32.mrb[0].mxu0
  %4375 = vdwg.mxu0
  %v4376 = vmul.f32 %v3889, %v154
  %v4377 = vmul.f32 %v3890, %v154
  %v4378 = vmul.f32 %v3891, %v154
  %v4380 = vsel %vm3904, %v4376, 0
  %v4383 = vsel %vm3904, %v4377, 0
  %v4386 = vsel %vm3904, %v4378, 0
  %4388 = vmatprep.subr.mxu0 0.0
  %4389 = vmatpush1.xpose.msra.mxu0 %v3914
  %4390 = vmatprep.subr.mxu0 0.0
  %4391 = vmatpush1.xpose.msra.mxu0 %v3916
  %4392 = vmatprep.subr.mxu0 0.0
  %4393 = vmatpush1.xpose.msra.mxu0 %v3918
  %4394 = vmatprep.subr.mxu0 0.0
  %4395 = vmatpush1.xpose.msra.mxu0 0.0
  %4396 = vmatprep.subr.mxu0 0.0
  %4397 = vmatpush1.xpose.msra.mxu0 0.0
  %4398 = vmatprep.subr.mxu0 0.0
  %4399 = vmatpush1.xpose.msra.mxu0 0.0
  %4400 = vmatprep.subr.mxu0 0.0
  %4401 = vmatpush1.xpose.msra.mxu0 0.0
  %4402 = vmatprep.subr.mxu0 0.0
  %4403 = vmatpush1.xpose.msra.mxu0 0.0
  %4404 = vmatprep.subr.mxu0 0.0
  %4405 = vmatpush1.xpose.msra.mxu0 0.0
  %4406 = vmatprep.subr.mxu0 0.0
  %4407 = vmatpush1.xpose.msra.mxu0 0.0
  %4408 = vmatprep.subr.mxu0 0.0
  %4409 = vmatpush1.xpose.msra.mxu0 0.0
  %4410 = vmatprep.subr.mxu0 0.0
  %4411 = vmatpush1.xpose.msra.mxu0 0.0
  %4412 = vmatprep.subr.mxu0 0.0
  %4413 = vmatpush1.xpose.msra.mxu0 0.0
  %4414 = vmatprep.subr.mxu0 0.0
  %4415 = vmatpush1.xpose.msra.mxu0 0.0
  %4416 = vmatprep.subr.mxu0 0.0
  %4417 = vmatpush1.xpose.msra.mxu0 0.0
  %4418 = vmatprep.subr.mxu0 0.0
  %4419 = vmatpush1.xpose.msra.mxu0 0.0
  %4420 = vmatprep.subr.mxu0 0.0
  %4421 = vmatpush1.xpose.msra.mxu0 0.0
  %4422 = vmatprep.subr.mxu0 0.0
  %4423 = vmatpush1.xpose.msra.mxu0 0.0
  %4424 = vmatprep.subr.mxu0 0.0
  %4425 = vmatpush1.xpose.msra.mxu0 0.0
  %4426 = vmatprep.subr.mxu0 0.0
  %4427 = vmatpush1.xpose.msra.mxu0 0.0
  %4428 = vmatprep.subr.mxu0 0.0
  %4429 = vmatpush1.xpose.msra.mxu0 0.0
  %4430 = vmatprep.subr.mxu0 0.0
  %4431 = vmatpush1.xpose.msra.mxu0 0.0
  %4432 = vmatprep.subr.mxu0 0.0
  %4433 = vmatpush1.xpose.msra.mxu0 0.0
  %4434 = vmatprep.subr.mxu0 0.0
  %4435 = vmatpush1.xpose.msra.mxu0 0.0
  %4436 = vmatprep.subr.mxu0 0.0
  %4437 = vmatpush1.xpose.msra.mxu0 0.0
  %4438 = vmatprep.subr.mxu0 0.0
  %4439 = vmatpush1.xpose.msra.mxu0 0.0
  %4440 = vmatprep.subr.mxu0 0.0
  %4441 = vmatpush1.xpose.msra.mxu0 0.0
  %4442 = vmatprep.subr.mxu0 0.0
  %4443 = vmatpush1.xpose.msra.mxu0 0.0
  %4444 = vmatprep.subr.mxu0 0.0
  %4445 = vmatpush1.xpose.msra.mxu0 0.0
  %4446 = vmatprep.subr.mxu0 0.0
  %4447 = vmatpush1.xpose.msra.mxu0 0.0
  %4448 = vmatprep.subr.mxu0 0.0
  %4449 = vmatpush1.xpose.msra.mxu0 0.0
  %4450 = vmatprep.subr.mxu0 0.0
  %4451 = vmatpush1.xpose.msra.mxu0 0.0
  %4452 = vmatprep.mubr.f32.mxu0 0.0
  %4453 = vmatmul.mubr.f32.gmra.mrb[0].mxu0 %v4380
  %v4454 = vpop.f32.mrb[0].mxu0
  %v4455 = vadd.f32 %v120, %v4454
  %v4456 = vpop.f32.mrb[0].mxu0
  %4457 = vmatprep.mubr.f32.mxu0 0.0
  %4458 = vmatmul.mubr.f32.gmra.mrb[0].mxu0 %v4383
  %v4459 = vpop.f32.mrb[0].mxu0
  %v4460 = vadd.f32 %v121, %v4459
  %v4461 = vpop.f32.mrb[0].mxu0
  %4462 = vmatprep.mubr.f32.mxu0 0.0
  %4463 = vmatmul.mubr.f32.gmra.mrb[0].mxu0 %v4386
  %v4464 = vpop.f32.mrb[0].mxu0
  %v4465 = vadd.f32 %v122, %v4464
  %v4466 = vpop.f32.mrb[0].mxu0
  %4467 = vdwg.mxu0
  %v4468 = vsel %vm612, %v4455, -inf
  %4469 = vmax.xlane.f32.xlu0 %v4468
  %v4470 = vpop.xlane.xlu0 %4469
  %v4471 = vsel %vm612, %v4460, -inf
  %4472 = vmax.xlane.f32.xlu0 %v4471
  %v4473 = vpop.xlane.xlu0 %4472
  %v4474 = vsel %vm619, %v4465, -inf
  %4475 = vmax.xlane.f32.xlu0 %v4474
  %v4476 = vpop.xlane.xlu0 %4475
  %v4477 = vsub.f32 %v4455, %v4470
  %v4478 = vsub.f32 %v4460, %v4473
  %v4479 = vsub.f32 %v4465, %v4476
  %v4480 = vmul.f32 %v4477, 1.442695
  %v4481 = vpow.pop %v4480
  %v4482 = vmul.f32 %v4478, 1.442695
  %v4483 = vpow.pop %v4482
  %v4484 = vmul.f32 %v4479, 1.442695
  %v4485 = vpow.pop %v4484
  %v4486 = vsel %vm612, %v4481, 0.0
  %4487 = vadd.xlane.f32.xlu0 %v4486
  %v4488 = vpop.xlane.xlu0 %4487
  %v4489 = vsel %vm612, %v4483, 0.0
  %4490 = vadd.xlane.f32.xlu0 %v4489
  %v4491 = vpop.xlane.xlu0 %4490
  %v4492 = vsel %vm619, %v4485, 0.0
  %4493 = vadd.xlane.f32.xlu0 %v4492
  %v4494 = vpop.xlane.xlu0 %4493
  %v4495 = vrcp.pop %v4488
  %v4496 = vrcp.pop %v4491
  %v4497 = vrcp.pop %v4494
  %v4498 = vmul.f32 %v4481, %v4495
  %v4499 = vmul.f32 %v4483, %v4496
  %v4500 = vmul.f32 %v4485, %v4497
  %4502 = vrot.lane.b32.xlu0 %v154, 64
  %v4503 = vpop.permute.xlu0 %4502
  %v4505 = vmul.f32 %v3876, %v4503
  %v4506 = vmul.f32 %v3881, %v4503
  %v4507 = vmul.f32 %v3886, %v4503
  %4511 = vrot.lane.b32.xlu0 %v4505, 64
  %v4512 = vpop.permute.xlu0 %4511
  %4513 = vrot.lane.b32.xlu0 %v4506, 64
  %v4514 = vpop.permute.xlu0 %4513
  %4515 = vrot.lane.b32.xlu0 %v4507, 64
  %v4516 = vpop.permute.xlu0 %4515
  %v4520 = vsel %vm612, %v4498, 0
  %v4523 = vsel %vm612, %v4499, 0
  %v4526 = vsel %vm612, %v4500, 0
  %v4528 = vsel %vm787, %v4516, 0
  %4530 = vmatprep.subr.mxu0 0.0
  %4531 = vmatpush1.msra.mxu0 %v4512
  %4532 = vmatprep.subr.mxu0 0.0
  %4533 = vmatpush1.msra.mxu0 %v4514
  %4534 = vmatprep.subr.mxu0 0.0
  %4535 = vmatpush1.msra.mxu0 %v4528
  %4536 = vmatprep.subr.mxu0 0.0
  %4537 = vmatpush1.msra.mxu0 0.0
  %4538 = vmatprep.subr.mxu0 0.0
  %4539 = vmatpush1.msra.mxu0 0.0
  %4540 = vmatprep.subr.mxu0 0.0
  %4541 = vmatpush1.msra.mxu0 0.0
  %4542 = vmatprep.subr.mxu0 0.0
  %4543 = vmatpush1.msra.mxu0 0.0
  %4544 = vmatprep.subr.mxu0 0.0
  %4545 = vmatpush1.msra.mxu0 0.0
  %4546 = vmatprep.subr.mxu0 0.0
  %4547 = vmatpush1.msra.mxu0 0.0
  %4548 = vmatprep.subr.mxu0 0.0
  %4549 = vmatpush1.msra.mxu0 0.0
  %4550 = vmatprep.subr.mxu0 0.0
  %4551 = vmatpush1.msra.mxu0 0.0
  %4552 = vmatprep.subr.mxu0 0.0
  %4553 = vmatpush1.msra.mxu0 0.0
  %4554 = vmatprep.subr.mxu0 0.0
  %4555 = vmatpush1.msra.mxu0 0.0
  %4556 = vmatprep.subr.mxu0 0.0
  %4557 = vmatpush1.msra.mxu0 0.0
  %4558 = vmatprep.subr.mxu0 0.0
  %4559 = vmatpush1.msra.mxu0 0.0
  %4560 = vmatprep.subr.mxu0 0.0
  %4561 = vmatpush1.msra.mxu0 0.0
  %4562 = vmatprep.subr.mxu0 0.0
  %4563 = vmatpush1.msra.mxu0 0.0
  %4564 = vmatprep.subr.mxu0 0.0
  %4565 = vmatpush1.msra.mxu0 0.0
  %4566 = vmatprep.subr.mxu0 0.0
  %4567 = vmatpush1.msra.mxu0 0.0
  %4568 = vmatprep.subr.mxu0 0.0
  %4569 = vmatpush1.msra.mxu0 0.0
  %4570 = vmatprep.subr.mxu0 0.0
  %4571 = vmatpush1.msra.mxu0 0.0
  %4572 = vmatprep.subr.mxu0 0.0
  %4573 = vmatpush1.msra.mxu0 0.0
  %4574 = vmatprep.subr.mxu0 0.0
  %4575 = vmatpush1.msra.mxu0 0.0
  %4576 = vmatprep.subr.mxu0 0.0
  %4577 = vmatpush1.msra.mxu0 0.0
  %4578 = vmatprep.subr.mxu0 0.0
  %4579 = vmatpush1.msra.mxu0 0.0
  %4580 = vmatprep.subr.mxu0 0.0
  %4581 = vmatpush1.msra.mxu0 0.0
  %4582 = vmatprep.subr.mxu0 0.0
  %4583 = vmatpush1.msra.mxu0 0.0
  %4584 = vmatprep.subr.mxu0 0.0
  %4585 = vmatpush1.msra.mxu0 0.0
  %4586 = vmatprep.subr.mxu0 0.0
  %4587 = vmatpush1.msra.mxu0 0.0
  %4588 = vmatprep.subr.mxu0 0.0
  %4589 = vmatpush1.msra.mxu0 0.0
  %4590 = vmatprep.subr.mxu0 0.0
  %4591 = vmatpush1.msra.mxu0 0.0
  %4592 = vmatprep.subr.mxu0 0.0
  %4593 = vmatpush1.msra.mxu0 0.0
  %4594 = vmatprep.mubr.f32.mxu0 0.0
  %4595 = vmatmul.mubr.f32.gmra.mrb[0].mxu0 %v4520
  %v4596 = vpop.f32.mrb[0].mxu0
  %v4597 = vadd.f32 0.0, %v4596
  %v4598 = vpop.f32.mrb[0].mxu0
  %4599 = vmatprep.mubr.f32.mxu0 0.0
  %4600 = vmatmul.mubr.f32.gmra.mrb[0].mxu0 %v4523
  %v4601 = vpop.f32.mrb[0].mxu0
  %v4602 = vadd.f32 0.0, %v4601
  %v4603 = vpop.f32.mrb[0].mxu0
  %4604 = vmatprep.mubr.f32.mxu0 0.0
  %4605 = vmatmul.mubr.f32.gmra.mrb[0].mxu0 %v4526
  %v4606 = vpop.f32.mrb[0].mxu0
  %v4607 = vadd.f32 0.0, %v4606
  %v4608 = vpop.f32.mrb[0].mxu0
  %4609 = vdwg.mxu0
  %v4610 = vadd.f32 %v4363, %v4597
  %v4611 = vadd.f32 %v4368, %v4602
  %v4612 = vadd.f32 %v4373, %v4607
  %v4613 = vmul.f32 %v3889, %v158
  %v4614 = vmul.f32 %v3890, %v158
  %v4615 = vmul.f32 %v3891, %v158
  %v4617 = vsel %vm3904, %v4613, 0
  %v4620 = vsel %vm3904, %v4614, 0
  %v4623 = vsel %vm3904, %v4615, 0
  %4625 = vmatprep.subr.mxu0 0.0
  %4626 = vmatpush1.xpose.msra.mxu0 %v3914
  %4627 = vmatprep.subr.mxu0 0.0
  %4628 = vmatpush1.xpose.msra.mxu0 %v3916
  %4629 = vmatprep.subr.mxu0 0.0
  %4630 = vmatpush1.xpose.msra.mxu0 %v3918
  %4631 = vmatprep.subr.mxu0 0.0
  %4632 = vmatpush1.xpose.msra.mxu0 0.0
  %4633 = vmatprep.subr.mxu0 0.0
  %4634 = vmatpush1.xpose.msra.mxu0 0.0
  %4635 = vmatprep.subr.mxu0 0.0
  %4636 = vmatpush1.xpose.msra.mxu0 0.0
  %4637 = vmatprep.subr.mxu0 0.0
  %4638 = vmatpush1.xpose.msra.mxu0 0.0
  %4639 = vmatprep.subr.mxu0 0.0
  %4640 = vmatpush1.xpose.msra.mxu0 0.0
  %4641 = vmatprep.subr.mxu0 0.0
  %4642 = vmatpush1.xpose.msra.mxu0 0.0
  %4643 = vmatprep.subr.mxu0 0.0
  %4644 = vmatpush1.xpose.msra.mxu0 0.0
  %4645 = vmatprep.subr.mxu0 0.0
  %4646 = vmatpush1.xpose.msra.mxu0 0.0
  %4647 = vmatprep.subr.mxu0 0.0
  %4648 = vmatpush1.xpose.msra.mxu0 0.0
  %4649 = vmatprep.subr.mxu0 0.0
  %4650 = vmatpush1.xpose.msra.mxu0 0.0
  %4651 = vmatprep.subr.mxu0 0.0
  %4652 = vmatpush1.xpose.msra.mxu0 0.0
  %4653 = vmatprep.subr.mxu0 0.0
  %4654 = vmatpush1.xpose.msra.mxu0 0.0
  %4655 = vmatprep.subr.mxu0 0.0
  %4656 = vmatpush1.xpose.msra.mxu0 0.0
  %4657 = vmatprep.subr.mxu0 0.0
  %4658 = vmatpush1.xpose.msra.mxu0 0.0
  %4659 = vmatprep.subr.mxu0 0.0
  %4660 = vmatpush1.xpose.msra.mxu0 0.0
  %4661 = vmatprep.subr.mxu0 0.0
  %4662 = vmatpush1.xpose.msra.mxu0 0.0
  %4663 = vmatprep.subr.mxu0 0.0
  %4664 = vmatpush1.xpose.msra.mxu0 0.0
  %4665 = vmatprep.subr.mxu0 0.0
  %4666 = vmatpush1.xpose.msra.mxu0 0.0
  %4667 = vmatprep.subr.mxu0 0.0
  %4668 = vmatpush1.xpose.msra.mxu0 0.0
  %4669 = vmatprep.subr.mxu0 0.0
  %4670 = vmatpush1.xpose.msra.mxu0 0.0
  %4671 = vmatprep.subr.mxu0 0.0
  %4672 = vmatpush1.xpose.msra.mxu0 0.0
  %4673 = vmatprep.subr.mxu0 0.0
  %4674 = vmatpush1.xpose.msra.mxu0 0.0
  %4675 = vmatprep.subr.mxu0 0.0
  %4676 = vmatpush1.xpose.msra.mxu0 0.0
  %4677 = vmatprep.subr.mxu0 0.0
  %4678 = vmatpush1.xpose.msra.mxu0 0.0
  %4679 = vmatprep.subr.mxu0 0.0
  %4680 = vmatpush1.xpose.msra.mxu0 0.0
  %4681 = vmatprep.subr.mxu0 0.0
  %4682 = vmatpush1.xpose.msra.mxu0 0.0
  %4683 = vmatprep.subr.mxu0 0.0
  %4684 = vmatpush1.xpose.msra.mxu0 0.0
  %4685 = vmatprep.subr.mxu0 0.0
  %4686 = vmatpush1.xpose.msra.mxu0 0.0
  %4687 = vmatprep.subr.mxu0 0.0
  %4688 = vmatpush1.xpose.msra.mxu0 0.0
  %4689 = vmatprep.mubr.f32.mxu0 0.0
  %4690 = vmatmul.mubr.f32.gmra.mrb[0].mxu0 %v4617
  %v4691 = vpop.f32.mrb[0].mxu0
  %v4692 = vadd.f32 %v120, %v4691
  %v4693 = vpop.f32.mrb[0].mxu0
  %4694 = vmatprep.mubr.f32.mxu0 0.0
  %4695 = vmatmul.mubr.f32.gmra.mrb[0].mxu0 %v4620
  %v4696 = vpop.f32.mrb[0].mxu0
  %v4697 = vadd.f32 %v121, %v4696
  %v4698 = vpop.f32.mrb[0].mxu0
  %4699 = vmatprep.mubr.f32.mxu0 0.0
  %4700 = vmatmul.mubr.f32.gmra.mrb[0].mxu0 %v4623
  %v4701 = vpop.f32.mrb[0].mxu0
  %v4702 = vadd.f32 %v122, %v4701
  %v4703 = vpop.f32.mrb[0].mxu0
  %4704 = vdwg.mxu0
  %v4705 = vsel %vm612, %v4692, -inf
  %4706 = vmax.xlane.f32.xlu0 %v4705
  %v4707 = vpop.xlane.xlu0 %4706
  %v4708 = vsel %vm612, %v4697, -inf
  %4709 = vmax.xlane.f32.xlu0 %v4708
  %v4710 = vpop.xlane.xlu0 %4709
  %v4711 = vsel %vm619, %v4702, -inf
  %4712 = vmax.xlane.f32.xlu0 %v4711
  %v4713 = vpop.xlane.xlu0 %4712
  %v4714 = vsub.f32 %v4692, %v4707
  %v4715 = vsub.f32 %v4697, %v4710
  %v4716 = vsub.f32 %v4702, %v4713
  %v4717 = vmul.f32 %v4714, 1.442695
  %v4718 = vpow.pop %v4717
  %v4719 = vmul.f32 %v4715, 1.442695
  %v4720 = vpow.pop %v4719
  %v4721 = vmul.f32 %v4716, 1.442695
  %v4722 = vpow.pop %v4721
  %v4723 = vsel %vm612, %v4718, 0.0
  %4724 = vadd.xlane.f32.xlu0 %v4723
  %v4725 = vpop.xlane.xlu0 %4724
  %v4726 = vsel %vm612, %v4720, 0.0
  %4727 = vadd.xlane.f32.xlu0 %v4726
  %v4728 = vpop.xlane.xlu0 %4727
  %v4729 = vsel %vm619, %v4722, 0.0
  %4730 = vadd.xlane.f32.xlu0 %v4729
  %v4731 = vpop.xlane.xlu0 %4730
  %v4732 = vrcp.pop %v4725
  %v4733 = vrcp.pop %v4728
  %v4734 = vrcp.pop %v4731
  %v4735 = vmul.f32 %v4718, %v4732
  %v4736 = vmul.f32 %v4720, %v4733
  %v4737 = vmul.f32 %v4722, %v4734
  %4739 = vrot.lane.b32.xlu0 %v158, 64
  %v4740 = vpop.permute.xlu0 %4739
  %v4742 = vmul.f32 %v3876, %v4740
  %v4743 = vmul.f32 %v3881, %v4740
  %v4744 = vmul.f32 %v3886, %v4740
  %4748 = vrot.lane.b32.xlu0 %v4742, 64
  %v4749 = vpop.permute.xlu0 %4748
  %4750 = vrot.lane.b32.xlu0 %v4743, 64
  %v4751 = vpop.permute.xlu0 %4750
  %4752 = vrot.lane.b32.xlu0 %v4744, 64
  %v4753 = vpop.permute.xlu0 %4752
  %v4757 = vsel %vm612, %v4735, 0
  %v4760 = vsel %vm612, %v4736, 0
  %v4763 = vsel %vm612, %v4737, 0
  %v4765 = vsel %vm787, %v4753, 0
  %4767 = vmatprep.subr.mxu0 0.0
  %4768 = vmatpush1.msra.mxu0 %v4749
  %4769 = vmatprep.subr.mxu0 0.0
  %4770 = vmatpush1.msra.mxu0 %v4751
  %4771 = vmatprep.subr.mxu0 0.0
  %4772 = vmatpush1.msra.mxu0 %v4765
  %4773 = vmatprep.subr.mxu0 0.0
  %4774 = vmatpush1.msra.mxu0 0.0
  %4775 = vmatprep.subr.mxu0 0.0
  %4776 = vmatpush1.msra.mxu0 0.0
  %4777 = vmatprep.subr.mxu0 0.0
  %4778 = vmatpush1.msra.mxu0 0.0
  %4779 = vmatprep.subr.mxu0 0.0
  %4780 = vmatpush1.msra.mxu0 0.0
  %4781 = vmatprep.subr.mxu0 0.0
  %4782 = vmatpush1.msra.mxu0 0.0
  %4783 = vmatprep.subr.mxu0 0.0
  %4784 = vmatpush1.msra.mxu0 0.0
  %4785 = vmatprep.subr.mxu0 0.0
  %4786 = vmatpush1.msra.mxu0 0.0
  %4787 = vmatprep.subr.mxu0 0.0
  %4788 = vmatpush1.msra.mxu0 0.0
  %4789 = vmatprep.subr.mxu0 0.0
  %4790 = vmatpush1.msra.mxu0 0.0
  %4791 = vmatprep.subr.mxu0 0.0
  %4792 = vmatpush1.msra.mxu0 0.0
  %4793 = vmatprep.subr.mxu0 0.0
  %4794 = vmatpush1.msra.mxu0 0.0
  %4795 = vmatprep.subr.mxu0 0.0
  %4796 = vmatpush1.msra.mxu0 0.0
  %4797 = vmatprep.subr.mxu0 0.0
  %4798 = vmatpush1.msra.mxu0 0.0
  %4799 = vmatprep.subr.mxu0 0.0
  %4800 = vmatpush1.msra.mxu0 0.0
  %4801 = vmatprep.subr.mxu0 0.0
  %4802 = vmatpush1.msra.mxu0 0.0
  %4803 = vmatprep.subr.mxu0 0.0
  %4804 = vmatpush1.msra.mxu0 0.0
  %4805 = vmatprep.subr.mxu0 0.0
  %4806 = vmatpush1.msra.mxu0 0.0
  %4807 = vmatprep.subr.mxu0 0.0
  %4808 = vmatpush1.msra.mxu0 0.0
  %4809 = vmatprep.subr.mxu0 0.0
  %4810 = vmatpush1.msra.mxu0 0.0
  %4811 = vmatprep.subr.mxu0 0.0
  %4812 = vmatpush1.msra.mxu0 0.0
  %4813 = vmatprep.subr.mxu0 0.0
  %4814 = vmatpush1.msra.mxu0 0.0
  %4815 = vmatprep.subr.mxu0 0.0
  %4816 = vmatpush1.msra.mxu0 0.0
  %4817 = vmatprep.subr.mxu0 0.0
  %4818 = vmatpush1.msra.mxu0 0.0
  %4819 = vmatprep.subr.mxu0 0.0
  %4820 = vmatpush1.msra.mxu0 0.0
  %4821 = vmatprep.subr.mxu0 0.0
  %4822 = vmatpush1.msra.mxu0 0.0
  %4823 = vmatprep.subr.mxu0 0.0
  %4824 = vmatpush1.msra.mxu0 0.0
  %4825 = vmatprep.subr.mxu0 0.0
  %4826 = vmatpush1.msra.mxu0 0.0
  %4827 = vmatprep.subr.mxu0 0.0
  %4828 = vmatpush1.msra.mxu0 0.0
  %4829 = vmatprep.subr.mxu0 0.0
  %4830 = vmatpush1.msra.mxu0 0.0
  %4831 = vmatprep.mubr.f32.mxu0 0.0
  %4832 = vmatmul.mubr.f32.gmra.mrb[0].mxu0 %v4757
  %v4833 = vpop.f32.mrb[0].mxu0
  %v4834 = vadd.f32 0.0, %v4833
  %v4835 = vpop.f32.mrb[0].mxu0
  %4836 = vmatprep.mubr.f32.mxu0 0.0
  %4837 = vmatmul.mubr.f32.gmra.mrb[0].mxu0 %v4760
  %v4838 = vpop.f32.mrb[0].mxu0
  %v4839 = vadd.f32 0.0, %v4838
  %v4840 = vpop.f32.mrb[0].mxu0
  %4841 = vmatprep.mubr.f32.mxu0 0.0
  %4842 = vmatmul.mubr.f32.gmra.mrb[0].mxu0 %v4763
  %v4843 = vpop.f32.mrb[0].mxu0
  %v4844 = vadd.f32 0.0, %v4843
  %v4845 = vpop.f32.mrb[0].mxu0
  %4846 = vdwg.mxu0
  %v4847 = vadd.f32 %v4610, %v4834
  %v4848 = vadd.f32 %v4611, %v4839
  %v4849 = vadd.f32 %v4612, %v4844
  %v4851 = vsel %vm3904, %v4847, 0
  %v4854 = vsel %vm3904, %v4848, 0
  %v4857 = vsel %vm3904, %v4849, 0
  %4859 = vmatprep.subr.mxu0 0.0
  %4860 = vmatpush1.msra.mxu0 %v3721
  %4861 = vmatprep.subr.mxu0 0.0
  %4862 = vmatpush1.msra.mxu0 %v3722
  %4863 = vmatprep.subr.mxu0 0.0
  %4864 = vmatpush1.msra.mxu0 %v3723
  %4865 = vmatprep.subr.mxu0 0.0
  %4866 = vmatpush1.msra.mxu0 %v3724
  %4867 = vmatprep.subr.mxu0 0.0
  %4868 = vmatpush1.msra.mxu0 0.0
  %4869 = vmatprep.subr.mxu0 0.0
  %4870 = vmatpush1.msra.mxu0 0.0
  %4871 = vmatprep.subr.mxu0 0.0
  %4872 = vmatpush1.msra.mxu0 0.0
  %4873 = vmatprep.subr.mxu0 0.0
  %4874 = vmatpush1.msra.mxu0 0.0
  %4875 = vmatprep.subr.mxu0 0.0
  %4876 = vmatpush1.msra.mxu0 0.0
  %4877 = vmatprep.subr.mxu0 0.0
  %4878 = vmatpush1.msra.mxu0 0.0
  %4879 = vmatprep.subr.mxu0 0.0
  %4880 = vmatpush1.msra.mxu0 0.0
  %4881 = vmatprep.subr.mxu0 0.0
  %4882 = vmatpush1.msra.mxu0 0.0
  %4883 = vmatprep.subr.mxu0 0.0
  %4884 = vmatpush1.msra.mxu0 0.0
  %4885 = vmatprep.subr.mxu0 0.0
  %4886 = vmatpush1.msra.mxu0 0.0
  %4887 = vmatprep.subr.mxu0 0.0
  %4888 = vmatpush1.msra.mxu0 0.0
  %4889 = vmatprep.subr.mxu0 0.0
  %4890 = vmatpush1.msra.mxu0 0.0
  %4891 = vmatprep.subr.mxu0 0.0
  %4892 = vmatpush1.msra.mxu0 0.0
  %4893 = vmatprep.subr.mxu0 0.0
  %4894 = vmatpush1.msra.mxu0 0.0
  %4895 = vmatprep.subr.mxu0 0.0
  %4896 = vmatpush1.msra.mxu0 0.0
  %4897 = vmatprep.subr.mxu0 0.0
  %4898 = vmatpush1.msra.mxu0 0.0
  %4899 = vmatprep.subr.mxu0 0.0
  %4900 = vmatpush1.msra.mxu0 0.0
  %4901 = vmatprep.subr.mxu0 0.0
  %4902 = vmatpush1.msra.mxu0 0.0
  %4903 = vmatprep.subr.mxu0 0.0
  %4904 = vmatpush1.msra.mxu0 0.0
  %4905 = vmatprep.subr.mxu0 0.0
  %4906 = vmatpush1.msra.mxu0 0.0
  %4907 = vmatprep.subr.mxu0 0.0
  %4908 = vmatpush1.msra.mxu0 0.0
  %4909 = vmatprep.subr.mxu0 0.0
  %4910 = vmatpush1.msra.mxu0 0.0
  %4911 = vmatprep.subr.mxu0 0.0
  %4912 = vmatpush1.msra.mxu0 0.0
  %4913 = vmatprep.subr.mxu0 0.0
  %4914 = vmatpush1.msra.mxu0 0.0
  %4915 = vmatprep.subr.mxu0 0.0
  %4916 = vmatpush1.msra.mxu0 0.0
  %4917 = vmatprep.subr.mxu0 0.0
  %4918 = vmatpush1.msra.mxu0 0.0
  %4919 = vmatprep.subr.mxu0 0.0
  %4920 = vmatpush1.msra.mxu0 0.0
  %4921 = vmatprep.subr.mxu0 0.0
  %4922 = vmatpush1.msra.mxu0 0.0
  %4923 = vmatprep.mubr.f32.mxu0 0.0
  %4924 = vmatmul.mubr.f32.gmra.mrb[0].mxu0 %v4851
  %v4925 = vpop.f32.mrb[0].mxu0
  %v4926 = vadd.f32 0.0, %v4925
  %v4927 = vpop.f32.mrb[0].mxu0
  %4928 = vmatprep.mubr.f32.mxu0 0.0
  %4929 = vmatmul.mubr.f32.gmra.mrb[0].mxu0 %v4854
  %v4930 = vpop.f32.mrb[0].mxu0
  %v4931 = vadd.f32 0.0, %v4930
  %v4932 = vpop.f32.mrb[0].mxu0
  %4933 = vmatprep.mubr.f32.mxu0 0.0
  %4934 = vmatmul.mubr.f32.gmra.mrb[0].mxu0 %v4857
  %v4935 = vpop.f32.mrb[0].mxu0
  %v4936 = vadd.f32 0.0, %v4935
  %v4937 = vpop.f32.mrb[0].mxu0
  %4938 = vdwg.mxu0
  %v4939 = vadd.f32 %v3714, %v4926
  %v4940 = vadd.f32 %v3715, %v4931
  %v4941 = vadd.f32 %v3716, %v4936
  %v4942 = vlaneseq
  %v4943 = vshrl.u32 %v4942, 7
  %v4944 = vsub.s32 2, %v4943
  %v4945 = vrot.slane %v3717, %v4944
  %v4946 = vadd.f32 %v4939, %v4945
  %v4947 = vadd.f32 %v4940, %v4945
  %v4948 = vadd.f32 %v4941, %v4945
  %v4949 = vsel %vm3740, %v4946, 0.0
  %4950 = vadd.xlane.f32.xlu0 %v4949
  %v4951 = vpop.xlane.xlu0 %4950
  %v4952 = vsel %vm3740, %v4947, 0.0
  %4953 = vadd.xlane.f32.xlu0 %v4952
  %v4954 = vpop.xlane.xlu0 %4953
  %v4955 = vsel %vm3747, %v4948, 0.0
  %4956 = vadd.xlane.f32.xlu0 %v4955
  %v4957 = vpop.xlane.xlu0 %4956
  %v4958 = vmul.f32 %v4951, %v3751
  %v4959 = vmul.f32 %v4954, %v3751
  %v4960 = vmul.f32 %v4957, %v3751
  %v4961 = vsub.f32 %v4946, %v4958
  %v4962 = vsub.f32 %v4947, %v4959
  %v4963 = vsub.f32 %v4948, %v4960
  %v4964 = vmul.f32 %v4961, %v4961
  %v4965 = vmul.f32 %v4962, %v4962
  %v4966 = vmul.f32 %v4963, %v4963
  %v4967 = vsel %vm3740, %v4964, 0.0
  %4968 = vadd.xlane.f32.xlu0 %v4967
  %v4969 = vpop.xlane.xlu0 %4968
  %v4970 = vsel %vm3740, %v4965, 0.0
  %4971 = vadd.xlane.f32.xlu0 %v4970
  %v4972 = vpop.xlane.xlu0 %4971
  %v4973 = vsel %vm3747, %v4966, 0.0
  %4974 = vadd.xlane.f32.xlu0 %v4973
  %v4975 = vpop.xlane.xlu0 %4974
  %v4976 = vmul.f32 %v4969, %v3751
  %v4977 = vmul.f32 %v4972, %v3751
  %v4978 = vmul.f32 %v4975, %v3751
  %v4979 = vadd.f32 %v4976, 1e-06
  %v4980 = vadd.f32 %v4977, 1e-06
  %v4981 = vadd.f32 %v4978, 1e-06
  %v4982 = vrsqrt.pop %v4979
  %v4983 = vrsqrt.pop %v4980
  %v4984 = vrsqrt.pop %v4981
  %v4985 = vmul.f32 %v4961, %v4982
  %v4986 = vmul.f32 %v4962, %v4983
  %v4987 = vmul.f32 %v4963, %v4984
  %v4988 = vlaneseq
  %v4989 = vshrl.u32 %v4988, 7
  %v4990 = vsub.s32 3, %v4989
  %v4991 = vrot.slane %v3717, %v4990
  %v4992 = vmul.f32 %v4985, %v4991
  %v4993 = vmul.f32 %v4986, %v4991
  %v4994 = vmul.f32 %v4987, %v4991
  %v4995 = vlaneseq
  %v4996 = vshrl.u32 %v4995, 7
  %v4997 = vsub.s32 4, %v4996
  %v4998 = vrot.slane %v3717, %v4997
  %v4999 = vadd.f32 %v4992, %v4998
  %v5000 = vadd.f32 %v4993, %v4998
  %v5001 = vadd.f32 %v4994, %v4998
  %v5002 = vlaneseq
  %v5003 = vshrl.u32 %v5002, 7
  %v5004 = vsub.s32 7, %v5003
  %v5005 = vrot.slane %v3717, %v5004
  %v5007 = vsel %vm3740, %v4999, 0
  %v5010 = vsel %vm3740, %v5000, 0
  %v5013 = vsel %vm3740, %v5001, 0
  %5015 = vmatprep.subr.mxu0 0.0
  %5016 = vmatpush1.msra.mxu0 %v3725
  %5017 = vmatprep.subr.mxu0 0.0
  %5018 = vmatpush1.msra.mxu0 %v3726
  %5019 = vmatprep.subr.mxu0 0.0
  %5020 = vmatpush1.msra.mxu0 %v3727
  %5021 = vmatprep.subr.mxu0 0.0
  %5022 = vmatpush1.msra.mxu0 0.0
  %5023 = vmatprep.subr.mxu0 0.0
  %5024 = vmatpush1.msra.mxu0 0.0
  %5025 = vmatprep.subr.mxu0 0.0
  %5026 = vmatpush1.msra.mxu0 0.0
  %5027 = vmatprep.subr.mxu0 0.0
  %5028 = vmatpush1.msra.mxu0 0.0
  %5029 = vmatprep.subr.mxu0 0.0
  %5030 = vmatpush1.msra.mxu0 0.0
  %5031 = vmatprep.subr.mxu0 0.0
  %5032 = vmatpush1.msra.mxu0 0.0
  %5033 = vmatprep.subr.mxu0 0.0
  %5034 = vmatpush1.msra.mxu0 0.0
  %5035 = vmatprep.subr.mxu0 0.0
  %5036 = vmatpush1.msra.mxu0 0.0
  %5037 = vmatprep.subr.mxu0 0.0
  %5038 = vmatpush1.msra.mxu0 0.0
  %5039 = vmatprep.subr.mxu0 0.0
  %5040 = vmatpush1.msra.mxu0 0.0
  %5041 = vmatprep.subr.mxu0 0.0
  %5042 = vmatpush1.msra.mxu0 0.0
  %5043 = vmatprep.subr.mxu0 0.0
  %5044 = vmatpush1.msra.mxu0 0.0
  %5045 = vmatprep.subr.mxu0 0.0
  %5046 = vmatpush1.msra.mxu0 0.0
  %5047 = vmatprep.subr.mxu0 0.0
  %5048 = vmatpush1.msra.mxu0 0.0
  %5049 = vmatprep.subr.mxu0 0.0
  %5050 = vmatpush1.msra.mxu0 0.0
  %5051 = vmatprep.subr.mxu0 0.0
  %5052 = vmatpush1.msra.mxu0 0.0
  %5053 = vmatprep.subr.mxu0 0.0
  %5054 = vmatpush1.msra.mxu0 0.0
  %5055 = vmatprep.subr.mxu0 0.0
  %5056 = vmatpush1.msra.mxu0 0.0
  %5057 = vmatprep.subr.mxu0 0.0
  %5058 = vmatpush1.msra.mxu0 0.0
  %5059 = vmatprep.subr.mxu0 0.0
  %5060 = vmatpush1.msra.mxu0 0.0
  %5061 = vmatprep.subr.mxu0 0.0
  %5062 = vmatpush1.msra.mxu0 0.0
  %5063 = vmatprep.subr.mxu0 0.0
  %5064 = vmatpush1.msra.mxu0 0.0
  %5065 = vmatprep.subr.mxu0 0.0
  %5066 = vmatpush1.msra.mxu0 0.0
  %5067 = vmatprep.subr.mxu0 0.0
  %5068 = vmatpush1.msra.mxu0 0.0
  %5069 = vmatprep.subr.mxu0 0.0
  %5070 = vmatpush1.msra.mxu0 0.0
  %5071 = vmatprep.subr.mxu0 0.0
  %5072 = vmatpush1.msra.mxu0 0.0
  %5073 = vmatprep.subr.mxu0 0.0
  %5074 = vmatpush1.msra.mxu0 0.0
  %5075 = vmatprep.subr.mxu0 0.0
  %5076 = vmatpush1.msra.mxu0 0.0
  %5077 = vmatprep.subr.mxu0 0.0
  %5078 = vmatpush1.msra.mxu0 0.0
  %5079 = vmatprep.mubr.f32.mxu0 0.0
  %5080 = vmatmul.mubr.f32.gmra.mrb[0].mxu0 %v5007
  %v5081 = vpop.f32.mrb[0].mxu0
  %v5082 = vadd.f32 %v5005, %v5081
  %v5083 = vpop.f32.mrb[0].mxu0
  %5084 = vmatprep.mubr.f32.mxu0 0.0
  %5085 = vmatmul.mubr.f32.gmra.mrb[0].mxu0 %v5010
  %v5086 = vpop.f32.mrb[0].mxu0
  %v5087 = vadd.f32 %v5005, %v5086
  %v5088 = vpop.f32.mrb[0].mxu0
  %5089 = vmatprep.mubr.f32.mxu0 0.0
  %5090 = vmatmul.mubr.f32.gmra.mrb[0].mxu0 %v5013
  %v5091 = vpop.f32.mrb[0].mxu0
  %v5092 = vadd.f32 %v5005, %v5091
  %v5093 = vpop.f32.mrb[0].mxu0
  %5094 = vdwg.mxu0
  %v5095 = vmul.f32 %v5082, 0.5
  %v5096 = vmul.f32 %v5087, 0.5
  %v5097 = vmul.f32 %v5092, 0.5
  %v5098 = vmul.f32 %v5082, 0.70710677
  %v5099 = vmul.f32 %v5087, 0.70710677
  %v5100 = vmul.f32 %v5092, 0.70710677
  %v5101 = vand.u32 2147483647, %v5098
  %v5102 = vand.u32 2147483647, %v5099
  %v5103 = vand.u32 2147483647, %v5100
  %v5104 = vmul.f32 %v5101, 0.3275911
  %v5105 = vmul.f32 %v5102, 0.3275911
  %v5106 = vmul.f32 %v5103, 0.3275911
  %v5107 = vadd.f32 %v5104, 1.0
  %v5108 = vadd.f32 %v5105, 1.0
  %v5109 = vadd.f32 %v5106, 1.0
  %v5110 = vrcp.pop %v5107
  %v5111 = vmul.f32 1.0, %v5110
  %v5112 = vrcp.pop %v5108
  %v5113 = vmul.f32 1.0, %v5112
  %v5114 = vrcp.pop %v5109
  %v5115 = vmul.f32 1.0, %v5114
  %v5116 = vmul.f32 %v5111, 1.0614054
  %v5117 = vmul.f32 %v5113, 1.0614054
  %v5118 = vmul.f32 %v5115, 1.0614054
  %v5119 = vsub.f32 %v5116, 1.4531521
  %v5120 = vsub.f32 %v5117, 1.4531521
  %v5121 = vsub.f32 %v5118, 1.4531521
  %v5122 = vmul.f32 %v5119, %v5111
  %v5123 = vmul.f32 %v5120, %v5113
  %v5124 = vmul.f32 %v5121, %v5115
  %v5125 = vadd.f32 %v5122, 1.4214138
  %v5126 = vadd.f32 %v5123, 1.4214138
  %v5127 = vadd.f32 %v5124, 1.4214138
  %v5128 = vmul.f32 %v5125, %v5111
  %v5129 = vmul.f32 %v5126, %v5113
  %v5130 = vmul.f32 %v5127, %v5115
  %v5131 = vsub.f32 %v5128, 0.28449672
  %v5132 = vsub.f32 %v5129, 0.28449672
  %v5133 = vsub.f32 %v5130, 0.28449672
  %v5134 = vmul.f32 %v5131, %v5111
  %v5135 = vmul.f32 %v5132, %v5113
  %v5136 = vmul.f32 %v5133, %v5115
  %v5137 = vadd.f32 %v5134, 0.2548296
  %v5138 = vadd.f32 %v5135, 0.2548296
  %v5139 = vadd.f32 %v5136, 0.2548296
  %v5140 = vmul.f32 %v5137, %v5111
  %v5141 = vmul.f32 %v5138, %v5113
  %v5142 = vmul.f32 %v5139, %v5115
  %v5143 = vmul.f32 %v5101, %v5101
  %v5144 = vmul.f32 %v5102, %v5102
  %v5145 = vmul.f32 %v5103, %v5103
  %v5146 = vsub.f32 0.0, %v5143
  %v5147 = vsub.f32 0.0, %v5144
  %v5148 = vsub.f32 0.0, %v5145
  %v5149 = vmul.f32 %v5146, 1.442695
  %v5150 = vpow.pop %v5149
  %v5151 = vmul.f32 %v5147, 1.442695
  %v5152 = vpow.pop %v5151
  %v5153 = vmul.f32 %v5148, 1.442695
  %v5154 = vpow.pop %v5153
  %v5155 = vmul.f32 %v5140, %v5150
  %v5156 = vmul.f32 %v5141, %v5152
  %v5157 = vmul.f32 %v5142, %v5154
  %v5158 = vsub.f32 1.0, %v5155
  %v5159 = vsub.f32 1.0, %v5156
  %v5160 = vsub.f32 1.0, %v5157
  %vm5161 = vcmp.lt.f32.partialorder %v5098, 0.0
  %vm5162 = vcmp.lt.f32.partialorder %v5099, 0.0
  %vm5163 = vcmp.lt.f32.partialorder %v5100, 0.0
  %v5164 = vsub.f32 0.0, %v5158
  %v5165 = vsub.f32 0.0, %v5159
  %v5166 = vsub.f32 0.0, %v5160
  %v5167 = vsel %vm5161, %v5164, %v5158
  %v5168 = vsel %vm5162, %v5165, %v5159
  %v5169 = vsel %vm5163, %v5166, %v5160
  %v5170 = vadd.f32 %v5167, 1.0
  %v5171 = vadd.f32 %v5168, 1.0
  %v5172 = vadd.f32 %v5169, 1.0
  %v5173 = vmul.f32 %v5095, %v5170
  %v5174 = vmul.f32 %v5096, %v5171
  %v5175 = vmul.f32 %v5097, %v5172
  %v5176 = vlaneseq
  %v5177 = vshrl.u32 %v5176, 7
  %v5178 = vsub.s32 5, %v5177
  %v5179 = vrot.slane %v3717, %v5178
  %vm5180 = vcmask 785408
  %v5182 = vsel %vm5180, %v5173, 0
  %v5185 = vsel %vm5180, %v5174, 0
  %v5188 = vsel %vm5180, %v5175, 0
  %5190 = vmatprep.subr.mxu0 0.0
  %5191 = vmatpush1.msra.mxu0 %v3728
  %5192 = vmatprep.subr.mxu0 0.0
  %5193 = vmatpush1.msra.mxu0 %v3729
  %5194 = vmatprep.subr.mxu0 0.0
  %5195 = vmatpush1.msra.mxu0 %v3730
  %5196 = vmatprep.subr.mxu0 0.0
  %5197 = vmatpush1.msra.mxu0 %v3731
  %5198 = vmatprep.subr.mxu0 0.0
  %5199 = vmatpush1.msra.mxu0 %v3732
  %5200 = vmatprep.subr.mxu0 0.0
  %5201 = vmatpush1.msra.mxu0 %v3733
  %5202 = vmatprep.subr.mxu0 0.0
  %5203 = vmatpush1.msra.mxu0 %v3734
  %5204 = vmatprep.subr.mxu0 0.0
  %5205 = vmatpush1.msra.mxu0 %v3735
  %5206 = vmatprep.subr.mxu0 0.0
  %5207 = vmatpush1.msra.mxu0 %v3736
  %5208 = vmatprep.subr.mxu0 0.0
  %5209 = vmatpush1.msra.mxu0 %v3737
  %5210 = vmatprep.subr.mxu0 0.0
  %5211 = vmatpush1.msra.mxu0 %v3738
  %5212 = vmatprep.subr.mxu0 0.0
  %5213 = vmatpush1.msra.mxu0 %v3739
  %5214 = vmatprep.subr.mxu0 0.0
  %5215 = vmatpush1.msra.mxu0 0.0
  %5216 = vmatprep.subr.mxu0 0.0
  %5217 = vmatpush1.msra.mxu0 0.0
  %5218 = vmatprep.subr.mxu0 0.0
  %5219 = vmatpush1.msra.mxu0 0.0
  %5220 = vmatprep.subr.mxu0 0.0
  %5221 = vmatpush1.msra.mxu0 0.0
  %5222 = vmatprep.subr.mxu0 0.0
  %5223 = vmatpush1.msra.mxu0 0.0
  %5224 = vmatprep.subr.mxu0 0.0
  %5225 = vmatpush1.msra.mxu0 0.0
  %5226 = vmatprep.subr.mxu0 0.0
  %5227 = vmatpush1.msra.mxu0 0.0
  %5228 = vmatprep.subr.mxu0 0.0
  %5229 = vmatpush1.msra.mxu0 0.0
  %5230 = vmatprep.subr.mxu0 0.0
  %5231 = vmatpush1.msra.mxu0 0.0
  %5232 = vmatprep.subr.mxu0 0.0
  %5233 = vmatpush1.msra.mxu0 0.0
  %5234 = vmatprep.subr.mxu0 0.0
  %5235 = vmatpush1.msra.mxu0 0.0
  %5236 = vmatprep.subr.mxu0 0.0
  %5237 = vmatpush1.msra.mxu0 0.0
  %5238 = vmatprep.subr.mxu0 0.0
  %5239 = vmatpush1.msra.mxu0 0.0
  %5240 = vmatprep.subr.mxu0 0.0
  %5241 = vmatpush1.msra.mxu0 0.0
  %5242 = vmatprep.subr.mxu0 0.0
  %5243 = vmatpush1.msra.mxu0 0.0
  %5244 = vmatprep.subr.mxu0 0.0
  %5245 = vmatpush1.msra.mxu0 0.0
  %5246 = vmatprep.subr.mxu0 0.0
  %5247 = vmatpush1.msra.mxu0 0.0
  %5248 = vmatprep.subr.mxu0 0.0
  %5249 = vmatpush1.msra.mxu0 0.0
  %5250 = vmatprep.subr.mxu0 0.0
  %5251 = vmatpush1.msra.mxu0 0.0
  %5252 = vmatprep.subr.mxu0 0.0
  %5253 = vmatpush1.msra.mxu0 0.0
  %5254 = vmatprep.mubr.f32.mxu0 0.0
  %5255 = vmatmul.mubr.f32.gmra.mrb[0].mxu0 %v5182
  %v5256 = vpop.f32.mrb[0].mxu0
  %v5257 = vadd.f32 %v5179, %v5256
  %v5258 = vpop.f32.mrb[0].mxu0
  %5259 = vmatprep.mubr.f32.mxu0 0.0
  %5260 = vmatmul.mubr.f32.gmra.mrb[0].mxu0 %v5185
  %v5261 = vpop.f32.mrb[0].mxu0
  %v5262 = vadd.f32 %v5179, %v5261
  %v5263 = vpop.f32.mrb[0].mxu0
  %5264 = vmatprep.mubr.f32.mxu0 0.0
  %5265 = vmatmul.mubr.f32.gmra.mrb[0].mxu0 %v5188
  %v5266 = vpop.f32.mrb[0].mxu0
  %v5267 = vadd.f32 %v5179, %v5266
  %v5268 = vpop.f32.mrb[0].mxu0
  %5269 = vdwg.mxu0
  %v5270 = vadd.f32 %v4946, %v5257
  %v5271 = vadd.f32 %v4947, %v5262
  %v5272 = vadd.f32 %v4948, %v5267
  %s5273 = scalar_lea.vmem %s16, 8
  %v5274 = vld [vmem:[%s5273] sm:$0xff]
  %s5275 = scalar_lea.vmem %s12, 24
  %v5276 = vld [vmem:[%s5275] sm:$0xff]
  %v5277 = vld [vmem:[%s5275 + $0x8] sm:$0xff]
  %v5278 = vld [vmem:[%s5275 + $0x10] sm:$0xff]
  %s5279 = scalar_lea.vmem %s13, 32
  %v5280 = vld [vmem:[%s5279] sm:$0xff]
  %v5281 = vld [vmem:[%s5279 + $0x8] sm:$0xff]
  %v5282 = vld [vmem:[%s5279 + $0x10] sm:$0xff]
  %v5283 = vld [vmem:[%s5279 + $0x18] sm:$0xff]
  %s5284 = scalar_lea.vmem %s14, 24
  %v5285 = vld [vmem:[%s5284] sm:$0xff]
  %v5286 = vld [vmem:[%s5284 + $0x8] sm:$0xff]
  %v5287 = vld [vmem:[%s5284 + $0x10] sm:$0xff]
  %s5288 = scalar_lea.vmem %s15, 96
  %v5289 = vld [vmem:[%s5288] sm:$0xff]
  %v5290 = vld [vmem:[%s5288 + $0x8] sm:$0xff]
  %v5291 = vld [vmem:[%s5288 + $0x10] sm:$0xff]
  %v5292 = vld [vmem:[%s5288 + $0x18] sm:$0xff]
  %v5293 = vld [vmem:[%s5288 + $0x20] sm:$0xff]
  %v5294 = vld [vmem:[%s5288 + $0x28] sm:$0xff]
  %v5295 = vld [vmem:[%s5288 + $0x30] sm:$0xff]
  %v5296 = vld [vmem:[%s5288 + $0x38] sm:$0xff]
  %v5297 = vld [vmem:[%s5288 + $0x40] sm:$0xff]
  %v5298 = vld [vmem:[%s5288 + $0x48] sm:$0xff]
  %v5299 = vld [vmem:[%s5288 + $0x50] sm:$0xff]
  %v5300 = vld [vmem:[%s5288 + $0x58] sm:$0xff]
  %v5301 = vsel %vm3740, %v5270, 0.0
  %5302 = vadd.xlane.f32.xlu0 %v5301
  %v5303 = vpop.xlane.xlu0 %5302
  %v5304 = vsel %vm3740, %v5271, 0.0
  %5305 = vadd.xlane.f32.xlu0 %v5304
  %v5306 = vpop.xlane.xlu0 %5305
  %v5307 = vsel %vm3747, %v5272, 0.0
  %5308 = vadd.xlane.f32.xlu0 %v5307
  %v5309 = vpop.xlane.xlu0 %5308
  %v5310 = vmul.f32 %v5303, %v3751
  %v5311 = vmul.f32 %v5306, %v3751
  %v5312 = vmul.f32 %v5309, %v3751
  %v5313 = vsub.f32 %v5270, %v5310
  %v5314 = vsub.f32 %v5271, %v5311
  %v5315 = vsub.f32 %v5272, %v5312
  %v5316 = vmul.f32 %v5313, %v5313
  %v5317 = vmul.f32 %v5314, %v5314
  %v5318 = vmul.f32 %v5315, %v5315
  %v5319 = vsel %vm3740, %v5316, 0.0
  %5320 = vadd.xlane.f32.xlu0 %v5319
  %v5321 = vpop.xlane.xlu0 %5320
  %v5322 = vsel %vm3740, %v5317, 0.0
  %5323 = vadd.xlane.f32.xlu0 %v5322
  %v5324 = vpop.xlane.xlu0 %5323
  %v5325 = vsel %vm3747, %v5318, 0.0
  %5326 = vadd.xlane.f32.xlu0 %v5325
  %v5327 = vpop.xlane.xlu0 %5326
  %v5328 = vmul.f32 %v5321, %v3751
  %v5329 = vmul.f32 %v5324, %v3751
  %v5330 = vmul.f32 %v5327, %v3751
  %v5331 = vadd.f32 %v5328, 1e-06
  %v5332 = vadd.f32 %v5329, 1e-06
  %v5333 = vadd.f32 %v5330, 1e-06
  %v5334 = vrsqrt.pop %v5331
  %v5335 = vrsqrt.pop %v5332
  %v5336 = vrsqrt.pop %v5333
  %v5337 = vmul.f32 %v5313, %v5334
  %v5338 = vmul.f32 %v5314, %v5335
  %v5339 = vmul.f32 %v5315, %v5336
  %v5340 = vlaneseq
  %v5341 = vshrl.u32 %v5340, 7
  %v5342 = vsub.s32 0, %v5341
  %v5343 = vrot.slane %v5274, %v5342
  %v5344 = vmul.f32 %v5337, %v5343
  %v5345 = vmul.f32 %v5338, %v5343
  %v5346 = vmul.f32 %v5339, %v5343
  %v5347 = vlaneseq
  %v5348 = vshrl.u32 %v5347, 7
  %v5349 = vsub.s32 1, %v5348
  %v5350 = vrot.slane %v5274, %v5349
  %v5351 = vadd.f32 %v5344, %v5350
  %v5352 = vadd.f32 %v5345, %v5350
  %v5353 = vadd.f32 %v5346, %v5350
  %v5354 = vlaneseq
  %v5355 = vshrl.u32 %v5354, 7
  %v5356 = vsub.s32 6, %v5355
  %v5357 = vrot.slane %v5274, %v5356
  %v5359 = vsel %vm3740, %v5351, 0
  %v5362 = vsel %vm3740, %v5352, 0
  %v5365 = vsel %vm3740, %v5353, 0
  %5367 = vmatprep.subr.mxu0 0.0
  %5368 = vmatpush1.msra.mxu0 %v5276
  %5369 = vmatprep.subr.mxu0 0.0
  %5370 = vmatpush1.msra.mxu0 %v5277
  %5371 = vmatprep.subr.mxu0 0.0
  %5372 = vmatpush1.msra.mxu0 %v5278
  %5373 = vmatprep.subr.mxu0 0.0
  %5374 = vmatpush1.msra.mxu0 0.0
  %5375 = vmatprep.subr.mxu0 0.0
  %5376 = vmatpush1.msra.mxu0 0.0
  %5377 = vmatprep.subr.mxu0 0.0
  %5378 = vmatpush1.msra.mxu0 0.0
  %5379 = vmatprep.subr.mxu0 0.0
  %5380 = vmatpush1.msra.mxu0 0.0
  %5381 = vmatprep.subr.mxu0 0.0
  %5382 = vmatpush1.msra.mxu0 0.0
  %5383 = vmatprep.subr.mxu0 0.0
  %5384 = vmatpush1.msra.mxu0 0.0
  %5385 = vmatprep.subr.mxu0 0.0
  %5386 = vmatpush1.msra.mxu0 0.0
  %5387 = vmatprep.subr.mxu0 0.0
  %5388 = vmatpush1.msra.mxu0 0.0
  %5389 = vmatprep.subr.mxu0 0.0
  %5390 = vmatpush1.msra.mxu0 0.0
  %5391 = vmatprep.subr.mxu0 0.0
  %5392 = vmatpush1.msra.mxu0 0.0
  %5393 = vmatprep.subr.mxu0 0.0
  %5394 = vmatpush1.msra.mxu0 0.0
  %5395 = vmatprep.subr.mxu0 0.0
  %5396 = vmatpush1.msra.mxu0 0.0
  %5397 = vmatprep.subr.mxu0 0.0
  %5398 = vmatpush1.msra.mxu0 0.0
  %5399 = vmatprep.subr.mxu0 0.0
  %5400 = vmatpush1.msra.mxu0 0.0
  %5401 = vmatprep.subr.mxu0 0.0
  %5402 = vmatpush1.msra.mxu0 0.0
  %5403 = vmatprep.subr.mxu0 0.0
  %5404 = vmatpush1.msra.mxu0 0.0
  %5405 = vmatprep.subr.mxu0 0.0
  %5406 = vmatpush1.msra.mxu0 0.0
  %5407 = vmatprep.subr.mxu0 0.0
  %5408 = vmatpush1.msra.mxu0 0.0
  %5409 = vmatprep.subr.mxu0 0.0
  %5410 = vmatpush1.msra.mxu0 0.0
  %5411 = vmatprep.subr.mxu0 0.0
  %5412 = vmatpush1.msra.mxu0 0.0
  %5413 = vmatprep.subr.mxu0 0.0
  %5414 = vmatpush1.msra.mxu0 0.0
  %5415 = vmatprep.subr.mxu0 0.0
  %5416 = vmatpush1.msra.mxu0 0.0
  %5417 = vmatprep.subr.mxu0 0.0
  %5418 = vmatpush1.msra.mxu0 0.0
  %5419 = vmatprep.subr.mxu0 0.0
  %5420 = vmatpush1.msra.mxu0 0.0
  %5421 = vmatprep.subr.mxu0 0.0
  %5422 = vmatpush1.msra.mxu0 0.0
  %5423 = vmatprep.subr.mxu0 0.0
  %5424 = vmatpush1.msra.mxu0 0.0
  %5425 = vmatprep.subr.mxu0 0.0
  %5426 = vmatpush1.msra.mxu0 0.0
  %5427 = vmatprep.subr.mxu0 0.0
  %5428 = vmatpush1.msra.mxu0 0.0
  %5429 = vmatprep.subr.mxu0 0.0
  %5430 = vmatpush1.msra.mxu0 0.0
  %5431 = vmatprep.mubr.f32.mxu0 0.0
  %5432 = vmatmul.mubr.f32.gmra.mrb[0].mxu0 %v5359
  %v5433 = vpop.f32.mrb[0].mxu0
  %v5434 = vadd.f32 %v5357, %v5433
  %v5435 = vpop.f32.mrb[0].mxu0
  %5436 = vmatprep.mubr.f32.mxu0 0.0
  %5437 = vmatmul.mubr.f32.gmra.mrb[0].mxu0 %v5362
  %v5438 = vpop.f32.mrb[0].mxu0
  %v5439 = vadd.f32 %v5357, %v5438
  %v5440 = vpop.f32.mrb[0].mxu0
  %5441 = vmatprep.mubr.f32.mxu0 0.0
  %5442 = vmatmul.mubr.f32.gmra.mrb[0].mxu0 %v5365
  %v5443 = vpop.f32.mrb[0].mxu0
  %v5444 = vadd.f32 %v5357, %v5443
  %v5445 = vpop.f32.mrb[0].mxu0
  %5446 = vdwg.mxu0
  %v5447 = vmul.f32 %v5434, 0.4082483
  %v5448 = vmul.f32 %v5439, 0.4082483
  %v5449 = vmul.f32 %v5444, 0.4082483
  %v5450 = vmul.f32 %v5447, %v146
  %v5451 = vmul.f32 %v5448, %v146
  %v5452 = vmul.f32 %v5449, %v146
  %5456 = vrot.lane.b32.xlu0 %v5434, 96
  %v5457 = vpop.permute.xlu0 %5456
  %5458 = vrot.lane.b32.xlu0 %v5439, 96
  %v5459 = vpop.permute.xlu0 %5458
  %5460 = vrot.lane.b32.xlu0 %v5444, 96
  %v5461 = vpop.permute.xlu0 %5460
  %v5463 = vsel %vm3904, %v5450, 0
  %v5466 = vsel %vm3904, %v5451, 0
  %v5469 = vsel %vm3904, %v5452, 0
  %v5471 = vsel %vm3904, %v5457, 0
  %v5473 = vsel %vm3904, %v5459, 0
  %v5475 = vsel %vm3904, %v5461, 0
  %5477 = vmatprep.subr.mxu0 0.0
  %5478 = vmatpush1.xpose.msra.mxu0 %v5471
  %5479 = vmatprep.subr.mxu0 0.0
  %5480 = vmatpush1.xpose.msra.mxu0 %v5473
  %5481 = vmatprep.subr.mxu0 0.0
  %5482 = vmatpush1.xpose.msra.mxu0 %v5475
  %5483 = vmatprep.subr.mxu0 0.0
  %5484 = vmatpush1.xpose.msra.mxu0 0.0
  %5485 = vmatprep.subr.mxu0 0.0
  %5486 = vmatpush1.xpose.msra.mxu0 0.0
  %5487 = vmatprep.subr.mxu0 0.0
  %5488 = vmatpush1.xpose.msra.mxu0 0.0
  %5489 = vmatprep.subr.mxu0 0.0
  %5490 = vmatpush1.xpose.msra.mxu0 0.0
  %5491 = vmatprep.subr.mxu0 0.0
  %5492 = vmatpush1.xpose.msra.mxu0 0.0
  %5493 = vmatprep.subr.mxu0 0.0
  %5494 = vmatpush1.xpose.msra.mxu0 0.0
  %5495 = vmatprep.subr.mxu0 0.0
  %5496 = vmatpush1.xpose.msra.mxu0 0.0
  %5497 = vmatprep.subr.mxu0 0.0
  %5498 = vmatpush1.xpose.msra.mxu0 0.0
  %5499 = vmatprep.subr.mxu0 0.0
  %5500 = vmatpush1.xpose.msra.mxu0 0.0
  %5501 = vmatprep.subr.mxu0 0.0
  %5502 = vmatpush1.xpose.msra.mxu0 0.0
  %5503 = vmatprep.subr.mxu0 0.0
  %5504 = vmatpush1.xpose.msra.mxu0 0.0
  %5505 = vmatprep.subr.mxu0 0.0
  %5506 = vmatpush1.xpose.msra.mxu0 0.0
  %5507 = vmatprep.subr.mxu0 0.0
  %5508 = vmatpush1.xpose.msra.mxu0 0.0
  %5509 = vmatprep.subr.mxu0 0.0
  %5510 = vmatpush1.xpose.msra.mxu0 0.0
  %5511 = vmatprep.subr.mxu0 0.0
  %5512 = vmatpush1.xpose.msra.mxu0 0.0
  %5513 = vmatprep.subr.mxu0 0.0
  %5514 = vmatpush1.xpose.msra.mxu0 0.0
  %5515 = vmatprep.subr.mxu0 0.0
  %5516 = vmatpush1.xpose.msra.mxu0 0.0
  %5517 = vmatprep.subr.mxu0 0.0
  %5518 = vmatpush1.xpose.msra.mxu0 0.0
  %5519 = vmatprep.subr.mxu0 0.0
  %5520 = vmatpush1.xpose.msra.mxu0 0.0
  %5521 = vmatprep.subr.mxu0 0.0
  %5522 = vmatpush1.xpose.msra.mxu0 0.0
  %5523 = vmatprep.subr.mxu0 0.0
  %5524 = vmatpush1.xpose.msra.mxu0 0.0
  %5525 = vmatprep.subr.mxu0 0.0
  %5526 = vmatpush1.xpose.msra.mxu0 0.0
  %5527 = vmatprep.subr.mxu0 0.0
  %5528 = vmatpush1.xpose.msra.mxu0 0.0
  %5529 = vmatprep.subr.mxu0 0.0
  %5530 = vmatpush1.xpose.msra.mxu0 0.0
  %5531 = vmatprep.subr.mxu0 0.0
  %5532 = vmatpush1.xpose.msra.mxu0 0.0
  %5533 = vmatprep.subr.mxu0 0.0
  %5534 = vmatpush1.xpose.msra.mxu0 0.0
  %5535 = vmatprep.subr.mxu0 0.0
  %5536 = vmatpush1.xpose.msra.mxu0 0.0
  %5537 = vmatprep.subr.mxu0 0.0
  %5538 = vmatpush1.xpose.msra.mxu0 0.0
  %5539 = vmatprep.subr.mxu0 0.0
  %5540 = vmatpush1.xpose.msra.mxu0 0.0
  %5541 = vmatprep.mubr.f32.mxu0 0.0
  %5542 = vmatmul.mubr.f32.gmra.mrb[0].mxu0 %v5463
  %v5543 = vpop.f32.mrb[0].mxu0
  %v5544 = vadd.f32 %v120, %v5543
  %v5545 = vpop.f32.mrb[0].mxu0
  %5546 = vmatprep.mubr.f32.mxu0 0.0
  %5547 = vmatmul.mubr.f32.gmra.mrb[0].mxu0 %v5466
  %v5548 = vpop.f32.mrb[0].mxu0
  %v5549 = vadd.f32 %v121, %v5548
  %v5550 = vpop.f32.mrb[0].mxu0
  %5551 = vmatprep.mubr.f32.mxu0 0.0
  %5552 = vmatmul.mubr.f32.gmra.mrb[0].mxu0 %v5469
  %v5553 = vpop.f32.mrb[0].mxu0
  %v5554 = vadd.f32 %v122, %v5553
  %v5555 = vpop.f32.mrb[0].mxu0
  %5556 = vdwg.mxu0
  %v5557 = vsel %vm612, %v5544, -inf
  %5558 = vmax.xlane.f32.xlu0 %v5557
  %v5559 = vpop.xlane.xlu0 %5558
  %v5560 = vsel %vm612, %v5549, -inf
  %5561 = vmax.xlane.f32.xlu0 %v5560
  %v5562 = vpop.xlane.xlu0 %5561
  %v5563 = vsel %vm619, %v5554, -inf
  %5564 = vmax.xlane.f32.xlu0 %v5563
  %v5565 = vpop.xlane.xlu0 %5564
  %v5566 = vsub.f32 %v5544, %v5559
  %v5567 = vsub.f32 %v5549, %v5562
  %v5568 = vsub.f32 %v5554, %v5565
  %v5569 = vmul.f32 %v5566, 1.442695
  %v5570 = vpow.pop %v5569
  %v5571 = vmul.f32 %v5567, 1.442695
  %v5572 = vpow.pop %v5571
  %v5573 = vmul.f32 %v5568, 1.442695
  %v5574 = vpow.pop %v5573
  %v5575 = vsel %vm612, %v5570, 0.0
  %5576 = vadd.xlane.f32.xlu0 %v5575
  %v5577 = vpop.xlane.xlu0 %5576
  %v5578 = vsel %vm612, %v5572, 0.0
  %5579 = vadd.xlane.f32.xlu0 %v5578
  %v5580 = vpop.xlane.xlu0 %5579
  %v5581 = vsel %vm619, %v5574, 0.0
  %5582 = vadd.xlane.f32.xlu0 %v5581
  %v5583 = vpop.xlane.xlu0 %5582
  %v5584 = vrcp.pop %v5577
  %v5585 = vrcp.pop %v5580
  %v5586 = vrcp.pop %v5583
  %v5587 = vmul.f32 %v5570, %v5584
  %v5588 = vmul.f32 %v5572, %v5585
  %v5589 = vmul.f32 %v5574, %v5586
  %v5590 = vmul.f32 %v5434, %v4035
  %v5591 = vmul.f32 %v5439, %v4035
  %v5592 = vmul.f32 %v5444, %v4035
  %v5593 = vmul.f32 %v5447, %v150
  %v5594 = vmul.f32 %v5448, %v150
  %v5595 = vmul.f32 %v5449, %v150
  %v5597 = vsel %vm3904, %v5593, 0
  %v5600 = vsel %vm3904, %v5594, 0
  %v5603 = vsel %vm3904, %v5595, 0
  %5605 = vmatprep.subr.mxu0 0.0
  %5606 = vmatpush1.xpose.msra.mxu0 %v5471
  %5607 = vmatprep.subr.mxu0 0.0
  %5608 = vmatpush1.xpose.msra.mxu0 %v5473
  %5609 = vmatprep.subr.mxu0 0.0
  %5610 = vmatpush1.xpose.msra.mxu0 %v5475
  %5611 = vmatprep.subr.mxu0 0.0
  %5612 = vmatpush1.xpose.msra.mxu0 0.0
  %5613 = vmatprep.subr.mxu0 0.0
  %5614 = vmatpush1.xpose.msra.mxu0 0.0
  %5615 = vmatprep.subr.mxu0 0.0
  %5616 = vmatpush1.xpose.msra.mxu0 0.0
  %5617 = vmatprep.subr.mxu0 0.0
  %5618 = vmatpush1.xpose.msra.mxu0 0.0
  %5619 = vmatprep.subr.mxu0 0.0
  %5620 = vmatpush1.xpose.msra.mxu0 0.0
  %5621 = vmatprep.subr.mxu0 0.0
  %5622 = vmatpush1.xpose.msra.mxu0 0.0
  %5623 = vmatprep.subr.mxu0 0.0
  %5624 = vmatpush1.xpose.msra.mxu0 0.0
  %5625 = vmatprep.subr.mxu0 0.0
  %5626 = vmatpush1.xpose.msra.mxu0 0.0
  %5627 = vmatprep.subr.mxu0 0.0
  %5628 = vmatpush1.xpose.msra.mxu0 0.0
  %5629 = vmatprep.subr.mxu0 0.0
  %5630 = vmatpush1.xpose.msra.mxu0 0.0
  %5631 = vmatprep.subr.mxu0 0.0
  %5632 = vmatpush1.xpose.msra.mxu0 0.0
  %5633 = vmatprep.subr.mxu0 0.0
  %5634 = vmatpush1.xpose.msra.mxu0 0.0
  %5635 = vmatprep.subr.mxu0 0.0
  %5636 = vmatpush1.xpose.msra.mxu0 0.0
  %5637 = vmatprep.subr.mxu0 0.0
  %5638 = vmatpush1.xpose.msra.mxu0 0.0
  %5639 = vmatprep.subr.mxu0 0.0
  %5640 = vmatpush1.xpose.msra.mxu0 0.0
  %5641 = vmatprep.subr.mxu0 0.0
  %5642 = vmatpush1.xpose.msra.mxu0 0.0
  %5643 = vmatprep.subr.mxu0 0.0
  %5644 = vmatpush1.xpose.msra.mxu0 0.0
  %5645 = vmatprep.subr.mxu0 0.0
  %5646 = vmatpush1.xpose.msra.mxu0 0.0
  %5647 = vmatprep.subr.mxu0 0.0
  %5648 = vmatpush1.xpose.msra.mxu0 0.0
  %5649 = vmatprep.subr.mxu0 0.0
  %5650 = vmatpush1.xpose.msra.mxu0 0.0
  %5651 = vmatprep.subr.mxu0 0.0
  %5652 = vmatpush1.xpose.msra.mxu0 0.0
  %5653 = vmatprep.subr.mxu0 0.0
  %5654 = vmatpush1.xpose.msra.mxu0 0.0
  %5655 = vmatprep.subr.mxu0 0.0
  %5656 = vmatpush1.xpose.msra.mxu0 0.0
  %5657 = vmatprep.subr.mxu0 0.0
  %5658 = vmatpush1.xpose.msra.mxu0 0.0
  %5659 = vmatprep.subr.mxu0 0.0
  %5660 = vmatpush1.xpose.msra.mxu0 0.0
  %5661 = vmatprep.subr.mxu0 0.0
  %5662 = vmatpush1.xpose.msra.mxu0 0.0
  %5663 = vmatprep.subr.mxu0 0.0
  %5664 = vmatpush1.xpose.msra.mxu0 0.0
  %5665 = vmatprep.subr.mxu0 0.0
  %5666 = vmatpush1.xpose.msra.mxu0 0.0
  %5667 = vmatprep.subr.mxu0 0.0
  %5668 = vmatpush1.xpose.msra.mxu0 0.0
  %5669 = vmatprep.mubr.f32.mxu0 0.0
  %5670 = vmatmul.mubr.f32.gmra.mrb[0].mxu0 %v5597
  %v5671 = vpop.f32.mrb[0].mxu0
  %v5672 = vadd.f32 %v120, %v5671
  %v5673 = vpop.f32.mrb[0].mxu0
  %5674 = vmatprep.mubr.f32.mxu0 0.0
  %5675 = vmatmul.mubr.f32.gmra.mrb[0].mxu0 %v5600
  %v5676 = vpop.f32.mrb[0].mxu0
  %v5677 = vadd.f32 %v121, %v5676
  %v5678 = vpop.f32.mrb[0].mxu0
  %5679 = vmatprep.mubr.f32.mxu0 0.0
  %5680 = vmatmul.mubr.f32.gmra.mrb[0].mxu0 %v5603
  %v5681 = vpop.f32.mrb[0].mxu0
  %v5682 = vadd.f32 %v122, %v5681
  %v5683 = vpop.f32.mrb[0].mxu0
  %5684 = vdwg.mxu0
  %v5685 = vsel %vm612, %v5672, -inf
  %5686 = vmax.xlane.f32.xlu0 %v5685
  %v5687 = vpop.xlane.xlu0 %5686
  %v5688 = vsel %vm612, %v5677, -inf
  %5689 = vmax.xlane.f32.xlu0 %v5688
  %v5690 = vpop.xlane.xlu0 %5689
  %v5691 = vsel %vm619, %v5682, -inf
  %5692 = vmax.xlane.f32.xlu0 %v5691
  %v5693 = vpop.xlane.xlu0 %5692
  %v5694 = vsub.f32 %v5672, %v5687
  %v5695 = vsub.f32 %v5677, %v5690
  %v5696 = vsub.f32 %v5682, %v5693
  %v5697 = vmul.f32 %v5694, 1.442695
  %v5698 = vpow.pop %v5697
  %v5699 = vmul.f32 %v5695, 1.442695
  %v5700 = vpow.pop %v5699
  %v5701 = vmul.f32 %v5696, 1.442695
  %v5702 = vpow.pop %v5701
  %v5703 = vsel %vm612, %v5698, 0.0
  %5704 = vadd.xlane.f32.xlu0 %v5703
  %v5705 = vpop.xlane.xlu0 %5704
  %v5706 = vsel %vm612, %v5700, 0.0
  %5707 = vadd.xlane.f32.xlu0 %v5706
  %v5708 = vpop.xlane.xlu0 %5707
  %v5709 = vsel %vm619, %v5702, 0.0
  %5710 = vadd.xlane.f32.xlu0 %v5709
  %v5711 = vpop.xlane.xlu0 %5710
  %v5712 = vrcp.pop %v5705
  %v5713 = vrcp.pop %v5708
  %v5714 = vrcp.pop %v5711
  %v5715 = vmul.f32 %v5698, %v5712
  %v5716 = vmul.f32 %v5700, %v5713
  %v5717 = vmul.f32 %v5702, %v5714
  %v5718 = vmul.f32 %v5434, %v4167
  %v5719 = vmul.f32 %v5439, %v4167
  %v5720 = vmul.f32 %v5444, %v4167
  %5724 = vrot.lane.b32.xlu0 %v5718, 64
  %v5725 = vpop.permute.xlu0 %5724
  %5726 = vrot.lane.b32.xlu0 %v5719, 64
  %v5727 = vpop.permute.xlu0 %5726
  %5728 = vrot.lane.b32.xlu0 %v5720, 64
  %v5729 = vpop.permute.xlu0 %5728
  %v5733 = vsel %vm612, %v5715, 0
  %v5736 = vsel %vm612, %v5716, 0
  %v5739 = vsel %vm612, %v5717, 0
  %v5741 = vsel %vm787, %v5729, 0
  %5743 = vmatprep.subr.mxu0 0.0
  %5744 = vmatpush1.msra.mxu0 %v5725
  %5745 = vmatprep.subr.mxu0 0.0
  %5746 = vmatpush1.msra.mxu0 %v5727
  %5747 = vmatprep.subr.mxu0 0.0
  %5748 = vmatpush1.msra.mxu0 %v5741
  %5749 = vmatprep.subr.mxu0 0.0
  %5750 = vmatpush1.msra.mxu0 0.0
  %5751 = vmatprep.subr.mxu0 0.0
  %5752 = vmatpush1.msra.mxu0 0.0
  %5753 = vmatprep.subr.mxu0 0.0
  %5754 = vmatpush1.msra.mxu0 0.0
  %5755 = vmatprep.subr.mxu0 0.0
  %5756 = vmatpush1.msra.mxu0 0.0
  %5757 = vmatprep.subr.mxu0 0.0
  %5758 = vmatpush1.msra.mxu0 0.0
  %5759 = vmatprep.subr.mxu0 0.0
  %5760 = vmatpush1.msra.mxu0 0.0
  %5761 = vmatprep.subr.mxu0 0.0
  %5762 = vmatpush1.msra.mxu0 0.0
  %5763 = vmatprep.subr.mxu0 0.0
  %5764 = vmatpush1.msra.mxu0 0.0
  %5765 = vmatprep.subr.mxu0 0.0
  %5766 = vmatpush1.msra.mxu0 0.0
  %5767 = vmatprep.subr.mxu0 0.0
  %5768 = vmatpush1.msra.mxu0 0.0
  %5769 = vmatprep.subr.mxu0 0.0
  %5770 = vmatpush1.msra.mxu0 0.0
  %5771 = vmatprep.subr.mxu0 0.0
  %5772 = vmatpush1.msra.mxu0 0.0
  %5773 = vmatprep.subr.mxu0 0.0
  %5774 = vmatpush1.msra.mxu0 0.0
  %5775 = vmatprep.subr.mxu0 0.0
  %5776 = vmatpush1.msra.mxu0 0.0
  %5777 = vmatprep.subr.mxu0 0.0
  %5778 = vmatpush1.msra.mxu0 0.0
  %5779 = vmatprep.subr.mxu0 0.0
  %5780 = vmatpush1.msra.mxu0 0.0
  %5781 = vmatprep.subr.mxu0 0.0
  %5782 = vmatpush1.msra.mxu0 0.0
  %5783 = vmatprep.subr.mxu0 0.0
  %5784 = vmatpush1.msra.mxu0 0.0
  %5785 = vmatprep.subr.mxu0 0.0
  %5786 = vmatpush1.msra.mxu0 0.0
  %5787 = vmatprep.subr.mxu0 0.0
  %5788 = vmatpush1.msra.mxu0 0.0
  %5789 = vmatprep.subr.mxu0 0.0
  %5790 = vmatpush1.msra.mxu0 0.0
  %5791 = vmatprep.subr.mxu0 0.0
  %5792 = vmatpush1.msra.mxu0 0.0
  %5793 = vmatprep.subr.mxu0 0.0
  %5794 = vmatpush1.msra.mxu0 0.0
  %5795 = vmatprep.subr.mxu0 0.0
  %5796 = vmatpush1.msra.mxu0 0.0
  %5797 = vmatprep.subr.mxu0 0.0
  %5798 = vmatpush1.msra.mxu0 0.0
  %5799 = vmatprep.subr.mxu0 0.0
  %5800 = vmatpush1.msra.mxu0 0.0
  %5801 = vmatprep.subr.mxu0 0.0
  %5802 = vmatpush1.msra.mxu0 0.0
  %5803 = vmatprep.subr.mxu0 0.0
  %5804 = vmatpush1.msra.mxu0 0.0
  %5805 = vmatprep.subr.mxu0 0.0
  %5806 = vmatpush1.msra.mxu0 0.0
  %5807 = vmatprep.mubr.f32.mxu0 0.0
  %5808 = vmatmul.mubr.f32.gmra.mrb[0].mxu0 %v5733
  %v5809 = vpop.f32.mrb[0].mxu0
  %v5810 = vadd.f32 0.0, %v5809
  %v5811 = vpop.f32.mrb[0].mxu0
  %5812 = vmatprep.mubr.f32.mxu0 0.0
  %5813 = vmatmul.mubr.f32.gmra.mrb[0].mxu0 %v5736
  %v5814 = vpop.f32.mrb[0].mxu0
  %v5815 = vadd.f32 0.0, %v5814
  %v5816 = vpop.f32.mrb[0].mxu0
  %5817 = vmatprep.mubr.f32.mxu0 0.0
  %5818 = vmatmul.mubr.f32.gmra.mrb[0].mxu0 %v5739
  %v5819 = vpop.f32.mrb[0].mxu0
  %v5820 = vadd.f32 0.0, %v5819
  %v5821 = vpop.f32.mrb[0].mxu0
  %5822 = vdwg.mxu0
  %5826 = vrot.lane.b32.xlu0 %v5590, 64
  %v5827 = vpop.permute.xlu0 %5826
  %5828 = vrot.lane.b32.xlu0 %v5591, 64
  %v5829 = vpop.permute.xlu0 %5828
  %5830 = vrot.lane.b32.xlu0 %v5592, 64
  %v5831 = vpop.permute.xlu0 %5830
  %v5835 = vsel %vm612, %v5587, 0
  %v5838 = vsel %vm612, %v5588, 0
  %v5841 = vsel %vm612, %v5589, 0
  %v5843 = vsel %vm787, %v5831, 0
  %5845 = vmatprep.subr.mxu0 0.0
  %5846 = vmatpush1.msra.mxu0 %v5827
  %5847 = vmatprep.subr.mxu0 0.0
  %5848 = vmatpush1.msra.mxu0 %v5829
  %5849 = vmatprep.subr.mxu0 0.0
  %5850 = vmatpush1.msra.mxu0 %v5843
  %5851 = vmatprep.subr.mxu0 0.0
  %5852 = vmatpush1.msra.mxu0 0.0
  %5853 = vmatprep.subr.mxu0 0.0
  %5854 = vmatpush1.msra.mxu0 0.0
  %5855 = vmatprep.subr.mxu0 0.0
  %5856 = vmatpush1.msra.mxu0 0.0
  %5857 = vmatprep.subr.mxu0 0.0
  %5858 = vmatpush1.msra.mxu0 0.0
  %5859 = vmatprep.subr.mxu0 0.0
  %5860 = vmatpush1.msra.mxu0 0.0
  %5861 = vmatprep.subr.mxu0 0.0
  %5862 = vmatpush1.msra.mxu0 0.0
  %5863 = vmatprep.subr.mxu0 0.0
  %5864 = vmatpush1.msra.mxu0 0.0
  %5865 = vmatprep.subr.mxu0 0.0
  %5866 = vmatpush1.msra.mxu0 0.0
  %5867 = vmatprep.subr.mxu0 0.0
  %5868 = vmatpush1.msra.mxu0 0.0
  %5869 = vmatprep.subr.mxu0 0.0
  %5870 = vmatpush1.msra.mxu0 0.0
  %5871 = vmatprep.subr.mxu0 0.0
  %5872 = vmatpush1.msra.mxu0 0.0
  %5873 = vmatprep.subr.mxu0 0.0
  %5874 = vmatpush1.msra.mxu0 0.0
  %5875 = vmatprep.subr.mxu0 0.0
  %5876 = vmatpush1.msra.mxu0 0.0
  %5877 = vmatprep.subr.mxu0 0.0
  %5878 = vmatpush1.msra.mxu0 0.0
  %5879 = vmatprep.subr.mxu0 0.0
  %5880 = vmatpush1.msra.mxu0 0.0
  %5881 = vmatprep.subr.mxu0 0.0
  %5882 = vmatpush1.msra.mxu0 0.0
  %5883 = vmatprep.subr.mxu0 0.0
  %5884 = vmatpush1.msra.mxu0 0.0
  %5885 = vmatprep.subr.mxu0 0.0
  %5886 = vmatpush1.msra.mxu0 0.0
  %5887 = vmatprep.subr.mxu0 0.0
  %5888 = vmatpush1.msra.mxu0 0.0
  %5889 = vmatprep.subr.mxu0 0.0
  %5890 = vmatpush1.msra.mxu0 0.0
  %5891 = vmatprep.subr.mxu0 0.0
  %5892 = vmatpush1.msra.mxu0 0.0
  %5893 = vmatprep.subr.mxu0 0.0
  %5894 = vmatpush1.msra.mxu0 0.0
  %5895 = vmatprep.subr.mxu0 0.0
  %5896 = vmatpush1.msra.mxu0 0.0
  %5897 = vmatprep.subr.mxu0 0.0
  %5898 = vmatpush1.msra.mxu0 0.0
  %5899 = vmatprep.subr.mxu0 0.0
  %5900 = vmatpush1.msra.mxu0 0.0
  %5901 = vmatprep.subr.mxu0 0.0
  %5902 = vmatpush1.msra.mxu0 0.0
  %5903 = vmatprep.subr.mxu0 0.0
  %5904 = vmatpush1.msra.mxu0 0.0
  %5905 = vmatprep.subr.mxu0 0.0
  %5906 = vmatpush1.msra.mxu0 0.0
  %5907 = vmatprep.subr.mxu0 0.0
  %5908 = vmatpush1.msra.mxu0 0.0
  %5909 = vmatprep.mubr.f32.mxu0 0.0
  %5910 = vmatmul.mubr.f32.gmra.mrb[0].mxu0 %v5835
  %v5911 = vpop.f32.mrb[0].mxu0
  %v5912 = vadd.f32 %v5810, %v5911
  %v5913 = vpop.f32.mrb[0].mxu0
  %5914 = vmatprep.mubr.f32.mxu0 0.0
  %5915 = vmatmul.mubr.f32.gmra.mrb[0].mxu0 %v5838
  %v5916 = vpop.f32.mrb[0].mxu0
  %v5917 = vadd.f32 %v5815, %v5916
  %v5918 = vpop.f32.mrb[0].mxu0
  %5919 = vmatprep.mubr.f32.mxu0 0.0
  %5920 = vmatmul.mubr.f32.gmra.mrb[0].mxu0 %v5841
  %v5921 = vpop.f32.mrb[0].mxu0
  %v5922 = vadd.f32 %v5820, %v5921
  %v5923 = vpop.f32.mrb[0].mxu0
  %5924 = vdwg.mxu0
  %v5925 = vmul.f32 %v5447, %v154
  %v5926 = vmul.f32 %v5448, %v154
  %v5927 = vmul.f32 %v5449, %v154
  %v5929 = vsel %vm3904, %v5925, 0
  %v5932 = vsel %vm3904, %v5926, 0
  %v5935 = vsel %vm3904, %v5927, 0
  %5937 = vmatprep.subr.mxu0 0.0
  %5938 = vmatpush1.xpose.msra.mxu0 %v5471
  %5939 = vmatprep.subr.mxu0 0.0
  %5940 = vmatpush1.xpose.msra.mxu0 %v5473
  %5941 = vmatprep.subr.mxu0 0.0
  %5942 = vmatpush1.xpose.msra.mxu0 %v5475
  %5943 = vmatprep.subr.mxu0 0.0
  %5944 = vmatpush1.xpose.msra.mxu0 0.0
  %5945 = vmatprep.subr.mxu0 0.0
  %5946 = vmatpush1.xpose.msra.mxu0 0.0
  %5947 = vmatprep.subr.mxu0 0.0
  %5948 = vmatpush1.xpose.msra.mxu0 0.0
  %5949 = vmatprep.subr.mxu0 0.0
  %5950 = vmatpush1.xpose.msra.mxu0 0.0
  %5951 = vmatprep.subr.mxu0 0.0
  %5952 = vmatpush1.xpose.msra.mxu0 0.0
  %5953 = vmatprep.subr.mxu0 0.0
  %5954 = vmatpush1.xpose.msra.mxu0 0.0
  %5955 = vmatprep.subr.mxu0 0.0
  %5956 = vmatpush1.xpose.msra.mxu0 0.0
  %5957 = vmatprep.subr.mxu0 0.0
  %5958 = vmatpush1.xpose.msra.mxu0 0.0
  %5959 = vmatprep.subr.mxu0 0.0
  %5960 = vmatpush1.xpose.msra.mxu0 0.0
  %5961 = vmatprep.subr.mxu0 0.0
  %5962 = vmatpush1.xpose.msra.mxu0 0.0
  %5963 = vmatprep.subr.mxu0 0.0
  %5964 = vmatpush1.xpose.msra.mxu0 0.0
  %5965 = vmatprep.subr.mxu0 0.0
  %5966 = vmatpush1.xpose.msra.mxu0 0.0
  %5967 = vmatprep.subr.mxu0 0.0
  %5968 = vmatpush1.xpose.msra.mxu0 0.0
  %5969 = vmatprep.subr.mxu0 0.0
  %5970 = vmatpush1.xpose.msra.mxu0 0.0
  %5971 = vmatprep.subr.mxu0 0.0
  %5972 = vmatpush1.xpose.msra.mxu0 0.0
  %5973 = vmatprep.subr.mxu0 0.0
  %5974 = vmatpush1.xpose.msra.mxu0 0.0
  %5975 = vmatprep.subr.mxu0 0.0
  %5976 = vmatpush1.xpose.msra.mxu0 0.0
  %5977 = vmatprep.subr.mxu0 0.0
  %5978 = vmatpush1.xpose.msra.mxu0 0.0
  %5979 = vmatprep.subr.mxu0 0.0
  %5980 = vmatpush1.xpose.msra.mxu0 0.0
  %5981 = vmatprep.subr.mxu0 0.0
  %5982 = vmatpush1.xpose.msra.mxu0 0.0
  %5983 = vmatprep.subr.mxu0 0.0
  %5984 = vmatpush1.xpose.msra.mxu0 0.0
  %5985 = vmatprep.subr.mxu0 0.0
  %5986 = vmatpush1.xpose.msra.mxu0 0.0
  %5987 = vmatprep.subr.mxu0 0.0
  %5988 = vmatpush1.xpose.msra.mxu0 0.0
  %5989 = vmatprep.subr.mxu0 0.0
  %5990 = vmatpush1.xpose.msra.mxu0 0.0
  %5991 = vmatprep.subr.mxu0 0.0
  %5992 = vmatpush1.xpose.msra.mxu0 0.0
  %5993 = vmatprep.subr.mxu0 0.0
  %5994 = vmatpush1.xpose.msra.mxu0 0.0
  %5995 = vmatprep.subr.mxu0 0.0
  %5996 = vmatpush1.xpose.msra.mxu0 0.0
  %5997 = vmatprep.subr.mxu0 0.0
  %5998 = vmatpush1.xpose.msra.mxu0 0.0
  %5999 = vmatprep.subr.mxu0 0.0
  %6000 = vmatpush1.xpose.msra.mxu0 0.0
  %6001 = vmatprep.mubr.f32.mxu0 0.0
  %6002 = vmatmul.mubr.f32.gmra.mrb[0].mxu0 %v5929
  %v6003 = vpop.f32.mrb[0].mxu0
  %v6004 = vadd.f32 %v120, %v6003
  %v6005 = vpop.f32.mrb[0].mxu0
  %6006 = vmatprep.mubr.f32.mxu0 0.0
  %6007 = vmatmul.mubr.f32.gmra.mrb[0].mxu0 %v5932
  %v6008 = vpop.f32.mrb[0].mxu0
  %v6009 = vadd.f32 %v121, %v6008
  %v6010 = vpop.f32.mrb[0].mxu0
  %6011 = vmatprep.mubr.f32.mxu0 0.0
  %6012 = vmatmul.mubr.f32.gmra.mrb[0].mxu0 %v5935
  %v6013 = vpop.f32.mrb[0].mxu0
  %v6014 = vadd.f32 %v122, %v6013
  %v6015 = vpop.f32.mrb[0].mxu0
  %6016 = vdwg.mxu0
  %v6017 = vsel %vm612, %v6004, -inf
  %6018 = vmax.xlane.f32.xlu0 %v6017
  %v6019 = vpop.xlane.xlu0 %6018
  %v6020 = vsel %vm612, %v6009, -inf
  %6021 = vmax.xlane.f32.xlu0 %v6020
  %v6022 = vpop.xlane.xlu0 %6021
  %v6023 = vsel %vm619, %v6014, -inf
  %6024 = vmax.xlane.f32.xlu0 %v6023
  %v6025 = vpop.xlane.xlu0 %6024
  %v6026 = vsub.f32 %v6004, %v6019
  %v6027 = vsub.f32 %v6009, %v6022
  %v6028 = vsub.f32 %v6014, %v6025
  %v6029 = vmul.f32 %v6026, 1.442695
  %v6030 = vpow.pop %v6029
  %v6031 = vmul.f32 %v6027, 1.442695
  %v6032 = vpow.pop %v6031
  %v6033 = vmul.f32 %v6028, 1.442695
  %v6034 = vpow.pop %v6033
  %v6035 = vsel %vm612, %v6030, 0.0
  %6036 = vadd.xlane.f32.xlu0 %v6035
  %v6037 = vpop.xlane.xlu0 %6036
  %v6038 = vsel %vm612, %v6032, 0.0
  %6039 = vadd.xlane.f32.xlu0 %v6038
  %v6040 = vpop.xlane.xlu0 %6039
  %v6041 = vsel %vm619, %v6034, 0.0
  %6042 = vadd.xlane.f32.xlu0 %v6041
  %v6043 = vpop.xlane.xlu0 %6042
  %v6044 = vrcp.pop %v6037
  %v6045 = vrcp.pop %v6040
  %v6046 = vrcp.pop %v6043
  %v6047 = vmul.f32 %v6030, %v6044
  %v6048 = vmul.f32 %v6032, %v6045
  %v6049 = vmul.f32 %v6034, %v6046
  %v6050 = vmul.f32 %v5434, %v4503
  %v6051 = vmul.f32 %v5439, %v4503
  %v6052 = vmul.f32 %v5444, %v4503
  %6056 = vrot.lane.b32.xlu0 %v6050, 64
  %v6057 = vpop.permute.xlu0 %6056
  %6058 = vrot.lane.b32.xlu0 %v6051, 64
  %v6059 = vpop.permute.xlu0 %6058
  %6060 = vrot.lane.b32.xlu0 %v6052, 64
  %v6061 = vpop.permute.xlu0 %6060
  %v6065 = vsel %vm612, %v6047, 0
  %v6068 = vsel %vm612, %v6048, 0
  %v6071 = vsel %vm612, %v6049, 0
  %v6073 = vsel %vm787, %v6061, 0
  %6075 = vmatprep.subr.mxu0 0.0
  %6076 = vmatpush1.msra.mxu0 %v6057
  %6077 = vmatprep.subr.mxu0 0.0
  %6078 = vmatpush1.msra.mxu0 %v6059
  %6079 = vmatprep.subr.mxu0 0.0
  %6080 = vmatpush1.msra.mxu0 %v6073
  %6081 = vmatprep.subr.mxu0 0.0
  %6082 = vmatpush1.msra.mxu0 0.0
  %6083 = vmatprep.subr.mxu0 0.0
  %6084 = vmatpush1.msra.mxu0 0.0
  %6085 = vmatprep.subr.mxu0 0.0
  %6086 = vmatpush1.msra.mxu0 0.0
  %6087 = vmatprep.subr.mxu0 0.0
  %6088 = vmatpush1.msra.mxu0 0.0
  %6089 = vmatprep.subr.mxu0 0.0
  %6090 = vmatpush1.msra.mxu0 0.0
  %6091 = vmatprep.subr.mxu0 0.0
  %6092 = vmatpush1.msra.mxu0 0.0
  %6093 = vmatprep.subr.mxu0 0.0
  %6094 = vmatpush1.msra.mxu0 0.0
  %6095 = vmatprep.subr.mxu0 0.0
  %6096 = vmatpush1.msra.mxu0 0.0
  %6097 = vmatprep.subr.mxu0 0.0
  %6098 = vmatpush1.msra.mxu0 0.0
  %6099 = vmatprep.subr.mxu0 0.0
  %6100 = vmatpush1.msra.mxu0 0.0
  %6101 = vmatprep.subr.mxu0 0.0
  %6102 = vmatpush1.msra.mxu0 0.0
  %6103 = vmatprep.subr.mxu0 0.0
  %6104 = vmatpush1.msra.mxu0 0.0
  %6105 = vmatprep.subr.mxu0 0.0
  %6106 = vmatpush1.msra.mxu0 0.0
  %6107 = vmatprep.subr.mxu0 0.0
  %6108 = vmatpush1.msra.mxu0 0.0
  %6109 = vmatprep.subr.mxu0 0.0
  %6110 = vmatpush1.msra.mxu0 0.0
  %6111 = vmatprep.subr.mxu0 0.0
  %6112 = vmatpush1.msra.mxu0 0.0
  %6113 = vmatprep.subr.mxu0 0.0
  %6114 = vmatpush1.msra.mxu0 0.0
  %6115 = vmatprep.subr.mxu0 0.0
  %6116 = vmatpush1.msra.mxu0 0.0
  %6117 = vmatprep.subr.mxu0 0.0
  %6118 = vmatpush1.msra.mxu0 0.0
  %6119 = vmatprep.subr.mxu0 0.0
  %6120 = vmatpush1.msra.mxu0 0.0
  %6121 = vmatprep.subr.mxu0 0.0
  %6122 = vmatpush1.msra.mxu0 0.0
  %6123 = vmatprep.subr.mxu0 0.0
  %6124 = vmatpush1.msra.mxu0 0.0
  %6125 = vmatprep.subr.mxu0 0.0
  %6126 = vmatpush1.msra.mxu0 0.0
  %6127 = vmatprep.subr.mxu0 0.0
  %6128 = vmatpush1.msra.mxu0 0.0
  %6129 = vmatprep.subr.mxu0 0.0
  %6130 = vmatpush1.msra.mxu0 0.0
  %6131 = vmatprep.subr.mxu0 0.0
  %6132 = vmatpush1.msra.mxu0 0.0
  %6133 = vmatprep.subr.mxu0 0.0
  %6134 = vmatpush1.msra.mxu0 0.0
  %6135 = vmatprep.subr.mxu0 0.0
  %6136 = vmatpush1.msra.mxu0 0.0
  %6137 = vmatprep.subr.mxu0 0.0
  %6138 = vmatpush1.msra.mxu0 0.0
  %6139 = vmatprep.mubr.f32.mxu0 0.0
  %6140 = vmatmul.mubr.f32.gmra.mrb[0].mxu0 %v6065
  %v6141 = vpop.f32.mrb[0].mxu0
  %v6142 = vadd.f32 0.0, %v6141
  %v6143 = vpop.f32.mrb[0].mxu0
  %6144 = vmatprep.mubr.f32.mxu0 0.0
  %6145 = vmatmul.mubr.f32.gmra.mrb[0].mxu0 %v6068
  %v6146 = vpop.f32.mrb[0].mxu0
  %v6147 = vadd.f32 0.0, %v6146
  %v6148 = vpop.f32.mrb[0].mxu0
  %6149 = vmatprep.mubr.f32.mxu0 0.0
  %6150 = vmatmul.mubr.f32.gmra.mrb[0].mxu0 %v6071
  %v6151 = vpop.f32.mrb[0].mxu0
  %v6152 = vadd.f32 0.0, %v6151
  %v6153 = vpop.f32.mrb[0].mxu0
  %6154 = vdwg.mxu0
  %v6155 = vadd.f32 %v5912, %v6142
  %v6156 = vadd.f32 %v5917, %v6147
  %v6157 = vadd.f32 %v5922, %v6152
  %v6158 = vmul.f32 %v5447, %v158
  %v6159 = vmul.f32 %v5448, %v158
  %v6160 = vmul.f32 %v5449, %v158
  %v6162 = vsel %vm3904, %v6158, 0
  %v6165 = vsel %vm3904, %v6159, 0
  %v6168 = vsel %vm3904, %v6160, 0
  %6170 = vmatprep.subr.mxu0 0.0
  %6171 = vmatpush1.xpose.msra.mxu0 %v5471
  %6172 = vmatprep.subr.mxu0 0.0
  %6173 = vmatpush1.xpose.msra.mxu0 %v5473
  %6174 = vmatprep.subr.mxu0 0.0
  %6175 = vmatpush1.xpose.msra.mxu0 %v5475
  %6176 = vmatprep.subr.mxu0 0.0
  %6177 = vmatpush1.xpose.msra.mxu0 0.0
  %6178 = vmatprep.subr.mxu0 0.0
  %6179 = vmatpush1.xpose.msra.mxu0 0.0
  %6180 = vmatprep.subr.mxu0 0.0
  %6181 = vmatpush1.xpose.msra.mxu0 0.0
  %6182 = vmatprep.subr.mxu0 0.0
  %6183 = vmatpush1.xpose.msra.mxu0 0.0
  %6184 = vmatprep.subr.mxu0 0.0
  %6185 = vmatpush1.xpose.msra.mxu0 0.0
  %6186 = vmatprep.subr.mxu0 0.0
  %6187 = vmatpush1.xpose.msra.mxu0 0.0
  %6188 = vmatprep.subr.mxu0 0.0
  %6189 = vmatpush1.xpose.msra.mxu0 0.0
  %6190 = vmatprep.subr.mxu0 0.0
  %6191 = vmatpush1.xpose.msra.mxu0 0.0
  %6192 = vmatprep.subr.mxu0 0.0
  %6193 = vmatpush1.xpose.msra.mxu0 0.0
  %6194 = vmatprep.subr.mxu0 0.0
  %6195 = vmatpush1.xpose.msra.mxu0 0.0
  %6196 = vmatprep.subr.mxu0 0.0
  %6197 = vmatpush1.xpose.msra.mxu0 0.0
  %6198 = vmatprep.subr.mxu0 0.0
  %6199 = vmatpush1.xpose.msra.mxu0 0.0
  %6200 = vmatprep.subr.mxu0 0.0
  %6201 = vmatpush1.xpose.msra.mxu0 0.0
  %6202 = vmatprep.subr.mxu0 0.0
  %6203 = vmatpush1.xpose.msra.mxu0 0.0
  %6204 = vmatprep.subr.mxu0 0.0
  %6205 = vmatpush1.xpose.msra.mxu0 0.0
  %6206 = vmatprep.subr.mxu0 0.0
  %6207 = vmatpush1.xpose.msra.mxu0 0.0
  %6208 = vmatprep.subr.mxu0 0.0
  %6209 = vmatpush1.xpose.msra.mxu0 0.0
  %6210 = vmatprep.subr.mxu0 0.0
  %6211 = vmatpush1.xpose.msra.mxu0 0.0
  %6212 = vmatprep.subr.mxu0 0.0
  %6213 = vmatpush1.xpose.msra.mxu0 0.0
  %6214 = vmatprep.subr.mxu0 0.0
  %6215 = vmatpush1.xpose.msra.mxu0 0.0
  %6216 = vmatprep.subr.mxu0 0.0
  %6217 = vmatpush1.xpose.msra.mxu0 0.0
  %6218 = vmatprep.subr.mxu0 0.0
  %6219 = vmatpush1.xpose.msra.mxu0 0.0
  %6220 = vmatprep.subr.mxu0 0.0
  %6221 = vmatpush1.xpose.msra.mxu0 0.0
  %6222 = vmatprep.subr.mxu0 0.0
  %6223 = vmatpush1.xpose.msra.mxu0 0.0
  %6224 = vmatprep.subr.mxu0 0.0
  %6225 = vmatpush1.xpose.msra.mxu0 0.0
  %6226 = vmatprep.subr.mxu0 0.0
  %6227 = vmatpush1.xpose.msra.mxu0 0.0
  %6228 = vmatprep.subr.mxu0 0.0
  %6229 = vmatpush1.xpose.msra.mxu0 0.0
  %6230 = vmatprep.subr.mxu0 0.0
  %6231 = vmatpush1.xpose.msra.mxu0 0.0
  %6232 = vmatprep.subr.mxu0 0.0
  %6233 = vmatpush1.xpose.msra.mxu0 0.0
  %6234 = vmatprep.mubr.f32.mxu0 0.0
  %6235 = vmatmul.mubr.f32.gmra.mrb[0].mxu0 %v6162
  %v6236 = vpop.f32.mrb[0].mxu0
  %v6237 = vadd.f32 %v120, %v6236
  %v6238 = vpop.f32.mrb[0].mxu0
  %6239 = vmatprep.mubr.f32.mxu0 0.0
  %6240 = vmatmul.mubr.f32.gmra.mrb[0].mxu0 %v6165
  %v6241 = vpop.f32.mrb[0].mxu0
  %v6242 = vadd.f32 %v121, %v6241
  %v6243 = vpop.f32.mrb[0].mxu0
  %6244 = vmatprep.mubr.f32.mxu0 0.0
  %6245 = vmatmul.mubr.f32.gmra.mrb[0].mxu0 %v6168
  %v6246 = vpop.f32.mrb[0].mxu0
  %v6247 = vadd.f32 %v122, %v6246
  %v6248 = vpop.f32.mrb[0].mxu0
  %6249 = vdwg.mxu0
  %v6250 = vsel %vm612, %v6237, -inf
  %6251 = vmax.xlane.f32.xlu0 %v6250
  %v6252 = vpop.xlane.xlu0 %6251
  %v6253 = vsel %vm612, %v6242, -inf
  %6254 = vmax.xlane.f32.xlu0 %v6253
  %v6255 = vpop.xlane.xlu0 %6254
  %v6256 = vsel %vm619, %v6247, -inf
  %6257 = vmax.xlane.f32.xlu0 %v6256
  %v6258 = vpop.xlane.xlu0 %6257
  %v6259 = vsub.f32 %v6237, %v6252
  %v6260 = vsub.f32 %v6242, %v6255
  %v6261 = vsub.f32 %v6247, %v6258
  %v6262 = vmul.f32 %v6259, 1.442695
  %v6263 = vpow.pop %v6262
  %v6264 = vmul.f32 %v6260, 1.442695
  %v6265 = vpow.pop %v6264
  %v6266 = vmul.f32 %v6261, 1.442695
  %v6267 = vpow.pop %v6266
  %v6268 = vsel %vm612, %v6263, 0.0
  %6269 = vadd.xlane.f32.xlu0 %v6268
  %v6270 = vpop.xlane.xlu0 %6269
  %v6271 = vsel %vm612, %v6265, 0.0
  %6272 = vadd.xlane.f32.xlu0 %v6271
  %v6273 = vpop.xlane.xlu0 %6272
  %v6274 = vsel %vm619, %v6267, 0.0
  %6275 = vadd.xlane.f32.xlu0 %v6274
  %v6276 = vpop.xlane.xlu0 %6275
  %v6277 = vrcp.pop %v6270
  %v6278 = vrcp.pop %v6273
  %v6279 = vrcp.pop %v6276
  %v6280 = vmul.f32 %v6263, %v6277
  %v6281 = vmul.f32 %v6265, %v6278
  %v6282 = vmul.f32 %v6267, %v6279
  %v6283 = vmul.f32 %v5434, %v4740
  %v6284 = vmul.f32 %v5439, %v4740
  %v6285 = vmul.f32 %v5444, %v4740
  %6289 = vrot.lane.b32.xlu0 %v6283, 64
  %v6290 = vpop.permute.xlu0 %6289
  %6291 = vrot.lane.b32.xlu0 %v6284, 64
  %v6292 = vpop.permute.xlu0 %6291
  %6293 = vrot.lane.b32.xlu0 %v6285, 64
  %v6294 = vpop.permute.xlu0 %6293
  %v6298 = vsel %vm612, %v6280, 0
  %v6301 = vsel %vm612, %v6281, 0
  %v6304 = vsel %vm612, %v6282, 0
  %v6306 = vsel %vm787, %v6294, 0
  %6308 = vmatprep.subr.mxu0 0.0
  %6309 = vmatpush1.msra.mxu0 %v6290
  %6310 = vmatprep.subr.mxu0 0.0
  %6311 = vmatpush1.msra.mxu0 %v6292
  %6312 = vmatprep.subr.mxu0 0.0
  %6313 = vmatpush1.msra.mxu0 %v6306
  %6314 = vmatprep.subr.mxu0 0.0
  %6315 = vmatpush1.msra.mxu0 0.0
  %6316 = vmatprep.subr.mxu0 0.0
  %6317 = vmatpush1.msra.mxu0 0.0
  %6318 = vmatprep.subr.mxu0 0.0
  %6319 = vmatpush1.msra.mxu0 0.0
  %6320 = vmatprep.subr.mxu0 0.0
  %6321 = vmatpush1.msra.mxu0 0.0
  %6322 = vmatprep.subr.mxu0 0.0
  %6323 = vmatpush1.msra.mxu0 0.0
  %6324 = vmatprep.subr.mxu0 0.0
  %6325 = vmatpush1.msra.mxu0 0.0
  %6326 = vmatprep.subr.mxu0 0.0
  %6327 = vmatpush1.msra.mxu0 0.0
  %6328 = vmatprep.subr.mxu0 0.0
  %6329 = vmatpush1.msra.mxu0 0.0
  %6330 = vmatprep.subr.mxu0 0.0
  %6331 = vmatpush1.msra.mxu0 0.0
  %6332 = vmatprep.subr.mxu0 0.0
  %6333 = vmatpush1.msra.mxu0 0.0
  %6334 = vmatprep.subr.mxu0 0.0
  %6335 = vmatpush1.msra.mxu0 0.0
  %6336 = vmatprep.subr.mxu0 0.0
  %6337 = vmatpush1.msra.mxu0 0.0
  %6338 = vmatprep.subr.mxu0 0.0
  %6339 = vmatpush1.msra.mxu0 0.0
  %6340 = vmatprep.subr.mxu0 0.0
  %6341 = vmatpush1.msra.mxu0 0.0
  %6342 = vmatprep.subr.mxu0 0.0
  %6343 = vmatpush1.msra.mxu0 0.0
  %6344 = vmatprep.subr.mxu0 0.0
  %6345 = vmatpush1.msra.mxu0 0.0
  %6346 = vmatprep.subr.mxu0 0.0
  %6347 = vmatpush1.msra.mxu0 0.0
  %6348 = vmatprep.subr.mxu0 0.0
  %6349 = vmatpush1.msra.mxu0 0.0
  %6350 = vmatprep.subr.mxu0 0.0
  %6351 = vmatpush1.msra.mxu0 0.0
  %6352 = vmatprep.subr.mxu0 0.0
  %6353 = vmatpush1.msra.mxu0 0.0
  %6354 = vmatprep.subr.mxu0 0.0
  %6355 = vmatpush1.msra.mxu0 0.0
  %6356 = vmatprep.subr.mxu0 0.0
  %6357 = vmatpush1.msra.mxu0 0.0
  %6358 = vmatprep.subr.mxu0 0.0
  %6359 = vmatpush1.msra.mxu0 0.0
  %6360 = vmatprep.subr.mxu0 0.0
  %6361 = vmatpush1.msra.mxu0 0.0
  %6362 = vmatprep.subr.mxu0 0.0
  %6363 = vmatpush1.msra.mxu0 0.0
  %6364 = vmatprep.subr.mxu0 0.0
  %6365 = vmatpush1.msra.mxu0 0.0
  %6366 = vmatprep.subr.mxu0 0.0
  %6367 = vmatpush1.msra.mxu0 0.0
  %6368 = vmatprep.subr.mxu0 0.0
  %6369 = vmatpush1.msra.mxu0 0.0
  %6370 = vmatprep.subr.mxu0 0.0
  %6371 = vmatpush1.msra.mxu0 0.0
  %6372 = vmatprep.mubr.f32.mxu0 0.0
  %6373 = vmatmul.mubr.f32.gmra.mrb[0].mxu0 %v6298
  %v6374 = vpop.f32.mrb[0].mxu0
  %v6375 = vadd.f32 0.0, %v6374
  %v6376 = vpop.f32.mrb[0].mxu0
  %6377 = vmatprep.mubr.f32.mxu0 0.0
  %6378 = vmatmul.mubr.f32.gmra.mrb[0].mxu0 %v6301
  %v6379 = vpop.f32.mrb[0].mxu0
  %v6380 = vadd.f32 0.0, %v6379
  %v6381 = vpop.f32.mrb[0].mxu0
  %6382 = vmatprep.mubr.f32.mxu0 0.0
  %6383 = vmatmul.mubr.f32.gmra.mrb[0].mxu0 %v6304
  %v6384 = vpop.f32.mrb[0].mxu0
  %v6385 = vadd.f32 0.0, %v6384
  %v6386 = vpop.f32.mrb[0].mxu0
  %6387 = vdwg.mxu0
  %v6388 = vadd.f32 %v6155, %v6375
  %v6389 = vadd.f32 %v6156, %v6380
  %v6390 = vadd.f32 %v6157, %v6385
  %v6392 = vsel %vm3904, %v6388, 0
  %v6395 = vsel %vm3904, %v6389, 0
  %v6398 = vsel %vm3904, %v6390, 0
  %6400 = vmatprep.subr.mxu0 0.0
  %6401 = vmatpush1.msra.mxu0 %v5280
  %6402 = vmatprep.subr.mxu0 0.0
  %6403 = vmatpush1.msra.mxu0 %v5281
  %6404 = vmatprep.subr.mxu0 0.0
  %6405 = vmatpush1.msra.mxu0 %v5282
  %6406 = vmatprep.subr.mxu0 0.0
  %6407 = vmatpush1.msra.mxu0 %v5283
  %6408 = vmatprep.subr.mxu0 0.0
  %6409 = vmatpush1.msra.mxu0 0.0
  %6410 = vmatprep.subr.mxu0 0.0
  %6411 = vmatpush1.msra.mxu0 0.0
  %6412 = vmatprep.subr.mxu0 0.0
  %6413 = vmatpush1.msra.mxu0 0.0
  %6414 = vmatprep.subr.mxu0 0.0
  %6415 = vmatpush1.msra.mxu0 0.0
  %6416 = vmatprep.subr.mxu0 0.0
  %6417 = vmatpush1.msra.mxu0 0.0
  %6418 = vmatprep.subr.mxu0 0.0
  %6419 = vmatpush1.msra.mxu0 0.0
  %6420 = vmatprep.subr.mxu0 0.0
  %6421 = vmatpush1.msra.mxu0 0.0
  %6422 = vmatprep.subr.mxu0 0.0
  %6423 = vmatpush1.msra.mxu0 0.0
  %6424 = vmatprep.subr.mxu0 0.0
  %6425 = vmatpush1.msra.mxu0 0.0
  %6426 = vmatprep.subr.mxu0 0.0
  %6427 = vmatpush1.msra.mxu0 0.0
  %6428 = vmatprep.subr.mxu0 0.0
  %6429 = vmatpush1.msra.mxu0 0.0
  %6430 = vmatprep.subr.mxu0 0.0
  %6431 = vmatpush1.msra.mxu0 0.0
  %6432 = vmatprep.subr.mxu0 0.0
  %6433 = vmatpush1.msra.mxu0 0.0
  %6434 = vmatprep.subr.mxu0 0.0
  %6435 = vmatpush1.msra.mxu0 0.0
  %6436 = vmatprep.subr.mxu0 0.0
  %6437 = vmatpush1.msra.mxu0 0.0
  %6438 = vmatprep.subr.mxu0 0.0
  %6439 = vmatpush1.msra.mxu0 0.0
  %6440 = vmatprep.subr.mxu0 0.0
  %6441 = vmatpush1.msra.mxu0 0.0
  %6442 = vmatprep.subr.mxu0 0.0
  %6443 = vmatpush1.msra.mxu0 0.0
  %6444 = vmatprep.subr.mxu0 0.0
  %6445 = vmatpush1.msra.mxu0 0.0
  %6446 = vmatprep.subr.mxu0 0.0
  %6447 = vmatpush1.msra.mxu0 0.0
  %6448 = vmatprep.subr.mxu0 0.0
  %6449 = vmatpush1.msra.mxu0 0.0
  %6450 = vmatprep.subr.mxu0 0.0
  %6451 = vmatpush1.msra.mxu0 0.0
  %6452 = vmatprep.subr.mxu0 0.0
  %6453 = vmatpush1.msra.mxu0 0.0
  %6454 = vmatprep.subr.mxu0 0.0
  %6455 = vmatpush1.msra.mxu0 0.0
  %6456 = vmatprep.subr.mxu0 0.0
  %6457 = vmatpush1.msra.mxu0 0.0
  %6458 = vmatprep.subr.mxu0 0.0
  %6459 = vmatpush1.msra.mxu0 0.0
  %6460 = vmatprep.subr.mxu0 0.0
  %6461 = vmatpush1.msra.mxu0 0.0
  %6462 = vmatprep.subr.mxu0 0.0
  %6463 = vmatpush1.msra.mxu0 0.0
  %6464 = vmatprep.mubr.f32.mxu0 0.0
  %6465 = vmatmul.mubr.f32.gmra.mrb[0].mxu0 %v6392
  %v6466 = vpop.f32.mrb[0].mxu0
  %v6467 = vadd.f32 0.0, %v6466
  %v6468 = vpop.f32.mrb[0].mxu0
  %6469 = vmatprep.mubr.f32.mxu0 0.0
  %6470 = vmatmul.mubr.f32.gmra.mrb[0].mxu0 %v6395
  %v6471 = vpop.f32.mrb[0].mxu0
  %v6472 = vadd.f32 0.0, %v6471
  %v6473 = vpop.f32.mrb[0].mxu0
  %6474 = vmatprep.mubr.f32.mxu0 0.0
  %6475 = vmatmul.mubr.f32.gmra.mrb[0].mxu0 %v6398
  %v6476 = vpop.f32.mrb[0].mxu0
  %v6477 = vadd.f32 0.0, %v6476
  %v6478 = vpop.f32.mrb[0].mxu0
  %6479 = vdwg.mxu0
  %v6480 = vadd.f32 %v5270, %v6467
  %v6481 = vadd.f32 %v5271, %v6472
  %v6482 = vadd.f32 %v5272, %v6477
  %v6483 = vlaneseq
  %v6484 = vshrl.u32 %v6483, 7
  %v6485 = vsub.s32 2, %v6484
  %v6486 = vrot.slane %v5274, %v6485
  %v6487 = vadd.f32 %v6480, %v6486
  %v6488 = vadd.f32 %v6481, %v6486
  %v6489 = vadd.f32 %v6482, %v6486
  %v6490 = vsel %vm3740, %v6487, 0.0
  %6491 = vadd.xlane.f32.xlu0 %v6490
  %v6492 = vpop.xlane.xlu0 %6491
  %v6493 = vsel %vm3740, %v6488, 0.0
  %6494 = vadd.xlane.f32.xlu0 %v6493
  %v6495 = vpop.xlane.xlu0 %6494
  %v6496 = vsel %vm3747, %v6489, 0.0
  %6497 = vadd.xlane.f32.xlu0 %v6496
  %v6498 = vpop.xlane.xlu0 %6497
  %v6499 = vmul.f32 %v6492, %v3751
  %v6500 = vmul.f32 %v6495, %v3751
  %v6501 = vmul.f32 %v6498, %v3751
  %v6502 = vsub.f32 %v6487, %v6499
  %v6503 = vsub.f32 %v6488, %v6500
  %v6504 = vsub.f32 %v6489, %v6501
  %v6505 = vmul.f32 %v6502, %v6502
  %v6506 = vmul.f32 %v6503, %v6503
  %v6507 = vmul.f32 %v6504, %v6504
  %v6508 = vsel %vm3740, %v6505, 0.0
  %6509 = vadd.xlane.f32.xlu0 %v6508
  %v6510 = vpop.xlane.xlu0 %6509
  %v6511 = vsel %vm3740, %v6506, 0.0
  %6512 = vadd.xlane.f32.xlu0 %v6511
  %v6513 = vpop.xlane.xlu0 %6512
  %v6514 = vsel %vm3747, %v6507, 0.0
  %6515 = vadd.xlane.f32.xlu0 %v6514
  %v6516 = vpop.xlane.xlu0 %6515
  %v6517 = vmul.f32 %v6510, %v3751
  %v6518 = vmul.f32 %v6513, %v3751
  %v6519 = vmul.f32 %v6516, %v3751
  %v6520 = vadd.f32 %v6517, 1e-06
  %v6521 = vadd.f32 %v6518, 1e-06
  %v6522 = vadd.f32 %v6519, 1e-06
  %v6523 = vrsqrt.pop %v6520
  %v6524 = vrsqrt.pop %v6521
  %v6525 = vrsqrt.pop %v6522
  %v6526 = vmul.f32 %v6502, %v6523
  %v6527 = vmul.f32 %v6503, %v6524
  %v6528 = vmul.f32 %v6504, %v6525
  %v6529 = vlaneseq
  %v6530 = vshrl.u32 %v6529, 7
  %v6531 = vsub.s32 3, %v6530
  %v6532 = vrot.slane %v5274, %v6531
  %v6533 = vmul.f32 %v6526, %v6532
  %v6534 = vmul.f32 %v6527, %v6532
  %v6535 = vmul.f32 %v6528, %v6532
  %v6536 = vlaneseq
  %v6537 = vshrl.u32 %v6536, 7
  %v6538 = vsub.s32 4, %v6537
  %v6539 = vrot.slane %v5274, %v6538
  %v6540 = vadd.f32 %v6533, %v6539
  %v6541 = vadd.f32 %v6534, %v6539
  %v6542 = vadd.f32 %v6535, %v6539
  %v6543 = vlaneseq
  %v6544 = vshrl.u32 %v6543, 7
  %v6545 = vsub.s32 7, %v6544
  %v6546 = vrot.slane %v5274, %v6545
  %v6548 = vsel %vm3740, %v6540, 0
  %v6551 = vsel %vm3740, %v6541, 0
  %v6554 = vsel %vm3740, %v6542, 0
  %6556 = vmatprep.subr.mxu0 0.0
  %6557 = vmatpush1.msra.mxu0 %v5285
  %6558 = vmatprep.subr.mxu0 0.0
  %6559 = vmatpush1.msra.mxu0 %v5286
  %6560 = vmatprep.subr.mxu0 0.0
  %6561 = vmatpush1.msra.mxu0 %v5287
  %6562 = vmatprep.subr.mxu0 0.0
  %6563 = vmatpush1.msra.mxu0 0.0
  %6564 = vmatprep.subr.mxu0 0.0
  %6565 = vmatpush1.msra.mxu0 0.0
  %6566 = vmatprep.subr.mxu0 0.0
  %6567 = vmatpush1.msra.mxu0 0.0
  %6568 = vmatprep.subr.mxu0 0.0
  %6569 = vmatpush1.msra.mxu0 0.0
  %6570 = vmatprep.subr.mxu0 0.0
  %6571 = vmatpush1.msra.mxu0 0.0
  %6572 = vmatprep.subr.mxu0 0.0
  %6573 = vmatpush1.msra.mxu0 0.0
  %6574 = vmatprep.subr.mxu0 0.0
  %6575 = vmatpush1.msra.mxu0 0.0
  %6576 = vmatprep.subr.mxu0 0.0
  %6577 = vmatpush1.msra.mxu0 0.0
  %6578 = vmatprep.subr.mxu0 0.0
  %6579 = vmatpush1.msra.mxu0 0.0
  %6580 = vmatprep.subr.mxu0 0.0
  %6581 = vmatpush1.msra.mxu0 0.0
  %6582 = vmatprep.subr.mxu0 0.0
  %6583 = vmatpush1.msra.mxu0 0.0
  %6584 = vmatprep.subr.mxu0 0.0
  %6585 = vmatpush1.msra.mxu0 0.0
  %6586 = vmatprep.subr.mxu0 0.0
  %6587 = vmatpush1.msra.mxu0 0.0
  %6588 = vmatprep.subr.mxu0 0.0
  %6589 = vmatpush1.msra.mxu0 0.0
  %6590 = vmatprep.subr.mxu0 0.0
  %6591 = vmatpush1.msra.mxu0 0.0
  %6592 = vmatprep.subr.mxu0 0.0
  %6593 = vmatpush1.msra.mxu0 0.0
  %6594 = vmatprep.subr.mxu0 0.0
  %6595 = vmatpush1.msra.mxu0 0.0
  %6596 = vmatprep.subr.mxu0 0.0
  %6597 = vmatpush1.msra.mxu0 0.0
  %6598 = vmatprep.subr.mxu0 0.0
  %6599 = vmatpush1.msra.mxu0 0.0
  %6600 = vmatprep.subr.mxu0 0.0
  %6601 = vmatpush1.msra.mxu0 0.0
  %6602 = vmatprep.subr.mxu0 0.0
  %6603 = vmatpush1.msra.mxu0 0.0
  %6604 = vmatprep.subr.mxu0 0.0
  %6605 = vmatpush1.msra.mxu0 0.0
  %6606 = vmatprep.subr.mxu0 0.0
  %6607 = vmatpush1.msra.mxu0 0.0
  %6608 = vmatprep.subr.mxu0 0.0
  %6609 = vmatpush1.msra.mxu0 0.0
  %6610 = vmatprep.subr.mxu0 0.0
  %6611 = vmatpush1.msra.mxu0 0.0
  %6612 = vmatprep.subr.mxu0 0.0
  %6613 = vmatpush1.msra.mxu0 0.0
  %6614 = vmatprep.subr.mxu0 0.0
  %6615 = vmatpush1.msra.mxu0 0.0
  %6616 = vmatprep.subr.mxu0 0.0
  %6617 = vmatpush1.msra.mxu0 0.0
  %6618 = vmatprep.subr.mxu0 0.0
  %6619 = vmatpush1.msra.mxu0 0.0
  %6620 = vmatprep.mubr.f32.mxu0 0.0
  %6621 = vmatmul.mubr.f32.gmra.mrb[0].mxu0 %v6548
  %v6622 = vpop.f32.mrb[0].mxu0
  %v6623 = vadd.f32 %v6546, %v6622
  %v6624 = vpop.f32.mrb[0].mxu0
  %6625 = vmatprep.mubr.f32.mxu0 0.0
  %6626 = vmatmul.mubr.f32.gmra.mrb[0].mxu0 %v6551
  %v6627 = vpop.f32.mrb[0].mxu0
  %v6628 = vadd.f32 %v6546, %v6627
  %v6629 = vpop.f32.mrb[0].mxu0
  %6630 = vmatprep.mubr.f32.mxu0 0.0
  %6631 = vmatmul.mubr.f32.gmra.mrb[0].mxu0 %v6554
  %v6632 = vpop.f32.mrb[0].mxu0
  %v6633 = vadd.f32 %v6546, %v6632
  %v6634 = vpop.f32.mrb[0].mxu0
  %6635 = vdwg.mxu0
  %v6636 = vmul.f32 %v6623, 0.5
  %v6637 = vmul.f32 %v6628, 0.5
  %v6638 = vmul.f32 %v6633, 0.5
  %v6639 = vmul.f32 %v6623, 0.70710677
  %v6640 = vmul.f32 %v6628, 0.70710677
  %v6641 = vmul.f32 %v6633, 0.70710677
  %v6642 = vand.u32 2147483647, %v6639
  %v6643 = vand.u32 2147483647, %v6640
  %v6644 = vand.u32 2147483647, %v6641
  %v6645 = vmul.f32 %v6642, 0.3275911
  %v6646 = vmul.f32 %v6643, 0.3275911
  %v6647 = vmul.f32 %v6644, 0.3275911
  %v6648 = vadd.f32 %v6645, 1.0
  %v6649 = vadd.f32 %v6646, 1.0
  %v6650 = vadd.f32 %v6647, 1.0
  %v6651 = vrcp.pop %v6648
  %v6652 = vmul.f32 1.0, %v6651
  %v6653 = vrcp.pop %v6649
  %v6654 = vmul.f32 1.0, %v6653
  %v6655 = vrcp.pop %v6650
  %v6656 = vmul.f32 1.0, %v6655
  %v6657 = vmul.f32 %v6652, 1.0614054
  %v6658 = vmul.f32 %v6654, 1.0614054
  %v6659 = vmul.f32 %v6656, 1.0614054
  %v6660 = vsub.f32 %v6657, 1.4531521
  %v6661 = vsub.f32 %v6658, 1.4531521
  %v6662 = vsub.f32 %v6659, 1.4531521
  %v6663 = vmul.f32 %v6660, %v6652
  %v6664 = vmul.f32 %v6661, %v6654
  %v6665 = vmul.f32 %v6662, %v6656
  %v6666 = vadd.f32 %v6663, 1.4214138
  %v6667 = vadd.f32 %v6664, 1.4214138
  %v6668 = vadd.f32 %v6665, 1.4214138
  %v6669 = vmul.f32 %v6666, %v6652
  %v6670 = vmul.f32 %v6667, %v6654
  %v6671 = vmul.f32 %v6668, %v6656
  %v6672 = vsub.f32 %v6669, 0.28449672
  %v6673 = vsub.f32 %v6670, 0.28449672
  %v6674 = vsub.f32 %v6671, 0.28449672
  %v6675 = vmul.f32 %v6672, %v6652
  %v6676 = vmul.f32 %v6673, %v6654
  %v6677 = vmul.f32 %v6674, %v6656
  %v6678 = vadd.f32 %v6675, 0.2548296
  %v6679 = vadd.f32 %v6676, 0.2548296
  %v6680 = vadd.f32 %v6677, 0.2548296
  %v6681 = vmul.f32 %v6678, %v6652
  %v6682 = vmul.f32 %v6679, %v6654
  %v6683 = vmul.f32 %v6680, %v6656
  %v6684 = vmul.f32 %v6642, %v6642
  %v6685 = vmul.f32 %v6643, %v6643
  %v6686 = vmul.f32 %v6644, %v6644
  %v6687 = vsub.f32 0.0, %v6684
  %v6688 = vsub.f32 0.0, %v6685
  %v6689 = vsub.f32 0.0, %v6686
  %v6690 = vmul.f32 %v6687, 1.442695
  %v6691 = vpow.pop %v6690
  %v6692 = vmul.f32 %v6688, 1.442695
  %v6693 = vpow.pop %v6692
  %v6694 = vmul.f32 %v6689, 1.442695
  %v6695 = vpow.pop %v6694
  %v6696 = vmul.f32 %v6681, %v6691
  %v6697 = vmul.f32 %v6682, %v6693
  %v6698 = vmul.f32 %v6683, %v6695
  %v6699 = vsub.f32 1.0, %v6696
  %v6700 = vsub.f32 1.0, %v6697
  %v6701 = vsub.f32 1.0, %v6698
  %vm6702 = vcmp.lt.f32.partialorder %v6639, 0.0
  %vm6703 = vcmp.lt.f32.partialorder %v6640, 0.0
  %vm6704 = vcmp.lt.f32.partialorder %v6641, 0.0
  %v6705 = vsub.f32 0.0, %v6699
  %v6706 = vsub.f32 0.0, %v6700
  %v6707 = vsub.f32 0.0, %v6701
  %v6708 = vsel %vm6702, %v6705, %v6699
  %v6709 = vsel %vm6703, %v6706, %v6700
  %v6710 = vsel %vm6704, %v6707, %v6701
  %v6711 = vadd.f32 %v6708, 1.0
  %v6712 = vadd.f32 %v6709, 1.0
  %v6713 = vadd.f32 %v6710, 1.0
  %v6714 = vmul.f32 %v6636, %v6711
  %v6715 = vmul.f32 %v6637, %v6712
  %v6716 = vmul.f32 %v6638, %v6713
  %v6717 = vlaneseq
  %v6718 = vshrl.u32 %v6717, 7
  %v6719 = vsub.s32 5, %v6718
  %v6720 = vrot.slane %v5274, %v6719
  %v6722 = vsel %vm5180, %v6714, 0
  %v6725 = vsel %vm5180, %v6715, 0
  %v6728 = vsel %vm5180, %v6716, 0
  %6730 = vmatprep.subr.mxu0 0.0
  %6731 = vmatpush1.msra.mxu0 %v5289
  %6732 = vmatprep.subr.mxu0 0.0
  %6733 = vmatpush1.msra.mxu0 %v5290
  %6734 = vmatprep.subr.mxu0 0.0
  %6735 = vmatpush1.msra.mxu0 %v5291
  %6736 = vmatprep.subr.mxu0 0.0
  %6737 = vmatpush1.msra.mxu0 %v5292
  %6738 = vmatprep.subr.mxu0 0.0
  %6739 = vmatpush1.msra.mxu0 %v5293
  %6740 = vmatprep.subr.mxu0 0.0
  %6741 = vmatpush1.msra.mxu0 %v5294
  %6742 = vmatprep.subr.mxu0 0.0
  %6743 = vmatpush1.msra.mxu0 %v5295
  %6744 = vmatprep.subr.mxu0 0.0
  %6745 = vmatpush1.msra.mxu0 %v5296
  %6746 = vmatprep.subr.mxu0 0.0
  %6747 = vmatpush1.msra.mxu0 %v5297
  %6748 = vmatprep.subr.mxu0 0.0
  %6749 = vmatpush1.msra.mxu0 %v5298
  %6750 = vmatprep.subr.mxu0 0.0
  %6751 = vmatpush1.msra.mxu0 %v5299
  %6752 = vmatprep.subr.mxu0 0.0
  %6753 = vmatpush1.msra.mxu0 %v5300
  %6754 = vmatprep.subr.mxu0 0.0
  %6755 = vmatpush1.msra.mxu0 0.0
  %6756 = vmatprep.subr.mxu0 0.0
  %6757 = vmatpush1.msra.mxu0 0.0
  %6758 = vmatprep.subr.mxu0 0.0
  %6759 = vmatpush1.msra.mxu0 0.0
  %6760 = vmatprep.subr.mxu0 0.0
  %6761 = vmatpush1.msra.mxu0 0.0
  %6762 = vmatprep.subr.mxu0 0.0
  %6763 = vmatpush1.msra.mxu0 0.0
  %6764 = vmatprep.subr.mxu0 0.0
  %6765 = vmatpush1.msra.mxu0 0.0
  %6766 = vmatprep.subr.mxu0 0.0
  %6767 = vmatpush1.msra.mxu0 0.0
  %6768 = vmatprep.subr.mxu0 0.0
  %6769 = vmatpush1.msra.mxu0 0.0
  %6770 = vmatprep.subr.mxu0 0.0
  %6771 = vmatpush1.msra.mxu0 0.0
  %6772 = vmatprep.subr.mxu0 0.0
  %6773 = vmatpush1.msra.mxu0 0.0
  %6774 = vmatprep.subr.mxu0 0.0
  %6775 = vmatpush1.msra.mxu0 0.0
  %6776 = vmatprep.subr.mxu0 0.0
  %6777 = vmatpush1.msra.mxu0 0.0
  %6778 = vmatprep.subr.mxu0 0.0
  %6779 = vmatpush1.msra.mxu0 0.0
  %6780 = vmatprep.subr.mxu0 0.0
  %6781 = vmatpush1.msra.mxu0 0.0
  %6782 = vmatprep.subr.mxu0 0.0
  %6783 = vmatpush1.msra.mxu0 0.0
  %6784 = vmatprep.subr.mxu0 0.0
  %6785 = vmatpush1.msra.mxu0 0.0
  %6786 = vmatprep.subr.mxu0 0.0
  %6787 = vmatpush1.msra.mxu0 0.0
  %6788 = vmatprep.subr.mxu0 0.0
  %6789 = vmatpush1.msra.mxu0 0.0
  %6790 = vmatprep.subr.mxu0 0.0
  %6791 = vmatpush1.msra.mxu0 0.0
  %6792 = vmatprep.subr.mxu0 0.0
  %6793 = vmatpush1.msra.mxu0 0.0
  %6794 = vmatprep.mubr.f32.mxu0 0.0
  %6795 = vmatmul.mubr.f32.gmra.mrb[0].mxu0 %v6722
  %v6796 = vpop.f32.mrb[0].mxu0
  %v6797 = vadd.f32 %v6720, %v6796
  %v6798 = vpop.f32.mrb[0].mxu0
  %6799 = vmatprep.mubr.f32.mxu0 0.0
  %6800 = vmatmul.mubr.f32.gmra.mrb[0].mxu0 %v6725
  %v6801 = vpop.f32.mrb[0].mxu0
  %v6802 = vadd.f32 %v6720, %v6801
  %v6803 = vpop.f32.mrb[0].mxu0
  %6804 = vmatprep.mubr.f32.mxu0 0.0
  %6805 = vmatmul.mubr.f32.gmra.mrb[0].mxu0 %v6728
  %v6806 = vpop.f32.mrb[0].mxu0
  %v6807 = vadd.f32 %v6720, %v6806
  %v6808 = vpop.f32.mrb[0].mxu0
  %6809 = vdwg.mxu0
  %v6810 = vadd.f32 %v6487, %v6797
  %v6811 = vadd.f32 %v6488, %v6802
  %v6812 = vadd.f32 %v6489, %v6807
  %v6813 = vsel %vm3740, %v6810, 0.0
  %6814 = vadd.xlane.f32.xlu0 %v6813
  %v6815 = vpop.xlane.xlu0 %6814
  %v6816 = vsel %vm3740, %v6811, 0.0
  %6817 = vadd.xlane.f32.xlu0 %v6816
  %v6818 = vpop.xlane.xlu0 %6817
  %v6819 = vsel %vm3747, %v6812, 0.0
  %6820 = vadd.xlane.f32.xlu0 %v6819
  %v6821 = vpop.xlane.xlu0 %6820
  %v6822 = vmul.f32 %v6815, %v3751
  %v6823 = vmul.f32 %v6818, %v3751
  %v6824 = vmul.f32 %v6821, %v3751
  %v6825 = vsub.f32 %v6810, %v6822
  %v6826 = vsub.f32 %v6811, %v6823
  %v6827 = vsub.f32 %v6812, %v6824
  %v6828 = vmul.f32 %v6825, %v6825
  %v6829 = vmul.f32 %v6826, %v6826
  %v6830 = vmul.f32 %v6827, %v6827
  %v6831 = vsel %vm3740, %v6828, 0.0
  %6832 = vadd.xlane.f32.xlu0 %v6831
  %v6833 = vpop.xlane.xlu0 %6832
  %v6834 = vsel %vm3740, %v6829, 0.0
  %6835 = vadd.xlane.f32.xlu0 %v6834
  %v6836 = vpop.xlane.xlu0 %6835
  %v6837 = vsel %vm3747, %v6830, 0.0
  %6838 = vadd.xlane.f32.xlu0 %v6837
  %v6839 = vpop.xlane.xlu0 %6838
  %v6840 = vmul.f32 %v6833, %v3751
  %v6841 = vmul.f32 %v6836, %v3751
  %v6842 = vmul.f32 %v6839, %v3751
  %v6843 = vadd.f32 %v6840, 1e-06
  %v6844 = vadd.f32 %v6841, 1e-06
  %v6845 = vadd.f32 %v6842, 1e-06
  %v6846 = vrsqrt.pop %v6843
  %v6847 = vrsqrt.pop %v6844
  %v6848 = vrsqrt.pop %v6845
  %v6849 = vmul.f32 %v6825, %v6846
  %v6850 = vmul.f32 %v6826, %v6847
  %v6851 = vmul.f32 %v6827, %v6848
  %v6852 = vlaneseq
  %v6853 = vshrl.u32 %v6852, 7
  %v6854 = vsub.s32 6, %v6853
  %v6855 = vrot.slane %v68, %v6854
  %v6856 = vmul.f32 %v6849, %v6855
  %v6857 = vmul.f32 %v6850, %v6855
  %v6858 = vmul.f32 %v6851, %v6855
  %v6859 = vlaneseq
  %v6860 = vshrl.u32 %v6859, 7
  %v6861 = vsub.s32 7, %v6860
  %v6862 = vrot.slane %v68, %v6861
  %v6863 = vadd.f32 %v6856, %v6862
  %v6864 = vadd.f32 %v6857, %v6862
  %v6865 = vadd.f32 %v6858, %v6862
  %v6866 = vld [vmem:[%s5] sm:$0xff]
  %v6867 = vld [vmem:[%s5 + $0x8] sm:$0xff]
  %v6868 = vld [vmem:[%s5 + $0x10] sm:$0xff]
  %v6869 = vld [vmem:[%s5 + $0x18] sm:$0xff]
  %v6870 = vld [vmem:[%s5 + $0x20] sm:$0xff]
  %v6871 = vld [vmem:[%s5 + $0x28] sm:$0xff]
  %v6872 = vlaneseq
  %v6873 = vshrl.u32 %v6872, 7
  %v6874 = vsub.s32 0, %v6873
  %v6875 = vrot.slane %v69, %v6874
  %v6876 = vlaneseq
  %v6877 = vshrl.u32 %v6876, 7
  %v6878 = vsub.s32 0, %v6877
  %v6879 = vrot.slane %v70, %v6878
  %v6881 = vsel %vm3740, %v6863, 0
  %v6884 = vsel %vm3740, %v6864, 0
  %v6887 = vsel %vm3740, %v6865, 0
  %6889 = vmatprep.subr.mxu0 %v6867
  %6890 = vmatpush1.msra.mxu0 %v6866
  %6891 = vmatprep.subr.mxu0 %v6869
  %6892 = vmatpush1.msra.mxu0 %v6868
  %6893 = vmatprep.subr.mxu0 %v6871
  %6894 = vmatpush1.msra.mxu0 %v6870
  %6895 = vmatprep.subr.mxu0 0.0
  %6896 = vmatpush1.msra.mxu0 0.0
  %6897 = vmatprep.subr.mxu0 0.0
  %6898 = vmatpush1.msra.mxu0 0.0
  %6899 = vmatprep.subr.mxu0 0.0
  %6900 = vmatpush1.msra.mxu0 0.0
  %6901 = vmatprep.subr.mxu0 0.0
  %6902 = vmatpush1.msra.mxu0 0.0
  %6903 = vmatprep.subr.mxu0 0.0
  %6904 = vmatpush1.msra.mxu0 0.0
  %6905 = vmatprep.subr.mxu0 0.0
  %6906 = vmatpush1.msra.mxu0 0.0
  %6907 = vmatprep.subr.mxu0 0.0
  %6908 = vmatpush1.msra.mxu0 0.0
  %6909 = vmatprep.subr.mxu0 0.0
  %6910 = vmatpush1.msra.mxu0 0.0
  %6911 = vmatprep.subr.mxu0 0.0
  %6912 = vmatpush1.msra.mxu0 0.0
  %6913 = vmatprep.subr.mxu0 0.0
  %6914 = vmatpush1.msra.mxu0 0.0
  %6915 = vmatprep.subr.mxu0 0.0
  %6916 = vmatpush1.msra.mxu0 0.0
  %6917 = vmatprep.subr.mxu0 0.0
  %6918 = vmatpush1.msra.mxu0 0.0
  %6919 = vmatprep.subr.mxu0 0.0
  %6920 = vmatpush1.msra.mxu0 0.0
  %6921 = vmatprep.subr.mxu0 0.0
  %6922 = vmatpush1.msra.mxu0 0.0
  %6923 = vmatprep.subr.mxu0 0.0
  %6924 = vmatpush1.msra.mxu0 0.0
  %6925 = vmatprep.subr.mxu0 0.0
  %6926 = vmatpush1.msra.mxu0 0.0
  %6927 = vmatprep.subr.mxu0 0.0
  %6928 = vmatpush1.msra.mxu0 0.0
  %6929 = vmatprep.subr.mxu0 0.0
  %6930 = vmatpush1.msra.mxu0 0.0
  %6931 = vmatprep.subr.mxu0 0.0
  %6932 = vmatpush1.msra.mxu0 0.0
  %6933 = vmatprep.subr.mxu0 0.0
  %6934 = vmatpush1.msra.mxu0 0.0
  %6935 = vmatprep.subr.mxu0 0.0
  %6936 = vmatpush1.msra.mxu0 0.0
  %6937 = vmatprep.subr.mxu0 0.0
  %6938 = vmatpush1.msra.mxu0 0.0
  %6939 = vmatprep.subr.mxu0 0.0
  %6940 = vmatpush1.msra.mxu0 0.0
  %6941 = vmatprep.subr.mxu0 0.0
  %6942 = vmatpush1.msra.mxu0 0.0
  %6943 = vmatprep.subr.mxu0 0.0
  %6944 = vmatpush1.msra.mxu0 0.0
  %6945 = vmatprep.subr.mxu0 0.0
  %6946 = vmatpush1.msra.mxu0 0.0
  %6947 = vmatprep.subr.mxu0 0.0
  %6948 = vmatpush1.msra.mxu0 0.0
  %6949 = vmatprep.subr.mxu0 0.0
  %6950 = vmatpush1.msra.mxu0 0.0
  %6951 = vmatprep.subr.mxu0 0.0
  %6952 = vmatpush1.msra.mxu0 0.0
  %6953 = vmatprep.mubr.f32.mxu0 0.0
  %6954 = vmatmul.mubr.f32.gmra.mrb[0].mxu0 %v6881
  %v6955 = vpop.f32.mrb[0].mxu0
  %v6956 = vadd.f32 %v6875, %v6955
  %v6957 = vpop.f32.mrb[0].mxu0
  %v6958 = vadd.f32 %v6879, %v6957
  %6959 = vmatprep.mubr.f32.mxu0 0.0
  %6960 = vmatmul.mubr.f32.gmra.mrb[0].mxu0 %v6884
  %v6961 = vpop.f32.mrb[0].mxu0
  %v6962 = vadd.f32 %v6875, %v6961
  %v6963 = vpop.f32.mrb[0].mxu0
  %v6964 = vadd.f32 %v6879, %v6963
  %6965 = vmatprep.mubr.f32.mxu0 0.0
  %6966 = vmatmul.mubr.f32.gmra.mrb[0].mxu0 %v6887
  %v6967 = vpop.f32.mrb[0].mxu0
  %v6968 = vadd.f32 %v6875, %v6967
  %v6969 = vpop.f32.mrb[0].mxu0
  %v6970 = vadd.f32 %v6879, %v6969
  %6971 = vdwg.mxu0
  %v6972 = vsel %vm181, %v57, 0.0
  %v6973 = vadd.f32 %v56, %v6972
  %6974 = vadd.xlane.f32.xlu0 %v6973
  %v6975 = vpop.xlane.xlu0 %6974
  %v6976 = vsel %vm181, %v59, 0.0
  %v6977 = vadd.f32 %v58, %v6976
  %6978 = vadd.xlane.f32.xlu0 %v6977
  %v6979 = vpop.xlane.xlu0 %6978
  %v6980 = vsel %vm787, %v60, 0.0
  %vm6981 = vcmask 123904
  %v6982 = vsel %vm6981, %v61, 0.0
  %v6983 = vadd.f32 %v6980, %v6982
  %6984 = vadd.xlane.f32.xlu0 %v6983
  %v6985 = vpop.xlane.xlu0 %6984
  %v6986 = vrcp.pop 144.0
  %v6987 = vmul.f32 %v6975, %v6986
  %v6988 = vmul.f32 %v6979, %v6986
  %v6989 = vmul.f32 %v6985, %v6986
  %v6990 = vsub.f32 %v56, %v6987
  %v6991 = vsub.f32 %v57, %v6987
  %v6992 = vsub.f32 %v58, %v6988
  %v6993 = vsub.f32 %v59, %v6988
  %v6994 = vsub.f32 %v60, %v6989
  %v6995 = vsub.f32 %v61, %v6989
  %v6996 = vmul.f32 %v6990, %v6990
  %v6997 = vmul.f32 %v6991, %v6991
  %v6998 = vmul.f32 %v6992, %v6992
  %v6999 = vmul.f32 %v6993, %v6993
  %v7000 = vmul.f32 %v6994, %v6994
  %v7001 = vmul.f32 %v6995, %v6995
  %v7002 = vsel %vm181, %v6997, 0.0
  %v7003 = vadd.f32 %v6996, %v7002
  %7004 = vadd.xlane.f32.xlu0 %v7003
  %v7005 = vpop.xlane.xlu0 %7004
  %v7006 = vsel %vm181, %v6999, 0.0
  %v7007 = vadd.f32 %v6998, %v7006
  %7008 = vadd.xlane.f32.xlu0 %v7007
  %v7009 = vpop.xlane.xlu0 %7008
  %v7010 = vsel %vm787, %v7000, 0.0
  %v7011 = vsel %vm6981, %v7001, 0.0
  %v7012 = vadd.f32 %v7010, %v7011
  %7013 = vadd.xlane.f32.xlu0 %v7012
  %v7014 = vpop.xlane.xlu0 %7013
  %v7015 = vmul.f32 %v7005, %v6986
  %v7016 = vmul.f32 %v7009, %v6986
  %v7017 = vmul.f32 %v7014, %v6986
  %v7018 = vadd.f32 %v7015, 1e-06
  %v7019 = vadd.f32 %v7016, 1e-06
  %v7020 = vadd.f32 %v7017, 1e-06
  %v7021 = vrsqrt.pop %v7018
  %v7022 = vrsqrt.pop %v7019
  %v7023 = vrsqrt.pop %v7020
  %v7024 = vmul.f32 %v6990, %v7021
  %v7025 = vmul.f32 %v6991, %v7021
  %v7026 = vmul.f32 %v6992, %v7022
  %v7027 = vmul.f32 %v6993, %v7022
  %v7028 = vmul.f32 %v6994, %v7023
  %v7029 = vmul.f32 %v6995, %v7023
  %v7030 = vsub.f32 %v6956, %v7024
  %v7031 = vsub.f32 %v6958, %v7025
  %v7032 = vsub.f32 %v6962, %v7026
  %v7033 = vsub.f32 %v6964, %v7027
  %v7034 = vsub.f32 %v6968, %v7028
  %v7035 = vsub.f32 %v6970, %v7029
  %v7036 = vmul.f32 %v7030, %v7030
  %v7037 = vmul.f32 %v7031, %v7031
  %v7038 = vmul.f32 %v7032, %v7032
  %v7039 = vmul.f32 %v7033, %v7033
  %v7040 = vmul.f32 %v7034, %v7034
  %v7041 = vmul.f32 %v7035, %v7035
  %v7042 = vsel %vm99, 1, 0
  %v7043 = vsel %vm100, 1, 0
  %v7044 = vsel %vm101, 1, 0
  %vm7045 = vcmp.eq.s32.totalorder %v7042, 1
  %vm7046 = vcmp.eq.s32.totalorder %v7043, 1
  %vm7047 = vcmp.eq.s32.totalorder %v7044, 1
  %v7048 = vsel %vm7045, %v7036, 0.0
  %v7049 = vsel %vm7045, %v7037, 0.0
  %v7050 = vsel %vm7046, %v7038, 0.0
  %v7051 = vsel %vm7046, %v7039, 0.0
  %v7052 = vsel %vm7047, %v7040, 0.0
  %v7053 = vsel %vm7047, %v7041, 0.0
  %v7054 = vsel %vm181, %v7049, 0.0
  %v7055 = vadd.f32 %v7048, %v7054
  %v7056 = vadd.f32 %v7055, %v7050
  %v7057 = vsel %vm181, %v7051, 0.0
  %v7058 = vadd.f32 %v7056, %v7057
  %v7059 = vsel %vm787, %v7052, 0.0
  %v7060 = vadd.f32 %v7058, %v7059
  %v7061 = vsel %vm6981, %v7053, 0.0
  %v7062 = vadd.f32 %v7060, %v7061
  %7063 = vadd.xlane.f32.xlu0 %v7062
  %v7064 = vpop.xlane.xlu0 %7063
  %v7065 = vrot.slane %v7064, 4
  %v7066 = vadd.f32 %v7064, %v7065
  %v7067 = vrot.slane %v7066, 2
  %v7068 = vadd.f32 %v7066, %v7067
  %v7069 = vrot.slane %v7068, 1
  %v7070 = vadd.f32 %v7068, %v7069
  %s7071 = vtos %v7070
  %v7072 = vstv %s7071
  %v7073 = vadd.f32 %v7072, 0.0
  %7074 = vst [vmem:[%s17] sm:$0xff] %v7073
  // Predicated region
  $region70: #{mae3d_forward.1} parent=0 // pred_check
    _
  $region71: #{mae3d_forward.1} parent=0 // pred_check_branch
    %7076 = sbr.rel (0) target = $region73
  $region72: #{mae3d_forward.1} parent=0 // pred_region
    _
  $region73: #{mae3d_forward.1} parent=0 // pred_fallthru
    _
  // Predicated region
  $region74: #{mae3d_forward.1} parent=0 // pred_check
    _
  $region75: #{mae3d_forward.1} parent=0 // pred_check_branch
    %7078 = sbr.rel (0) target = $region77
  $region76: #{mae3d_forward.1} parent=0 // pred_region
    _
  $region77: #{mae3d_forward.1} parent=0 // pred_fallthru
    _

</llo_original>
